<compile_context>
chip_gen: v7x
topology: tpu7x:2x2x1
jax: 0.10.0
libtpu: 0.0.40
codegen_flags: <defaults>
</compile_context>

<pallas_src>
import math

import numpy as np
import jax
import jax.numpy as jnp
from jax.experimental import pallas as pl
from jax.experimental.pallas import tpu as pltpu


# ----------------------------------------------------------------------------
# f32 epilogue helpers (MXU inputs are bf16, accumulation stays f32)
# ----------------------------------------------------------------------------

def _lrelu(x):
    return jnp.where(x > 0.0, x, 0.01 * x)


def _relu(x):
    return jnp.maximum(x, 0.0)


def _sigmoid(x):                       # stable; divide moved to EUP reciprocal
    e = jnp.exp(-jnp.abs(x))
    r = pl.reciprocal(1.0 + e, approx=True)
    return jnp.where(x >= 0.0, r, e * r)


def _softplus(x):                      # matches F.softplus, stable
    return jnp.maximum(x, 0.0) + jnp.log(1.0 + jnp.exp(-jnp.abs(x)))


# ----------------------------------------------------------------------------
# Full forward (eval mode), one pallas_call gridded over batch
# ----------------------------------------------------------------------------

def encoder_decoder_forward(params, image, observed, mask, eps):
    B, inp_channels, H, W = image.shape
    assert H % 4 == 0 and W % 4 == 0
    pp, mp = params["proposal"], params["main"]
    n_hidden = mp["in_conv"]["w"].shape[0]
    fc_hidden = mp["fc1_w"].shape[0]
    fc_out = mp["fcm_w"].shape[0]
    cin_in = inp_channels + 1
    H2, W2, H4, W4 = H // 2, W // 2, H // 4, W // 4
    HW, HW2, HW4 = H * W, H2 * W2, H4 * W4
    assert mp["fc1_w"].shape[1] == n_hidden * HW4

    bf16, f32 = jnp.bfloat16, jnp.float32

    # ------------------- host-side weight re-layout / packing ----------------
    def conv_mat(w):                   # (Cout, Cin, 3, 3) -> (Cout, 9*Cin) tap-major
        co, ci = w.shape[:2]
        return jnp.transpose(w, (0, 2, 3, 1)).reshape(co, 9 * ci)

    def conv_bd(wp, wm):               # block-diag over prop/main branches
        co, ci = wp.shape[:2]
        ap = jnp.transpose(wp, (0, 2, 3, 1))
        am = jnp.transpose(wm, (0, 2, 3, 1))
        z = jnp.zeros_like(ap)
        top = jnp.concatenate([ap, z], axis=3)
        bot = jnp.concatenate([z, am], axis=3)
        return jnp.concatenate([top, bot], axis=0).reshape(2 * co, 9 * 2 * ci)

    KMAX = 9 * 2 * n_hidden            # widest conv contraction (144)
    entries = []
    entries.append(("enc_ic", conv_bd(pp["in_conv"]["w"], mp["in_conv"]["w"]),
                    jnp.concatenate([pp["in_conv"]["b"], mp["in_conv"]["b"]])))
    for nm, key in (("enc_r1", "res1"), ("enc_r2", "res2")):
        for suf, wk, bk in (("_c1", "w1", "b1"), ("_c2", "w2", "b2")):
            entries.append((nm + suf, conv_bd(pp[key][wk], mp[key][wk]),
                            jnp.concatenate([pp[key][bk], mp[key][bk]])))
    for nm, key in (("dr1", "out_res1"), ("dr2", "out_res2"), ("dr3", "out_res3")):
        rp = mp[key]
        entries.append((nm + "_c1", conv_mat(rp["w1"]), rp["b1"]))
        entries.append((nm + "_c2", conv_mat(rp["w2"]), rp["b2"]))
        if "ws" in rp:                 # 1x1-conv shortcut
            entries.append((nm + "_s", rp["ws"].reshape(rp["ws"].shape[0], -1),
                            rp["bs"]))
    entries.append(("oc", conv_mat(mp["out_conv_w"]), mp["out_conv_b"]))

    conv_layout = {}
    wrows, brows = [], []
    off = 0
    for nm, m, b in entries:
        co, k = m.shape
        co_pad = -(-co // 16) * 16     # 16-row alignment for bf16 slab slices
        conv_layout[nm] = (off, co, k)
        wrows.append(jnp.pad(m, ((0, co_pad - co), (0, KMAX - k))))
        brows.append(jnp.pad(b.reshape(co, 1), ((0, co_pad - co), (0, 0))))
        off += co_pad
    cw_slab = jnp.concatenate(wrows, axis=0).astype(bf16)     # packed conv weights
    cb_slab = jnp.concatenate(brows, axis=0).astype(f32)      # packed conv biases

    # fc1 + mean/sigma heads, block-diagonal over the two encoder branches.
    z1 = jnp.zeros((n_hidden * HW4, fc_hidden), f32)
    fc1_bd = jnp.concatenate(
        [jnp.concatenate([pp["fc1_w"].T, z1], axis=1),
         jnp.concatenate([z1, mp["fc1_w"].T], axis=1)], axis=0).astype(bf16)
    z2 = jnp.zeros((fc_hidden, 2 * fc_out), f32)
    ms_p = jnp.concatenate([pp["fcm_w"].T, pp["fcs_w"].T], axis=1)
    ms_m = jnp.concatenate([mp["fcm_w"].T, mp["fcs_w"].T], axis=1)
    ms_bd = jnp.concatenate(
        [jnp.concatenate([ms_p, z2], axis=1),
         jnp.concatenate([z2, ms_m], axis=1)], axis=0).astype(bf16)

    ofc1_t = mp["out_fc1_w"].T.astype(bf16)                   # (fc_out, fc_hidden)
    # out_fc2 with the torch .view(B, C, 7, 7) unflatten folded into the layout:
    # z[c, p] = sum_f h[f] * W2[c*49+p, f]  ->  weight (C*fc_hidden, 49)
    ofc2_r = (mp["out_fc2_w"].reshape(n_hidden, HW4, fc_hidden)
              .transpose(0, 2, 1).reshape(n_hidden * fc_hidden, HW4).astype(bf16))
    ofc2_b = mp["out_fc2_b"].reshape(n_hidden, HW4).astype(f32)

    FB = max(2 * fc_hidden, 4 * fc_out)
    fcb = jnp.zeros((3, FB), f32)
    fcb = fcb.at[0, 0:2 * fc_hidden].set(
        jnp.concatenate([pp["fc1_b"], mp["fc1_b"]]))
    fcb = fcb.at[1, 0:4 * fc_out].set(
        jnp.concatenate([pp["fcm_b"], pp["fcs_b"], mp["fcm_b"], mp["fcs_b"]]))
    fcb = fcb.at[2, 0:fc_hidden].set(mp["out_fc1_b"])

    # Constant matrices (exact in bf16): pool / upsample / flatten helpers.
    def pool_t(h, w):
        h2, w2 = h // 2, w // 2
        m = np.zeros((h * w, h2 * w2), np.float32)
        p = np.arange(h * w)
        m[p, (p // w // 2) * w2 + (p % w) // 2] = 0.25
        return m

    def up_t(h, w):
        ho, wo = 2 * h, 2 * w
        m = np.zeros((h * w, ho * wo), np.float32)
        q = np.arange(ho * wo)
        m[(q // wo // 2) * w + (q % wo) // 2, q] = 1.0
        return m

    p1_t = jnp.asarray(pool_t(H, W), bf16)                    # (HW, HW2)
    p2_t = jnp.asarray(pool_t(H2, W2), bf16)                  # (HW2, HW4)
    u1_t = jnp.asarray(up_t(H4, W4), bf16)                    # (HW4, HW2)
    u2_t = jnp.asarray(up_t(H2, W2), bf16)                    # (HW2, HW)

    # Reshape-free NCHW flatten helpers: spread (49 -> 2C*49) then mask+reduce.
    e_flat = jnp.asarray(np.tile(np.eye(HW4, dtype=np.float32),
                                 (1, 2 * n_hidden)), bf16)    # (HW4, 2C*HW4)
    m_flat = jnp.asarray(
        (np.arange(2 * n_hidden * HW4)[None, :] // HW4 ==
         np.arange(2 * n_hidden)[:, None]).astype(np.float32), f32)
    # Block mask for the out_fc2 "unflatten-by-weight-layout" trick.
    h_mask = jnp.asarray(
        (np.arange(n_hidden * fc_hidden)[None, :] // fc_hidden ==
         np.arange(n_hidden)[:, None]).astype(np.float32), bf16)

    # Horizontal-boundary masks (1 inside, 0 at the wrapped column) per size.
    edges = np.zeros((6, HW), np.float32)
    for row, (h, w) in enumerate(((H, W), (H2, W2), (H4, W4))):
        p = np.arange(h * w)
        edges[2 * row, :h * w] = (p % w != 0)
        edges[2 * row + 1, :h * w] = (p % w != w - 1)
    edge_m = jnp.asarray(edges, bf16)

    weights = [cw_slab, cb_slab, fc1_bd, ms_bd, ofc1_t, ofc2_r, fcb, ofc2_b,
               p1_t, p2_t, u1_t, u2_t, e_flat, m_flat, h_mask, edge_m]

    # ----------------------------- input prep --------------------------------
    # (B, C, H, W) -> (B, C, H*W): channels on sublanes, spatial on lanes, bf16.
    xin = jnp.concatenate([image, mask, observed, mask], axis=1).reshape(
        B, 2 * cin_in, HW).astype(bf16)
    eps3 = eps.astype(f32).reshape(B, 1, fc_out)

    # ------------------------------- kernel ----------------------------------
    def kernel(xin_ref, eps_ref, cw_ref, cb_ref, fc1_ref, ms_ref, ofc1_ref,
               ofc2_ref, fcb_ref, ofc2b_ref, p1_ref, p2_ref, u1_ref, u2_ref,
               ef_ref, mf_ref, hm_ref, edge_ref, out_ref, ml_ref):
        nl = {W: edge_ref[0:1, 0:HW], W2: edge_ref[2:3, 0:HW2],
              W4: edge_ref[4:5, 0:HW4]}
        nr = {W: edge_ref[1:2, 0:HW], W2: edge_ref[3:4, 0:HW2],
              W4: edge_ref[5:6, 0:HW4]}

        def cwb(name):
            r, co, k = conv_layout[name]
            return cw_ref[r:r + co, 0:k], cb_ref[r:r + co, :]

        def conv(x, name, w, act=None, residual=None):
            """3x3 conv (pad=1) on (Cin, HW): one fused-tap matmul on the MXU."""
            wm, b = cwb(name)
            cin, hw = x.shape
            pad = w + 1
            xb = x.astype(bf16)
            zp = jnp.zeros((cin, pad), bf16)
            xp = jnp.concatenate([zp, xb, zp], axis=1)
            taps = []
            for dy in (-1, 0, 1):
                for dx in (-1, 0, 1):
                    s = pad + dy * w + dx
                    t = xp[:, s:s + hw]
                    if dx == -1:
                        t = t * nl[w]
                    elif dx == 1:
                        t = t * nr[w]
                    taps.append(t)
            slab = jnp.concatenate(taps, axis=0)               # (9*Cin, HW) bf16
            acc = jnp.dot(wm, slab, preferred_element_type=f32) + b
            if residual is not None:
                acc = acc + residual
            return act(acc) if act is not None else acc

        def resblock(x, pre, w, has_short):
            h = conv(x, pre + "_c1", w, act=_lrelu)
            if has_short:
                ws, bs = cwb(pre + "_s")
                short = jnp.dot(ws, x.astype(bf16),
                                preferred_element_type=f32) + bs
            else:
                short = x
            return conv(h, pre + "_c2", w, act=_lrelu, residual=short)

        # -------- encoder: proposal + main branches fused block-diagonally ---
        x = xin_ref[0]                                          # (2*cin_in, HW) bf16
        y = conv(x, "enc_ic", W, act=_lrelu)                    # (2nh, HW)
        y = resblock(y, "enc_r1", W, False)
        y1 = jnp.dot(y.astype(bf16), p1_ref[...],
                     preferred_element_type=f32)                # pool1 (2nh, HW2)
        y = resblock(y1, "enc_r2", W2, False)
        y2 = jnp.dot(y.astype(bf16), p2_ref[...],
                     preferred_element_type=f32)                # pool2 (2nh, HW4)

        out1 = y1[n_hidden:2 * n_hidden, :]                     # main-branch skips
        out2 = y2[n_hidden:2 * n_hidden, :]

        # NCHW flatten of (2nh, HW4) -> (1, 2nh*HW4) via spread + mask + reduce.
        t = jnp.dot(y2.astype(bf16), ef_ref[...], preferred_element_type=f32)
        o2flat = jnp.sum(t * mf_ref[...], axis=0, keepdims=True)

        hfc = jnp.dot(o2flat.astype(bf16), fc1_ref[...],
                      preferred_element_type=f32) + fcb_ref[0:1, 0:2 * fc_hidden]
        lane = jax.lax.broadcasted_iota(jnp.int32, (1, 2 * fc_hidden), 1)
        hfc = jnp.where(lane < fc_hidden, _lrelu(hfc), _relu(hfc))

        ml = jnp.dot(hfc.astype(bf16), ms_ref[...],
                     preferred_element_type=f32) + fcb_ref[1:2, 0:4 * fc_out]
        ml_ref[0] = ml                       # [prop_mean, prop_logs, mean, logs]

        mean = ml[:, 2 * fc_out:3 * fc_out]
        logs = ml[:, 3 * fc_out:4 * fc_out]
        sample = mean + _softplus(logs) * eps_ref[0]            # eval-mode branch

        # ------------------------------ decoder ------------------------------
        h = _relu(jnp.dot(sample.astype(bf16), ofc1_ref[...],
                          preferred_element_type=f32) + fcb_ref[2:3, 0:fc_hidden])
        hrep = jnp.concatenate([h.astype(bf16)] * n_hidden, axis=1)
        hbig = hrep * hm_ref[...]                               # (nh, nh*fc_hidden)
        z = _relu(jnp.dot(hbig, ofc2_ref[...],
                          preferred_element_type=f32) + ofc2b_ref[...])  # (nh, HW4)

        d = jnp.concatenate([z, out2], axis=0)                  # (2nh, HW4)
        d = resblock(d, "dr1", W4, True)
        d = jnp.dot(d.astype(bf16), u1_ref[...],
                    preferred_element_type=f32)                 # upsample -> 14x14
        d = jnp.concatenate([d, out1], axis=0)
        d = resblock(d, "dr2", W2, True)
        d = jnp.dot(d.astype(bf16), u2_ref[...],
                    preferred_element_type=f32)                 # upsample -> 28x28
        d = resblock(d, "dr3", W, False)
        out_ref[0] = conv(d, "oc", W, act=_sigmoid)             # (2*inp, HW)

    # ------------------------------- specs ------------------------------------
    in_specs = ([pl.BlockSpec((1, 2 * cin_in, HW), lambda b: (b, 0, 0)),
                 pl.BlockSpec((1, 1, fc_out), lambda b: (b, 0, 0))]
                + [pl.BlockSpec(a.shape, lambda b: (0, 0)) for a in weights])
    out_specs = (pl.BlockSpec((1, 2 * inp_channels, HW), lambda b: (b, 0, 0)),
                 pl.BlockSpec((1, 1, 4 * fc_out), lambda b: (b, 0, 0)))
    out_shape = (jax.ShapeDtypeStruct((B, 2 * inp_channels, HW), f32),
                 jax.ShapeDtypeStruct((B, 1, 4 * fc_out), f32))

    out_flat, ml = pl.pallas_call(
        kernel,
        grid=(B,),
        in_specs=in_specs,
        out_specs=out_specs,
        out_shape=out_shape,
        compiler_params=pltpu.CompilerParams(
            dimension_semantics=("parallel",),     # v7x: one sample per TensorCore
            vmem_limit_bytes=32 * 1024 * 1024),
        cost_estimate=pl.CostEstimate(flops=int(45e6) * B,
                                      transcendentals=8192 * B,
                                      bytes_accessed=int(1_200_000) + 50_000 * B),
    )(xin, eps3, *weights)

    out = out_flat.reshape(B, 2 * inp_channels, H, W)           # free (no transpose)
    return {"out": out,
            "prop_mean": ml[:, 0, 0:fc_out],
            "prop_logs": ml[:, 0, fc_out:2 * fc_out],
            "mean": ml[:, 0, 2 * fc_out:3 * fc_out],
            "logs": ml[:, 0, 3 * fc_out:4 * fc_out]}


# ----------------------------------------------------------------------------
# Deterministic parameter initialization (PyTorch-like uniform bounds)
# ----------------------------------------------------------------------------

def init_params(key, inp_channels, n_hidden, fc_hidden, fc_out):
    kit = iter(jax.random.split(key, 64))
    nk = lambda: next(kit)

    def conv_p(cin, cout, k=3):
        bound = 1.0 / math.sqrt(cin * k * k)
        w = jax.random.uniform(nk(), (cout, cin, k, k), jnp.float32, -bound, bound)
        b = jax.random.uniform(nk(), (cout,), jnp.float32, -bound, bound)
        return w, b

    def lin_p(cin, cout):
        bound = 1.0 / math.sqrt(cin)
        w = jax.random.uniform(nk(), (cout, cin), jnp.float32, -bound, bound)
        b = jax.random.uniform(nk(), (cout,), jnp.float32, -bound, bound)
        return w, b

    def res_p(cin, cout):
        w1, b1 = conv_p(cin, cout)
        w2, b2 = conv_p(cout, cout)
        p = {"w1": w1, "b1": b1, "w2": w2, "b2": b2}
        if cin != cout:
            ws, bs = conv_p(cin, cout, k=1)
            p["ws"] = ws
            p["bs"] = bs
        return p

    def enc_branch(cin):
        wi, bi = conv_p(cin, n_hidden)
        fc1w, fc1b = lin_p(n_hidden * 7 * 7, fc_hidden)
        fmw, fmb = lin_p(fc_hidden, fc_out)
        fsw, fsb = lin_p(fc_hidden, fc_out)
        return {"in_conv": {"w": wi, "b": bi},
                "res1": res_p(n_hidden, n_hidden),
                "res2": res_p(n_hidden, n_hidden),
                "fc1_w": fc1w, "fc1_b": fc1b,
                "fcm_w": fmw, "fcm_b": fmb,
                "fcs_w": fsw, "fcs_b": fsb}

    proposal = enc_branch(inp_channels + 1)
    main = enc_branch(inp_channels + 1)

    ofc1w, ofc1b = lin_p(fc_out, fc_hidden)
    ofc2w, ofc2b = lin_p(fc_hidden, n_hidden * 7 * 7)
    ocw, ocb = conv_p(n_hidden, 2 * inp_channels)
    main.update({"out_fc1_w": ofc1w, "out_fc1_b": ofc1b,
                 "out_fc2_w": ofc2w, "out_fc2_b": ofc2b,
                 "out_res1": res_p(2 * n_hidden, n_hidden),
                 "out_res2": res_p(2 * n_hidden, n_hidden),
                 "out_res3": res_p(n_hidden, n_hidden),
                 "out_conv_w": ocw, "out_conv_b": ocb})
    return {"proposal": proposal, "main": main}


# ----------------------------------------------------------------------------
# Main
# ----------------------------------------------------------------------------

if __name__ == "__main__":
    # cfg['model']: n_hidden=8, fc_hidden=32, fc_out=16, inp_channels=1,
    #               last_layer='sigmoid'.  MNIST spatial 28x28 (7x7 after 2 pools).
    INP_CHANNELS, N_HIDDEN, FC_HIDDEN, FC_OUT = 1, 8, 32, 16
    B, H, W = 2, 28, 28

    key = jax.random.PRNGKey(0)
    k_img, k_obs, k_msk, k_eps, k_par = jax.random.split(key, 5)

    image = jax.random.normal(k_img, (B, INP_CHANNELS, H, W), jnp.float32)
    observed = jax.random.normal(k_obs, (B, INP_CHANNELS, H, W), jnp.float32)
    mask = (jax.random.uniform(k_msk, (B, 1, H, W)) > 0.5).astype(jnp.float32)
    eps = jax.random.normal(k_eps, (B, FC_OUT), jnp.float32)

    params = init_params(k_par, INP_CHANNELS, N_HIDDEN, FC_HIDDEN, FC_OUT)

    fwd = jax.jit(encoder_decoder_forward)
    out = fwd(params, image, observed, mask, eps)
    jax.block_until_ready(out)

    assert out["out"].shape == (B, 2 * INP_CHANNELS, H, W)
    assert out["mean"].shape == (B, FC_OUT)
    assert out["prop_mean"].shape == (B, FC_OUT)
    assert bool(jnp.all(jnp.isfinite(out["out"])))
    print("KERNEL_OK")
</pallas_src>

<mosaic_0001>
module attributes {stable_mosaic.version = 11 : i64} {
  func.func @kernel(%arg0: i32, %arg1: memref<1x4x784xbf16, #tpu.memory_space<vmem>>, %arg2: memref<1x1x16xf32, #tpu.memory_space<vmem>>, %arg3: memref<224x144xbf16, #tpu.memory_space<vmem>>, %arg4: memref<224x1xf32, #tpu.memory_space<vmem>>, %arg5: memref<784x64xbf16, #tpu.memory_space<vmem>>, %arg6: memref<64x64xbf16, #tpu.memory_space<vmem>>, %arg7: memref<16x32xbf16, #tpu.memory_space<vmem>>, %arg8: memref<256x49xbf16, #tpu.memory_space<vmem>>, %arg9: memref<3x64xf32, #tpu.memory_space<vmem>>, %arg10: memref<8x49xf32, #tpu.memory_space<vmem>>, %arg11: memref<784x196xbf16, #tpu.memory_space<vmem>>, %arg12: memref<196x49xbf16, #tpu.memory_space<vmem>>, %arg13: memref<49x196xbf16, #tpu.memory_space<vmem>>, %arg14: memref<196x784xbf16, #tpu.memory_space<vmem>>, %arg15: memref<49x784xbf16, #tpu.memory_space<vmem>>, %arg16: memref<16x784xf32, #tpu.memory_space<vmem>>, %arg17: memref<8x256xbf16, #tpu.memory_space<vmem>>, %arg18: memref<6x784xbf16, #tpu.memory_space<vmem>>, %arg19: memref<1x2x784xf32, #tpu.memory_space<vmem>>, %arg20: memref<1x1x64xf32, #tpu.memory_space<vmem>>) attributes {dimension_semantics = [#tpu.dimension_semantics<parallel>], iteration_bounds = array<i64: 2>, scalar_prefetch = 0 : i64, scratch_operands = 0 : i64, tpu.core_type = #tpu.core_type<tc>, window_params = [{transform_indices = @transform_0, window_bounds = array<i64: 1, 4, 784>}, {transform_indices = @transform_1, window_bounds = array<i64: 1, 1, 16>}, {pipeline_mode = #tpu.pipeline_mode<synchronous>, transform_indices = @transform_2, window_bounds = array<i64: 224, 144>}, {pipeline_mode = #tpu.pipeline_mode<synchronous>, transform_indices = @transform_3, window_bounds = array<i64: 224, 1>}, {pipeline_mode = #tpu.pipeline_mode<synchronous>, transform_indices = @transform_4, window_bounds = array<i64: 784, 64>}, {pipeline_mode = #tpu.pipeline_mode<synchronous>, transform_indices = @transform_5, window_bounds = array<i64: 64, 64>}, {pipeline_mode = #tpu.pipeline_mode<synchronous>, transform_indices = @transform_6, window_bounds = array<i64: 16, 32>}, {pipeline_mode = #tpu.pipeline_mode<synchronous>, transform_indices = @transform_7, window_bounds = array<i64: 256, 49>}, {pipeline_mode = #tpu.pipeline_mode<synchronous>, transform_indices = @transform_8, window_bounds = array<i64: 3, 64>}, {pipeline_mode = #tpu.pipeline_mode<synchronous>, transform_indices = @transform_9, window_bounds = array<i64: 8, 49>}, {pipeline_mode = #tpu.pipeline_mode<synchronous>, transform_indices = @transform_10, window_bounds = array<i64: 784, 196>}, {pipeline_mode = #tpu.pipeline_mode<synchronous>, transform_indices = @transform_11, window_bounds = array<i64: 196, 49>}, {pipeline_mode = #tpu.pipeline_mode<synchronous>, transform_indices = @transform_12, window_bounds = array<i64: 49, 196>}, {pipeline_mode = #tpu.pipeline_mode<synchronous>, transform_indices = @transform_13, window_bounds = array<i64: 196, 784>}, {pipeline_mode = #tpu.pipeline_mode<synchronous>, transform_indices = @transform_14, window_bounds = array<i64: 49, 784>}, {pipeline_mode = #tpu.pipeline_mode<synchronous>, transform_indices = @transform_15, window_bounds = array<i64: 16, 784>}, {pipeline_mode = #tpu.pipeline_mode<synchronous>, transform_indices = @transform_16, window_bounds = array<i64: 8, 256>}, {pipeline_mode = #tpu.pipeline_mode<synchronous>, transform_indices = @transform_17, window_bounds = array<i64: 6, 784>}, {transform_indices = @transform_18, window_bounds = array<i64: 1, 2, 784>}, {transform_indices = @transform_19, window_bounds = array<i64: 1, 1, 64>}]} {
    %c0 = arith.constant 0 : index
    %c0_0 = arith.constant 0 : index
    %0 = vector.load %arg18[%c0, %c0_0] : memref<6x784xbf16, #tpu.memory_space<vmem>>, vector<1x784xbf16>
    %c2 = arith.constant 2 : index
    %c0_1 = arith.constant 0 : index
    %1 = vector.load %arg18[%c2, %c0_1] : memref<6x784xbf16, #tpu.memory_space<vmem>>, vector<1x196xbf16>
    %c4 = arith.constant 4 : index
    %c0_2 = arith.constant 0 : index
    %2 = vector.load %arg18[%c4, %c0_2] : memref<6x784xbf16, #tpu.memory_space<vmem>>, vector<1x49xbf16>
    %c1 = arith.constant 1 : index
    %c0_3 = arith.constant 0 : index
    %3 = vector.load %arg18[%c1, %c0_3] : memref<6x784xbf16, #tpu.memory_space<vmem>>, vector<1x784xbf16>
    %c3 = arith.constant 3 : index
    %c0_4 = arith.constant 0 : index
    %4 = vector.load %arg18[%c3, %c0_4] : memref<6x784xbf16, #tpu.memory_space<vmem>>, vector<1x196xbf16>
    %c5 = arith.constant 5 : index
    %c0_5 = arith.constant 0 : index
    %5 = vector.load %arg18[%c5, %c0_5] : memref<6x784xbf16, #tpu.memory_space<vmem>>, vector<1x49xbf16>
    %c0_6 = arith.constant 0 : index
    %c0_7 = arith.constant 0 : index
    %c0_8 = arith.constant 0 : index
    %6 = vector.load %arg1[%c0_6, %c0_7, %c0_8] : memref<1x4x784xbf16, #tpu.memory_space<vmem>>, vector<1x4x784xbf16>
    %7 = vector.shape_cast %6 : vector<1x4x784xbf16> to vector<4x784xbf16>
    %c0_9 = arith.constant 0 : index
    %c0_10 = arith.constant 0 : index
    %8 = vector.load %arg3[%c0_9, %c0_10] : memref<224x144xbf16, #tpu.memory_space<vmem>>, vector<16x36xbf16>
    %c0_11 = arith.constant 0 : index
    %c0_12 = arith.constant 0 : index
    %9 = vector.load %arg4[%c0_11, %c0_12] : memref<224x1xf32, #tpu.memory_space<vmem>>, vector<16x1xf32>
    %cst = arith.constant 0.000000e+00 : bf16
    %10 = vector.broadcast %cst : bf16 to vector<4x29xbf16>
    %11 = tpu.concatenate %10, %7, %10 in 1 : vector<4x29xbf16>, vector<4x784xbf16>, vector<4x29xbf16> -> vector<4x842xbf16>
    %12 = vector.extract_strided_slice %11 {offsets = [0, 0], sizes = [4, 784], strides = [1, 1]} : vector<4x842xbf16> to vector<4x784xbf16>
    %13 = vector.broadcast %0 : vector<1x784xbf16> to vector<4x784xbf16>
    %14 = arith.mulf %12, %13 : vector<4x784xbf16>
    %15 = vector.extract_strided_slice %11 {offsets = [0, 1], sizes = [4, 784], strides = [1, 1]} : vector<4x842xbf16> to vector<4x784xbf16>
    %16 = vector.extract_strided_slice %11 {offsets = [0, 2], sizes = [4, 784], strides = [1, 1]} : vector<4x842xbf16> to vector<4x784xbf16>
    %17 = vector.broadcast %3 : vector<1x784xbf16> to vector<4x784xbf16>
    %18 = arith.mulf %16, %17 : vector<4x784xbf16>
    %19 = vector.extract_strided_slice %11 {offsets = [0, 28], sizes = [4, 784], strides = [1, 1]} : vector<4x842xbf16> to vector<4x784xbf16>
    %20 = vector.broadcast %0 : vector<1x784xbf16> to vector<4x784xbf16>
    %21 = arith.mulf %19, %20 : vector<4x784xbf16>
    %22 = vector.extract_strided_slice %11 {offsets = [0, 29], sizes = [4, 784], strides = [1, 1]} : vector<4x842xbf16> to vector<4x784xbf16>
    %23 = vector.extract_strided_slice %11 {offsets = [0, 30], sizes = [4, 784], strides = [1, 1]} : vector<4x842xbf16> to vector<4x784xbf16>
    %24 = vector.broadcast %3 : vector<1x784xbf16> to vector<4x784xbf16>
    %25 = arith.mulf %23, %24 : vector<4x784xbf16>
    %26 = vector.extract_strided_slice %11 {offsets = [0, 56], sizes = [4, 784], strides = [1, 1]} : vector<4x842xbf16> to vector<4x784xbf16>
    %27 = vector.broadcast %0 : vector<1x784xbf16> to vector<4x784xbf16>
    %28 = arith.mulf %26, %27 : vector<4x784xbf16>
    %29 = vector.extract_strided_slice %11 {offsets = [0, 57], sizes = [4, 784], strides = [1, 1]} : vector<4x842xbf16> to vector<4x784xbf16>
    %30 = vector.extract_strided_slice %11 {offsets = [0, 58], sizes = [4, 784], strides = [1, 1]} : vector<4x842xbf16> to vector<4x784xbf16>
    %31 = vector.broadcast %3 : vector<1x784xbf16> to vector<4x784xbf16>
    %32 = arith.mulf %30, %31 : vector<4x784xbf16>
    %33 = tpu.concatenate %14, %15, %18, %21, %22, %25, %28, %29, %32 in 0 : vector<4x784xbf16>, vector<4x784xbf16>, vector<4x784xbf16>, vector<4x784xbf16>, vector<4x784xbf16>, vector<4x784xbf16>, vector<4x784xbf16>, vector<4x784xbf16>, vector<4x784xbf16> -> vector<36x784xbf16>
    %cst_13 = arith.constant dense<0.000000e+00> : vector<16x784xf32>
    %34 = tpu.matmul %8, %33, %cst_13 {dimension_numbers = #tpu.dot_dimension_numbers<[1], [0], [0], [1], [0, 0, 1, 1], [], []>} : vector<16x36xbf16>, vector<36x784xbf16>, vector<16x784xf32> -> vector<16x784xf32>
    %35 = vector.broadcast %9 : vector<16x1xf32> to vector<16x784xf32>
    %36 = arith.addf %34, %35 : vector<16x784xf32>
    %cst_14 = arith.constant 0.000000e+00 : f32
    %37 = vector.broadcast %cst_14 : f32 to vector<16x784xf32>
    %38 = arith.cmpf ogt, %36, %37 : vector<16x784xf32>
    %cst_15 = arith.constant 0.00999999977 : f32
    %39 = vector.broadcast %cst_15 : f32 to vector<16x784xf32>
    %40 = arith.mulf %39, %36 : vector<16x784xf32>
    %41 = arith.select %38, %36, %40 : vector<16x784xi1>, vector<16x784xf32>
    %c16 = arith.constant 16 : index
    %c0_16 = arith.constant 0 : index
    %42 = vector.load %arg3[%c16, %c0_16] : memref<224x144xbf16, #tpu.memory_space<vmem>>, vector<16x144xbf16>
    %c16_17 = arith.constant 16 : index
    %c0_18 = arith.constant 0 : index
    %43 = vector.load %arg4[%c16_17, %c0_18] : memref<224x1xf32, #tpu.memory_space<vmem>>, vector<16x1xf32>
    %44 = arith.truncf %41 : vector<16x784xf32> to vector<16x784xbf16>
    %cst_19 = arith.constant 0.000000e+00 : bf16
    %45 = vector.broadcast %cst_19 : bf16 to vector<16x29xbf16>
    %46 = tpu.concatenate %45, %44, %45 in 1 : vector<16x29xbf16>, vector<16x784xbf16>, vector<16x29xbf16> -> vector<16x842xbf16>
    %47 = vector.extract_strided_slice %46 {offsets = [0, 0], sizes = [16, 784], strides = [1, 1]} : vector<16x842xbf16> to vector<16x784xbf16>
    %48 = vector.broadcast %0 : vector<1x784xbf16> to vector<16x784xbf16>
    %49 = arith.mulf %47, %48 : vector<16x784xbf16>
    %50 = vector.extract_strided_slice %46 {offsets = [0, 1], sizes = [16, 784], strides = [1, 1]} : vector<16x842xbf16> to vector<16x784xbf16>
    %51 = vector.extract_strided_slice %46 {offsets = [0, 2], sizes = [16, 784], strides = [1, 1]} : vector<16x842xbf16> to vector<16x784xbf16>
    %52 = vector.broadcast %3 : vector<1x784xbf16> to vector<16x784xbf16>
    %53 = arith.mulf %51, %52 : vector<16x784xbf16>
    %54 = vector.extract_strided_slice %46 {offsets = [0, 28], sizes = [16, 784], strides = [1, 1]} : vector<16x842xbf16> to vector<16x784xbf16>
    %55 = vector.broadcast %0 : vector<1x784xbf16> to vector<16x784xbf16>
    %56 = arith.mulf %54, %55 : vector<16x784xbf16>
    %57 = vector.extract_strided_slice %46 {offsets = [0, 29], sizes = [16, 784], strides = [1, 1]} : vector<16x842xbf16> to vector<16x784xbf16>
    %58 = vector.extract_strided_slice %46 {offsets = [0, 30], sizes = [16, 784], strides = [1, 1]} : vector<16x842xbf16> to vector<16x784xbf16>
    %59 = vector.broadcast %3 : vector<1x784xbf16> to vector<16x784xbf16>
    %60 = arith.mulf %58, %59 : vector<16x784xbf16>
    %61 = vector.extract_strided_slice %46 {offsets = [0, 56], sizes = [16, 784], strides = [1, 1]} : vector<16x842xbf16> to vector<16x784xbf16>
    %62 = vector.broadcast %0 : vector<1x784xbf16> to vector<16x784xbf16>
    %63 = arith.mulf %61, %62 : vector<16x784xbf16>
    %64 = vector.extract_strided_slice %46 {offsets = [0, 57], sizes = [16, 784], strides = [1, 1]} : vector<16x842xbf16> to vector<16x784xbf16>
    %65 = vector.extract_strided_slice %46 {offsets = [0, 58], sizes = [16, 784], strides = [1, 1]} : vector<16x842xbf16> to vector<16x784xbf16>
    %66 = vector.broadcast %3 : vector<1x784xbf16> to vector<16x784xbf16>
    %67 = arith.mulf %65, %66 : vector<16x784xbf16>
    %68 = tpu.concatenate %49, %50, %53, %56, %57, %60, %63, %64, %67 in 0 : vector<16x784xbf16>, vector<16x784xbf16>, vector<16x784xbf16>, vector<16x784xbf16>, vector<16x784xbf16>, vector<16x784xbf16>, vector<16x784xbf16>, vector<16x784xbf16>, vector<16x784xbf16> -> vector<144x784xbf16>
    %cst_20 = arith.constant dense<0.000000e+00> : vector<16x784xf32>
    %69 = tpu.matmul %42, %68, %cst_20 {dimension_numbers = #tpu.dot_dimension_numbers<[1], [0], [0], [1], [0, 0, 1, 1], [], []>} : vector<16x144xbf16>, vector<144x784xbf16>, vector<16x784xf32> -> vector<16x784xf32>
    %70 = vector.broadcast %43 : vector<16x1xf32> to vector<16x784xf32>
    %71 = arith.addf %69, %70 : vector<16x784xf32>
    %cst_21 = arith.constant 0.000000e+00 : f32
    %72 = vector.broadcast %cst_21 : f32 to vector<16x784xf32>
    %73 = arith.cmpf ogt, %71, %72 : vector<16x784xf32>
    %cst_22 = arith.constant 0.00999999977 : f32
    %74 = vector.broadcast %cst_22 : f32 to vector<16x784xf32>
    %75 = arith.mulf %74, %71 : vector<16x784xf32>
    %76 = arith.select %73, %71, %75 : vector<16x784xi1>, vector<16x784xf32>
    %c32 = arith.constant 32 : index
    %c0_23 = arith.constant 0 : index
    %77 = vector.load %arg3[%c32, %c0_23] : memref<224x144xbf16, #tpu.memory_space<vmem>>, vector<16x144xbf16>
    %c32_24 = arith.constant 32 : index
    %c0_25 = arith.constant 0 : index
    %78 = vector.load %arg4[%c32_24, %c0_25] : memref<224x1xf32, #tpu.memory_space<vmem>>, vector<16x1xf32>
    %79 = arith.truncf %76 : vector<16x784xf32> to vector<16x784xbf16>
    %cst_26 = arith.constant 0.000000e+00 : bf16
    %80 = vector.broadcast %cst_26 : bf16 to vector<16x29xbf16>
    %81 = tpu.concatenate %80, %79, %80 in 1 : vector<16x29xbf16>, vector<16x784xbf16>, vector<16x29xbf16> -> vector<16x842xbf16>
    %82 = vector.extract_strided_slice %81 {offsets = [0, 0], sizes = [16, 784], strides = [1, 1]} : vector<16x842xbf16> to vector<16x784xbf16>
    %83 = vector.broadcast %0 : vector<1x784xbf16> to vector<16x784xbf16>
    %84 = arith.mulf %82, %83 : vector<16x784xbf16>
    %85 = vector.extract_strided_slice %81 {offsets = [0, 1], sizes = [16, 784], strides = [1, 1]} : vector<16x842xbf16> to vector<16x784xbf16>
    %86 = vector.extract_strided_slice %81 {offsets = [0, 2], sizes = [16, 784], strides = [1, 1]} : vector<16x842xbf16> to vector<16x784xbf16>
    %87 = vector.broadcast %3 : vector<1x784xbf16> to vector<16x784xbf16>
    %88 = arith.mulf %86, %87 : vector<16x784xbf16>
    %89 = vector.extract_strided_slice %81 {offsets = [0, 28], sizes = [16, 784], strides = [1, 1]} : vector<16x842xbf16> to vector<16x784xbf16>
    %90 = vector.broadcast %0 : vector<1x784xbf16> to vector<16x784xbf16>
    %91 = arith.mulf %89, %90 : vector<16x784xbf16>
    %92 = vector.extract_strided_slice %81 {offsets = [0, 29], sizes = [16, 784], strides = [1, 1]} : vector<16x842xbf16> to vector<16x784xbf16>
    %93 = vector.extract_strided_slice %81 {offsets = [0, 30], sizes = [16, 784], strides = [1, 1]} : vector<16x842xbf16> to vector<16x784xbf16>
    %94 = vector.broadcast %3 : vector<1x784xbf16> to vector<16x784xbf16>
    %95 = arith.mulf %93, %94 : vector<16x784xbf16>
    %96 = vector.extract_strided_slice %81 {offsets = [0, 56], sizes = [16, 784], strides = [1, 1]} : vector<16x842xbf16> to vector<16x784xbf16>
    %97 = vector.broadcast %0 : vector<1x784xbf16> to vector<16x784xbf16>
    %98 = arith.mulf %96, %97 : vector<16x784xbf16>
    %99 = vector.extract_strided_slice %81 {offsets = [0, 57], sizes = [16, 784], strides = [1, 1]} : vector<16x842xbf16> to vector<16x784xbf16>
    %100 = vector.extract_strided_slice %81 {offsets = [0, 58], sizes = [16, 784], strides = [1, 1]} : vector<16x842xbf16> to vector<16x784xbf16>
    %101 = vector.broadcast %3 : vector<1x784xbf16> to vector<16x784xbf16>
    %102 = arith.mulf %100, %101 : vector<16x784xbf16>
    %103 = tpu.concatenate %84, %85, %88, %91, %92, %95, %98, %99, %102 in 0 : vector<16x784xbf16>, vector<16x784xbf16>, vector<16x784xbf16>, vector<16x784xbf16>, vector<16x784xbf16>, vector<16x784xbf16>, vector<16x784xbf16>, vector<16x784xbf16>, vector<16x784xbf16> -> vector<144x784xbf16>
    %cst_27 = arith.constant dense<0.000000e+00> : vector<16x784xf32>
    %104 = tpu.matmul %77, %103, %cst_27 {dimension_numbers = #tpu.dot_dimension_numbers<[1], [0], [0], [1], [0, 0, 1, 1], [], []>} : vector<16x144xbf16>, vector<144x784xbf16>, vector<16x784xf32> -> vector<16x784xf32>
    %105 = vector.broadcast %78 : vector<16x1xf32> to vector<16x784xf32>
    %106 = arith.addf %104, %105 : vector<16x784xf32>
    %107 = arith.addf %106, %41 : vector<16x784xf32>
    %cst_28 = arith.constant 0.000000e+00 : f32
    %108 = vector.broadcast %cst_28 : f32 to vector<16x784xf32>
    %109 = arith.cmpf ogt, %107, %108 : vector<16x784xf32>
    %cst_29 = arith.constant 0.00999999977 : f32
    %110 = vector.broadcast %cst_29 : f32 to vector<16x784xf32>
    %111 = arith.mulf %110, %107 : vector<16x784xf32>
    %112 = arith.select %109, %107, %111 : vector<16x784xi1>, vector<16x784xf32>
    %113 = arith.truncf %112 : vector<16x784xf32> to vector<16x784xbf16>
    %c0_30 = arith.constant 0 : index
    %c0_31 = arith.constant 0 : index
    %114 = vector.load %arg11[%c0_30, %c0_31] : memref<784x196xbf16, #tpu.memory_space<vmem>>, vector<784x196xbf16>
    %cst_32 = arith.constant dense<0.000000e+00> : vector<16x196xf32>
    %115 = tpu.matmul %113, %114, %cst_32 {dimension_numbers = #tpu.dot_dimension_numbers<[1], [0], [0], [1], [0, 0, 1, 1], [], []>} : vector<16x784xbf16>, vector<784x196xbf16>, vector<16x196xf32> -> vector<16x196xf32>
    %c48 = arith.constant 48 : index
    %c0_33 = arith.constant 0 : index
    %116 = vector.load %arg3[%c48, %c0_33] : memref<224x144xbf16, #tpu.memory_space<vmem>>, vector<16x144xbf16>
    %c48_34 = arith.constant 48 : index
    %c0_35 = arith.constant 0 : index
    %117 = vector.load %arg4[%c48_34, %c0_35] : memref<224x1xf32, #tpu.memory_space<vmem>>, vector<16x1xf32>
    %118 = arith.truncf %115 : vector<16x196xf32> to vector<16x196xbf16>
    %cst_36 = arith.constant 0.000000e+00 : bf16
    %119 = vector.broadcast %cst_36 : bf16 to vector<16x15xbf16>
    %120 = tpu.concatenate %119, %118, %119 in 1 : vector<16x15xbf16>, vector<16x196xbf16>, vector<16x15xbf16> -> vector<16x226xbf16>
    %121 = vector.extract_strided_slice %120 {offsets = [0, 0], sizes = [16, 196], strides = [1, 1]} : vector<16x226xbf16> to vector<16x196xbf16>
    %122 = vector.broadcast %1 : vector<1x196xbf16> to vector<16x196xbf16>
    %123 = arith.mulf %121, %122 : vector<16x196xbf16>
    %124 = vector.extract_strided_slice %120 {offsets = [0, 1], sizes = [16, 196], strides = [1, 1]} : vector<16x226xbf16> to vector<16x196xbf16>
    %125 = vector.extract_strided_slice %120 {offsets = [0, 2], sizes = [16, 196], strides = [1, 1]} : vector<16x226xbf16> to vector<16x196xbf16>
    %126 = vector.broadcast %4 : vector<1x196xbf16> to vector<16x196xbf16>
    %127 = arith.mulf %125, %126 : vector<16x196xbf16>
    %128 = vector.extract_strided_slice %120 {offsets = [0, 14], sizes = [16, 196], strides = [1, 1]} : vector<16x226xbf16> to vector<16x196xbf16>
    %129 = vector.broadcast %1 : vector<1x196xbf16> to vector<16x196xbf16>
    %130 = arith.mulf %128, %129 : vector<16x196xbf16>
    %131 = vector.extract_strided_slice %120 {offsets = [0, 15], sizes = [16, 196], strides = [1, 1]} : vector<16x226xbf16> to vector<16x196xbf16>
    %132 = vector.extract_strided_slice %120 {offsets = [0, 16], sizes = [16, 196], strides = [1, 1]} : vector<16x226xbf16> to vector<16x196xbf16>
    %133 = vector.broadcast %4 : vector<1x196xbf16> to vector<16x196xbf16>
    %134 = arith.mulf %132, %133 : vector<16x196xbf16>
    %135 = vector.extract_strided_slice %120 {offsets = [0, 28], sizes = [16, 196], strides = [1, 1]} : vector<16x226xbf16> to vector<16x196xbf16>
    %136 = vector.broadcast %1 : vector<1x196xbf16> to vector<16x196xbf16>
    %137 = arith.mulf %135, %136 : vector<16x196xbf16>
    %138 = vector.extract_strided_slice %120 {offsets = [0, 29], sizes = [16, 196], strides = [1, 1]} : vector<16x226xbf16> to vector<16x196xbf16>
    %139 = vector.extract_strided_slice %120 {offsets = [0, 30], sizes = [16, 196], strides = [1, 1]} : vector<16x226xbf16> to vector<16x196xbf16>
    %140 = vector.broadcast %4 : vector<1x196xbf16> to vector<16x196xbf16>
    %141 = arith.mulf %139, %140 : vector<16x196xbf16>
    %142 = tpu.concatenate %123, %124, %127, %130, %131, %134, %137, %138, %141 in 0 : vector<16x196xbf16>, vector<16x196xbf16>, vector<16x196xbf16>, vector<16x196xbf16>, vector<16x196xbf16>, vector<16x196xbf16>, vector<16x196xbf16>, vector<16x196xbf16>, vector<16x196xbf16> -> vector<144x196xbf16>
    %cst_37 = arith.constant dense<0.000000e+00> : vector<16x196xf32>
    %143 = tpu.matmul %116, %142, %cst_37 {dimension_numbers = #tpu.dot_dimension_numbers<[1], [0], [0], [1], [0, 0, 1, 1], [], []>} : vector<16x144xbf16>, vector<144x196xbf16>, vector<16x196xf32> -> vector<16x196xf32>
    %144 = vector.broadcast %117 : vector<16x1xf32> to vector<16x196xf32>
    %145 = arith.addf %143, %144 : vector<16x196xf32>
    %cst_38 = arith.constant 0.000000e+00 : f32
    %146 = vector.broadcast %cst_38 : f32 to vector<16x196xf32>
    %147 = arith.cmpf ogt, %145, %146 : vector<16x196xf32>
    %cst_39 = arith.constant 0.00999999977 : f32
    %148 = vector.broadcast %cst_39 : f32 to vector<16x196xf32>
    %149 = arith.mulf %148, %145 : vector<16x196xf32>
    %150 = arith.select %147, %145, %149 : vector<16x196xi1>, vector<16x196xf32>
    %c64 = arith.constant 64 : index
    %c0_40 = arith.constant 0 : index
    %151 = vector.load %arg3[%c64, %c0_40] : memref<224x144xbf16, #tpu.memory_space<vmem>>, vector<16x144xbf16>
    %c64_41 = arith.constant 64 : index
    %c0_42 = arith.constant 0 : index
    %152 = vector.load %arg4[%c64_41, %c0_42] : memref<224x1xf32, #tpu.memory_space<vmem>>, vector<16x1xf32>
    %153 = arith.truncf %150 : vector<16x196xf32> to vector<16x196xbf16>
    %cst_43 = arith.constant 0.000000e+00 : bf16
    %154 = vector.broadcast %cst_43 : bf16 to vector<16x15xbf16>
    %155 = tpu.concatenate %154, %153, %154 in 1 : vector<16x15xbf16>, vector<16x196xbf16>, vector<16x15xbf16> -> vector<16x226xbf16>
    %156 = vector.extract_strided_slice %155 {offsets = [0, 0], sizes = [16, 196], strides = [1, 1]} : vector<16x226xbf16> to vector<16x196xbf16>
    %157 = vector.broadcast %1 : vector<1x196xbf16> to vector<16x196xbf16>
    %158 = arith.mulf %156, %157 : vector<16x196xbf16>
    %159 = vector.extract_strided_slice %155 {offsets = [0, 1], sizes = [16, 196], strides = [1, 1]} : vector<16x226xbf16> to vector<16x196xbf16>
    %160 = vector.extract_strided_slice %155 {offsets = [0, 2], sizes = [16, 196], strides = [1, 1]} : vector<16x226xbf16> to vector<16x196xbf16>
    %161 = vector.broadcast %4 : vector<1x196xbf16> to vector<16x196xbf16>
    %162 = arith.mulf %160, %161 : vector<16x196xbf16>
    %163 = vector.extract_strided_slice %155 {offsets = [0, 14], sizes = [16, 196], strides = [1, 1]} : vector<16x226xbf16> to vector<16x196xbf16>
    %164 = vector.broadcast %1 : vector<1x196xbf16> to vector<16x196xbf16>
    %165 = arith.mulf %163, %164 : vector<16x196xbf16>
    %166 = vector.extract_strided_slice %155 {offsets = [0, 15], sizes = [16, 196], strides = [1, 1]} : vector<16x226xbf16> to vector<16x196xbf16>
    %167 = vector.extract_strided_slice %155 {offsets = [0, 16], sizes = [16, 196], strides = [1, 1]} : vector<16x226xbf16> to vector<16x196xbf16>
    %168 = vector.broadcast %4 : vector<1x196xbf16> to vector<16x196xbf16>
    %169 = arith.mulf %167, %168 : vector<16x196xbf16>
    %170 = vector.extract_strided_slice %155 {offsets = [0, 28], sizes = [16, 196], strides = [1, 1]} : vector<16x226xbf16> to vector<16x196xbf16>
    %171 = vector.broadcast %1 : vector<1x196xbf16> to vector<16x196xbf16>
    %172 = arith.mulf %170, %171 : vector<16x196xbf16>
    %173 = vector.extract_strided_slice %155 {offsets = [0, 29], sizes = [16, 196], strides = [1, 1]} : vector<16x226xbf16> to vector<16x196xbf16>
    %174 = vector.extract_strided_slice %155 {offsets = [0, 30], sizes = [16, 196], strides = [1, 1]} : vector<16x226xbf16> to vector<16x196xbf16>
    %175 = vector.broadcast %4 : vector<1x196xbf16> to vector<16x196xbf16>
    %176 = arith.mulf %174, %175 : vector<16x196xbf16>
    %177 = tpu.concatenate %158, %159, %162, %165, %166, %169, %172, %173, %176 in 0 : vector<16x196xbf16>, vector<16x196xbf16>, vector<16x196xbf16>, vector<16x196xbf16>, vector<16x196xbf16>, vector<16x196xbf16>, vector<16x196xbf16>, vector<16x196xbf16>, vector<16x196xbf16> -> vector<144x196xbf16>
    %cst_44 = arith.constant dense<0.000000e+00> : vector<16x196xf32>
    %178 = tpu.matmul %151, %177, %cst_44 {dimension_numbers = #tpu.dot_dimension_numbers<[1], [0], [0], [1], [0, 0, 1, 1], [], []>} : vector<16x144xbf16>, vector<144x196xbf16>, vector<16x196xf32> -> vector<16x196xf32>
    %179 = vector.broadcast %152 : vector<16x1xf32> to vector<16x196xf32>
    %180 = arith.addf %178, %179 : vector<16x196xf32>
    %181 = arith.addf %180, %115 : vector<16x196xf32>
    %cst_45 = arith.constant 0.000000e+00 : f32
    %182 = vector.broadcast %cst_45 : f32 to vector<16x196xf32>
    %183 = arith.cmpf ogt, %181, %182 : vector<16x196xf32>
    %cst_46 = arith.constant 0.00999999977 : f32
    %184 = vector.broadcast %cst_46 : f32 to vector<16x196xf32>
    %185 = arith.mulf %184, %181 : vector<16x196xf32>
    %186 = arith.select %183, %181, %185 : vector<16x196xi1>, vector<16x196xf32>
    %187 = arith.truncf %186 : vector<16x196xf32> to vector<16x196xbf16>
    %c0_47 = arith.constant 0 : index
    %c0_48 = arith.constant 0 : index
    %188 = vector.load %arg12[%c0_47, %c0_48] : memref<196x49xbf16, #tpu.memory_space<vmem>>, vector<196x49xbf16>
    %cst_49 = arith.constant dense<0.000000e+00> : vector<16x49xf32>
    %189 = tpu.matmul %187, %188, %cst_49 {dimension_numbers = #tpu.dot_dimension_numbers<[1], [0], [0], [1], [0, 0, 1, 1], [], []>} : vector<16x196xbf16>, vector<196x49xbf16>, vector<16x49xf32> -> vector<16x49xf32>
    %190 = vector.extract_strided_slice %115 {offsets = [8, 0], sizes = [8, 196], strides = [1, 1]} : vector<16x196xf32> to vector<8x196xf32>
    %191 = vector.extract_strided_slice %189 {offsets = [8, 0], sizes = [8, 49], strides = [1, 1]} : vector<16x49xf32> to vector<8x49xf32>
    %192 = arith.truncf %189 : vector<16x49xf32> to vector<16x49xbf16>
    %c0_50 = arith.constant 0 : index
    %c0_51 = arith.constant 0 : index
    %193 = vector.load %arg15[%c0_50, %c0_51] : memref<49x784xbf16, #tpu.memory_space<vmem>>, vector<49x784xbf16>
    %cst_52 = arith.constant dense<0.000000e+00> : vector<16x784xf32>
    %194 = tpu.matmul %192, %193, %cst_52 {dimension_numbers = #tpu.dot_dimension_numbers<[1], [0], [0], [1], [0, 0, 1, 1], [], []>} : vector<16x49xbf16>, vector<49x784xbf16>, vector<16x784xf32> -> vector<16x784xf32>
    %c0_53 = arith.constant 0 : index
    %c0_54 = arith.constant 0 : index
    %195 = vector.load %arg16[%c0_53, %c0_54] : memref<16x784xf32, #tpu.memory_space<vmem>>, vector<16x784xf32>
    %196 = arith.mulf %194, %195 : vector<16x784xf32>
    %cst_55 = arith.constant dense<0.000000e+00> : vector<784xf32>
    %197 = vector.multi_reduction <add>, %196, %cst_55 [0] : vector<16x784xf32> to vector<784xf32>
    %198 = vector.shape_cast %197 : vector<784xf32> to vector<1x784xf32>
    %199 = arith.truncf %198 : vector<1x784xf32> to vector<1x784xbf16>
    %c0_56 = arith.constant 0 : index
    %c0_57 = arith.constant 0 : index
    %200 = vector.load %arg5[%c0_56, %c0_57] : memref<784x64xbf16, #tpu.memory_space<vmem>>, vector<784x64xbf16>
    %cst_58 = arith.constant dense<0.000000e+00> : vector<1x64xf32>
    %201 = tpu.matmul %199, %200, %cst_58 {dimension_numbers = #tpu.dot_dimension_numbers<[1], [0], [0], [1], [0, 0, 1, 1], [], []>} : vector<1x784xbf16>, vector<784x64xbf16>, vector<1x64xf32> -> vector<1x64xf32>
    %c0_59 = arith.constant 0 : index
    %c0_60 = arith.constant 0 : index
    %202 = vector.load %arg9[%c0_59, %c0_60] : memref<3x64xf32, #tpu.memory_space<vmem>>, vector<1x64xf32>
    %203 = arith.addf %201, %202 : vector<1x64xf32>
    %204 = tpu.iota {dimensions = array<i32: 1>} : vector<1x64xi32>
    %c32_i32 = arith.constant 32 : i32
    %205 = vector.broadcast %c32_i32 : i32 to vector<1x64xi32>
    %206 = arith.cmpi slt, %204, %205 : vector<1x64xi32>
    %cst_61 = arith.constant 0.000000e+00 : f32
    %207 = vector.broadcast %cst_61 : f32 to vector<1x64xf32>
    %208 = arith.cmpf ogt, %203, %207 : vector<1x64xf32>
    %cst_62 = arith.constant 0.00999999977 : f32
    %209 = vector.broadcast %cst_62 : f32 to vector<1x64xf32>
    %210 = arith.mulf %209, %203 : vector<1x64xf32>
    %211 = arith.select %208, %203, %210 : vector<1x64xi1>, vector<1x64xf32>
    %cst_63 = arith.constant 0.000000e+00 : f32
    %212 = vector.broadcast %cst_63 : f32 to vector<1x64xf32>
    %213 = arith.maximumf %203, %212 : vector<1x64xf32>
    %214 = arith.select %206, %211, %213 : vector<1x64xi1>, vector<1x64xf32>
    %215 = arith.truncf %214 : vector<1x64xf32> to vector<1x64xbf16>
    %c0_64 = arith.constant 0 : index
    %c0_65 = arith.constant 0 : index
    %216 = vector.load %arg6[%c0_64, %c0_65] : memref<64x64xbf16, #tpu.memory_space<vmem>>, vector<64x64xbf16>
    %cst_66 = arith.constant dense<0.000000e+00> : vector<1x64xf32>
    %217 = tpu.matmul %215, %216, %cst_66 {dimension_numbers = #tpu.dot_dimension_numbers<[1], [0], [0], [1], [0, 0, 1, 1], [], []>} : vector<1x64xbf16>, vector<64x64xbf16>, vector<1x64xf32> -> vector<1x64xf32>
    %c1_67 = arith.constant 1 : index
    %c0_68 = arith.constant 0 : index
    %218 = vector.load %arg9[%c1_67, %c0_68] : memref<3x64xf32, #tpu.memory_space<vmem>>, vector<1x64xf32>
    %219 = arith.addf %217, %218 : vector<1x64xf32>
    %c0_69 = arith.constant 0 : index
    %c0_70 = arith.constant 0 : index
    %c0_71 = arith.constant 0 : index
    %220 = vector.load %arg20[%c0_69, %c0_70, %c0_71] : memref<1x1x64xf32, #tpu.memory_space<vmem>>, vector<1x1x64xf32>
    %221 = vector.shape_cast %220 : vector<1x1x64xf32> to vector<1x64xf32>
    %222 = vector.shape_cast %219 : vector<1x64xf32> to vector<1x1x64xf32>
    tpu.vector_store %arg20[%c0_69, %c0_70, %c0_71], %222 {strides = array<i32>} : memref<1x1x64xf32, #tpu.memory_space<vmem>>, vector<1x1x64xf32>,
    %223 = vector.extract_strided_slice %219 {offsets = [0, 32], sizes = [1, 16], strides = [1, 1]} : vector<1x64xf32> to vector<1x16xf32>
    %224 = vector.extract_strided_slice %219 {offsets = [0, 48], sizes = [1, 16], strides = [1, 1]} : vector<1x64xf32> to vector<1x16xf32>
    %cst_72 = arith.constant 0.000000e+00 : f32
    %225 = vector.broadcast %cst_72 : f32 to vector<1x16xf32>
    %226 = arith.maximumf %224, %225 : vector<1x16xf32>
    %227 = math.absf %224 : vector<1x16xf32>
    %cst_73 = arith.constant 0.000000e+00 : f32
    %228 = vector.broadcast %cst_73 : f32 to vector<1x16xf32>
    %229 = arith.subf %228, %227 : vector<1x16xf32>
    %230 = math.exp %229 : vector<1x16xf32>
    %cst_74 = arith.constant 1.000000e+00 : f32
    %231 = vector.broadcast %cst_74 : f32 to vector<1x16xf32>
    %232 = arith.addf %231, %230 : vector<1x16xf32>
    %233 = math.log %232 : vector<1x16xf32>
    %234 = arith.addf %226, %233 : vector<1x16xf32>
    %c0_75 = arith.constant 0 : index
    %c0_76 = arith.constant 0 : index
    %c0_77 = arith.constant 0 : index
    %235 = vector.load %arg2[%c0_75, %c0_76, %c0_77] : memref<1x1x16xf32, #tpu.memory_space<vmem>>, vector<1x1x16xf32>
    %236 = vector.shape_cast %235 : vector<1x1x16xf32> to vector<1x16xf32>
    %237 = arith.mulf %234, %236 : vector<1x16xf32>
    %238 = arith.addf %223, %237 : vector<1x16xf32>
    %239 = arith.truncf %238 : vector<1x16xf32> to vector<1x16xbf16>
    %c0_78 = arith.constant 0 : index
    %c0_79 = arith.constant 0 : index
    %240 = vector.load %arg7[%c0_78, %c0_79] : memref<16x32xbf16, #tpu.memory_space<vmem>>, vector<16x32xbf16>
    %cst_80 = arith.constant dense<0.000000e+00> : vector<1x32xf32>
    %241 = tpu.matmul %239, %240, %cst_80 {dimension_numbers = #tpu.dot_dimension_numbers<[1], [0], [0], [1], [0, 0, 1, 1], [], []>} : vector<1x16xbf16>, vector<16x32xbf16>, vector<1x32xf32> -> vector<1x32xf32>
    %c2_81 = arith.constant 2 : index
    %c0_82 = arith.constant 0 : index
    %242 = vector.load %arg9[%c2_81, %c0_82] : memref<3x64xf32, #tpu.memory_space<vmem>>, vector<1x32xf32>
    %243 = arith.addf %241, %242 : vector<1x32xf32>
    %cst_83 = arith.constant 0.000000e+00 : f32
    %244 = vector.broadcast %cst_83 : f32 to vector<1x32xf32>
    %245 = arith.maximumf %243, %244 : vector<1x32xf32>
    %246 = arith.truncf %245 : vector<1x32xf32> to vector<1x32xbf16>
    %247 = tpu.concatenate %246, %246, %246, %246, %246, %246, %246, %246 in 1 : vector<1x32xbf16>, vector<1x32xbf16>, vector<1x32xbf16>, vector<1x32xbf16>, vector<1x32xbf16>, vector<1x32xbf16>, vector<1x32xbf16>, vector<1x32xbf16> -> vector<1x256xbf16>
    %c0_84 = arith.constant 0 : index
    %c0_85 = arith.constant 0 : index
    %248 = vector.load %arg17[%c0_84, %c0_85] : memref<8x256xbf16, #tpu.memory_space<vmem>>, vector<8x256xbf16>
    %249 = vector.broadcast %247 : vector<1x256xbf16> to vector<8x256xbf16>
    %250 = arith.mulf %249, %248 : vector<8x256xbf16>
    %c0_86 = arith.constant 0 : index
    %c0_87 = arith.constant 0 : index
    %251 = vector.load %arg8[%c0_86, %c0_87] : memref<256x49xbf16, #tpu.memory_space<vmem>>, vector<256x49xbf16>
    %cst_88 = arith.constant dense<0.000000e+00> : vector<8x49xf32>
    %252 = tpu.matmul %250, %251, %cst_88 {dimension_numbers = #tpu.dot_dimension_numbers<[1], [0], [0], [1], [0, 0, 1, 1], [], []>} : vector<8x256xbf16>, vector<256x49xbf16>, vector<8x49xf32> -> vector<8x49xf32>
    %c0_89 = arith.constant 0 : index
    %c0_90 = arith.constant 0 : index
    %253 = vector.load %arg10[%c0_89, %c0_90] : memref<8x49xf32, #tpu.memory_space<vmem>>, vector<8x49xf32>
    %254 = arith.addf %252, %253 : vector<8x49xf32>
    %cst_91 = arith.constant 0.000000e+00 : f32
    %255 = vector.broadcast %cst_91 : f32 to vector<8x49xf32>
    %256 = arith.maximumf %254, %255 : vector<8x49xf32>
    %257 = tpu.concatenate %256, %191 in 0 : vector<8x49xf32>, vector<8x49xf32> -> vector<16x49xf32>
    %c80 = arith.constant 80 : index
    %c0_92 = arith.constant 0 : index
    %258 = vector.load %arg3[%c80, %c0_92] : memref<224x144xbf16, #tpu.memory_space<vmem>>, vector<8x144xbf16>
    %c80_93 = arith.constant 80 : index
    %c0_94 = arith.constant 0 : index
    %259 = vector.load %arg4[%c80_93, %c0_94] : memref<224x1xf32, #tpu.memory_space<vmem>>, vector<8x1xf32>
    %260 = arith.truncf %257 : vector<16x49xf32> to vector<16x49xbf16>
    %cst_95 = arith.constant 0.000000e+00 : bf16
    %261 = vector.broadcast %cst_95 : bf16 to vector<16x8xbf16>
    %262 = tpu.concatenate %261, %260, %261 in 1 : vector<16x8xbf16>, vector<16x49xbf16>, vector<16x8xbf16> -> vector<16x65xbf16>
    %263 = vector.extract_strided_slice %262 {offsets = [0, 0], sizes = [16, 49], strides = [1, 1]} : vector<16x65xbf16> to vector<16x49xbf16>
    %264 = vector.broadcast %2 : vector<1x49xbf16> to vector<16x49xbf16>
    %265 = arith.mulf %263, %264 : vector<16x49xbf16>
    %266 = vector.extract_strided_slice %262 {offsets = [0, 1], sizes = [16, 49], strides = [1, 1]} : vector<16x65xbf16> to vector<16x49xbf16>
    %267 = vector.extract_strided_slice %262 {offsets = [0, 2], sizes = [16, 49], strides = [1, 1]} : vector<16x65xbf16> to vector<16x49xbf16>
    %268 = vector.broadcast %5 : vector<1x49xbf16> to vector<16x49xbf16>
    %269 = arith.mulf %267, %268 : vector<16x49xbf16>
    %270 = vector.extract_strided_slice %262 {offsets = [0, 7], sizes = [16, 49], strides = [1, 1]} : vector<16x65xbf16> to vector<16x49xbf16>
    %271 = vector.broadcast %2 : vector<1x49xbf16> to vector<16x49xbf16>
    %272 = arith.mulf %270, %271 : vector<16x49xbf16>
    %273 = vector.extract_strided_slice %262 {offsets = [0, 8], sizes = [16, 49], strides = [1, 1]} : vector<16x65xbf16> to vector<16x49xbf16>
    %274 = vector.extract_strided_slice %262 {offsets = [0, 9], sizes = [16, 49], strides = [1, 1]} : vector<16x65xbf16> to vector<16x49xbf16>
    %275 = vector.broadcast %5 : vector<1x49xbf16> to vector<16x49xbf16>
    %276 = arith.mulf %274, %275 : vector<16x49xbf16>
    %277 = vector.extract_strided_slice %262 {offsets = [0, 14], sizes = [16, 49], strides = [1, 1]} : vector<16x65xbf16> to vector<16x49xbf16>
    %278 = vector.broadcast %2 : vector<1x49xbf16> to vector<16x49xbf16>
    %279 = arith.mulf %277, %278 : vector<16x49xbf16>
    %280 = vector.extract_strided_slice %262 {offsets = [0, 15], sizes = [16, 49], strides = [1, 1]} : vector<16x65xbf16> to vector<16x49xbf16>
    %281 = vector.extract_strided_slice %262 {offsets = [0, 16], sizes = [16, 49], strides = [1, 1]} : vector<16x65xbf16> to vector<16x49xbf16>
    %282 = vector.broadcast %5 : vector<1x49xbf16> to vector<16x49xbf16>
    %283 = arith.mulf %281, %282 : vector<16x49xbf16>
    %284 = tpu.concatenate %265, %266, %269, %272, %273, %276, %279, %280, %283 in 0 : vector<16x49xbf16>, vector<16x49xbf16>, vector<16x49xbf16>, vector<16x49xbf16>, vector<16x49xbf16>, vector<16x49xbf16>, vector<16x49xbf16>, vector<16x49xbf16>, vector<16x49xbf16> -> vector<144x49xbf16>
    %cst_96 = arith.constant dense<0.000000e+00> : vector<8x49xf32>
    %285 = tpu.matmul %258, %284, %cst_96 {dimension_numbers = #tpu.dot_dimension_numbers<[1], [0], [0], [1], [0, 0, 1, 1], [], []>} : vector<8x144xbf16>, vector<144x49xbf16>, vector<8x49xf32> -> vector<8x49xf32>
    %286 = vector.broadcast %259 : vector<8x1xf32> to vector<8x49xf32>
    %287 = arith.addf %285, %286 : vector<8x49xf32>
    %cst_97 = arith.constant 0.000000e+00 : f32
    %288 = vector.broadcast %cst_97 : f32 to vector<8x49xf32>
    %289 = arith.cmpf ogt, %287, %288 : vector<8x49xf32>
    %cst_98 = arith.constant 0.00999999977 : f32
    %290 = vector.broadcast %cst_98 : f32 to vector<8x49xf32>
    %291 = arith.mulf %290, %287 : vector<8x49xf32>
    %292 = arith.select %289, %287, %291 : vector<8x49xi1>, vector<8x49xf32>
    %c112 = arith.constant 112 : index
    %c0_99 = arith.constant 0 : index
    %293 = vector.load %arg3[%c112, %c0_99] : memref<224x144xbf16, #tpu.memory_space<vmem>>, vector<8x16xbf16>
    %c112_100 = arith.constant 112 : index
    %c0_101 = arith.constant 0 : index
    %294 = vector.load %arg4[%c112_100, %c0_101] : memref<224x1xf32, #tpu.memory_space<vmem>>, vector<8x1xf32>
    %295 = arith.truncf %257 : vector<16x49xf32> to vector<16x49xbf16>
    %cst_102 = arith.constant dense<0.000000e+00> : vector<8x49xf32>
    %296 = tpu.matmul %293, %295, %cst_102 {dimension_numbers = #tpu.dot_dimension_numbers<[1], [0], [0], [1], [0, 0, 1, 1], [], []>} : vector<8x16xbf16>, vector<16x49xbf16>, vector<8x49xf32> -> vector<8x49xf32>
    %297 = vector.broadcast %294 : vector<8x1xf32> to vector<8x49xf32>
    %298 = arith.addf %296, %297 : vector<8x49xf32>
    %c96 = arith.constant 96 : index
    %c0_103 = arith.constant 0 : index
    %299 = vector.load %arg3[%c96, %c0_103] : memref<224x144xbf16, #tpu.memory_space<vmem>>, vector<8x72xbf16>
    %c96_104 = arith.constant 96 : index
    %c0_105 = arith.constant 0 : index
    %300 = vector.load %arg4[%c96_104, %c0_105] : memref<224x1xf32, #tpu.memory_space<vmem>>, vector<8x1xf32>
    %301 = arith.truncf %292 : vector<8x49xf32> to vector<8x49xbf16>
    %cst_106 = arith.constant 0.000000e+00 : bf16
    %302 = vector.broadcast %cst_106 : bf16 to vector<8x8xbf16>
    %303 = tpu.concatenate %302, %301, %302 in 1 : vector<8x8xbf16>, vector<8x49xbf16>, vector<8x8xbf16> -> vector<8x65xbf16>
    %304 = vector.extract_strided_slice %303 {offsets = [0, 0], sizes = [8, 49], strides = [1, 1]} : vector<8x65xbf16> to vector<8x49xbf16>
    %305 = vector.broadcast %2 : vector<1x49xbf16> to vector<8x49xbf16>
    %306 = arith.mulf %304, %305 : vector<8x49xbf16>
    %307 = vector.extract_strided_slice %303 {offsets = [0, 1], sizes = [8, 49], strides = [1, 1]} : vector<8x65xbf16> to vector<8x49xbf16>
    %308 = vector.extract_strided_slice %303 {offsets = [0, 2], sizes = [8, 49], strides = [1, 1]} : vector<8x65xbf16> to vector<8x49xbf16>
    %309 = vector.broadcast %5 : vector<1x49xbf16> to vector<8x49xbf16>
    %310 = arith.mulf %308, %309 : vector<8x49xbf16>
    %311 = vector.extract_strided_slice %303 {offsets = [0, 7], sizes = [8, 49], strides = [1, 1]} : vector<8x65xbf16> to vector<8x49xbf16>
    %312 = vector.broadcast %2 : vector<1x49xbf16> to vector<8x49xbf16>
    %313 = arith.mulf %311, %312 : vector<8x49xbf16>
    %314 = vector.extract_strided_slice %303 {offsets = [0, 8], sizes = [8, 49], strides = [1, 1]} : vector<8x65xbf16> to vector<8x49xbf16>
    %315 = vector.extract_strided_slice %303 {offsets = [0, 9], sizes = [8, 49], strides = [1, 1]} : vector<8x65xbf16> to vector<8x49xbf16>
    %316 = vector.broadcast %5 : vector<1x49xbf16> to vector<8x49xbf16>
    %317 = arith.mulf %315, %316 : vector<8x49xbf16>
    %318 = vector.extract_strided_slice %303 {offsets = [0, 14], sizes = [8, 49], strides = [1, 1]} : vector<8x65xbf16> to vector<8x49xbf16>
    %319 = vector.broadcast %2 : vector<1x49xbf16> to vector<8x49xbf16>
    %320 = arith.mulf %318, %319 : vector<8x49xbf16>
    %321 = vector.extract_strided_slice %303 {offsets = [0, 15], sizes = [8, 49], strides = [1, 1]} : vector<8x65xbf16> to vector<8x49xbf16>
    %322 = vector.extract_strided_slice %303 {offsets = [0, 16], sizes = [8, 49], strides = [1, 1]} : vector<8x65xbf16> to vector<8x49xbf16>
    %323 = vector.broadcast %5 : vector<1x49xbf16> to vector<8x49xbf16>
    %324 = arith.mulf %322, %323 : vector<8x49xbf16>
    %325 = tpu.concatenate %306, %307, %310, %313, %314, %317, %320, %321, %324 in 0 : vector<8x49xbf16>, vector<8x49xbf16>, vector<8x49xbf16>, vector<8x49xbf16>, vector<8x49xbf16>, vector<8x49xbf16>, vector<8x49xbf16>, vector<8x49xbf16>, vector<8x49xbf16> -> vector<72x49xbf16>
    %cst_107 = arith.constant dense<0.000000e+00> : vector<8x49xf32>
    %326 = tpu.matmul %299, %325, %cst_107 {dimension_numbers = #tpu.dot_dimension_numbers<[1], [0], [0], [1], [0, 0, 1, 1], [], []>} : vector<8x72xbf16>, vector<72x49xbf16>, vector<8x49xf32> -> vector<8x49xf32>
    %327 = vector.broadcast %300 : vector<8x1xf32> to vector<8x49xf32>
    %328 = arith.addf %326, %327 : vector<8x49xf32>
    %329 = arith.addf %328, %298 : vector<8x49xf32>
    %cst_108 = arith.constant 0.000000e+00 : f32
    %330 = vector.broadcast %cst_108 : f32 to vector<8x49xf32>
    %331 = arith.cmpf ogt, %329, %330 : vector<8x49xf32>
    %cst_109 = arith.constant 0.00999999977 : f32
    %332 = vector.broadcast %cst_109 : f32 to vector<8x49xf32>
    %333 = arith.mulf %332, %329 : vector<8x49xf32>
    %334 = arith.select %331, %329, %333 : vector<8x49xi1>, vector<8x49xf32>
    %335 = arith.truncf %334 : vector<8x49xf32> to vector<8x49xbf16>
    %c0_110 = arith.constant 0 : index
    %c0_111 = arith.constant 0 : index
    %336 = vector.load %arg13[%c0_110, %c0_111] : memref<49x196xbf16, #tpu.memory_space<vmem>>, vector<49x196xbf16>
    %cst_112 = arith.constant dense<0.000000e+00> : vector<8x196xf32>
    %337 = tpu.matmul %335, %336, %cst_112 {dimension_numbers = #tpu.dot_dimension_numbers<[1], [0], [0], [1], [0, 0, 1, 1], [], []>} : vector<8x49xbf16>, vector<49x196xbf16>, vector<8x196xf32> -> vector<8x196xf32>
    %338 = tpu.concatenate %337, %190 in 0 : vector<8x196xf32>, vector<8x196xf32> -> vector<16x196xf32>
    %c128 = arith.constant 128 : index
    %c0_113 = arith.constant 0 : index
    %339 = vector.load %arg3[%c128, %c0_113] : memref<224x144xbf16, #tpu.memory_space<vmem>>, vector<8x144xbf16>
    %c128_114 = arith.constant 128 : index
    %c0_115 = arith.constant 0 : index
    %340 = vector.load %arg4[%c128_114, %c0_115] : memref<224x1xf32, #tpu.memory_space<vmem>>, vector<8x1xf32>
    %341 = arith.truncf %338 : vector<16x196xf32> to vector<16x196xbf16>
    %cst_116 = arith.constant 0.000000e+00 : bf16
    %342 = vector.broadcast %cst_116 : bf16 to vector<16x15xbf16>
    %343 = tpu.concatenate %342, %341, %342 in 1 : vector<16x15xbf16>, vector<16x196xbf16>, vector<16x15xbf16> -> vector<16x226xbf16>
    %344 = vector.extract_strided_slice %343 {offsets = [0, 0], sizes = [16, 196], strides = [1, 1]} : vector<16x226xbf16> to vector<16x196xbf16>
    %345 = vector.broadcast %1 : vector<1x196xbf16> to vector<16x196xbf16>
    %346 = arith.mulf %344, %345 : vector<16x196xbf16>
    %347 = vector.extract_strided_slice %343 {offsets = [0, 1], sizes = [16, 196], strides = [1, 1]} : vector<16x226xbf16> to vector<16x196xbf16>
    %348 = vector.extract_strided_slice %343 {offsets = [0, 2], sizes = [16, 196], strides = [1, 1]} : vector<16x226xbf16> to vector<16x196xbf16>
    %349 = vector.broadcast %4 : vector<1x196xbf16> to vector<16x196xbf16>
    %350 = arith.mulf %348, %349 : vector<16x196xbf16>
    %351 = vector.extract_strided_slice %343 {offsets = [0, 14], sizes = [16, 196], strides = [1, 1]} : vector<16x226xbf16> to vector<16x196xbf16>
    %352 = vector.broadcast %1 : vector<1x196xbf16> to vector<16x196xbf16>
    %353 = arith.mulf %351, %352 : vector<16x196xbf16>
    %354 = vector.extract_strided_slice %343 {offsets = [0, 15], sizes = [16, 196], strides = [1, 1]} : vector<16x226xbf16> to vector<16x196xbf16>
    %355 = vector.extract_strided_slice %343 {offsets = [0, 16], sizes = [16, 196], strides = [1, 1]} : vector<16x226xbf16> to vector<16x196xbf16>
    %356 = vector.broadcast %4 : vector<1x196xbf16> to vector<16x196xbf16>
    %357 = arith.mulf %355, %356 : vector<16x196xbf16>
    %358 = vector.extract_strided_slice %343 {offsets = [0, 28], sizes = [16, 196], strides = [1, 1]} : vector<16x226xbf16> to vector<16x196xbf16>
    %359 = vector.broadcast %1 : vector<1x196xbf16> to vector<16x196xbf16>
    %360 = arith.mulf %358, %359 : vector<16x196xbf16>
    %361 = vector.extract_strided_slice %343 {offsets = [0, 29], sizes = [16, 196], strides = [1, 1]} : vector<16x226xbf16> to vector<16x196xbf16>
    %362 = vector.extract_strided_slice %343 {offsets = [0, 30], sizes = [16, 196], strides = [1, 1]} : vector<16x226xbf16> to vector<16x196xbf16>
    %363 = vector.broadcast %4 : vector<1x196xbf16> to vector<16x196xbf16>
    %364 = arith.mulf %362, %363 : vector<16x196xbf16>
    %365 = tpu.concatenate %346, %347, %350, %353, %354, %357, %360, %361, %364 in 0 : vector<16x196xbf16>, vector<16x196xbf16>, vector<16x196xbf16>, vector<16x196xbf16>, vector<16x196xbf16>, vector<16x196xbf16>, vector<16x196xbf16>, vector<16x196xbf16>, vector<16x196xbf16> -> vector<144x196xbf16>
    %cst_117 = arith.constant dense<0.000000e+00> : vector<8x196xf32>
    %366 = tpu.matmul %339, %365, %cst_117 {dimension_numbers = #tpu.dot_dimension_numbers<[1], [0], [0], [1], [0, 0, 1, 1], [], []>} : vector<8x144xbf16>, vector<144x196xbf16>, vector<8x196xf32> -> vector<8x196xf32>
    %367 = vector.broadcast %340 : vector<8x1xf32> to vector<8x196xf32>
    %368 = arith.addf %366, %367 : vector<8x196xf32>
    %cst_118 = arith.constant 0.000000e+00 : f32
    %369 = vector.broadcast %cst_118 : f32 to vector<8x196xf32>
    %370 = arith.cmpf ogt, %368, %369 : vector<8x196xf32>
    %cst_119 = arith.constant 0.00999999977 : f32
    %371 = vector.broadcast %cst_119 : f32 to vector<8x196xf32>
    %372 = arith.mulf %371, %368 : vector<8x196xf32>
    %373 = arith.select %370, %368, %372 : vector<8x196xi1>, vector<8x196xf32>
    %c160 = arith.constant 160 : index
    %c0_120 = arith.constant 0 : index
    %374 = vector.load %arg3[%c160, %c0_120] : memref<224x144xbf16, #tpu.memory_space<vmem>>, vector<8x16xbf16>
    %c160_121 = arith.constant 160 : index
    %c0_122 = arith.constant 0 : index
    %375 = vector.load %arg4[%c160_121, %c0_122] : memref<224x1xf32, #tpu.memory_space<vmem>>, vector<8x1xf32>
    %376 = arith.truncf %338 : vector<16x196xf32> to vector<16x196xbf16>
    %cst_123 = arith.constant dense<0.000000e+00> : vector<8x196xf32>
    %377 = tpu.matmul %374, %376, %cst_123 {dimension_numbers = #tpu.dot_dimension_numbers<[1], [0], [0], [1], [0, 0, 1, 1], [], []>} : vector<8x16xbf16>, vector<16x196xbf16>, vector<8x196xf32> -> vector<8x196xf32>
    %378 = vector.broadcast %375 : vector<8x1xf32> to vector<8x196xf32>
    %379 = arith.addf %377, %378 : vector<8x196xf32>
    %c144 = arith.constant 144 : index
    %c0_124 = arith.constant 0 : index
    %380 = vector.load %arg3[%c144, %c0_124] : memref<224x144xbf16, #tpu.memory_space<vmem>>, vector<8x72xbf16>
    %c144_125 = arith.constant 144 : index
    %c0_126 = arith.constant 0 : index
    %381 = vector.load %arg4[%c144_125, %c0_126] : memref<224x1xf32, #tpu.memory_space<vmem>>, vector<8x1xf32>
    %382 = arith.truncf %373 : vector<8x196xf32> to vector<8x196xbf16>
    %cst_127 = arith.constant 0.000000e+00 : bf16
    %383 = vector.broadcast %cst_127 : bf16 to vector<8x15xbf16>
    %384 = tpu.concatenate %383, %382, %383 in 1 : vector<8x15xbf16>, vector<8x196xbf16>, vector<8x15xbf16> -> vector<8x226xbf16>
    %385 = vector.extract_strided_slice %384 {offsets = [0, 0], sizes = [8, 196], strides = [1, 1]} : vector<8x226xbf16> to vector<8x196xbf16>
    %386 = vector.broadcast %1 : vector<1x196xbf16> to vector<8x196xbf16>
    %387 = arith.mulf %385, %386 : vector<8x196xbf16>
    %388 = vector.extract_strided_slice %384 {offsets = [0, 1], sizes = [8, 196], strides = [1, 1]} : vector<8x226xbf16> to vector<8x196xbf16>
    %389 = vector.extract_strided_slice %384 {offsets = [0, 2], sizes = [8, 196], strides = [1, 1]} : vector<8x226xbf16> to vector<8x196xbf16>
    %390 = vector.broadcast %4 : vector<1x196xbf16> to vector<8x196xbf16>
    %391 = arith.mulf %389, %390 : vector<8x196xbf16>
    %392 = vector.extract_strided_slice %384 {offsets = [0, 14], sizes = [8, 196], strides = [1, 1]} : vector<8x226xbf16> to vector<8x196xbf16>
    %393 = vector.broadcast %1 : vector<1x196xbf16> to vector<8x196xbf16>
    %394 = arith.mulf %392, %393 : vector<8x196xbf16>
    %395 = vector.extract_strided_slice %384 {offsets = [0, 15], sizes = [8, 196], strides = [1, 1]} : vector<8x226xbf16> to vector<8x196xbf16>
    %396 = vector.extract_strided_slice %384 {offsets = [0, 16], sizes = [8, 196], strides = [1, 1]} : vector<8x226xbf16> to vector<8x196xbf16>
    %397 = vector.broadcast %4 : vector<1x196xbf16> to vector<8x196xbf16>
    %398 = arith.mulf %396, %397 : vector<8x196xbf16>
    %399 = vector.extract_strided_slice %384 {offsets = [0, 28], sizes = [8, 196], strides = [1, 1]} : vector<8x226xbf16> to vector<8x196xbf16>
    %400 = vector.broadcast %1 : vector<1x196xbf16> to vector<8x196xbf16>
    %401 = arith.mulf %399, %400 : vector<8x196xbf16>
    %402 = vector.extract_strided_slice %384 {offsets = [0, 29], sizes = [8, 196], strides = [1, 1]} : vector<8x226xbf16> to vector<8x196xbf16>
    %403 = vector.extract_strided_slice %384 {offsets = [0, 30], sizes = [8, 196], strides = [1, 1]} : vector<8x226xbf16> to vector<8x196xbf16>
    %404 = vector.broadcast %4 : vector<1x196xbf16> to vector<8x196xbf16>
    %405 = arith.mulf %403, %404 : vector<8x196xbf16>
    %406 = tpu.concatenate %387, %388, %391, %394, %395, %398, %401, %402, %405 in 0 : vector<8x196xbf16>, vector<8x196xbf16>, vector<8x196xbf16>, vector<8x196xbf16>, vector<8x196xbf16>, vector<8x196xbf16>, vector<8x196xbf16>, vector<8x196xbf16>, vector<8x196xbf16> -> vector<72x196xbf16>
    %cst_128 = arith.constant dense<0.000000e+00> : vector<8x196xf32>
    %407 = tpu.matmul %380, %406, %cst_128 {dimension_numbers = #tpu.dot_dimension_numbers<[1], [0], [0], [1], [0, 0, 1, 1], [], []>} : vector<8x72xbf16>, vector<72x196xbf16>, vector<8x196xf32> -> vector<8x196xf32>
    %408 = vector.broadcast %381 : vector<8x1xf32> to vector<8x196xf32>
    %409 = arith.addf %407, %408 : vector<8x196xf32>
    %410 = arith.addf %409, %379 : vector<8x196xf32>
    %cst_129 = arith.constant 0.000000e+00 : f32
    %411 = vector.broadcast %cst_129 : f32 to vector<8x196xf32>
    %412 = arith.cmpf ogt, %410, %411 : vector<8x196xf32>
    %cst_130 = arith.constant 0.00999999977 : f32
    %413 = vector.broadcast %cst_130 : f32 to vector<8x196xf32>
    %414 = arith.mulf %413, %410 : vector<8x196xf32>
    %415 = arith.select %412, %410, %414 : vector<8x196xi1>, vector<8x196xf32>
    %416 = arith.truncf %415 : vector<8x196xf32> to vector<8x196xbf16>
    %c0_131 = arith.constant 0 : index
    %c0_132 = arith.constant 0 : index
    %417 = vector.load %arg14[%c0_131, %c0_132] : memref<196x784xbf16, #tpu.memory_space<vmem>>, vector<196x784xbf16>
    %cst_133 = arith.constant dense<0.000000e+00> : vector<8x784xf32>
    %418 = tpu.matmul %416, %417, %cst_133 {dimension_numbers = #tpu.dot_dimension_numbers<[1], [0], [0], [1], [0, 0, 1, 1], [], []>} : vector<8x196xbf16>, vector<196x784xbf16>, vector<8x784xf32> -> vector<8x784xf32>
    %c176 = arith.constant 176 : index
    %c0_134 = arith.constant 0 : index
    %419 = vector.load %arg3[%c176, %c0_134] : memref<224x144xbf16, #tpu.memory_space<vmem>>, vector<8x72xbf16>
    %c176_135 = arith.constant 176 : index
    %c0_136 = arith.constant 0 : index
    %420 = vector.load %arg4[%c176_135, %c0_136] : memref<224x1xf32, #tpu.memory_space<vmem>>, vector<8x1xf32>
    %421 = arith.truncf %418 : vector<8x784xf32> to vector<8x784xbf16>
    %cst_137 = arith.constant 0.000000e+00 : bf16
    %422 = vector.broadcast %cst_137 : bf16 to vector<8x29xbf16>
    %423 = tpu.concatenate %422, %421, %422 in 1 : vector<8x29xbf16>, vector<8x784xbf16>, vector<8x29xbf16> -> vector<8x842xbf16>
    %424 = vector.extract_strided_slice %423 {offsets = [0, 0], sizes = [8, 784], strides = [1, 1]} : vector<8x842xbf16> to vector<8x784xbf16>
    %425 = vector.broadcast %0 : vector<1x784xbf16> to vector<8x784xbf16>
    %426 = arith.mulf %424, %425 : vector<8x784xbf16>
    %427 = vector.extract_strided_slice %423 {offsets = [0, 1], sizes = [8, 784], strides = [1, 1]} : vector<8x842xbf16> to vector<8x784xbf16>
    %428 = vector.extract_strided_slice %423 {offsets = [0, 2], sizes = [8, 784], strides = [1, 1]} : vector<8x842xbf16> to vector<8x784xbf16>
    %429 = vector.broadcast %3 : vector<1x784xbf16> to vector<8x784xbf16>
    %430 = arith.mulf %428, %429 : vector<8x784xbf16>
    %431 = vector.extract_strided_slice %423 {offsets = [0, 28], sizes = [8, 784], strides = [1, 1]} : vector<8x842xbf16> to vector<8x784xbf16>
    %432 = vector.broadcast %0 : vector<1x784xbf16> to vector<8x784xbf16>
    %433 = arith.mulf %431, %432 : vector<8x784xbf16>
    %434 = vector.extract_strided_slice %423 {offsets = [0, 29], sizes = [8, 784], strides = [1, 1]} : vector<8x842xbf16> to vector<8x784xbf16>
    %435 = vector.extract_strided_slice %423 {offsets = [0, 30], sizes = [8, 784], strides = [1, 1]} : vector<8x842xbf16> to vector<8x784xbf16>
    %436 = vector.broadcast %3 : vector<1x784xbf16> to vector<8x784xbf16>
    %437 = arith.mulf %435, %436 : vector<8x784xbf16>
    %438 = vector.extract_strided_slice %423 {offsets = [0, 56], sizes = [8, 784], strides = [1, 1]} : vector<8x842xbf16> to vector<8x784xbf16>
    %439 = vector.broadcast %0 : vector<1x784xbf16> to vector<8x784xbf16>
    %440 = arith.mulf %438, %439 : vector<8x784xbf16>
    %441 = vector.extract_strided_slice %423 {offsets = [0, 57], sizes = [8, 784], strides = [1, 1]} : vector<8x842xbf16> to vector<8x784xbf16>
    %442 = vector.extract_strided_slice %423 {offsets = [0, 58], sizes = [8, 784], strides = [1, 1]} : vector<8x842xbf16> to vector<8x784xbf16>
    %443 = vector.broadcast %3 : vector<1x784xbf16> to vector<8x784xbf16>
    %444 = arith.mulf %442, %443 : vector<8x784xbf16>
    %445 = tpu.concatenate %426, %427, %430, %433, %434, %437, %440, %441, %444 in 0 : vector<8x784xbf16>, vector<8x784xbf16>, vector<8x784xbf16>, vector<8x784xbf16>, vector<8x784xbf16>, vector<8x784xbf16>, vector<8x784xbf16>, vector<8x784xbf16>, vector<8x784xbf16> -> vector<72x784xbf16>
    %cst_138 = arith.constant dense<0.000000e+00> : vector<8x784xf32>
    %446 = tpu.matmul %419, %445, %cst_138 {dimension_numbers = #tpu.dot_dimension_numbers<[1], [0], [0], [1], [0, 0, 1, 1], [], []>} : vector<8x72xbf16>, vector<72x784xbf16>, vector<8x784xf32> -> vector<8x784xf32>
    %447 = vector.broadcast %420 : vector<8x1xf32> to vector<8x784xf32>
    %448 = arith.addf %446, %447 : vector<8x784xf32>
    %cst_139 = arith.constant 0.000000e+00 : f32
    %449 = vector.broadcast %cst_139 : f32 to vector<8x784xf32>
    %450 = arith.cmpf ogt, %448, %449 : vector<8x784xf32>
    %cst_140 = arith.constant 0.00999999977 : f32
    %451 = vector.broadcast %cst_140 : f32 to vector<8x784xf32>
    %452 = arith.mulf %451, %448 : vector<8x784xf32>
    %453 = arith.select %450, %448, %452 : vector<8x784xi1>, vector<8x784xf32>
    %c192 = arith.constant 192 : index
    %c0_141 = arith.constant 0 : index
    %454 = vector.load %arg3[%c192, %c0_141] : memref<224x144xbf16, #tpu.memory_space<vmem>>, vector<8x72xbf16>
    %c192_142 = arith.constant 192 : index
    %c0_143 = arith.constant 0 : index
    %455 = vector.load %arg4[%c192_142, %c0_143] : memref<224x1xf32, #tpu.memory_space<vmem>>, vector<8x1xf32>
    %456 = arith.truncf %453 : vector<8x784xf32> to vector<8x784xbf16>
    %cst_144 = arith.constant 0.000000e+00 : bf16
    %457 = vector.broadcast %cst_144 : bf16 to vector<8x29xbf16>
    %458 = tpu.concatenate %457, %456, %457 in 1 : vector<8x29xbf16>, vector<8x784xbf16>, vector<8x29xbf16> -> vector<8x842xbf16>
    %459 = vector.extract_strided_slice %458 {offsets = [0, 0], sizes = [8, 784], strides = [1, 1]} : vector<8x842xbf16> to vector<8x784xbf16>
    %460 = vector.broadcast %0 : vector<1x784xbf16> to vector<8x784xbf16>
    %461 = arith.mulf %459, %460 : vector<8x784xbf16>
    %462 = vector.extract_strided_slice %458 {offsets = [0, 1], sizes = [8, 784], strides = [1, 1]} : vector<8x842xbf16> to vector<8x784xbf16>
    %463 = vector.extract_strided_slice %458 {offsets = [0, 2], sizes = [8, 784], strides = [1, 1]} : vector<8x842xbf16> to vector<8x784xbf16>
    %464 = vector.broadcast %3 : vector<1x784xbf16> to vector<8x784xbf16>
    %465 = arith.mulf %463, %464 : vector<8x784xbf16>
    %466 = vector.extract_strided_slice %458 {offsets = [0, 28], sizes = [8, 784], strides = [1, 1]} : vector<8x842xbf16> to vector<8x784xbf16>
    %467 = vector.broadcast %0 : vector<1x784xbf16> to vector<8x784xbf16>
    %468 = arith.mulf %466, %467 : vector<8x784xbf16>
    %469 = vector.extract_strided_slice %458 {offsets = [0, 29], sizes = [8, 784], strides = [1, 1]} : vector<8x842xbf16> to vector<8x784xbf16>
    %470 = vector.extract_strided_slice %458 {offsets = [0, 30], sizes = [8, 784], strides = [1, 1]} : vector<8x842xbf16> to vector<8x784xbf16>
    %471 = vector.broadcast %3 : vector<1x784xbf16> to vector<8x784xbf16>
    %472 = arith.mulf %470, %471 : vector<8x784xbf16>
    %473 = vector.extract_strided_slice %458 {offsets = [0, 56], sizes = [8, 784], strides = [1, 1]} : vector<8x842xbf16> to vector<8x784xbf16>
    %474 = vector.broadcast %0 : vector<1x784xbf16> to vector<8x784xbf16>
    %475 = arith.mulf %473, %474 : vector<8x784xbf16>
    %476 = vector.extract_strided_slice %458 {offsets = [0, 57], sizes = [8, 784], strides = [1, 1]} : vector<8x842xbf16> to vector<8x784xbf16>
    %477 = vector.extract_strided_slice %458 {offsets = [0, 58], sizes = [8, 784], strides = [1, 1]} : vector<8x842xbf16> to vector<8x784xbf16>
    %478 = vector.broadcast %3 : vector<1x784xbf16> to vector<8x784xbf16>
    %479 = arith.mulf %477, %478 : vector<8x784xbf16>
    %480 = tpu.concatenate %461, %462, %465, %468, %469, %472, %475, %476, %479 in 0 : vector<8x784xbf16>, vector<8x784xbf16>, vector<8x784xbf16>, vector<8x784xbf16>, vector<8x784xbf16>, vector<8x784xbf16>, vector<8x784xbf16>, vector<8x784xbf16>, vector<8x784xbf16> -> vector<72x784xbf16>
    %cst_145 = arith.constant dense<0.000000e+00> : vector<8x784xf32>
    %481 = tpu.matmul %454, %480, %cst_145 {dimension_numbers = #tpu.dot_dimension_numbers<[1], [0], [0], [1], [0, 0, 1, 1], [], []>} : vector<8x72xbf16>, vector<72x784xbf16>, vector<8x784xf32> -> vector<8x784xf32>
    %482 = vector.broadcast %455 : vector<8x1xf32> to vector<8x784xf32>
    %483 = arith.addf %481, %482 : vector<8x784xf32>
    %484 = arith.addf %483, %418 : vector<8x784xf32>
    %cst_146 = arith.constant 0.000000e+00 : f32
    %485 = vector.broadcast %cst_146 : f32 to vector<8x784xf32>
    %486 = arith.cmpf ogt, %484, %485 : vector<8x784xf32>
    %cst_147 = arith.constant 0.00999999977 : f32
    %487 = vector.broadcast %cst_147 : f32 to vector<8x784xf32>
    %488 = arith.mulf %487, %484 : vector<8x784xf32>
    %489 = arith.select %486, %484, %488 : vector<8x784xi1>, vector<8x784xf32>
    %c208 = arith.constant 208 : index
    %c0_148 = arith.constant 0 : index
    %490 = vector.load %arg3[%c208, %c0_148] : memref<224x144xbf16, #tpu.memory_space<vmem>>, vector<2x72xbf16>
    %c208_149 = arith.constant 208 : index
    %c0_150 = arith.constant 0 : index
    %491 = vector.load %arg4[%c208_149, %c0_150] : memref<224x1xf32, #tpu.memory_space<vmem>>, vector<2x1xf32>
    %492 = arith.truncf %489 : vector<8x784xf32> to vector<8x784xbf16>
    %cst_151 = arith.constant 0.000000e+00 : bf16
    %493 = vector.broadcast %cst_151 : bf16 to vector<8x29xbf16>
    %494 = tpu.concatenate %493, %492, %493 in 1 : vector<8x29xbf16>, vector<8x784xbf16>, vector<8x29xbf16> -> vector<8x842xbf16>
    %495 = vector.extract_strided_slice %494 {offsets = [0, 0], sizes = [8, 784], strides = [1, 1]} : vector<8x842xbf16> to vector<8x784xbf16>
    %496 = vector.broadcast %0 : vector<1x784xbf16> to vector<8x784xbf16>
    %497 = arith.mulf %495, %496 : vector<8x784xbf16>
    %498 = vector.extract_strided_slice %494 {offsets = [0, 1], sizes = [8, 784], strides = [1, 1]} : vector<8x842xbf16> to vector<8x784xbf16>
    %499 = vector.extract_strided_slice %494 {offsets = [0, 2], sizes = [8, 784], strides = [1, 1]} : vector<8x842xbf16> to vector<8x784xbf16>
    %500 = vector.broadcast %3 : vector<1x784xbf16> to vector<8x784xbf16>
    %501 = arith.mulf %499, %500 : vector<8x784xbf16>
    %502 = vector.extract_strided_slice %494 {offsets = [0, 28], sizes = [8, 784], strides = [1, 1]} : vector<8x842xbf16> to vector<8x784xbf16>
    %503 = vector.broadcast %0 : vector<1x784xbf16> to vector<8x784xbf16>
    %504 = arith.mulf %502, %503 : vector<8x784xbf16>
    %505 = vector.extract_strided_slice %494 {offsets = [0, 29], sizes = [8, 784], strides = [1, 1]} : vector<8x842xbf16> to vector<8x784xbf16>
    %506 = vector.extract_strided_slice %494 {offsets = [0, 30], sizes = [8, 784], strides = [1, 1]} : vector<8x842xbf16> to vector<8x784xbf16>
    %507 = vector.broadcast %3 : vector<1x784xbf16> to vector<8x784xbf16>
    %508 = arith.mulf %506, %507 : vector<8x784xbf16>
    %509 = vector.extract_strided_slice %494 {offsets = [0, 56], sizes = [8, 784], strides = [1, 1]} : vector<8x842xbf16> to vector<8x784xbf16>
    %510 = vector.broadcast %0 : vector<1x784xbf16> to vector<8x784xbf16>
    %511 = arith.mulf %509, %510 : vector<8x784xbf16>
    %512 = vector.extract_strided_slice %494 {offsets = [0, 57], sizes = [8, 784], strides = [1, 1]} : vector<8x842xbf16> to vector<8x784xbf16>
    %513 = vector.extract_strided_slice %494 {offsets = [0, 58], sizes = [8, 784], strides = [1, 1]} : vector<8x842xbf16> to vector<8x784xbf16>
    %514 = vector.broadcast %3 : vector<1x784xbf16> to vector<8x784xbf16>
    %515 = arith.mulf %513, %514 : vector<8x784xbf16>
    %516 = tpu.concatenate %497, %498, %501, %504, %505, %508, %511, %512, %515 in 0 : vector<8x784xbf16>, vector<8x784xbf16>, vector<8x784xbf16>, vector<8x784xbf16>, vector<8x784xbf16>, vector<8x784xbf16>, vector<8x784xbf16>, vector<8x784xbf16>, vector<8x784xbf16> -> vector<72x784xbf16>
    %cst_152 = arith.constant dense<0.000000e+00> : vector<2x784xf32>
    %517 = tpu.matmul %490, %516, %cst_152 {dimension_numbers = #tpu.dot_dimension_numbers<[1], [0], [0], [1], [0, 0, 1, 1], [], []>} : vector<2x72xbf16>, vector<72x784xbf16>, vector<2x784xf32> -> vector<2x784xf32>
    %518 = vector.broadcast %491 : vector<2x1xf32> to vector<2x784xf32>
    %519 = arith.addf %517, %518 : vector<2x784xf32>
    %520 = math.absf %519 : vector<2x784xf32>
    %cst_153 = arith.constant 0.000000e+00 : f32
    %521 = vector.broadcast %cst_153 : f32 to vector<2x784xf32>
    %522 = arith.subf %521, %520 : vector<2x784xf32>
    %523 = math.exp %522 : vector<2x784xf32>
    %cst_154 = arith.constant 1.000000e+00 : f32
    %524 = vector.broadcast %cst_154 : f32 to vector<2x784xf32>
    %525 = arith.addf %524, %523 : vector<2x784xf32>
    %526 = tpu.reciprocal %525 {approx = true} : vector<2x784xf32> -> vector<2x784xf32>
    %cst_155 = arith.constant 0.000000e+00 : f32
    %527 = vector.broadcast %cst_155 : f32 to vector<2x784xf32>
    %528 = arith.cmpf oge, %519, %527 : vector<2x784xf32>
    %529 = arith.mulf %523, %526 : vector<2x784xf32>
    %530 = arith.select %528, %526, %529 : vector<2x784xi1>, vector<2x784xf32>
    %c0_156 = arith.constant 0 : index
    %c0_157 = arith.constant 0 : index
    %c0_158 = arith.constant 0 : index
    %531 = vector.load %arg19[%c0_156, %c0_157, %c0_158] : memref<1x2x784xf32, #tpu.memory_space<vmem>>, vector<1x2x784xf32>
    %532 = vector.shape_cast %531 : vector<1x2x784xf32> to vector<2x784xf32>
    %533 = vector.shape_cast %530 : vector<2x784xf32> to vector<1x2x784xf32>
    tpu.vector_store %arg19[%c0_156, %c0_157, %c0_158], %533 {strides = array<i32>} : memref<1x2x784xf32, #tpu.memory_space<vmem>>, vector<1x2x784xf32>,
    return
  }
  func.func @transform_0(%arg0: i32) -> (i32, i32, i32) {
    %c0_i32 = arith.constant 0 : i32
    %c0_i32_0 = arith.constant 0 : i32
    %c0_i32_1 = arith.constant 0 : i32
    return %arg0, %c0_i32, %c0_i32_0 : i32, i32, i32
  }
  func.func @transform_1(%arg0: i32) -> (i32, i32, i32) {
    %c0_i32 = arith.constant 0 : i32
    %c0_i32_0 = arith.constant 0 : i32
    %c0_i32_1 = arith.constant 0 : i32
    return %arg0, %c0_i32, %c0_i32_0 : i32, i32, i32
  }
  func.func @transform_2(%arg0: i32) -> (i32, i32) {
    %c0_i32 = arith.constant 0 : i32
    %c0_i32_0 = arith.constant 0 : i32
    %c0_i32_1 = arith.constant 0 : i32
    return %c0_i32, %c0_i32_0 : i32, i32
  }
  func.func @transform_3(%arg0: i32) -> (i32, i32) {
    %c0_i32 = arith.constant 0 : i32
    %c0_i32_0 = arith.constant 0 : i32
    %c0_i32_1 = arith.constant 0 : i32
    return %c0_i32, %c0_i32_0 : i32, i32
  }
  func.func @transform_4(%arg0: i32) -> (i32, i32) {
    %c0_i32 = arith.constant 0 : i32
    %c0_i32_0 = arith.constant 0 : i32
    %c0_i32_1 = arith.constant 0 : i32
    return %c0_i32, %c0_i32_0 : i32, i32
  }
  func.func @transform_5(%arg0: i32) -> (i32, i32) {
    %c0_i32 = arith.constant 0 : i32
    %c0_i32_0 = arith.constant 0 : i32
    %c0_i32_1 = arith.constant 0 : i32
    return %c0_i32, %c0_i32_0 : i32, i32
  }
  func.func @transform_6(%arg0: i32) -> (i32, i32) {
    %c0_i32 = arith.constant 0 : i32
    %c0_i32_0 = arith.constant 0 : i32
    %c0_i32_1 = arith.constant 0 : i32
    return %c0_i32, %c0_i32_0 : i32, i32
  }
  func.func @transform_7(%arg0: i32) -> (i32, i32) {
    %c0_i32 = arith.constant 0 : i32
    %c0_i32_0 = arith.constant 0 : i32
    %c0_i32_1 = arith.constant 0 : i32
    return %c0_i32, %c0_i32_0 : i32, i32
  }
  func.func @transform_8(%arg0: i32) -> (i32, i32) {
    %c0_i32 = arith.constant 0 : i32
    %c0_i32_0 = arith.constant 0 : i32
    %c0_i32_1 = arith.constant 0 : i32
    return %c0_i32, %c0_i32_0 : i32, i32
  }
  func.func @transform_9(%arg0: i32) -> (i32, i32) {
    %c0_i32 = arith.constant 0 : i32
    %c0_i32_0 = arith.constant 0 : i32
    %c0_i32_1 = arith.constant 0 : i32
    return %c0_i32, %c0_i32_0 : i32, i32
  }
  func.func @transform_10(%arg0: i32) -> (i32, i32) {
    %c0_i32 = arith.constant 0 : i32
    %c0_i32_0 = arith.constant 0 : i32
    %c0_i32_1 = arith.constant 0 : i32
    return %c0_i32, %c0_i32_0 : i32, i32
  }
  func.func @transform_11(%arg0: i32) -> (i32, i32) {
    %c0_i32 = arith.constant 0 : i32
    %c0_i32_0 = arith.constant 0 : i32
    %c0_i32_1 = arith.constant 0 : i32
    return %c0_i32, %c0_i32_0 : i32, i32
  }
  func.func @transform_12(%arg0: i32) -> (i32, i32) {
    %c0_i32 = arith.constant 0 : i32
    %c0_i32_0 = arith.constant 0 : i32
    %c0_i32_1 = arith.constant 0 : i32
    return %c0_i32, %c0_i32_0 : i32, i32
  }
  func.func @transform_13(%arg0: i32) -> (i32, i32) {
    %c0_i32 = arith.constant 0 : i32
    %c0_i32_0 = arith.constant 0 : i32
    %c0_i32_1 = arith.constant 0 : i32
    return %c0_i32, %c0_i32_0 : i32, i32
  }
  func.func @transform_14(%arg0: i32) -> (i32, i32) {
    %c0_i32 = arith.constant 0 : i32
    %c0_i32_0 = arith.constant 0 : i32
    %c0_i32_1 = arith.constant 0 : i32
    return %c0_i32, %c0_i32_0 : i32, i32
  }
  func.func @transform_15(%arg0: i32) -> (i32, i32) {
    %c0_i32 = arith.constant 0 : i32
    %c0_i32_0 = arith.constant 0 : i32
    %c0_i32_1 = arith.constant 0 : i32
    return %c0_i32, %c0_i32_0 : i32, i32
  }
  func.func @transform_16(%arg0: i32) -> (i32, i32) {
    %c0_i32 = arith.constant 0 : i32
    %c0_i32_0 = arith.constant 0 : i32
    %c0_i32_1 = arith.constant 0 : i32
    return %c0_i32, %c0_i32_0 : i32, i32
  }
  func.func @transform_17(%arg0: i32) -> (i32, i32) {
    %c0_i32 = arith.constant 0 : i32
    %c0_i32_0 = arith.constant 0 : i32
    %c0_i32_1 = arith.constant 0 : i32
    return %c0_i32, %c0_i32_0 : i32, i32
  }
  func.func @transform_18(%arg0: i32) -> (i32, i32, i32) {
    %c0_i32 = arith.constant 0 : i32
    %c0_i32_0 = arith.constant 0 : i32
    %c0_i32_1 = arith.constant 0 : i32
    return %arg0, %c0_i32, %c0_i32_0 : i32, i32, i32
  }
  func.func @transform_19(%arg0: i32) -> (i32, i32, i32) {
    %c0_i32 = arith.constant 0 : i32
    %c0_i32_0 = arith.constant 0 : i32
    %c0_i32_1 = arith.constant 0 : i32
    return %arg0, %c0_i32, %c0_i32_0 : i32, i32, i32
  }
}

</mosaic_0001>

<llo_original>
// kernel: encoder_decoder_forward.1
$region0: #{encoder_decoder_forward.1}
  #allocation0 [shape = 'u32[]', space=smem, size = 0x4, offset = 0x4, fixed_abs, tag = 'smem constant byte address 0x4 - core index']
  #allocation1 [shape = 'u32[144,128]{1,0:T(1,128)}', space=vmem, size = 0x12000, scoped, tag = 'internal scratch']
  %s0 = inlined_call_operand.vmem [shape: bf16[2,4,784], index: 0, kind: input, shape index: {}]
  %s1 = inlined_call_operand.vmem [shape: f32[2,1,16], index: 1, kind: input, shape index: {}]
  %s2 = inlined_call_operand.vmem [shape: bf16[224,144], index: 2, kind: input, shape index: {}]
  %s3 = inlined_call_operand.vmem [shape: f32[224,1], index: 3, kind: input, shape index: {}]
  %s4 = inlined_call_operand.vmem [shape: bf16[784,64], index: 4, kind: input, shape index: {}]
  %s5 = inlined_call_operand.vmem [shape: bf16[64,64], index: 5, kind: input, shape index: {}]
  %s6 = inlined_call_operand.vmem [shape: bf16[16,32], index: 6, kind: input, shape index: {}]
  %s7 = inlined_call_operand.vmem [shape: bf16[256,49], index: 7, kind: input, shape index: {}]
  %s8 = inlined_call_operand.vmem [shape: f32[3,64], index: 8, kind: input, shape index: {}]
  %s9 = inlined_call_operand.vmem [shape: f32[8,49], index: 9, kind: input, shape index: {}]
  %s10 = inlined_call_operand.vmem [shape: bf16[784,196], index: 10, kind: input, shape index: {}]
  %s11 = inlined_call_operand.vmem [shape: bf16[196,49], index: 11, kind: input, shape index: {}]
  %s12 = inlined_call_operand.vmem [shape: bf16[49,196], index: 12, kind: input, shape index: {}]
  %s13 = inlined_call_operand.vmem [shape: bf16[196,784], index: 13, kind: input, shape index: {}]
  %s14 = inlined_call_operand.vmem [shape: bf16[49,784], index: 14, kind: input, shape index: {}]
  %s15 = inlined_call_operand.vmem [shape: f32[16,784], index: 15, kind: input, shape index: {}]
  %s16 = inlined_call_operand.vmem [shape: bf16[8,256], index: 16, kind: input, shape index: {}]
  %s17 = inlined_call_operand.vmem [shape: bf16[6,784], index: 17, kind: input, shape index: {}]
  %s18 = inlined_call_operand.vmem [shape: f32[2,2,784], index: 18, kind: output, shape index: {0}]
  %s19 = inlined_call_operand.vmem [shape: f32[2,1,64], index: 19, kind: output, shape index: {1}]
  %20 = xla_tuple %s18, %s19
  %s21 = sld [smem:[#allocation0]]
  $region113: #{encoder_decoder_forward.1} parent=0
    _
  %s23 = ssub.s32 1, %s21
  %s24 = scalar_select 0, %s23, %s21
  loop: start=0, step=1, limit=4
  $region2: #{encoder_decoder_forward.1} parent=0 // loop_pre_header
    _
  $region3: #{encoder_decoder_forward.1} parent=0 // loop_header
    %s26 = sphi 0, %s30
    %p27 = scmp.ge.s32.totalorder %s26, 4
    %s36 = sphi 0, %s38
    %s39 = sphi 0, %s36
    %s40 = sphi 0, %s39
    %s56 = sphi 0, %s40
    %s62 = sphi 0, %s64
    %s65 = sphi 0, %s62
    %s66 = sphi 0, %s65
    %s82 = sphi 0, %s66
    %s86 = sphi 0, %s86
    %s88 = sphi 0, %s86
    %s89 = sphi 0, %s88
    %s103 = sphi 0, %s89
    %s107 = sphi 0, %s107
    %s109 = sphi 0, %s107
    %s110 = sphi 0, %s109
    %s124 = sphi 0, %s110
    %s128 = sphi 0, %s128
    %s130 = sphi 0, %s128
    %s131 = sphi 0, %s130
    %s145 = sphi 0, %s131
    %s149 = sphi 0, %s149
    %s151 = sphi 0, %s149
    %s152 = sphi 0, %s151
    %s166 = sphi 0, %s152
    %s170 = sphi 0, %s170
    %s172 = sphi 0, %s170
    %s173 = sphi 0, %s172
    %s187 = sphi 0, %s173
    %s191 = sphi 0, %s191
    %s193 = sphi 0, %s191
    %s194 = sphi 0, %s193
    %s208 = sphi 0, %s194
    %s212 = sphi 0, %s212
    %s214 = sphi 0, %s212
    %s215 = sphi 0, %s214
    %s229 = sphi 0, %s215
    %s233 = sphi 0, %s233
    %s235 = sphi 0, %s233
    %s236 = sphi 0, %s235
    %s250 = sphi 0, %s236
    %s254 = sphi 0, %s254
    %s256 = sphi 0, %s254
    %s257 = sphi 0, %s256
    %s271 = sphi 0, %s257
    %s275 = sphi 0, %s275
    %s277 = sphi 0, %s275
    %s278 = sphi 0, %s277
    %s292 = sphi 0, %s278
    %s296 = sphi 0, %s296
    %s298 = sphi 0, %s296
    %s299 = sphi 0, %s298
    %s313 = sphi 0, %s299
    %s317 = sphi 0, %s317
    %s319 = sphi 0, %s317
    %s320 = sphi 0, %s319
    %s334 = sphi 0, %s320
    %s338 = sphi 0, %s338
    %s340 = sphi 0, %s338
    %s341 = sphi 0, %s340
    %s355 = sphi 0, %s341
    %s359 = sphi 0, %s359
    %s361 = sphi 0, %s359
    %s362 = sphi 0, %s361
    %s376 = sphi 0, %s362
    %s380 = sphi 0, %s380
    %s382 = sphi 0, %s380
    %s383 = sphi 0, %s382
    %s397 = sphi 0, %s383
    %s401 = sphi 0, %s401
    %s403 = sphi 0, %s401
    %s404 = sphi 0, %s403
    %s418 = sphi 0, %s404
    %s424 = sphi 0, %s426
    %s427 = sphi 0, %s424
    %s428 = sphi 0, %s427
    %s444 = sphi 0, %s428
    %s450 = sphi 0, %s452
    %s453 = sphi 0, %s450
    %s454 = sphi 0, %s453
    %s470 = sphi 0, %s454
  $region4: #{encoder_decoder_forward.1} parent=0 // loop_header_branch
    %29 = sbr.rel (%p27) target = $region8
  $region5: #{encoder_decoder_forward.1} parent=0 // loop_body
    %s31 = ssub.s32 %s26, 1
    %s32 = ssub.s32 %s26, 2
    %s33 = sadd.s32 %s26, 1
    %s34 = ssub.s32 %s26, %s33
    %p35 = scmp.eq.s32.totalorder %s34, 0
    %s37 = sadd.s32 %s36, 1
    %s38 = scalar_select %p35, %s36, %s37
    %p41 = pneg %p35
    %p42 = scmp.eq.s32.totalorder %s26, 1
    %p43 = por %p41, %p42
    %p44 = scmp.ne.s32.totalorder %s36, %s39
    %p45 = scmp.eq.s32.totalorder %s26, 0
    %p46 = por %p44, %p45
    %p47 = scmp.ne.s32.totalorder %s36, %s39
    %p48 = scmp.eq.s32.totalorder %s31, 1
    %p49 = por %p47, %p48
    %p50 = scmp.ne.s32.totalorder %s39, %s40
    %p51 = scmp.eq.s32.totalorder %s31, 0
    %p52 = por %p50, %p51
    %p53 = scmp.ne.s32.totalorder %s39, %s40
    %p54 = scmp.eq.s32.totalorder %s32, 1
    %p55 = por %p53, %p54
    %p57 = scmp.ne.s32.totalorder %s40, %s56
    %p58 = scmp.eq.s32.totalorder %s32, 0
    %p59 = por %p57, %p58
    %s60 = ssub.s32 %s26, %s33
    %p61 = scmp.eq.s32.totalorder %s60, 0
    %s63 = sadd.s32 %s62, 1
    %s64 = scalar_select %p61, %s62, %s63
    %p67 = pneg %p61
    %p68 = scmp.eq.s32.totalorder %s26, 1
    %p69 = por %p67, %p68
    %p70 = scmp.ne.s32.totalorder %s62, %s65
    %p71 = scmp.eq.s32.totalorder %s26, 0
    %p72 = por %p70, %p71
    %p73 = scmp.ne.s32.totalorder %s62, %s65
    %p74 = scmp.eq.s32.totalorder %s31, 1
    %p75 = por %p73, %p74
    %p76 = scmp.ne.s32.totalorder %s65, %s66
    %p77 = scmp.eq.s32.totalorder %s31, 0
    %p78 = por %p76, %p77
    %p79 = scmp.ne.s32.totalorder %s65, %s66
    %p80 = scmp.eq.s32.totalorder %s32, 1
    %p81 = por %p79, %p80
    %p83 = scmp.ne.s32.totalorder %s66, %s82
    %p84 = scmp.eq.s32.totalorder %s32, 0
    %p85 = por %p83, %p84
    %s87 = sadd.s32 %s86, 1
    %p90 = scmp.eq.s32.totalorder %s26, 1
    %p91 = scmp.ne.s32.totalorder %s86, %s88
    %p92 = scmp.eq.s32.totalorder %s26, 0
    %p93 = por %p91, %p92
    %p94 = scmp.ne.s32.totalorder %s86, %s88
    %p95 = scmp.eq.s32.totalorder %s31, 1
    %p96 = por %p94, %p95
    %p97 = scmp.ne.s32.totalorder %s88, %s89
    %p98 = scmp.eq.s32.totalorder %s31, 0
    %p99 = por %p97, %p98
    %p100 = scmp.ne.s32.totalorder %s88, %s89
    %p101 = scmp.eq.s32.totalorder %s32, 1
    %p102 = por %p100, %p101
    %p104 = scmp.ne.s32.totalorder %s89, %s103
    %p105 = scmp.eq.s32.totalorder %s32, 0
    %p106 = por %p104, %p105
    %s108 = sadd.s32 %s107, 1
    %p111 = scmp.eq.s32.totalorder %s26, 1
    %p112 = scmp.ne.s32.totalorder %s107, %s109
    %p113 = scmp.eq.s32.totalorder %s26, 0
    %p114 = por %p112, %p113
    %p115 = scmp.ne.s32.totalorder %s107, %s109
    %p116 = scmp.eq.s32.totalorder %s31, 1
    %p117 = por %p115, %p116
    %p118 = scmp.ne.s32.totalorder %s109, %s110
    %p119 = scmp.eq.s32.totalorder %s31, 0
    %p120 = por %p118, %p119
    %p121 = scmp.ne.s32.totalorder %s109, %s110
    %p122 = scmp.eq.s32.totalorder %s32, 1
    %p123 = por %p121, %p122
    %p125 = scmp.ne.s32.totalorder %s110, %s124
    %p126 = scmp.eq.s32.totalorder %s32, 0
    %p127 = por %p125, %p126
    %s129 = sadd.s32 %s128, 1
    %p132 = scmp.eq.s32.totalorder %s26, 1
    %p133 = scmp.ne.s32.totalorder %s128, %s130
    %p134 = scmp.eq.s32.totalorder %s26, 0
    %p135 = por %p133, %p134
    %p136 = scmp.ne.s32.totalorder %s128, %s130
    %p137 = scmp.eq.s32.totalorder %s31, 1
    %p138 = por %p136, %p137
    %p139 = scmp.ne.s32.totalorder %s130, %s131
    %p140 = scmp.eq.s32.totalorder %s31, 0
    %p141 = por %p139, %p140
    %p142 = scmp.ne.s32.totalorder %s130, %s131
    %p143 = scmp.eq.s32.totalorder %s32, 1
    %p144 = por %p142, %p143
    %p146 = scmp.ne.s32.totalorder %s131, %s145
    %p147 = scmp.eq.s32.totalorder %s32, 0
    %p148 = por %p146, %p147
    %s150 = sadd.s32 %s149, 1
    %p153 = scmp.eq.s32.totalorder %s26, 1
    %p154 = scmp.ne.s32.totalorder %s149, %s151
    %p155 = scmp.eq.s32.totalorder %s26, 0
    %p156 = por %p154, %p155
    %p157 = scmp.ne.s32.totalorder %s149, %s151
    %p158 = scmp.eq.s32.totalorder %s31, 1
    %p159 = por %p157, %p158
    %p160 = scmp.ne.s32.totalorder %s151, %s152
    %p161 = scmp.eq.s32.totalorder %s31, 0
    %p162 = por %p160, %p161
    %p163 = scmp.ne.s32.totalorder %s151, %s152
    %p164 = scmp.eq.s32.totalorder %s32, 1
    %p165 = por %p163, %p164
    %p167 = scmp.ne.s32.totalorder %s152, %s166
    %p168 = scmp.eq.s32.totalorder %s32, 0
    %p169 = por %p167, %p168
    %s171 = sadd.s32 %s170, 1
    %p174 = scmp.eq.s32.totalorder %s26, 1
    %p175 = scmp.ne.s32.totalorder %s170, %s172
    %p176 = scmp.eq.s32.totalorder %s26, 0
    %p177 = por %p175, %p176
    %p178 = scmp.ne.s32.totalorder %s170, %s172
    %p179 = scmp.eq.s32.totalorder %s31, 1
    %p180 = por %p178, %p179
    %p181 = scmp.ne.s32.totalorder %s172, %s173
    %p182 = scmp.eq.s32.totalorder %s31, 0
    %p183 = por %p181, %p182
    %p184 = scmp.ne.s32.totalorder %s172, %s173
    %p185 = scmp.eq.s32.totalorder %s32, 1
    %p186 = por %p184, %p185
    %p188 = scmp.ne.s32.totalorder %s173, %s187
    %p189 = scmp.eq.s32.totalorder %s32, 0
    %p190 = por %p188, %p189
    %s192 = sadd.s32 %s191, 1
    %p195 = scmp.eq.s32.totalorder %s26, 1
    %p196 = scmp.ne.s32.totalorder %s191, %s193
    %p197 = scmp.eq.s32.totalorder %s26, 0
    %p198 = por %p196, %p197
    %p199 = scmp.ne.s32.totalorder %s191, %s193
    %p200 = scmp.eq.s32.totalorder %s31, 1
    %p201 = por %p199, %p200
    %p202 = scmp.ne.s32.totalorder %s193, %s194
    %p203 = scmp.eq.s32.totalorder %s31, 0
    %p204 = por %p202, %p203
    %p205 = scmp.ne.s32.totalorder %s193, %s194
    %p206 = scmp.eq.s32.totalorder %s32, 1
    %p207 = por %p205, %p206
    %p209 = scmp.ne.s32.totalorder %s194, %s208
    %p210 = scmp.eq.s32.totalorder %s32, 0
    %p211 = por %p209, %p210
    %s213 = sadd.s32 %s212, 1
    %p216 = scmp.eq.s32.totalorder %s26, 1
    %p217 = scmp.ne.s32.totalorder %s212, %s214
    %p218 = scmp.eq.s32.totalorder %s26, 0
    %p219 = por %p217, %p218
    %p220 = scmp.ne.s32.totalorder %s212, %s214
    %p221 = scmp.eq.s32.totalorder %s31, 1
    %p222 = por %p220, %p221
    %p223 = scmp.ne.s32.totalorder %s214, %s215
    %p224 = scmp.eq.s32.totalorder %s31, 0
    %p225 = por %p223, %p224
    %p226 = scmp.ne.s32.totalorder %s214, %s215
    %p227 = scmp.eq.s32.totalorder %s32, 1
    %p228 = por %p226, %p227
    %p230 = scmp.ne.s32.totalorder %s215, %s229
    %p231 = scmp.eq.s32.totalorder %s32, 0
    %p232 = por %p230, %p231
    %s234 = sadd.s32 %s233, 1
    %p237 = scmp.eq.s32.totalorder %s26, 1
    %p238 = scmp.ne.s32.totalorder %s233, %s235
    %p239 = scmp.eq.s32.totalorder %s26, 0
    %p240 = por %p238, %p239
    %p241 = scmp.ne.s32.totalorder %s233, %s235
    %p242 = scmp.eq.s32.totalorder %s31, 1
    %p243 = por %p241, %p242
    %p244 = scmp.ne.s32.totalorder %s235, %s236
    %p245 = scmp.eq.s32.totalorder %s31, 0
    %p246 = por %p244, %p245
    %p247 = scmp.ne.s32.totalorder %s235, %s236
    %p248 = scmp.eq.s32.totalorder %s32, 1
    %p249 = por %p247, %p248
    %p251 = scmp.ne.s32.totalorder %s236, %s250
    %p252 = scmp.eq.s32.totalorder %s32, 0
    %p253 = por %p251, %p252
    %s255 = sadd.s32 %s254, 1
    %p258 = scmp.eq.s32.totalorder %s26, 1
    %p259 = scmp.ne.s32.totalorder %s254, %s256
    %p260 = scmp.eq.s32.totalorder %s26, 0
    %p261 = por %p259, %p260
    %p262 = scmp.ne.s32.totalorder %s254, %s256
    %p263 = scmp.eq.s32.totalorder %s31, 1
    %p264 = por %p262, %p263
    %p265 = scmp.ne.s32.totalorder %s256, %s257
    %p266 = scmp.eq.s32.totalorder %s31, 0
    %p267 = por %p265, %p266
    %p268 = scmp.ne.s32.totalorder %s256, %s257
    %p269 = scmp.eq.s32.totalorder %s32, 1
    %p270 = por %p268, %p269
    %p272 = scmp.ne.s32.totalorder %s257, %s271
    %p273 = scmp.eq.s32.totalorder %s32, 0
    %p274 = por %p272, %p273
    %s276 = sadd.s32 %s275, 1
    %p279 = scmp.eq.s32.totalorder %s26, 1
    %p280 = scmp.ne.s32.totalorder %s275, %s277
    %p281 = scmp.eq.s32.totalorder %s26, 0
    %p282 = por %p280, %p281
    %p283 = scmp.ne.s32.totalorder %s275, %s277
    %p284 = scmp.eq.s32.totalorder %s31, 1
    %p285 = por %p283, %p284
    %p286 = scmp.ne.s32.totalorder %s277, %s278
    %p287 = scmp.eq.s32.totalorder %s31, 0
    %p288 = por %p286, %p287
    %p289 = scmp.ne.s32.totalorder %s277, %s278
    %p290 = scmp.eq.s32.totalorder %s32, 1
    %p291 = por %p289, %p290
    %p293 = scmp.ne.s32.totalorder %s278, %s292
    %p294 = scmp.eq.s32.totalorder %s32, 0
    %p295 = por %p293, %p294
    %s297 = sadd.s32 %s296, 1
    %p300 = scmp.eq.s32.totalorder %s26, 1
    %p301 = scmp.ne.s32.totalorder %s296, %s298
    %p302 = scmp.eq.s32.totalorder %s26, 0
    %p303 = por %p301, %p302
    %p304 = scmp.ne.s32.totalorder %s296, %s298
    %p305 = scmp.eq.s32.totalorder %s31, 1
    %p306 = por %p304, %p305
    %p307 = scmp.ne.s32.totalorder %s298, %s299
    %p308 = scmp.eq.s32.totalorder %s31, 0
    %p309 = por %p307, %p308
    %p310 = scmp.ne.s32.totalorder %s298, %s299
    %p311 = scmp.eq.s32.totalorder %s32, 1
    %p312 = por %p310, %p311
    %p314 = scmp.ne.s32.totalorder %s299, %s313
    %p315 = scmp.eq.s32.totalorder %s32, 0
    %p316 = por %p314, %p315
    %s318 = sadd.s32 %s317, 1
    %p321 = scmp.eq.s32.totalorder %s26, 1
    %p322 = scmp.ne.s32.totalorder %s317, %s319
    %p323 = scmp.eq.s32.totalorder %s26, 0
    %p324 = por %p322, %p323
    %p325 = scmp.ne.s32.totalorder %s317, %s319
    %p326 = scmp.eq.s32.totalorder %s31, 1
    %p327 = por %p325, %p326
    %p328 = scmp.ne.s32.totalorder %s319, %s320
    %p329 = scmp.eq.s32.totalorder %s31, 0
    %p330 = por %p328, %p329
    %p331 = scmp.ne.s32.totalorder %s319, %s320
    %p332 = scmp.eq.s32.totalorder %s32, 1
    %p333 = por %p331, %p332
    %p335 = scmp.ne.s32.totalorder %s320, %s334
    %p336 = scmp.eq.s32.totalorder %s32, 0
    %p337 = por %p335, %p336
    %s339 = sadd.s32 %s338, 1
    %p342 = scmp.eq.s32.totalorder %s26, 1
    %p343 = scmp.ne.s32.totalorder %s338, %s340
    %p344 = scmp.eq.s32.totalorder %s26, 0
    %p345 = por %p343, %p344
    %p346 = scmp.ne.s32.totalorder %s338, %s340
    %p347 = scmp.eq.s32.totalorder %s31, 1
    %p348 = por %p346, %p347
    %p349 = scmp.ne.s32.totalorder %s340, %s341
    %p350 = scmp.eq.s32.totalorder %s31, 0
    %p351 = por %p349, %p350
    %p352 = scmp.ne.s32.totalorder %s340, %s341
    %p353 = scmp.eq.s32.totalorder %s32, 1
    %p354 = por %p352, %p353
    %p356 = scmp.ne.s32.totalorder %s341, %s355
    %p357 = scmp.eq.s32.totalorder %s32, 0
    %p358 = por %p356, %p357
    %s360 = sadd.s32 %s359, 1
    %p363 = scmp.eq.s32.totalorder %s26, 1
    %p364 = scmp.ne.s32.totalorder %s359, %s361
    %p365 = scmp.eq.s32.totalorder %s26, 0
    %p366 = por %p364, %p365
    %p367 = scmp.ne.s32.totalorder %s359, %s361
    %p368 = scmp.eq.s32.totalorder %s31, 1
    %p369 = por %p367, %p368
    %p370 = scmp.ne.s32.totalorder %s361, %s362
    %p371 = scmp.eq.s32.totalorder %s31, 0
    %p372 = por %p370, %p371
    %p373 = scmp.ne.s32.totalorder %s361, %s362
    %p374 = scmp.eq.s32.totalorder %s32, 1
    %p375 = por %p373, %p374
    %p377 = scmp.ne.s32.totalorder %s362, %s376
    %p378 = scmp.eq.s32.totalorder %s32, 0
    %p379 = por %p377, %p378
    %s381 = sadd.s32 %s380, 1
    %p384 = scmp.eq.s32.totalorder %s26, 1
    %p385 = scmp.ne.s32.totalorder %s380, %s382
    %p386 = scmp.eq.s32.totalorder %s26, 0
    %p387 = por %p385, %p386
    %p388 = scmp.ne.s32.totalorder %s380, %s382
    %p389 = scmp.eq.s32.totalorder %s31, 1
    %p390 = por %p388, %p389
    %p391 = scmp.ne.s32.totalorder %s382, %s383
    %p392 = scmp.eq.s32.totalorder %s31, 0
    %p393 = por %p391, %p392
    %p394 = scmp.ne.s32.totalorder %s382, %s383
    %p395 = scmp.eq.s32.totalorder %s32, 1
    %p396 = por %p394, %p395
    %p398 = scmp.ne.s32.totalorder %s383, %s397
    %p399 = scmp.eq.s32.totalorder %s32, 0
    %p400 = por %p398, %p399
    %s402 = sadd.s32 %s401, 1
    %p405 = scmp.eq.s32.totalorder %s26, 1
    %p406 = scmp.ne.s32.totalorder %s401, %s403
    %p407 = scmp.eq.s32.totalorder %s26, 0
    %p408 = por %p406, %p407
    %p409 = scmp.ne.s32.totalorder %s401, %s403
    %p410 = scmp.eq.s32.totalorder %s31, 1
    %p411 = por %p409, %p410
    %p412 = scmp.ne.s32.totalorder %s403, %s404
    %p413 = scmp.eq.s32.totalorder %s31, 0
    %p414 = por %p412, %p413
    %p415 = scmp.ne.s32.totalorder %s403, %s404
    %p416 = scmp.eq.s32.totalorder %s32, 1
    %p417 = por %p415, %p416
    %p419 = scmp.ne.s32.totalorder %s404, %s418
    %p420 = scmp.eq.s32.totalorder %s32, 0
    %p421 = por %p419, %p420
    %s422 = ssub.s32 %s26, %s33
    %p423 = scmp.eq.s32.totalorder %s422, 0
    %s425 = sadd.s32 %s424, 1
    %s426 = scalar_select %p423, %s424, %s425
    %p429 = pneg %p423
    %p430 = scmp.eq.s32.totalorder %s26, 1
    %p431 = por %p429, %p430
    %p432 = scmp.ne.s32.totalorder %s424, %s427
    %p433 = scmp.eq.s32.totalorder %s26, 0
    %p434 = por %p432, %p433
    %p435 = scmp.ne.s32.totalorder %s424, %s427
    %p436 = scmp.eq.s32.totalorder %s31, 1
    %p437 = por %p435, %p436
    %p438 = scmp.ne.s32.totalorder %s427, %s428
    %p439 = scmp.eq.s32.totalorder %s31, 0
    %p440 = por %p438, %p439
    %p441 = scmp.ne.s32.totalorder %s427, %s428
    %p442 = scmp.eq.s32.totalorder %s32, 1
    %p443 = por %p441, %p442
    %p445 = scmp.ne.s32.totalorder %s428, %s444
    %p446 = scmp.eq.s32.totalorder %s32, 0
    %p447 = por %p445, %p446
    %s448 = ssub.s32 %s26, %s33
    %p449 = scmp.eq.s32.totalorder %s448, 0
    %s451 = sadd.s32 %s450, 1
    %s452 = scalar_select %p449, %s450, %s451
    %p455 = pneg %p449
    %p456 = scmp.eq.s32.totalorder %s26, 1
    %p457 = por %p455, %p456
    %p458 = scmp.ne.s32.totalorder %s450, %s453
    %p459 = scmp.eq.s32.totalorder %s26, 0
    %p460 = por %p458, %p459
    %p461 = scmp.ne.s32.totalorder %s450, %s453
    %p462 = scmp.eq.s32.totalorder %s31, 1
    %p463 = por %p461, %p462
    %p464 = scmp.ne.s32.totalorder %s453, %s454
    %p465 = scmp.eq.s32.totalorder %s31, 0
    %p466 = por %p464, %p465
    %p467 = scmp.ne.s32.totalorder %s453, %s454
    %p468 = scmp.eq.s32.totalorder %s32, 1
    %p469 = por %p467, %p468
    %p471 = scmp.ne.s32.totalorder %s454, %s470
    %p472 = scmp.eq.s32.totalorder %s32, 0
    %p473 = por %p471, %p472
    %p474 = scmp.le.s32.totalorder 1, %s26
    %p475 = scmp.lt.s32.totalorder %s26, 3
    %p476 = pnand %p474, %p475
    %p477 = pneg %p476
    // Predicated region
    $region9: #{encoder_decoder_forward.1} parent=5 // pred_check
      _
    $region10: #{encoder_decoder_forward.1} parent=5 // pred_check_branch
      %479 = sbr.rel (%p476) target = $region12
    $region11: #{encoder_decoder_forward.1} parent=5 // pred_region
      %s480 = ssub.s32 %s26, 1
      // Predicated region
      $region13: #{encoder_decoder_forward.1} parent=11 // pred_check
        %p481 = pneg %p99
      $region14: #{encoder_decoder_forward.1} parent=11 // pred_check_branch
        %483 = sbr.rel (%p481) target = $region16
      $region15: #{encoder_decoder_forward.1} parent=11 // pred_region
        _
      $region16: #{encoder_decoder_forward.1} parent=11 // pred_fallthru
        _
      // Predicated region
      $region17: #{encoder_decoder_forward.1} parent=11 // pred_check
        %p484 = pneg %p120
      $region18: #{encoder_decoder_forward.1} parent=11 // pred_check_branch
        %486 = sbr.rel (%p484) target = $region20
      $region19: #{encoder_decoder_forward.1} parent=11 // pred_region
        _
      $region20: #{encoder_decoder_forward.1} parent=11 // pred_fallthru
        _
      // Predicated region
      $region21: #{encoder_decoder_forward.1} parent=11 // pred_check
        %p487 = pneg %p141
      $region22: #{encoder_decoder_forward.1} parent=11 // pred_check_branch
        %489 = sbr.rel (%p487) target = $region24
      $region23: #{encoder_decoder_forward.1} parent=11 // pred_region
        _
      $region24: #{encoder_decoder_forward.1} parent=11 // pred_fallthru
        _
      // Predicated region
      $region25: #{encoder_decoder_forward.1} parent=11 // pred_check
        %p490 = pneg %p162
      $region26: #{encoder_decoder_forward.1} parent=11 // pred_check_branch
        %492 = sbr.rel (%p490) target = $region28
      $region27: #{encoder_decoder_forward.1} parent=11 // pred_region
        _
      $region28: #{encoder_decoder_forward.1} parent=11 // pred_fallthru
        _
      // Predicated region
      $region29: #{encoder_decoder_forward.1} parent=11 // pred_check
        %p493 = pneg %p183
      $region30: #{encoder_decoder_forward.1} parent=11 // pred_check_branch
        %495 = sbr.rel (%p493) target = $region32
      $region31: #{encoder_decoder_forward.1} parent=11 // pred_region
        _
      $region32: #{encoder_decoder_forward.1} parent=11 // pred_fallthru
        _
      // Predicated region
      $region33: #{encoder_decoder_forward.1} parent=11 // pred_check
        %p496 = pneg %p204
      $region34: #{encoder_decoder_forward.1} parent=11 // pred_check_branch
        %498 = sbr.rel (%p496) target = $region36
      $region35: #{encoder_decoder_forward.1} parent=11 // pred_region
        _
      $region36: #{encoder_decoder_forward.1} parent=11 // pred_fallthru
        _
      // Predicated region
      $region37: #{encoder_decoder_forward.1} parent=11 // pred_check
        %p499 = pneg %p225
      $region38: #{encoder_decoder_forward.1} parent=11 // pred_check_branch
        %501 = sbr.rel (%p499) target = $region40
      $region39: #{encoder_decoder_forward.1} parent=11 // pred_region
        _
      $region40: #{encoder_decoder_forward.1} parent=11 // pred_fallthru
        _
      // Predicated region
      $region41: #{encoder_decoder_forward.1} parent=11 // pred_check
        %p502 = pneg %p246
      $region42: #{encoder_decoder_forward.1} parent=11 // pred_check_branch
        %504 = sbr.rel (%p502) target = $region44
      $region43: #{encoder_decoder_forward.1} parent=11 // pred_region
        _
      $region44: #{encoder_decoder_forward.1} parent=11 // pred_fallthru
        _
      // Predicated region
      $region45: #{encoder_decoder_forward.1} parent=11 // pred_check
        %p505 = pneg %p267
      $region46: #{encoder_decoder_forward.1} parent=11 // pred_check_branch
        %507 = sbr.rel (%p505) target = $region48
      $region47: #{encoder_decoder_forward.1} parent=11 // pred_region
        _
      $region48: #{encoder_decoder_forward.1} parent=11 // pred_fallthru
        _
      // Predicated region
      $region49: #{encoder_decoder_forward.1} parent=11 // pred_check
        %p508 = pneg %p288
      $region50: #{encoder_decoder_forward.1} parent=11 // pred_check_branch
        %510 = sbr.rel (%p508) target = $region52
      $region51: #{encoder_decoder_forward.1} parent=11 // pred_region
        _
      $region52: #{encoder_decoder_forward.1} parent=11 // pred_fallthru
        _
      // Predicated region
      $region53: #{encoder_decoder_forward.1} parent=11 // pred_check
        %p511 = pneg %p309
      $region54: #{encoder_decoder_forward.1} parent=11 // pred_check_branch
        %513 = sbr.rel (%p511) target = $region56
      $region55: #{encoder_decoder_forward.1} parent=11 // pred_region
        _
      $region56: #{encoder_decoder_forward.1} parent=11 // pred_fallthru
        _
      // Predicated region
      $region57: #{encoder_decoder_forward.1} parent=11 // pred_check
        %p514 = pneg %p330
      $region58: #{encoder_decoder_forward.1} parent=11 // pred_check_branch
        %516 = sbr.rel (%p514) target = $region60
      $region59: #{encoder_decoder_forward.1} parent=11 // pred_region
        _
      $region60: #{encoder_decoder_forward.1} parent=11 // pred_fallthru
        _
      // Predicated region
      $region61: #{encoder_decoder_forward.1} parent=11 // pred_check
        %p517 = pneg %p351
      $region62: #{encoder_decoder_forward.1} parent=11 // pred_check_branch
        %519 = sbr.rel (%p517) target = $region64
      $region63: #{encoder_decoder_forward.1} parent=11 // pred_region
        _
      $region64: #{encoder_decoder_forward.1} parent=11 // pred_fallthru
        _
      // Predicated region
      $region65: #{encoder_decoder_forward.1} parent=11 // pred_check
        %p520 = pneg %p372
      $region66: #{encoder_decoder_forward.1} parent=11 // pred_check_branch
        %522 = sbr.rel (%p520) target = $region68
      $region67: #{encoder_decoder_forward.1} parent=11 // pred_region
        _
      $region68: #{encoder_decoder_forward.1} parent=11 // pred_fallthru
        _
      // Predicated region
      $region69: #{encoder_decoder_forward.1} parent=11 // pred_check
        %p523 = pneg %p393
      $region70: #{encoder_decoder_forward.1} parent=11 // pred_check_branch
        %525 = sbr.rel (%p523) target = $region72
      $region71: #{encoder_decoder_forward.1} parent=11 // pred_region
        _
      $region72: #{encoder_decoder_forward.1} parent=11 // pred_fallthru
        _
      // Predicated region
      $region73: #{encoder_decoder_forward.1} parent=11 // pred_check
        %p526 = pneg %p414
      $region74: #{encoder_decoder_forward.1} parent=11 // pred_check_branch
        %528 = sbr.rel (%p526) target = $region76
      $region75: #{encoder_decoder_forward.1} parent=11 // pred_region
        _
      $region76: #{encoder_decoder_forward.1} parent=11 // pred_fallthru
        _
    $region12: #{encoder_decoder_forward.1} parent=5 // pred_fallthru
      _
    %p529 = scmp.lt.s32.totalorder %s26, 2
    // Predicated region
    $region77: #{encoder_decoder_forward.1} parent=5 // pred_check
      %p530 = pneg %p529
    $region78: #{encoder_decoder_forward.1} parent=5 // pred_check_branch
      %532 = sbr.rel (%p530) target = $region80
    $region79: #{encoder_decoder_forward.1} parent=5 // pred_region
      // Predicated region
      $region81: #{encoder_decoder_forward.1} parent=79 // pred_check
        %p533 = pneg %p46
      $region82: #{encoder_decoder_forward.1} parent=79 // pred_check_branch
        %535 = sbr.rel (%p533) target = $region84
      $region83: #{encoder_decoder_forward.1} parent=79 // pred_region
        %p536 = scmp.lt.s32.totalorder %s26, 1
        %s537 = scalar_select %p536, %s26, 1
        %s538 = smul.addr %s537, 7
        %s539 = smul.addr %s538, 2
        %s540 = scalar_lea.vmem %s0, %s539
      $region84: #{encoder_decoder_forward.1} parent=79 // pred_fallthru
        _
      // Predicated region
      $region85: #{encoder_decoder_forward.1} parent=79 // pred_check
        %p541 = pneg %p72
      $region86: #{encoder_decoder_forward.1} parent=79 // pred_check_branch
        %543 = sbr.rel (%p541) target = $region88
      $region87: #{encoder_decoder_forward.1} parent=79 // pred_region
        %p544 = scmp.lt.s32.totalorder %s26, 1
        %s545 = scalar_select %p544, %s26, 1
        %s546 = scalar_lea.vmem %s1, %s545
      $region88: #{encoder_decoder_forward.1} parent=79 // pred_fallthru
        _
    $region80: #{encoder_decoder_forward.1} parent=5 // pred_fallthru
      _
    %p547 = scmp.le.s32.totalorder 1, %s26
    %p548 = scmp.lt.s32.totalorder %s26, 3
    %p549 = pnand %p547, %p548
    %p550 = pneg %p549
    // Predicated region
    $region89: #{encoder_decoder_forward.1} parent=5 // pred_check
      _
    $region90: #{encoder_decoder_forward.1} parent=5 // pred_check_branch
      %552 = sbr.rel (%p549) target = $region92
    $region91: #{encoder_decoder_forward.1} parent=5 // pred_region
      %s553 = ssub.s32 %s26, 1
      %p554 = scmp.lt.s32.totalorder %s31, 1
      %s555 = scalar_select %p554, %s31, 1
      %s556 = smul.addr %s555, 7
      %s557 = smul.addr %s556, 2
      %s558 = scalar_lea.vmem %s0, %s557
      %p559 = pneg %p52
      %p560 = pneg %p49
      %p561 = scmp.lt.s32.totalorder %s31, 1
      %s562 = scalar_select %p561, %s31, 1
      %s563 = scalar_lea.vmem %s1, %s562
      %p564 = pneg %p78
      %p565 = pneg %p75
      %p566 = pneg %p99
      %p567 = pneg %p96
      %p568 = pneg %p120
      %p569 = pneg %p117
      %p570 = pneg %p141
      %p571 = pneg %p138
      %p572 = pneg %p162
      %p573 = pneg %p159
      %p574 = pneg %p183
      %p575 = pneg %p180
      %p576 = pneg %p204
      %p577 = pneg %p201
      %p578 = pneg %p225
      %p579 = pneg %p222
      %p580 = pneg %p246
      %p581 = pneg %p243
      %p582 = pneg %p267
      %p583 = pneg %p264
      %p584 = pneg %p288
      %p585 = pneg %p285
      %p586 = pneg %p309
      %p587 = pneg %p306
      %p588 = pneg %p330
      %p589 = pneg %p327
      %p590 = pneg %p351
      %p591 = pneg %p348
      %p592 = pneg %p372
      %p593 = pneg %p369
      %p594 = pneg %p393
      %p595 = pneg %p390
      %p596 = pneg %p414
      %p597 = pneg %p411
      %p598 = pneg %p440
      %p599 = pneg %p437
      %p600 = scmp.lt.s32.totalorder %s31, 1
      %s601 = scalar_select %p600, %s31, 1
      %s602 = smul.addr %s601, 7
      %s603 = smul.addr %s602, 2
      %s604 = scalar_lea.vmem %s18, %s603
      %p605 = pneg %p466
      %p606 = pneg %p463
      %p607 = scmp.lt.s32.totalorder %s31, 1
      %s608 = scalar_select %p607, %s31, 1
      %s609 = scalar_lea.vmem %s19, %s608
      %p610 = scmp.lt.s32.totalorder %s31, 1
      %s611 = scalar_select %p610, %s31, 1
      %s612 = smul.addr %s611, 7
      %s613 = smul.addr %s612, 2
      %s614 = scalar_lea.vmem %s0, %s613
      %p615 = scmp.lt.s32.totalorder %s31, 1
      %s616 = scalar_select %p615, %s31, 1
      %s617 = scalar_lea.vmem %s1, %s616
      %p618 = scmp.lt.s32.totalorder %s31, 1
      %s619 = scalar_select %p618, %s31, 1
      %s620 = smul.addr %s619, 7
      %s621 = smul.addr %s620, 2
      %s622 = scalar_lea.vmem %s18, %s621
      %p623 = scmp.lt.s32.totalorder %s31, 1
      %s624 = scalar_select %p623, %s31, 1
      %s625 = scalar_lea.vmem %s19, %s624
      %v627 = vld [vmem:[%s17] sm:$0x11]
      %v628 = vld [vmem:[%s17 + $0x8] sm:$0x11]
      %v629 = vld [vmem:[%s17 + $0x10] sm:$0x11]
      %v630 = vld [vmem:[%s17 + $0x18] sm:$0x1]
      %v631 = vld [vmem:[%s17] sm:$0x22]
      %v632 = vld [vmem:[%s17] sm:$0x4]
      %v633 = vld [vmem:[%s614] sm:$0xff]
      %v634 = vld [vmem:[%s614 + $0x8] sm:$0x3f]
      %v635 = vld [vmem:[%s2] sm:$0xf]
      %v636 = vld [vmem:[%s2 + $0x8] sm:$0xf]
      %v637 = vld [vmem:[%s3] sm:$0xff]
      %v638 = vld [vmem:[%s3 + $0x8] sm:$0xff]
      %v641 = vcombine.high %v633, %v633
      %v643 = vunpack.c.l.s4 1983009808
      %v644 = vunpack.c.0.s8 %v643
      %v645 = vlaneseq
      %v646 = vshrl.u32 %v645, 7
      %v647 = vsub.s32 %v644, %v646
      %v648 = vrot.slane %v633, %v647
      %v650 = vunpack.c.l.s4 1983009808
      %v651 = vunpack.c.0.s8 %v650
      %v652 = vlaneseq
      %v653 = vshrl.u32 %v652, 7
      %v654 = vsub.s32 %v651, %v653
      %v655 = vrot.slane %v641, %v654
      %v656 = vcombine.high %v648, %v648
      %v657 = vcombine.high %v655, %v655
      %v658 = vcombine.high %v634, %v634
      %v660 = vunpack.c.l.s4 1983009808
      %v661 = vunpack.c.0.s8 %v660
      %v662 = vlaneseq
      %v663 = vshrl.u32 %v662, 7
      %v664 = vsub.s32 %v661, %v663
      %v665 = vrot.slane %v634, %v664
      %v667 = vunpack.c.l.s4 1983009808
      %v668 = vunpack.c.0.s8 %v667
      %v669 = vlaneseq
      %v670 = vshrl.u32 %v669, 7
      %v671 = vsub.s32 %v668, %v670
      %v672 = vrot.slane %v658, %v671
      %v673 = vcombine.high %v665, %v665
      %674 = vrot.lane.b32.xlu0 %v648, 29
      %v675 = vpop.permute.xlu0 %674
      %676 = vrot.lane.b32.xlu0 %v656, 29
      %v677 = vpop.permute.xlu0 %676
      %678 = vrot.lane.b32.xlu0 %v655, 29
      %v679 = vpop.permute.xlu0 %678
      %680 = vrot.lane.b32.xlu0 %v657, 29
      %v681 = vpop.permute.xlu0 %680
      %682 = vrot.lane.b32.xlu0 %v665, 29
      %v683 = vpop.permute.xlu0 %682
      %684 = vrot.lane.b32.xlu0 %v673, 29
      %v685 = vpop.permute.xlu0 %684
      %686 = vrot.lane.b32.xlu0 %v672, 29
      %v687 = vpop.permute.xlu0 %686
      %vm688 = vcmask 236544
      %v689 = vsel %vm688, %v675, %v677
      %v690 = vsel %vm688, %v677, %v679
      %v691 = vsel %vm688, %v679, %v681
      %v692 = vsel %vm688, %v681, %v683
      %v693 = vsel %vm688, %v683, %v685
      %v694 = vsel %vm688, %v685, %v687
      %vm700 = vcmask 236544
      %v703 = vsel %vm700, 0, %v675
      %vm705 = vcmask 367616
      %v707 = vsel %vm705, %v694, 0
      %v713 = vunpack.c.l.b16 %v627
      %v714 = vunpack.c.h.b16 %v627
      %v715 = vunpack.c.l.b16 %v628
      %v716 = vunpack.c.h.b16 %v628
      %v717 = vunpack.c.l.b16 %v629
      %v718 = vunpack.c.h.b16 %v629
      %v719 = vunpack.c.l.b16 %v630
      %v720 = vpack.c.b16 %v713, %v713
      %v721 = vpack.c.b16 %v714, %v714
      %v722 = vpack.c.b16 %v715, %v715
      %v723 = vpack.c.b16 %v716, %v716
      %v724 = vpack.c.b16 %v717, %v717
      %v725 = vpack.c.b16 %v718, %v718
      %v726 = vpack.c.b16 %v719, %v719
      %v728 = vpack.i.b16 %v720, %v720
      %v730 = vlaneseq
      %v731 = vshrl.u32 %v730, 7
      %v732 = vsub.s32 0, %v731
      %v733 = vrot.slane %v728, %v732
      %v735 = vpack.i.b16 %v721, %v721
      %v737 = vlaneseq
      %v738 = vshrl.u32 %v737, 7
      %v739 = vsub.s32 0, %v738
      %v740 = vrot.slane %v735, %v739
      %v742 = vpack.i.b16 %v722, %v722
      %v744 = vlaneseq
      %v745 = vshrl.u32 %v744, 7
      %v746 = vsub.s32 0, %v745
      %v747 = vrot.slane %v742, %v746
      %v749 = vpack.i.b16 %v723, %v723
      %v751 = vlaneseq
      %v752 = vshrl.u32 %v751, 7
      %v753 = vsub.s32 0, %v752
      %v754 = vrot.slane %v749, %v753
      %v756 = vpack.i.b16 %v724, %v724
      %v758 = vlaneseq
      %v759 = vshrl.u32 %v758, 7
      %v760 = vsub.s32 0, %v759
      %v761 = vrot.slane %v756, %v760
      %v763 = vpack.i.b16 %v725, %v725
      %v765 = vlaneseq
      %v766 = vshrl.u32 %v765, 7
      %v767 = vsub.s32 0, %v766
      %v768 = vrot.slane %v763, %v767
      %v770 = vpack.i.b16 %v726, %v726
      %v772 = vlaneseq
      %v773 = vshrl.u32 %v772, 7
      %v774 = vsub.s32 0, %v773
      %v775 = vrot.slane %v770, %v774
      %v776 = vmul.bf16 %v703, %v733
      %v777 = vmul.bf16 %v689, %v740
      %v778 = vmul.bf16 %v690, %v747
      %v779 = vmul.bf16 %v691, %v754
      %v780 = vmul.bf16 %v692, %v761
      %v781 = vmul.bf16 %v693, %v768
      %v782 = vmul.bf16 %v707, %v775
      %v783 = vshrl.u32 %v720, 16
      %v784 = vpack.i.b16 %v783, %v783
      %v786 = vlaneseq
      %v787 = vshrl.u32 %v786, 7
      %v788 = vsub.s32 0, %v787
      %v789 = vrot.slane %v784, %v788
      %v790 = vshrl.u32 %v721, 16
      %v791 = vpack.i.b16 %v790, %v790
      %v793 = vlaneseq
      %v794 = vshrl.u32 %v793, 7
      %v795 = vsub.s32 0, %v794
      %v796 = vrot.slane %v791, %v795
      %v797 = vshrl.u32 %v722, 16
      %v798 = vpack.i.b16 %v797, %v797
      %v800 = vlaneseq
      %v801 = vshrl.u32 %v800, 7
      %v802 = vsub.s32 0, %v801
      %v803 = vrot.slane %v798, %v802
      %v804 = vshrl.u32 %v723, 16
      %v805 = vpack.i.b16 %v804, %v804
      %v807 = vlaneseq
      %v808 = vshrl.u32 %v807, 7
      %v809 = vsub.s32 0, %v808
      %v810 = vrot.slane %v805, %v809
      %v811 = vshrl.u32 %v724, 16
      %v812 = vpack.i.b16 %v811, %v811
      %v814 = vlaneseq
      %v815 = vshrl.u32 %v814, 7
      %v816 = vsub.s32 0, %v815
      %v817 = vrot.slane %v812, %v816
      %v818 = vshrl.u32 %v725, 16
      %v819 = vpack.i.b16 %v818, %v818
      %v821 = vlaneseq
      %v822 = vshrl.u32 %v821, 7
      %v823 = vsub.s32 0, %v822
      %v824 = vrot.slane %v819, %v823
      %v825 = vshrl.u32 %v726, 16
      %v826 = vpack.i.b16 %v825, %v825
      %v828 = vlaneseq
      %v829 = vshrl.u32 %v828, 7
      %v830 = vsub.s32 0, %v829
      %v831 = vrot.slane %v826, %v830
      %839 = vrot.lane.b32.xlu0 %v789, 2
      %v840 = vpop.permute.xlu0 %839
      %841 = vrot.lane.b32.xlu0 %v796, 2
      %v842 = vpop.permute.xlu0 %841
      %843 = vrot.lane.b32.xlu0 %v803, 2
      %v844 = vpop.permute.xlu0 %843
      %845 = vrot.lane.b32.xlu0 %v810, 2
      %v846 = vpop.permute.xlu0 %845
      %847 = vrot.lane.b32.xlu0 %v817, 2
      %v848 = vpop.permute.xlu0 %847
      %849 = vrot.lane.b32.xlu0 %v824, 2
      %v850 = vpop.permute.xlu0 %849
      %851 = vrot.lane.b32.xlu0 %v831, 2
      %v852 = vpop.permute.xlu0 %851
      %vm853 = vcmask 15360
      %v854 = vsel %vm853, %v840, %v842
      %v855 = vsel %vm853, %v842, %v844
      %v856 = vsel %vm853, %v844, %v846
      %v857 = vsel %vm853, %v846, %v848
      %v858 = vsel %vm853, %v848, %v850
      %v859 = vsel %vm853, %v850, %v852
      %v867 = vmul.bf16 %v703, %v840
      %v868 = vmul.bf16 %v689, %v854
      %v869 = vmul.bf16 %v690, %v855
      %v870 = vmul.bf16 %v691, %v856
      %v871 = vmul.bf16 %v692, %v857
      %v872 = vmul.bf16 %v693, %v858
      %v873 = vmul.bf16 %v707, %v859
      %881 = vrot.lane.b32.xlu0 %v733, 28
      %v882 = vpop.permute.xlu0 %881
      %883 = vrot.lane.b32.xlu0 %v740, 28
      %v884 = vpop.permute.xlu0 %883
      %885 = vrot.lane.b32.xlu0 %v747, 28
      %v886 = vpop.permute.xlu0 %885
      %887 = vrot.lane.b32.xlu0 %v754, 28
      %v888 = vpop.permute.xlu0 %887
      %889 = vrot.lane.b32.xlu0 %v761, 28
      %v890 = vpop.permute.xlu0 %889
      %891 = vrot.lane.b32.xlu0 %v768, 28
      %v892 = vpop.permute.xlu0 %891
      %893 = vrot.lane.b32.xlu0 %v775, 28
      %v894 = vpop.permute.xlu0 %893
      %vm895 = vcmask 228352
      %v896 = vsel %vm895, %v882, %v884
      %v897 = vsel %vm895, %v884, %v886
      %v898 = vsel %vm895, %v886, %v888
      %v899 = vsel %vm895, %v888, %v890
      %v900 = vsel %vm895, %v890, %v892
      %v901 = vsel %vm895, %v892, %v894
      %v909 = vmul.bf16 %v703, %v882
      %v910 = vmul.bf16 %v689, %v896
      %v911 = vmul.bf16 %v690, %v897
      %v912 = vmul.bf16 %v691, %v898
      %v913 = vmul.bf16 %v692, %v899
      %v914 = vmul.bf16 %v693, %v900
      %v915 = vmul.bf16 %v707, %v901
      %916 = vrot.lane.b32.xlu0 %v789, 30
      %v917 = vpop.permute.xlu0 %916
      %918 = vrot.lane.b32.xlu0 %v796, 30
      %v919 = vpop.permute.xlu0 %918
      %920 = vrot.lane.b32.xlu0 %v803, 30
      %v921 = vpop.permute.xlu0 %920
      %922 = vrot.lane.b32.xlu0 %v810, 30
      %v923 = vpop.permute.xlu0 %922
      %924 = vrot.lane.b32.xlu0 %v817, 30
      %v925 = vpop.permute.xlu0 %924
      %926 = vrot.lane.b32.xlu0 %v824, 30
      %v927 = vpop.permute.xlu0 %926
      %928 = vrot.lane.b32.xlu0 %v831, 30
      %v929 = vpop.permute.xlu0 %928
      %vm930 = vcmask 244736
      %v931 = vsel %vm930, %v917, %v919
      %v932 = vsel %vm930, %v919, %v921
      %v933 = vsel %vm930, %v921, %v923
      %v934 = vsel %vm930, %v923, %v925
      %v935 = vsel %vm930, %v925, %v927
      %v936 = vsel %vm930, %v927, %v929
      %v944 = vmul.bf16 %v703, %v917
      %v945 = vmul.bf16 %v689, %v931
      %v946 = vmul.bf16 %v690, %v932
      %v947 = vmul.bf16 %v691, %v933
      %v948 = vmul.bf16 %v692, %v934
      %v949 = vmul.bf16 %v693, %v935
      %v950 = vmul.bf16 %v707, %v936
      %951 = vrot.lane.b32.xlu0 %v733, 56
      %v952 = vpop.permute.xlu0 %951
      %953 = vrot.lane.b32.xlu0 %v740, 56
      %v954 = vpop.permute.xlu0 %953
      %955 = vrot.lane.b32.xlu0 %v747, 56
      %v956 = vpop.permute.xlu0 %955
      %957 = vrot.lane.b32.xlu0 %v754, 56
      %v958 = vpop.permute.xlu0 %957
      %959 = vrot.lane.b32.xlu0 %v761, 56
      %v960 = vpop.permute.xlu0 %959
      %961 = vrot.lane.b32.xlu0 %v768, 56
      %v962 = vpop.permute.xlu0 %961
      %963 = vrot.lane.b32.xlu0 %v775, 56
      %v964 = vpop.permute.xlu0 %963
      %vm965 = vcmask 457728
      %v966 = vsel %vm965, %v952, %v954
      %v967 = vsel %vm965, %v954, %v956
      %v968 = vsel %vm965, %v956, %v958
      %v969 = vsel %vm965, %v958, %v960
      %v970 = vsel %vm965, %v960, %v962
      %v971 = vsel %vm965, %v962, %v964
      %v979 = vmul.bf16 %v703, %v952
      %v980 = vmul.bf16 %v689, %v966
      %v981 = vmul.bf16 %v690, %v967
      %v982 = vmul.bf16 %v691, %v968
      %v983 = vmul.bf16 %v692, %v969
      %v984 = vmul.bf16 %v693, %v970
      %v985 = vmul.bf16 %v707, %v971
      %986 = vrot.lane.b32.xlu0 %v789, 58
      %v987 = vpop.permute.xlu0 %986
      %988 = vrot.lane.b32.xlu0 %v796, 58
      %v989 = vpop.permute.xlu0 %988
      %990 = vrot.lane.b32.xlu0 %v803, 58
      %v991 = vpop.permute.xlu0 %990
      %992 = vrot.lane.b32.xlu0 %v810, 58
      %v993 = vpop.permute.xlu0 %992
      %994 = vrot.lane.b32.xlu0 %v817, 58
      %v995 = vpop.permute.xlu0 %994
      %996 = vrot.lane.b32.xlu0 %v824, 58
      %v997 = vpop.permute.xlu0 %996
      %998 = vrot.lane.b32.xlu0 %v831, 58
      %v999 = vpop.permute.xlu0 %998
      %vm1000 = vcmask 474112
      %v1001 = vsel %vm1000, %v987, %v989
      %v1002 = vsel %vm1000, %v989, %v991
      %v1003 = vsel %vm1000, %v991, %v993
      %v1004 = vsel %vm1000, %v993, %v995
      %v1005 = vsel %vm1000, %v995, %v997
      %v1006 = vsel %vm1000, %v997, %v999
      %v1014 = vmul.bf16 %v703, %v987
      %v1015 = vmul.bf16 %v689, %v1001
      %v1016 = vmul.bf16 %v690, %v1002
      %v1017 = vmul.bf16 %v691, %v1003
      %v1018 = vmul.bf16 %v692, %v1004
      %v1019 = vmul.bf16 %v693, %v1005
      %v1020 = vmul.bf16 %v707, %v1006
      %v1023 = vrot.slane %v703, 6
      %v1024 = vrot.slane %v689, 6
      %v1025 = vrot.slane %v690, 6
      %v1026 = vrot.slane %v691, 6
      %v1027 = vrot.slane %v692, 6
      %v1028 = vrot.slane %v693, 6
      %v1029 = vrot.slane %v707, 6
      %1030 = vrot.lane.b32.xlu0 %v1023, 127
      %v1031 = vpop.permute.xlu0 %1030
      %1032 = vrot.lane.b32.xlu0 %v1024, 127
      %v1033 = vpop.permute.xlu0 %1032
      %1034 = vrot.lane.b32.xlu0 %v1025, 127
      %v1035 = vpop.permute.xlu0 %1034
      %1036 = vrot.lane.b32.xlu0 %v1026, 127
      %v1037 = vpop.permute.xlu0 %1036
      %1038 = vrot.lane.b32.xlu0 %v1027, 127
      %v1039 = vpop.permute.xlu0 %1038
      %1040 = vrot.lane.b32.xlu0 %v1028, 127
      %v1041 = vpop.permute.xlu0 %1040
      %1042 = vrot.lane.b32.xlu0 %v1029, 127
      %v1043 = vpop.permute.xlu0 %1042
      %vm1044 = vcmask 1039360
      %v1045 = vsel %vm1044, %v1031, %v1033
      %v1046 = vsel %vm1044, %v1033, %v1035
      %v1047 = vsel %vm1044, %v1035, %v1037
      %v1048 = vsel %vm1044, %v1037, %v1039
      %v1049 = vsel %vm1044, %v1039, %v1041
      %v1050 = vsel %vm1044, %v1041, %v1043
      %v1058 = vrot.slane %v867, 4
      %v1059 = vrot.slane %v868, 4
      %v1060 = vrot.slane %v869, 4
      %v1061 = vrot.slane %v870, 4
      %v1062 = vrot.slane %v871, 4
      %v1063 = vrot.slane %v872, 4
      %v1064 = vrot.slane %v873, 4
      %1065 = vrot.lane.b32.xlu0 %v1058, 126
      %v1066 = vpop.permute.xlu0 %1065
      %1067 = vrot.lane.b32.xlu0 %v1059, 126
      %v1068 = vpop.permute.xlu0 %1067
      %1069 = vrot.lane.b32.xlu0 %v1060, 126
      %v1070 = vpop.permute.xlu0 %1069
      %1071 = vrot.lane.b32.xlu0 %v1061, 126
      %v1072 = vpop.permute.xlu0 %1071
      %1073 = vrot.lane.b32.xlu0 %v1062, 126
      %v1074 = vpop.permute.xlu0 %1073
      %1075 = vrot.lane.b32.xlu0 %v1063, 126
      %v1076 = vpop.permute.xlu0 %1075
      %1077 = vrot.lane.b32.xlu0 %v1064, 126
      %v1078 = vpop.permute.xlu0 %1077
      %vm1079 = vcmask 1031168
      %v1080 = vsel %vm1079, %v1066, %v1068
      %v1081 = vsel %vm1079, %v1068, %v1070
      %v1082 = vsel %vm1079, %v1070, %v1072
      %v1083 = vsel %vm1079, %v1072, %v1074
      %v1084 = vsel %vm1079, %v1074, %v1076
      %v1085 = vsel %vm1079, %v1076, %v1078
      %v1093 = vrot.slane %v909, 2
      %v1094 = vrot.slane %v910, 2
      %v1095 = vrot.slane %v911, 2
      %v1096 = vrot.slane %v912, 2
      %v1097 = vrot.slane %v913, 2
      %v1098 = vrot.slane %v914, 2
      %v1099 = vrot.slane %v915, 2
      %1100 = vrot.lane.b32.xlu0 %v1093, 100
      %v1101 = vpop.permute.xlu0 %1100
      %1102 = vrot.lane.b32.xlu0 %v1094, 100
      %v1103 = vpop.permute.xlu0 %1102
      %1104 = vrot.lane.b32.xlu0 %v1095, 100
      %v1105 = vpop.permute.xlu0 %1104
      %1106 = vrot.lane.b32.xlu0 %v1096, 100
      %v1107 = vpop.permute.xlu0 %1106
      %1108 = vrot.lane.b32.xlu0 %v1097, 100
      %v1109 = vpop.permute.xlu0 %1108
      %1110 = vrot.lane.b32.xlu0 %v1098, 100
      %v1111 = vpop.permute.xlu0 %1110
      %1112 = vrot.lane.b32.xlu0 %v1099, 100
      %v1113 = vpop.permute.xlu0 %1112
      %vm1114 = vcmask 818176
      %v1115 = vsel %vm1114, %v1101, %v1103
      %v1116 = vsel %vm1114, %v1103, %v1105
      %v1117 = vsel %vm1114, %v1105, %v1107
      %v1118 = vsel %vm1114, %v1107, %v1109
      %v1119 = vsel %vm1114, %v1109, %v1111
      %v1120 = vsel %vm1114, %v1111, %v1113
      %1121 = vrot.lane.b32.xlu0 %v703, 99
      %v1122 = vpop.permute.xlu0 %1121
      %1123 = vrot.lane.b32.xlu0 %v689, 99
      %v1124 = vpop.permute.xlu0 %1123
      %1125 = vrot.lane.b32.xlu0 %v690, 99
      %v1126 = vpop.permute.xlu0 %1125
      %1127 = vrot.lane.b32.xlu0 %v691, 99
      %v1128 = vpop.permute.xlu0 %1127
      %1129 = vrot.lane.b32.xlu0 %v692, 99
      %v1130 = vpop.permute.xlu0 %1129
      %1131 = vrot.lane.b32.xlu0 %v693, 99
      %v1132 = vpop.permute.xlu0 %1131
      %1133 = vrot.lane.b32.xlu0 %v707, 99
      %v1134 = vpop.permute.xlu0 %1133
      %vm1135 = vcmask 809984
      %v1136 = vsel %vm1135, %v1122, %v1124
      %v1137 = vsel %vm1135, %v1124, %v1126
      %v1138 = vsel %vm1135, %v1126, %v1128
      %v1139 = vsel %vm1135, %v1128, %v1130
      %v1140 = vsel %vm1135, %v1130, %v1132
      %v1141 = vsel %vm1135, %v1132, %v1134
      %v1149 = vrot.slane %v944, 6
      %v1150 = vrot.slane %v945, 6
      %v1151 = vrot.slane %v946, 6
      %v1152 = vrot.slane %v947, 6
      %v1153 = vrot.slane %v948, 6
      %v1154 = vrot.slane %v949, 6
      %v1155 = vrot.slane %v950, 6
      %1156 = vrot.lane.b32.xlu0 %v1149, 98
      %v1157 = vpop.permute.xlu0 %1156
      %1158 = vrot.lane.b32.xlu0 %v1150, 98
      %v1159 = vpop.permute.xlu0 %1158
      %1160 = vrot.lane.b32.xlu0 %v1151, 98
      %v1161 = vpop.permute.xlu0 %1160
      %1162 = vrot.lane.b32.xlu0 %v1152, 98
      %v1163 = vpop.permute.xlu0 %1162
      %1164 = vrot.lane.b32.xlu0 %v1153, 98
      %v1165 = vpop.permute.xlu0 %1164
      %1166 = vrot.lane.b32.xlu0 %v1154, 98
      %v1167 = vpop.permute.xlu0 %1166
      %1168 = vrot.lane.b32.xlu0 %v1155, 98
      %v1169 = vpop.permute.xlu0 %1168
      %vm1170 = vcmask 801792
      %v1171 = vsel %vm1170, %v1157, %v1159
      %v1172 = vsel %vm1170, %v1159, %v1161
      %v1173 = vsel %vm1170, %v1161, %v1163
      %v1174 = vsel %vm1170, %v1163, %v1165
      %v1175 = vsel %vm1170, %v1165, %v1167
      %v1176 = vsel %vm1170, %v1167, %v1169
      %v1184 = vrot.slane %v979, 4
      %v1185 = vrot.slane %v980, 4
      %v1186 = vrot.slane %v981, 4
      %v1187 = vrot.slane %v982, 4
      %v1188 = vrot.slane %v983, 4
      %v1189 = vrot.slane %v984, 4
      %v1190 = vrot.slane %v985, 4
      %1191 = vrot.lane.b32.xlu0 %v1184, 72
      %v1192 = vpop.permute.xlu0 %1191
      %1193 = vrot.lane.b32.xlu0 %v1185, 72
      %v1194 = vpop.permute.xlu0 %1193
      %1195 = vrot.lane.b32.xlu0 %v1186, 72
      %v1196 = vpop.permute.xlu0 %1195
      %1197 = vrot.lane.b32.xlu0 %v1187, 72
      %v1198 = vpop.permute.xlu0 %1197
      %1199 = vrot.lane.b32.xlu0 %v1188, 72
      %v1200 = vpop.permute.xlu0 %1199
      %1201 = vrot.lane.b32.xlu0 %v1189, 72
      %v1202 = vpop.permute.xlu0 %1201
      %1203 = vrot.lane.b32.xlu0 %v1190, 72
      %v1204 = vpop.permute.xlu0 %1203
      %vm1205 = vcmask 588800
      %v1206 = vsel %vm1205, %v1192, %v1194
      %v1207 = vsel %vm1205, %v1194, %v1196
      %v1208 = vsel %vm1205, %v1196, %v1198
      %v1209 = vsel %vm1205, %v1198, %v1200
      %v1210 = vsel %vm1205, %v1200, %v1202
      %v1211 = vsel %vm1205, %v1202, %v1204
      %v1212 = vrot.slane %v703, 2
      %v1213 = vrot.slane %v689, 2
      %v1214 = vrot.slane %v690, 2
      %v1215 = vrot.slane %v691, 2
      %v1216 = vrot.slane %v692, 2
      %v1217 = vrot.slane %v693, 2
      %v1218 = vrot.slane %v707, 2
      %1219 = vrot.lane.b32.xlu0 %v1212, 71
      %v1220 = vpop.permute.xlu0 %1219
      %1221 = vrot.lane.b32.xlu0 %v1213, 71
      %v1222 = vpop.permute.xlu0 %1221
      %1223 = vrot.lane.b32.xlu0 %v1214, 71
      %v1224 = vpop.permute.xlu0 %1223
      %1225 = vrot.lane.b32.xlu0 %v1215, 71
      %v1226 = vpop.permute.xlu0 %1225
      %1227 = vrot.lane.b32.xlu0 %v1216, 71
      %v1228 = vpop.permute.xlu0 %1227
      %1229 = vrot.lane.b32.xlu0 %v1217, 71
      %v1230 = vpop.permute.xlu0 %1229
      %1231 = vrot.lane.b32.xlu0 %v1218, 71
      %v1232 = vpop.permute.xlu0 %1231
      %vm1233 = vcmask 580608
      %v1234 = vsel %vm1233, %v1220, %v1222
      %v1235 = vsel %vm1233, %v1222, %v1224
      %v1236 = vsel %vm1233, %v1224, %v1226
      %v1237 = vsel %vm1233, %v1226, %v1228
      %v1238 = vsel %vm1233, %v1228, %v1230
      %v1239 = vsel %vm1233, %v1230, %v1232
      %1247 = vrot.lane.b32.xlu0 %v1014, 70
      %v1248 = vpop.permute.xlu0 %1247
      %1249 = vrot.lane.b32.xlu0 %v1015, 70
      %v1250 = vpop.permute.xlu0 %1249
      %1251 = vrot.lane.b32.xlu0 %v1016, 70
      %v1252 = vpop.permute.xlu0 %1251
      %1253 = vrot.lane.b32.xlu0 %v1017, 70
      %v1254 = vpop.permute.xlu0 %1253
      %1255 = vrot.lane.b32.xlu0 %v1018, 70
      %v1256 = vpop.permute.xlu0 %1255
      %1257 = vrot.lane.b32.xlu0 %v1019, 70
      %v1258 = vpop.permute.xlu0 %1257
      %1259 = vrot.lane.b32.xlu0 %v1020, 70
      %v1260 = vpop.permute.xlu0 %1259
      %vm1261 = vcmask 572416
      %v1262 = vsel %vm1261, %v1248, %v1250
      %v1263 = vsel %vm1261, %v1250, %v1252
      %v1264 = vsel %vm1261, %v1252, %v1254
      %v1265 = vsel %vm1261, %v1254, %v1256
      %v1266 = vsel %vm1261, %v1256, %v1258
      %v1267 = vsel %vm1261, %v1258, %v1260
      %vm1268 = vcmask 1041408
      %v1271 = vsel %vm1268, %v776, %v1045
      %v1274 = vsel %vm1268, %v777, %v1046
      %v1277 = vsel %vm1268, %v778, %v1047
      %v1280 = vsel %vm1268, %v779, %v1048
      %v1283 = vsel %vm1268, %v780, %v1049
      %v1286 = vsel %vm1268, %v781, %v1050
      %v1289 = vsel %vm1268, %v782, %v1043
      %vm1290 = vcmask 1043456
      %v1292 = vsel %vm1290, %v1271, %v1080
      %v1294 = vsel %vm1290, %v1274, %v1081
      %v1296 = vsel %vm1290, %v1277, %v1082
      %v1298 = vsel %vm1290, %v1280, %v1083
      %v1300 = vsel %vm1290, %v1283, %v1084
      %v1302 = vsel %vm1290, %v1286, %v1085
      %v1304 = vsel %vm1290, %v1289, %v1078
      %vm1305 = vcmask 1045504
      %v1307 = vsel %vm1305, %v1292, %v1115
      %v1310 = vsel %vm1305, %v1294, %v1116
      %v1313 = vsel %vm1305, %v1296, %v1117
      %v1316 = vsel %vm1305, %v1298, %v1118
      %v1319 = vsel %vm1305, %v1300, %v1119
      %v1322 = vsel %vm1305, %v1302, %v1120
      %v1325 = vsel %vm1305, %v1304, %v1113
      %v1329 = vsel %vm1268, %v1136, %v1171
      %v1332 = vsel %vm1268, %v1137, %v1172
      %v1335 = vsel %vm1268, %v1138, %v1173
      %v1338 = vsel %vm1268, %v1139, %v1174
      %v1341 = vsel %vm1268, %v1140, %v1175
      %v1344 = vsel %vm1268, %v1141, %v1176
      %v1347 = vsel %vm1268, %v1134, %v1169
      %v1349 = vsel %vm1290, %v1329, %v1206
      %v1351 = vsel %vm1290, %v1332, %v1207
      %v1353 = vsel %vm1290, %v1335, %v1208
      %v1355 = vsel %vm1290, %v1338, %v1209
      %v1357 = vsel %vm1290, %v1341, %v1210
      %v1359 = vsel %vm1290, %v1344, %v1211
      %v1361 = vsel %vm1290, %v1347, %v1204
      %v1363 = vsel %vm1305, %v1349, %v1234
      %v1366 = vsel %vm1305, %v1351, %v1235
      %v1369 = vsel %vm1305, %v1353, %v1236
      %v1372 = vsel %vm1305, %v1355, %v1237
      %v1375 = vsel %vm1305, %v1357, %v1238
      %v1378 = vsel %vm1305, %v1359, %v1239
      %v1381 = vsel %vm1305, %v1361, %v1232
      %1384 = vset.pattern.permute.xlu0 0
      %1385 = vperm.xlu0 %1384, %v637
      %v1386 = vpop.permute.xlu0 %1385
      %1389 = vset.pattern.permute.xlu0 0
      %1390 = vperm.xlu0 %1389, %v638
      %v1391 = vpop.permute.xlu0 %1390
      %v1395 = vunpack.c.l.b16 %v635
      %v1396 = vunpack.c.l.b16 %v636
      %v1397 = vpack.c.b16 %v1396, %v1395
      %vm1398 = vcmask 293888
      %v1400 = vsel %vm1398, %v1397, 0
      %v1403 = vsel %vm1268, %v1262, 0
      %v1406 = vsel %vm1268, %v1263, 0
      %v1409 = vsel %vm1268, %v1264, 0
      %v1412 = vsel %vm1268, %v1265, 0
      %v1415 = vsel %vm1268, %v1266, 0
      %v1418 = vsel %vm1268, %v1267, 0
      %v1421 = vsel %vm1268, %v1260, 0
      %1423 = vmatprep.subr.bf16.mxu0 %v1310
      %1424 = vmatpush1.bf16.msra.mxu0 %v1307
      %1425 = vmatprep.subr.bf16.mxu0 %v1366
      %1426 = vmatpush1.bf16.msra.mxu0 %v1363
      %1427 = vmatprep.subr.bf16.mxu0 %v1406
      %1428 = vmatpush1.bf16.msra.mxu0 %v1403
      %1429 = vmatprep.subr.bf16.mxu0 0
      %1430 = vmatpush1.bf16.msra.mxu0 0
      %1431 = vmatprep.subr.bf16.mxu0 0
      %1432 = vmatpush1.bf16.msra.mxu0 0
      %1433 = vmatprep.subr.bf16.mxu0 0
      %1434 = vmatpush1.bf16.msra.mxu0 0
      %1435 = vmatprep.subr.bf16.mxu0 0
      %1436 = vmatpush1.bf16.msra.mxu0 0
      %1437 = vmatprep.subr.bf16.mxu0 0
      %1438 = vmatpush1.bf16.msra.mxu0 0
      %1439 = vmatprep.subr.bf16.mxu0 0
      %1440 = vmatpush1.bf16.msra.mxu0 0
      %1441 = vmatprep.subr.bf16.mxu0 0
      %1442 = vmatpush1.bf16.msra.mxu0 0
      %1443 = vmatprep.subr.bf16.mxu0 0
      %1444 = vmatpush1.bf16.msra.mxu0 0
      %1445 = vmatprep.subr.bf16.mxu0 0
      %1446 = vmatpush1.bf16.msra.mxu0 0
      %1447 = vmatprep.subr.bf16.mxu0 0
      %1448 = vmatpush1.bf16.msra.mxu0 0
      %1449 = vmatprep.subr.bf16.mxu0 0
      %1450 = vmatpush1.bf16.msra.mxu0 0
      %1451 = vmatprep.subr.bf16.mxu0 0
      %1452 = vmatpush1.bf16.msra.mxu0 0
      %1453 = vmatprep.subr.bf16.mxu0 0
      %1454 = vmatpush1.bf16.msra.mxu0 0
      %1455 = vmatprep.mubr.bf16.mxu0 0
      %1456 = vmatmul.mubr.bf16.gmra.mrb[0].mxu0 %v1400
      %v1457 = vpop.f32.mrb[0].mxu0
      %v1458 = vadd.f32 %v1386, %v1457
      %v1459 = vpop.f32.mrb[0].mxu0
      %v1460 = vadd.f32 %v1386, %v1459
      %v1461 = vpop.f32.mrb[0].mxu0
      %v1462 = vadd.f32 %v1391, %v1461
      %v1463 = vpop.f32.mrb[0].mxu0
      %v1464 = vadd.f32 %v1391, %v1463
      %1465 = vdwg.mxu0
      %1466 = vmatprep.subr.bf16.mxu0 %v1316
      %1467 = vmatpush1.bf16.msra.mxu0 %v1313
      %1468 = vmatprep.subr.bf16.mxu0 %v1372
      %1469 = vmatpush1.bf16.msra.mxu0 %v1369
      %1470 = vmatprep.subr.bf16.mxu0 %v1412
      %1471 = vmatpush1.bf16.msra.mxu0 %v1409
      %1472 = vmatprep.subr.bf16.mxu0 0
      %1473 = vmatpush1.bf16.msra.mxu0 0
      %1474 = vmatprep.subr.bf16.mxu0 0
      %1475 = vmatpush1.bf16.msra.mxu0 0
      %1476 = vmatprep.subr.bf16.mxu0 0
      %1477 = vmatpush1.bf16.msra.mxu0 0
      %1478 = vmatprep.subr.bf16.mxu0 0
      %1479 = vmatpush1.bf16.msra.mxu0 0
      %1480 = vmatprep.subr.bf16.mxu0 0
      %1481 = vmatpush1.bf16.msra.mxu0 0
      %1482 = vmatprep.subr.bf16.mxu0 0
      %1483 = vmatpush1.bf16.msra.mxu0 0
      %1484 = vmatprep.subr.bf16.mxu0 0
      %1485 = vmatpush1.bf16.msra.mxu0 0
      %1486 = vmatprep.subr.bf16.mxu0 0
      %1487 = vmatpush1.bf16.msra.mxu0 0
      %1488 = vmatprep.subr.bf16.mxu0 0
      %1489 = vmatpush1.bf16.msra.mxu0 0
      %1490 = vmatprep.subr.bf16.mxu0 0
      %1491 = vmatpush1.bf16.msra.mxu0 0
      %1492 = vmatprep.subr.bf16.mxu0 0
      %1493 = vmatpush1.bf16.msra.mxu0 0
      %1494 = vmatprep.subr.bf16.mxu0 0
      %1495 = vmatpush1.bf16.msra.mxu0 0
      %1496 = vmatprep.subr.bf16.mxu0 0
      %1497 = vmatpush1.bf16.msra.mxu0 0
      %1498 = vmatprep.mubr.bf16.mxu0 0
      %1499 = vmatmul.mubr.bf16.gmra.mrb[0].mxu0 %v1400
      %v1500 = vpop.f32.mrb[0].mxu0
      %v1501 = vadd.f32 %v1386, %v1500
      %v1502 = vpop.f32.mrb[0].mxu0
      %v1503 = vadd.f32 %v1386, %v1502
      %v1504 = vpop.f32.mrb[0].mxu0
      %v1505 = vadd.f32 %v1391, %v1504
      %v1506 = vpop.f32.mrb[0].mxu0
      %v1507 = vadd.f32 %v1391, %v1506
      %1508 = vdwg.mxu0
      %1509 = vmatprep.subr.bf16.mxu0 %v1322
      %1510 = vmatpush1.bf16.msra.mxu0 %v1319
      %1511 = vmatprep.subr.bf16.mxu0 %v1378
      %1512 = vmatpush1.bf16.msra.mxu0 %v1375
      %1513 = vmatprep.subr.bf16.mxu0 %v1418
      %1514 = vmatpush1.bf16.msra.mxu0 %v1415
      %1515 = vmatprep.subr.bf16.mxu0 0
      %1516 = vmatpush1.bf16.msra.mxu0 0
      %1517 = vmatprep.subr.bf16.mxu0 0
      %1518 = vmatpush1.bf16.msra.mxu0 0
      %1519 = vmatprep.subr.bf16.mxu0 0
      %1520 = vmatpush1.bf16.msra.mxu0 0
      %1521 = vmatprep.subr.bf16.mxu0 0
      %1522 = vmatpush1.bf16.msra.mxu0 0
      %1523 = vmatprep.subr.bf16.mxu0 0
      %1524 = vmatpush1.bf16.msra.mxu0 0
      %1525 = vmatprep.subr.bf16.mxu0 0
      %1526 = vmatpush1.bf16.msra.mxu0 0
      %1527 = vmatprep.subr.bf16.mxu0 0
      %1528 = vmatpush1.bf16.msra.mxu0 0
      %1529 = vmatprep.subr.bf16.mxu0 0
      %1530 = vmatpush1.bf16.msra.mxu0 0
      %1531 = vmatprep.subr.bf16.mxu0 0
      %1532 = vmatpush1.bf16.msra.mxu0 0
      %1533 = vmatprep.subr.bf16.mxu0 0
      %1534 = vmatpush1.bf16.msra.mxu0 0
      %1535 = vmatprep.subr.bf16.mxu0 0
      %1536 = vmatpush1.bf16.msra.mxu0 0
      %1537 = vmatprep.subr.bf16.mxu0 0
      %1538 = vmatpush1.bf16.msra.mxu0 0
      %1539 = vmatprep.subr.bf16.mxu0 0
      %1540 = vmatpush1.bf16.msra.mxu0 0
      %1541 = vmatprep.mubr.bf16.mxu0 0
      %1542 = vmatmul.mubr.bf16.gmra.mrb[0].mxu0 %v1400
      %v1543 = vpop.f32.mrb[0].mxu0
      %v1544 = vadd.f32 %v1386, %v1543
      %v1545 = vpop.f32.mrb[0].mxu0
      %v1546 = vadd.f32 %v1386, %v1545
      %v1547 = vpop.f32.mrb[0].mxu0
      %v1548 = vadd.f32 %v1391, %v1547
      %v1549 = vpop.f32.mrb[0].mxu0
      %v1550 = vadd.f32 %v1391, %v1549
      %1551 = vdwg.mxu0
      %1552 = vmatprep.subr.bf16.mxu0 0
      %1553 = vmatpush1.bf16.msra.mxu0 %v1325
      %1554 = vmatprep.subr.bf16.mxu0 0
      %1555 = vmatpush1.bf16.msra.mxu0 %v1381
      %1556 = vmatprep.subr.bf16.mxu0 0
      %1557 = vmatpush1.bf16.msra.mxu0 %v1421
      %1558 = vmatprep.subr.bf16.mxu0 0
      %1559 = vmatpush1.bf16.msra.mxu0 0
      %1560 = vmatprep.subr.bf16.mxu0 0
      %1561 = vmatpush1.bf16.msra.mxu0 0
      %1562 = vmatprep.subr.bf16.mxu0 0
      %1563 = vmatpush1.bf16.msra.mxu0 0
      %1564 = vmatprep.subr.bf16.mxu0 0
      %1565 = vmatpush1.bf16.msra.mxu0 0
      %1566 = vmatprep.subr.bf16.mxu0 0
      %1567 = vmatpush1.bf16.msra.mxu0 0
      %1568 = vmatprep.subr.bf16.mxu0 0
      %1569 = vmatpush1.bf16.msra.mxu0 0
      %1570 = vmatprep.subr.bf16.mxu0 0
      %1571 = vmatpush1.bf16.msra.mxu0 0
      %1572 = vmatprep.subr.bf16.mxu0 0
      %1573 = vmatpush1.bf16.msra.mxu0 0
      %1574 = vmatprep.subr.bf16.mxu0 0
      %1575 = vmatpush1.bf16.msra.mxu0 0
      %1576 = vmatprep.subr.bf16.mxu0 0
      %1577 = vmatpush1.bf16.msra.mxu0 0
      %1578 = vmatprep.subr.bf16.mxu0 0
      %1579 = vmatpush1.bf16.msra.mxu0 0
      %1580 = vmatprep.subr.bf16.mxu0 0
      %1581 = vmatpush1.bf16.msra.mxu0 0
      %1582 = vmatprep.subr.bf16.mxu0 0
      %1583 = vmatpush1.bf16.msra.mxu0 0
      %1584 = vmatprep.mubr.bf16.mxu0 0
      %1585 = vmatmul.mubr.bf16.gmra.mrb[0].mxu0 %v1400
      %v1586 = vpop.f32.mrb[0].mxu0
      %v1587 = vadd.f32 %v1386, %v1586
      %v1588 = vpop.f32.mrb[0].mxu0
      %v1589 = vpop.f32.mrb[0].mxu0
      %v1590 = vadd.f32 %v1391, %v1589
      %v1591 = vpop.f32.mrb[0].mxu0
      %1592 = vdwg.mxu0
      %vm1593 = vcmp.gt.f32.partialorder %v1458, 0.0
      %vm1594 = vcmp.gt.f32.partialorder %v1460, 0.0
      %vm1595 = vcmp.gt.f32.partialorder %v1501, 0.0
      %vm1596 = vcmp.gt.f32.partialorder %v1503, 0.0
      %vm1597 = vcmp.gt.f32.partialorder %v1544, 0.0
      %vm1598 = vcmp.gt.f32.partialorder %v1546, 0.0
      %vm1599 = vcmp.gt.f32.partialorder %v1587, 0.0
      %vm1600 = vcmp.gt.f32.partialorder %v1462, 0.0
      %vm1601 = vcmp.gt.f32.partialorder %v1464, 0.0
      %vm1602 = vcmp.gt.f32.partialorder %v1505, 0.0
      %vm1603 = vcmp.gt.f32.partialorder %v1507, 0.0
      %vm1604 = vcmp.gt.f32.partialorder %v1548, 0.0
      %vm1605 = vcmp.gt.f32.partialorder %v1550, 0.0
      %vm1606 = vcmp.gt.f32.partialorder %v1590, 0.0
      %v1607 = vmul.f32 %v1458, 0.01
      %v1608 = vmul.f32 %v1460, 0.01
      %v1609 = vmul.f32 %v1501, 0.01
      %v1610 = vmul.f32 %v1503, 0.01
      %v1611 = vmul.f32 %v1544, 0.01
      %v1612 = vmul.f32 %v1546, 0.01
      %v1613 = vmul.f32 %v1587, 0.01
      %v1614 = vmul.f32 %v1462, 0.01
      %v1615 = vmul.f32 %v1464, 0.01
      %v1616 = vmul.f32 %v1505, 0.01
      %v1617 = vmul.f32 %v1507, 0.01
      %v1618 = vmul.f32 %v1548, 0.01
      %v1619 = vmul.f32 %v1550, 0.01
      %v1620 = vmul.f32 %v1590, 0.01
      %v1621 = vsel %vm1593, %v1458, %v1607
      %v1622 = vsel %vm1594, %v1460, %v1608
      %v1623 = vsel %vm1595, %v1501, %v1609
      %v1624 = vsel %vm1596, %v1503, %v1610
      %v1625 = vsel %vm1597, %v1544, %v1611
      %v1626 = vsel %vm1598, %v1546, %v1612
      %v1627 = vsel %vm1599, %v1587, %v1613
      %v1628 = vsel %vm1600, %v1462, %v1614
      %v1629 = vsel %vm1601, %v1464, %v1615
      %v1630 = vsel %vm1602, %v1505, %v1616
      %v1631 = vsel %vm1603, %v1507, %v1617
      %v1632 = vsel %vm1604, %v1548, %v1618
      %v1633 = vsel %vm1605, %v1550, %v1619
      %v1634 = vsel %vm1606, %v1590, %v1620
      %v1635 = vld [vmem:[%s2 + $0x10] sm:$0xff]
      %v1636 = vld [vmem:[%s2 + $0x18] sm:$0xff]
      %v1637 = vld [vmem:[%s3 + $0x10] sm:$0xff]
      %v1638 = vld [vmem:[%s3 + $0x18] sm:$0xff]
      %v1639 = vpack.c.bf16 %v1628, %v1621
      %v1640 = vpack.c.bf16 %v1629, %v1622
      %v1641 = vpack.c.bf16 %v1630, %v1623
      %v1642 = vpack.c.bf16 %v1631, %v1624
      %v1643 = vpack.c.bf16 %v1632, %v1625
      %v1644 = vpack.c.bf16 %v1633, %v1626
      %v1645 = vpack.c.bf16 %v1634, %v1627
      %1653 = vrot.lane.b32.xlu0 %v1639, 29
      %v1654 = vpop.permute.xlu0 %1653
      %1655 = vrot.lane.b32.xlu0 %v1640, 29
      %v1656 = vpop.permute.xlu0 %1655
      %1657 = vrot.lane.b32.xlu0 %v1641, 29
      %v1658 = vpop.permute.xlu0 %1657
      %1659 = vrot.lane.b32.xlu0 %v1642, 29
      %v1660 = vpop.permute.xlu0 %1659
      %1661 = vrot.lane.b32.xlu0 %v1643, 29
      %v1662 = vpop.permute.xlu0 %1661
      %1663 = vrot.lane.b32.xlu0 %v1644, 29
      %v1664 = vpop.permute.xlu0 %1663
      %1665 = vrot.lane.b32.xlu0 %v1645, 29
      %v1666 = vpop.permute.xlu0 %1665
      %v1667 = vsel %vm688, %v1654, %v1656
      %v1668 = vsel %vm688, %v1656, %v1658
      %v1669 = vsel %vm688, %v1658, %v1660
      %v1670 = vsel %vm688, %v1660, %v1662
      %v1671 = vsel %vm688, %v1662, %v1664
      %v1672 = vsel %vm688, %v1664, %v1666
      %v1679 = vsel %vm700, 0, %v1654
      %v1682 = vsel %vm705, %v1672, 0
      %v1684 = vmul.bf16 %v1679, %v733
      %v1685 = vmul.bf16 %v1667, %v740
      %v1686 = vmul.bf16 %v1668, %v747
      %v1687 = vmul.bf16 %v1669, %v754
      %v1688 = vmul.bf16 %v1670, %v761
      %v1689 = vmul.bf16 %v1671, %v768
      %v1690 = vmul.bf16 %v1682, %v775
      %v1691 = vmul.bf16 %v1679, %v840
      %v1692 = vmul.bf16 %v1667, %v854
      %v1693 = vmul.bf16 %v1668, %v855
      %v1694 = vmul.bf16 %v1669, %v856
      %v1695 = vmul.bf16 %v1670, %v857
      %v1696 = vmul.bf16 %v1671, %v858
      %v1697 = vmul.bf16 %v1682, %v859
      %v1698 = vmul.bf16 %v1679, %v882
      %v1699 = vmul.bf16 %v1667, %v896
      %v1700 = vmul.bf16 %v1668, %v897
      %v1701 = vmul.bf16 %v1669, %v898
      %v1702 = vmul.bf16 %v1670, %v899
      %v1703 = vmul.bf16 %v1671, %v900
      %v1704 = vmul.bf16 %v1682, %v901
      %v1705 = vmul.bf16 %v1679, %v917
      %v1706 = vmul.bf16 %v1667, %v931
      %v1707 = vmul.bf16 %v1668, %v932
      %v1708 = vmul.bf16 %v1669, %v933
      %v1709 = vmul.bf16 %v1670, %v934
      %v1710 = vmul.bf16 %v1671, %v935
      %v1711 = vmul.bf16 %v1682, %v936
      %v1712 = vmul.bf16 %v1679, %v952
      %v1713 = vmul.bf16 %v1667, %v966
      %v1714 = vmul.bf16 %v1668, %v967
      %v1715 = vmul.bf16 %v1669, %v968
      %v1716 = vmul.bf16 %v1670, %v969
      %v1717 = vmul.bf16 %v1671, %v970
      %v1718 = vmul.bf16 %v1682, %v971
      %v1719 = vmul.bf16 %v1679, %v987
      %v1720 = vmul.bf16 %v1667, %v1001
      %v1721 = vmul.bf16 %v1668, %v1002
      %v1722 = vmul.bf16 %v1669, %v1003
      %v1723 = vmul.bf16 %v1670, %v1004
      %v1724 = vmul.bf16 %v1671, %v1005
      %v1725 = vmul.bf16 %v1682, %v1006
      %1728 = vrot.lane.b32.xlu0 %v1679, 127
      %v1729 = vpop.permute.xlu0 %1728
      %1730 = vrot.lane.b32.xlu0 %v1667, 127
      %v1731 = vpop.permute.xlu0 %1730
      %1732 = vrot.lane.b32.xlu0 %v1668, 127
      %v1733 = vpop.permute.xlu0 %1732
      %1734 = vrot.lane.b32.xlu0 %v1669, 127
      %v1735 = vpop.permute.xlu0 %1734
      %1736 = vrot.lane.b32.xlu0 %v1670, 127
      %v1737 = vpop.permute.xlu0 %1736
      %1738 = vrot.lane.b32.xlu0 %v1671, 127
      %v1739 = vpop.permute.xlu0 %1738
      %1740 = vrot.lane.b32.xlu0 %v1682, 127
      %v1741 = vpop.permute.xlu0 %1740
      %v1742 = vsel %vm1044, %v1729, %v1731
      %v1743 = vsel %vm1044, %v1731, %v1733
      %v1744 = vsel %vm1044, %v1733, %v1735
      %v1745 = vsel %vm1044, %v1735, %v1737
      %v1746 = vsel %vm1044, %v1737, %v1739
      %v1747 = vsel %vm1044, %v1739, %v1741
      %1762 = vrot.lane.b32.xlu0 %v1691, 126
      %v1763 = vpop.permute.xlu0 %1762
      %1764 = vrot.lane.b32.xlu0 %v1692, 126
      %v1765 = vpop.permute.xlu0 %1764
      %1766 = vrot.lane.b32.xlu0 %v1693, 126
      %v1767 = vpop.permute.xlu0 %1766
      %1768 = vrot.lane.b32.xlu0 %v1694, 126
      %v1769 = vpop.permute.xlu0 %1768
      %1770 = vrot.lane.b32.xlu0 %v1695, 126
      %v1771 = vpop.permute.xlu0 %1770
      %1772 = vrot.lane.b32.xlu0 %v1696, 126
      %v1773 = vpop.permute.xlu0 %1772
      %1774 = vrot.lane.b32.xlu0 %v1697, 126
      %v1775 = vpop.permute.xlu0 %1774
      %v1776 = vsel %vm1079, %v1763, %v1765
      %v1777 = vsel %vm1079, %v1765, %v1767
      %v1778 = vsel %vm1079, %v1767, %v1769
      %v1779 = vsel %vm1079, %v1769, %v1771
      %v1780 = vsel %vm1079, %v1771, %v1773
      %v1781 = vsel %vm1079, %v1773, %v1775
      %1796 = vrot.lane.b32.xlu0 %v1698, 100
      %v1797 = vpop.permute.xlu0 %1796
      %1798 = vrot.lane.b32.xlu0 %v1699, 100
      %v1799 = vpop.permute.xlu0 %1798
      %1800 = vrot.lane.b32.xlu0 %v1700, 100
      %v1801 = vpop.permute.xlu0 %1800
      %1802 = vrot.lane.b32.xlu0 %v1701, 100
      %v1803 = vpop.permute.xlu0 %1802
      %1804 = vrot.lane.b32.xlu0 %v1702, 100
      %v1805 = vpop.permute.xlu0 %1804
      %1806 = vrot.lane.b32.xlu0 %v1703, 100
      %v1807 = vpop.permute.xlu0 %1806
      %1808 = vrot.lane.b32.xlu0 %v1704, 100
      %v1809 = vpop.permute.xlu0 %1808
      %v1810 = vsel %vm1114, %v1797, %v1799
      %v1811 = vsel %vm1114, %v1799, %v1801
      %v1812 = vsel %vm1114, %v1801, %v1803
      %v1813 = vsel %vm1114, %v1803, %v1805
      %v1814 = vsel %vm1114, %v1805, %v1807
      %v1815 = vsel %vm1114, %v1807, %v1809
      %1823 = vrot.lane.b32.xlu0 %v1679, 99
      %v1824 = vpop.permute.xlu0 %1823
      %1825 = vrot.lane.b32.xlu0 %v1667, 99
      %v1826 = vpop.permute.xlu0 %1825
      %1827 = vrot.lane.b32.xlu0 %v1668, 99
      %v1828 = vpop.permute.xlu0 %1827
      %1829 = vrot.lane.b32.xlu0 %v1669, 99
      %v1830 = vpop.permute.xlu0 %1829
      %1831 = vrot.lane.b32.xlu0 %v1670, 99
      %v1832 = vpop.permute.xlu0 %1831
      %1833 = vrot.lane.b32.xlu0 %v1671, 99
      %v1834 = vpop.permute.xlu0 %1833
      %1835 = vrot.lane.b32.xlu0 %v1682, 99
      %v1836 = vpop.permute.xlu0 %1835
      %v1837 = vsel %vm1135, %v1824, %v1826
      %v1838 = vsel %vm1135, %v1826, %v1828
      %v1839 = vsel %vm1135, %v1828, %v1830
      %v1840 = vsel %vm1135, %v1830, %v1832
      %v1841 = vsel %vm1135, %v1832, %v1834
      %v1842 = vsel %vm1135, %v1834, %v1836
      %1857 = vrot.lane.b32.xlu0 %v1705, 98
      %v1858 = vpop.permute.xlu0 %1857
      %1859 = vrot.lane.b32.xlu0 %v1706, 98
      %v1860 = vpop.permute.xlu0 %1859
      %1861 = vrot.lane.b32.xlu0 %v1707, 98
      %v1862 = vpop.permute.xlu0 %1861
      %1863 = vrot.lane.b32.xlu0 %v1708, 98
      %v1864 = vpop.permute.xlu0 %1863
      %1865 = vrot.lane.b32.xlu0 %v1709, 98
      %v1866 = vpop.permute.xlu0 %1865
      %1867 = vrot.lane.b32.xlu0 %v1710, 98
      %v1868 = vpop.permute.xlu0 %1867
      %1869 = vrot.lane.b32.xlu0 %v1711, 98
      %v1870 = vpop.permute.xlu0 %1869
      %v1871 = vsel %vm1170, %v1858, %v1860
      %v1872 = vsel %vm1170, %v1860, %v1862
      %v1873 = vsel %vm1170, %v1862, %v1864
      %v1874 = vsel %vm1170, %v1864, %v1866
      %v1875 = vsel %vm1170, %v1866, %v1868
      %v1876 = vsel %vm1170, %v1868, %v1870
      %1891 = vrot.lane.b32.xlu0 %v1712, 72
      %v1892 = vpop.permute.xlu0 %1891
      %1893 = vrot.lane.b32.xlu0 %v1713, 72
      %v1894 = vpop.permute.xlu0 %1893
      %1895 = vrot.lane.b32.xlu0 %v1714, 72
      %v1896 = vpop.permute.xlu0 %1895
      %1897 = vrot.lane.b32.xlu0 %v1715, 72
      %v1898 = vpop.permute.xlu0 %1897
      %1899 = vrot.lane.b32.xlu0 %v1716, 72
      %v1900 = vpop.permute.xlu0 %1899
      %1901 = vrot.lane.b32.xlu0 %v1717, 72
      %v1902 = vpop.permute.xlu0 %1901
      %1903 = vrot.lane.b32.xlu0 %v1718, 72
      %v1904 = vpop.permute.xlu0 %1903
      %v1905 = vsel %vm1205, %v1892, %v1894
      %v1906 = vsel %vm1205, %v1894, %v1896
      %v1907 = vsel %vm1205, %v1896, %v1898
      %v1908 = vsel %vm1205, %v1898, %v1900
      %v1909 = vsel %vm1205, %v1900, %v1902
      %v1910 = vsel %vm1205, %v1902, %v1904
      %1918 = vrot.lane.b32.xlu0 %v1679, 71
      %v1919 = vpop.permute.xlu0 %1918
      %1920 = vrot.lane.b32.xlu0 %v1667, 71
      %v1921 = vpop.permute.xlu0 %1920
      %1922 = vrot.lane.b32.xlu0 %v1668, 71
      %v1923 = vpop.permute.xlu0 %1922
      %1924 = vrot.lane.b32.xlu0 %v1669, 71
      %v1925 = vpop.permute.xlu0 %1924
      %1926 = vrot.lane.b32.xlu0 %v1670, 71
      %v1927 = vpop.permute.xlu0 %1926
      %1928 = vrot.lane.b32.xlu0 %v1671, 71
      %v1929 = vpop.permute.xlu0 %1928
      %1930 = vrot.lane.b32.xlu0 %v1682, 71
      %v1931 = vpop.permute.xlu0 %1930
      %v1932 = vsel %vm1233, %v1919, %v1921
      %v1933 = vsel %vm1233, %v1921, %v1923
      %v1934 = vsel %vm1233, %v1923, %v1925
      %v1935 = vsel %vm1233, %v1925, %v1927
      %v1936 = vsel %vm1233, %v1927, %v1929
      %v1937 = vsel %vm1233, %v1929, %v1931
      %1952 = vrot.lane.b32.xlu0 %v1719, 70
      %v1953 = vpop.permute.xlu0 %1952
      %1954 = vrot.lane.b32.xlu0 %v1720, 70
      %v1955 = vpop.permute.xlu0 %1954
      %1956 = vrot.lane.b32.xlu0 %v1721, 70
      %v1957 = vpop.permute.xlu0 %1956
      %1958 = vrot.lane.b32.xlu0 %v1722, 70
      %v1959 = vpop.permute.xlu0 %1958
      %1960 = vrot.lane.b32.xlu0 %v1723, 70
      %v1961 = vpop.permute.xlu0 %1960
      %1962 = vrot.lane.b32.xlu0 %v1724, 70
      %v1963 = vpop.permute.xlu0 %1962
      %1964 = vrot.lane.b32.xlu0 %v1725, 70
      %v1965 = vpop.permute.xlu0 %1964
      %v1966 = vsel %vm1261, %v1953, %v1955
      %v1967 = vsel %vm1261, %v1955, %v1957
      %v1968 = vsel %vm1261, %v1957, %v1959
      %v1969 = vsel %vm1261, %v1959, %v1961
      %v1970 = vsel %vm1261, %v1961, %v1963
      %v1971 = vsel %vm1261, %v1963, %v1965
      %1980 = vset.pattern.permute.xlu0 0
      %1981 = vperm.xlu0 %1980, %v1637
      %v1982 = vpop.permute.xlu0 %1981
      %1985 = vset.pattern.permute.xlu0 0
      %1986 = vperm.xlu0 %1985, %v1638
      %v1987 = vpop.permute.xlu0 %1986
      %v1991 = vunpack.c.l.b16 %v1635
      %v1992 = vunpack.c.h.b16 %v1635
      %v1993 = vunpack.c.l.b16 %v1636
      %v1994 = vunpack.c.h.b16 %v1636
      %v1995 = vpack.c.b16 %v1993, %v1991
      %v1996 = vpack.c.b16 %v1994, %v1992
      %vm1998 = vcmask 130048
      %v2000 = vsel %vm1998, %v1996, 0
      %2002 = vmatprep.subr.bf16.mxu0 %v1685
      %2003 = vmatpush1.bf16.msra.mxu0 %v1684
      %2004 = vmatprep.subr.bf16.mxu0 %v1743
      %2005 = vmatpush1.bf16.msra.mxu0 %v1742
      %2006 = vmatprep.subr.bf16.mxu0 %v1777
      %2007 = vmatpush1.bf16.msra.mxu0 %v1776
      %2008 = vmatprep.subr.bf16.mxu0 %v1811
      %2009 = vmatpush1.bf16.msra.mxu0 %v1810
      %2010 = vmatprep.subr.bf16.mxu0 %v1838
      %2011 = vmatpush1.bf16.msra.mxu0 %v1837
      %2012 = vmatprep.subr.bf16.mxu0 %v1872
      %2013 = vmatpush1.bf16.msra.mxu0 %v1871
      %2014 = vmatprep.subr.bf16.mxu0 %v1906
      %2015 = vmatpush1.bf16.msra.mxu0 %v1905
      %2016 = vmatprep.subr.bf16.mxu0 %v1933
      %2017 = vmatpush1.bf16.msra.mxu0 %v1932
      %2018 = vmatprep.subr.bf16.mxu0 %v1967
      %2019 = vmatpush1.bf16.msra.mxu0 %v1966
      %2020 = vmatprep.subr.bf16.mxu0 0
      %2021 = vmatpush1.bf16.msra.mxu0 0
      %2022 = vmatprep.subr.bf16.mxu0 0
      %2023 = vmatpush1.bf16.msra.mxu0 0
      %2024 = vmatprep.subr.bf16.mxu0 0
      %2025 = vmatpush1.bf16.msra.mxu0 0
      %2026 = vmatprep.subr.bf16.mxu0 0
      %2027 = vmatpush1.bf16.msra.mxu0 0
      %2028 = vmatprep.subr.bf16.mxu0 0
      %2029 = vmatpush1.bf16.msra.mxu0 0
      %2030 = vmatprep.subr.bf16.mxu0 0
      %2031 = vmatpush1.bf16.msra.mxu0 0
      %2032 = vmatprep.subr.bf16.mxu0 0
      %2033 = vmatpush1.bf16.msra.mxu0 0
      %2034 = vmatprep.mubr.bf16.mxu0 %v2000
      %2035 = vmatmul.mubr.bf16.gmra.mrb[0].mxu0 %v1995
      %v2036 = vpop.f32.mrb[0].mxu0
      %v2037 = vadd.f32 %v1982, %v2036
      %v2038 = vpop.f32.mrb[0].mxu0
      %v2039 = vadd.f32 %v1982, %v2038
      %v2040 = vpop.f32.mrb[0].mxu0
      %v2041 = vadd.f32 %v1987, %v2040
      %v2042 = vpop.f32.mrb[0].mxu0
      %v2043 = vadd.f32 %v1987, %v2042
      %2044 = vdwg.mxu0
      %2045 = vmatprep.subr.bf16.mxu0 %v1687
      %2046 = vmatpush1.bf16.msra.mxu0 %v1686
      %2047 = vmatprep.subr.bf16.mxu0 %v1745
      %2048 = vmatpush1.bf16.msra.mxu0 %v1744
      %2049 = vmatprep.subr.bf16.mxu0 %v1779
      %2050 = vmatpush1.bf16.msra.mxu0 %v1778
      %2051 = vmatprep.subr.bf16.mxu0 %v1813
      %2052 = vmatpush1.bf16.msra.mxu0 %v1812
      %2053 = vmatprep.subr.bf16.mxu0 %v1840
      %2054 = vmatpush1.bf16.msra.mxu0 %v1839
      %2055 = vmatprep.subr.bf16.mxu0 %v1874
      %2056 = vmatpush1.bf16.msra.mxu0 %v1873
      %2057 = vmatprep.subr.bf16.mxu0 %v1908
      %2058 = vmatpush1.bf16.msra.mxu0 %v1907
      %2059 = vmatprep.subr.bf16.mxu0 %v1935
      %2060 = vmatpush1.bf16.msra.mxu0 %v1934
      %2061 = vmatprep.subr.bf16.mxu0 %v1969
      %2062 = vmatpush1.bf16.msra.mxu0 %v1968
      %2063 = vmatprep.subr.bf16.mxu0 0
      %2064 = vmatpush1.bf16.msra.mxu0 0
      %2065 = vmatprep.subr.bf16.mxu0 0
      %2066 = vmatpush1.bf16.msra.mxu0 0
      %2067 = vmatprep.subr.bf16.mxu0 0
      %2068 = vmatpush1.bf16.msra.mxu0 0
      %2069 = vmatprep.subr.bf16.mxu0 0
      %2070 = vmatpush1.bf16.msra.mxu0 0
      %2071 = vmatprep.subr.bf16.mxu0 0
      %2072 = vmatpush1.bf16.msra.mxu0 0
      %2073 = vmatprep.subr.bf16.mxu0 0
      %2074 = vmatpush1.bf16.msra.mxu0 0
      %2075 = vmatprep.subr.bf16.mxu0 0
      %2076 = vmatpush1.bf16.msra.mxu0 0
      %2077 = vmatprep.mubr.bf16.mxu0 %v2000
      %2078 = vmatmul.mubr.bf16.gmra.mrb[0].mxu0 %v1995
      %v2079 = vpop.f32.mrb[0].mxu0
      %v2080 = vadd.f32 %v1982, %v2079
      %v2081 = vpop.f32.mrb[0].mxu0
      %v2082 = vadd.f32 %v1982, %v2081
      %v2083 = vpop.f32.mrb[0].mxu0
      %v2084 = vadd.f32 %v1987, %v2083
      %v2085 = vpop.f32.mrb[0].mxu0
      %v2086 = vadd.f32 %v1987, %v2085
      %2087 = vdwg.mxu0
      %2088 = vmatprep.subr.bf16.mxu0 %v1689
      %2089 = vmatpush1.bf16.msra.mxu0 %v1688
      %2090 = vmatprep.subr.bf16.mxu0 %v1747
      %2091 = vmatpush1.bf16.msra.mxu0 %v1746
      %2092 = vmatprep.subr.bf16.mxu0 %v1781
      %2093 = vmatpush1.bf16.msra.mxu0 %v1780
      %2094 = vmatprep.subr.bf16.mxu0 %v1815
      %2095 = vmatpush1.bf16.msra.mxu0 %v1814
      %2096 = vmatprep.subr.bf16.mxu0 %v1842
      %2097 = vmatpush1.bf16.msra.mxu0 %v1841
      %2098 = vmatprep.subr.bf16.mxu0 %v1876
      %2099 = vmatpush1.bf16.msra.mxu0 %v1875
      %2100 = vmatprep.subr.bf16.mxu0 %v1910
      %2101 = vmatpush1.bf16.msra.mxu0 %v1909
      %2102 = vmatprep.subr.bf16.mxu0 %v1937
      %2103 = vmatpush1.bf16.msra.mxu0 %v1936
      %2104 = vmatprep.subr.bf16.mxu0 %v1971
      %2105 = vmatpush1.bf16.msra.mxu0 %v1970
      %2106 = vmatprep.subr.bf16.mxu0 0
      %2107 = vmatpush1.bf16.msra.mxu0 0
      %2108 = vmatprep.subr.bf16.mxu0 0
      %2109 = vmatpush1.bf16.msra.mxu0 0
      %2110 = vmatprep.subr.bf16.mxu0 0
      %2111 = vmatpush1.bf16.msra.mxu0 0
      %2112 = vmatprep.subr.bf16.mxu0 0
      %2113 = vmatpush1.bf16.msra.mxu0 0
      %2114 = vmatprep.subr.bf16.mxu0 0
      %2115 = vmatpush1.bf16.msra.mxu0 0
      %2116 = vmatprep.subr.bf16.mxu0 0
      %2117 = vmatpush1.bf16.msra.mxu0 0
      %2118 = vmatprep.subr.bf16.mxu0 0
      %2119 = vmatpush1.bf16.msra.mxu0 0
      %2120 = vmatprep.mubr.bf16.mxu0 %v2000
      %2121 = vmatmul.mubr.bf16.gmra.mrb[0].mxu0 %v1995
      %v2122 = vpop.f32.mrb[0].mxu0
      %v2123 = vadd.f32 %v1982, %v2122
      %v2124 = vpop.f32.mrb[0].mxu0
      %v2125 = vadd.f32 %v1982, %v2124
      %v2126 = vpop.f32.mrb[0].mxu0
      %v2127 = vadd.f32 %v1987, %v2126
      %v2128 = vpop.f32.mrb[0].mxu0
      %v2129 = vadd.f32 %v1987, %v2128
      %2130 = vdwg.mxu0
      %2131 = vmatprep.subr.bf16.mxu0 0
      %2132 = vmatpush1.bf16.msra.mxu0 %v1690
      %2133 = vmatprep.subr.bf16.mxu0 0
      %2134 = vmatpush1.bf16.msra.mxu0 %v1741
      %2135 = vmatprep.subr.bf16.mxu0 0
      %2136 = vmatpush1.bf16.msra.mxu0 %v1775
      %2137 = vmatprep.subr.bf16.mxu0 0
      %2138 = vmatpush1.bf16.msra.mxu0 %v1809
      %2139 = vmatprep.subr.bf16.mxu0 0
      %2140 = vmatpush1.bf16.msra.mxu0 %v1836
      %2141 = vmatprep.subr.bf16.mxu0 0
      %2142 = vmatpush1.bf16.msra.mxu0 %v1870
      %2143 = vmatprep.subr.bf16.mxu0 0
      %2144 = vmatpush1.bf16.msra.mxu0 %v1904
      %2145 = vmatprep.subr.bf16.mxu0 0
      %2146 = vmatpush1.bf16.msra.mxu0 %v1931
      %2147 = vmatprep.subr.bf16.mxu0 0
      %2148 = vmatpush1.bf16.msra.mxu0 %v1965
      %2149 = vmatprep.subr.bf16.mxu0 0
      %2150 = vmatpush1.bf16.msra.mxu0 0
      %2151 = vmatprep.subr.bf16.mxu0 0
      %2152 = vmatpush1.bf16.msra.mxu0 0
      %2153 = vmatprep.subr.bf16.mxu0 0
      %2154 = vmatpush1.bf16.msra.mxu0 0
      %2155 = vmatprep.subr.bf16.mxu0 0
      %2156 = vmatpush1.bf16.msra.mxu0 0
      %2157 = vmatprep.subr.bf16.mxu0 0
      %2158 = vmatpush1.bf16.msra.mxu0 0
      %2159 = vmatprep.subr.bf16.mxu0 0
      %2160 = vmatpush1.bf16.msra.mxu0 0
      %2161 = vmatprep.subr.bf16.mxu0 0
      %2162 = vmatpush1.bf16.msra.mxu0 0
      %2163 = vmatprep.mubr.bf16.mxu0 %v2000
      %2164 = vmatmul.mubr.bf16.gmra.mrb[0].mxu0 %v1995
      %v2165 = vpop.f32.mrb[0].mxu0
      %v2166 = vadd.f32 %v1982, %v2165
      %v2167 = vpop.f32.mrb[0].mxu0
      %v2168 = vpop.f32.mrb[0].mxu0
      %v2169 = vadd.f32 %v1987, %v2168
      %v2170 = vpop.f32.mrb[0].mxu0
      %2171 = vdwg.mxu0
      %vm2172 = vcmp.gt.f32.partialorder %v2037, 0.0
      %vm2173 = vcmp.gt.f32.partialorder %v2039, 0.0
      %vm2174 = vcmp.gt.f32.partialorder %v2080, 0.0
      %vm2175 = vcmp.gt.f32.partialorder %v2082, 0.0
      %vm2176 = vcmp.gt.f32.partialorder %v2123, 0.0
      %vm2177 = vcmp.gt.f32.partialorder %v2125, 0.0
      %vm2178 = vcmp.gt.f32.partialorder %v2166, 0.0
      %vm2179 = vcmp.gt.f32.partialorder %v2041, 0.0
      %vm2180 = vcmp.gt.f32.partialorder %v2043, 0.0
      %vm2181 = vcmp.gt.f32.partialorder %v2084, 0.0
      %vm2182 = vcmp.gt.f32.partialorder %v2086, 0.0
      %vm2183 = vcmp.gt.f32.partialorder %v2127, 0.0
      %vm2184 = vcmp.gt.f32.partialorder %v2129, 0.0
      %vm2185 = vcmp.gt.f32.partialorder %v2169, 0.0
      %v2186 = vmul.f32 %v2037, 0.01
      %v2187 = vmul.f32 %v2039, 0.01
      %v2188 = vmul.f32 %v2080, 0.01
      %v2189 = vmul.f32 %v2082, 0.01
      %v2190 = vmul.f32 %v2123, 0.01
      %v2191 = vmul.f32 %v2125, 0.01
      %v2192 = vmul.f32 %v2166, 0.01
      %v2193 = vmul.f32 %v2041, 0.01
      %v2194 = vmul.f32 %v2043, 0.01
      %v2195 = vmul.f32 %v2084, 0.01
      %v2196 = vmul.f32 %v2086, 0.01
      %v2197 = vmul.f32 %v2127, 0.01
      %v2198 = vmul.f32 %v2129, 0.01
      %v2199 = vmul.f32 %v2169, 0.01
      %v2200 = vsel %vm2172, %v2037, %v2186
      %v2201 = vsel %vm2173, %v2039, %v2187
      %v2202 = vsel %vm2174, %v2080, %v2188
      %v2203 = vsel %vm2175, %v2082, %v2189
      %v2204 = vsel %vm2176, %v2123, %v2190
      %v2205 = vsel %vm2177, %v2125, %v2191
      %v2206 = vsel %vm2178, %v2166, %v2192
      %v2207 = vsel %vm2179, %v2041, %v2193
      %v2208 = vsel %vm2180, %v2043, %v2194
      %v2209 = vsel %vm2181, %v2084, %v2195
      %v2210 = vsel %vm2182, %v2086, %v2196
      %v2211 = vsel %vm2183, %v2127, %v2197
      %v2212 = vsel %vm2184, %v2129, %v2198
      %v2213 = vsel %vm2185, %v2169, %v2199
      %v2214 = vld [vmem:[%s2 + $0x20] sm:$0xff]
      %v2215 = vld [vmem:[%s2 + $0x28] sm:$0xff]
      %v2216 = vld [vmem:[%s3 + $0x20] sm:$0xff]
      %v2217 = vld [vmem:[%s3 + $0x28] sm:$0xff]
      %v2218 = vpack.c.bf16 %v2207, %v2200
      %v2219 = vpack.c.bf16 %v2208, %v2201
      %v2220 = vpack.c.bf16 %v2209, %v2202
      %v2221 = vpack.c.bf16 %v2210, %v2203
      %v2222 = vpack.c.bf16 %v2211, %v2204
      %v2223 = vpack.c.bf16 %v2212, %v2205
      %v2224 = vpack.c.bf16 %v2213, %v2206
      %2232 = vrot.lane.b32.xlu0 %v2218, 29
      %v2233 = vpop.permute.xlu0 %2232
      %2234 = vrot.lane.b32.xlu0 %v2219, 29
      %v2235 = vpop.permute.xlu0 %2234
      %2236 = vrot.lane.b32.xlu0 %v2220, 29
      %v2237 = vpop.permute.xlu0 %2236
      %2238 = vrot.lane.b32.xlu0 %v2221, 29
      %v2239 = vpop.permute.xlu0 %2238
      %2240 = vrot.lane.b32.xlu0 %v2222, 29
      %v2241 = vpop.permute.xlu0 %2240
      %2242 = vrot.lane.b32.xlu0 %v2223, 29
      %v2243 = vpop.permute.xlu0 %2242
      %2244 = vrot.lane.b32.xlu0 %v2224, 29
      %v2245 = vpop.permute.xlu0 %2244
      %v2246 = vsel %vm688, %v2233, %v2235
      %v2247 = vsel %vm688, %v2235, %v2237
      %v2248 = vsel %vm688, %v2237, %v2239
      %v2249 = vsel %vm688, %v2239, %v2241
      %v2250 = vsel %vm688, %v2241, %v2243
      %v2251 = vsel %vm688, %v2243, %v2245
      %v2258 = vsel %vm700, 0, %v2233
      %v2261 = vsel %vm705, %v2251, 0
      %v2263 = vmul.bf16 %v2258, %v733
      %v2264 = vmul.bf16 %v2246, %v740
      %v2265 = vmul.bf16 %v2247, %v747
      %v2266 = vmul.bf16 %v2248, %v754
      %v2267 = vmul.bf16 %v2249, %v761
      %v2268 = vmul.bf16 %v2250, %v768
      %v2269 = vmul.bf16 %v2261, %v775
      %v2270 = vmul.bf16 %v2258, %v840
      %v2271 = vmul.bf16 %v2246, %v854
      %v2272 = vmul.bf16 %v2247, %v855
      %v2273 = vmul.bf16 %v2248, %v856
      %v2274 = vmul.bf16 %v2249, %v857
      %v2275 = vmul.bf16 %v2250, %v858
      %v2276 = vmul.bf16 %v2261, %v859
      %v2277 = vmul.bf16 %v2258, %v882
      %v2278 = vmul.bf16 %v2246, %v896
      %v2279 = vmul.bf16 %v2247, %v897
      %v2280 = vmul.bf16 %v2248, %v898
      %v2281 = vmul.bf16 %v2249, %v899
      %v2282 = vmul.bf16 %v2250, %v900
      %v2283 = vmul.bf16 %v2261, %v901
      %v2284 = vmul.bf16 %v2258, %v917
      %v2285 = vmul.bf16 %v2246, %v931
      %v2286 = vmul.bf16 %v2247, %v932
      %v2287 = vmul.bf16 %v2248, %v933
      %v2288 = vmul.bf16 %v2249, %v934
      %v2289 = vmul.bf16 %v2250, %v935
      %v2290 = vmul.bf16 %v2261, %v936
      %v2291 = vmul.bf16 %v2258, %v952
      %v2292 = vmul.bf16 %v2246, %v966
      %v2293 = vmul.bf16 %v2247, %v967
      %v2294 = vmul.bf16 %v2248, %v968
      %v2295 = vmul.bf16 %v2249, %v969
      %v2296 = vmul.bf16 %v2250, %v970
      %v2297 = vmul.bf16 %v2261, %v971
      %v2298 = vmul.bf16 %v2258, %v987
      %v2299 = vmul.bf16 %v2246, %v1001
      %v2300 = vmul.bf16 %v2247, %v1002
      %v2301 = vmul.bf16 %v2248, %v1003
      %v2302 = vmul.bf16 %v2249, %v1004
      %v2303 = vmul.bf16 %v2250, %v1005
      %v2304 = vmul.bf16 %v2261, %v1006
      %2307 = vrot.lane.b32.xlu0 %v2258, 127
      %v2308 = vpop.permute.xlu0 %2307
      %2309 = vrot.lane.b32.xlu0 %v2246, 127
      %v2310 = vpop.permute.xlu0 %2309
      %2311 = vrot.lane.b32.xlu0 %v2247, 127
      %v2312 = vpop.permute.xlu0 %2311
      %2313 = vrot.lane.b32.xlu0 %v2248, 127
      %v2314 = vpop.permute.xlu0 %2313
      %2315 = vrot.lane.b32.xlu0 %v2249, 127
      %v2316 = vpop.permute.xlu0 %2315
      %2317 = vrot.lane.b32.xlu0 %v2250, 127
      %v2318 = vpop.permute.xlu0 %2317
      %2319 = vrot.lane.b32.xlu0 %v2261, 127
      %v2320 = vpop.permute.xlu0 %2319
      %v2321 = vsel %vm1044, %v2308, %v2310
      %v2322 = vsel %vm1044, %v2310, %v2312
      %v2323 = vsel %vm1044, %v2312, %v2314
      %v2324 = vsel %vm1044, %v2314, %v2316
      %v2325 = vsel %vm1044, %v2316, %v2318
      %v2326 = vsel %vm1044, %v2318, %v2320
      %2341 = vrot.lane.b32.xlu0 %v2270, 126
      %v2342 = vpop.permute.xlu0 %2341
      %2343 = vrot.lane.b32.xlu0 %v2271, 126
      %v2344 = vpop.permute.xlu0 %2343
      %2345 = vrot.lane.b32.xlu0 %v2272, 126
      %v2346 = vpop.permute.xlu0 %2345
      %2347 = vrot.lane.b32.xlu0 %v2273, 126
      %v2348 = vpop.permute.xlu0 %2347
      %2349 = vrot.lane.b32.xlu0 %v2274, 126
      %v2350 = vpop.permute.xlu0 %2349
      %2351 = vrot.lane.b32.xlu0 %v2275, 126
      %v2352 = vpop.permute.xlu0 %2351
      %2353 = vrot.lane.b32.xlu0 %v2276, 126
      %v2354 = vpop.permute.xlu0 %2353
      %v2355 = vsel %vm1079, %v2342, %v2344
      %v2356 = vsel %vm1079, %v2344, %v2346
      %v2357 = vsel %vm1079, %v2346, %v2348
      %v2358 = vsel %vm1079, %v2348, %v2350
      %v2359 = vsel %vm1079, %v2350, %v2352
      %v2360 = vsel %vm1079, %v2352, %v2354
      %2375 = vrot.lane.b32.xlu0 %v2277, 100
      %v2376 = vpop.permute.xlu0 %2375
      %2377 = vrot.lane.b32.xlu0 %v2278, 100
      %v2378 = vpop.permute.xlu0 %2377
      %2379 = vrot.lane.b32.xlu0 %v2279, 100
      %v2380 = vpop.permute.xlu0 %2379
      %2381 = vrot.lane.b32.xlu0 %v2280, 100
      %v2382 = vpop.permute.xlu0 %2381
      %2383 = vrot.lane.b32.xlu0 %v2281, 100
      %v2384 = vpop.permute.xlu0 %2383
      %2385 = vrot.lane.b32.xlu0 %v2282, 100
      %v2386 = vpop.permute.xlu0 %2385
      %2387 = vrot.lane.b32.xlu0 %v2283, 100
      %v2388 = vpop.permute.xlu0 %2387
      %v2389 = vsel %vm1114, %v2376, %v2378
      %v2390 = vsel %vm1114, %v2378, %v2380
      %v2391 = vsel %vm1114, %v2380, %v2382
      %v2392 = vsel %vm1114, %v2382, %v2384
      %v2393 = vsel %vm1114, %v2384, %v2386
      %v2394 = vsel %vm1114, %v2386, %v2388
      %2402 = vrot.lane.b32.xlu0 %v2258, 99
      %v2403 = vpop.permute.xlu0 %2402
      %2404 = vrot.lane.b32.xlu0 %v2246, 99
      %v2405 = vpop.permute.xlu0 %2404
      %2406 = vrot.lane.b32.xlu0 %v2247, 99
      %v2407 = vpop.permute.xlu0 %2406
      %2408 = vrot.lane.b32.xlu0 %v2248, 99
      %v2409 = vpop.permute.xlu0 %2408
      %2410 = vrot.lane.b32.xlu0 %v2249, 99
      %v2411 = vpop.permute.xlu0 %2410
      %2412 = vrot.lane.b32.xlu0 %v2250, 99
      %v2413 = vpop.permute.xlu0 %2412
      %2414 = vrot.lane.b32.xlu0 %v2261, 99
      %v2415 = vpop.permute.xlu0 %2414
      %v2416 = vsel %vm1135, %v2403, %v2405
      %v2417 = vsel %vm1135, %v2405, %v2407
      %v2418 = vsel %vm1135, %v2407, %v2409
      %v2419 = vsel %vm1135, %v2409, %v2411
      %v2420 = vsel %vm1135, %v2411, %v2413
      %v2421 = vsel %vm1135, %v2413, %v2415
      %2436 = vrot.lane.b32.xlu0 %v2284, 98
      %v2437 = vpop.permute.xlu0 %2436
      %2438 = vrot.lane.b32.xlu0 %v2285, 98
      %v2439 = vpop.permute.xlu0 %2438
      %2440 = vrot.lane.b32.xlu0 %v2286, 98
      %v2441 = vpop.permute.xlu0 %2440
      %2442 = vrot.lane.b32.xlu0 %v2287, 98
      %v2443 = vpop.permute.xlu0 %2442
      %2444 = vrot.lane.b32.xlu0 %v2288, 98
      %v2445 = vpop.permute.xlu0 %2444
      %2446 = vrot.lane.b32.xlu0 %v2289, 98
      %v2447 = vpop.permute.xlu0 %2446
      %2448 = vrot.lane.b32.xlu0 %v2290, 98
      %v2449 = vpop.permute.xlu0 %2448
      %v2450 = vsel %vm1170, %v2437, %v2439
      %v2451 = vsel %vm1170, %v2439, %v2441
      %v2452 = vsel %vm1170, %v2441, %v2443
      %v2453 = vsel %vm1170, %v2443, %v2445
      %v2454 = vsel %vm1170, %v2445, %v2447
      %v2455 = vsel %vm1170, %v2447, %v2449
      %2470 = vrot.lane.b32.xlu0 %v2291, 72
      %v2471 = vpop.permute.xlu0 %2470
      %2472 = vrot.lane.b32.xlu0 %v2292, 72
      %v2473 = vpop.permute.xlu0 %2472
      %2474 = vrot.lane.b32.xlu0 %v2293, 72
      %v2475 = vpop.permute.xlu0 %2474
      %2476 = vrot.lane.b32.xlu0 %v2294, 72
      %v2477 = vpop.permute.xlu0 %2476
      %2478 = vrot.lane.b32.xlu0 %v2295, 72
      %v2479 = vpop.permute.xlu0 %2478
      %2480 = vrot.lane.b32.xlu0 %v2296, 72
      %v2481 = vpop.permute.xlu0 %2480
      %2482 = vrot.lane.b32.xlu0 %v2297, 72
      %v2483 = vpop.permute.xlu0 %2482
      %v2484 = vsel %vm1205, %v2471, %v2473
      %v2485 = vsel %vm1205, %v2473, %v2475
      %v2486 = vsel %vm1205, %v2475, %v2477
      %v2487 = vsel %vm1205, %v2477, %v2479
      %v2488 = vsel %vm1205, %v2479, %v2481
      %v2489 = vsel %vm1205, %v2481, %v2483
      %2497 = vrot.lane.b32.xlu0 %v2258, 71
      %v2498 = vpop.permute.xlu0 %2497
      %2499 = vrot.lane.b32.xlu0 %v2246, 71
      %v2500 = vpop.permute.xlu0 %2499
      %2501 = vrot.lane.b32.xlu0 %v2247, 71
      %v2502 = vpop.permute.xlu0 %2501
      %2503 = vrot.lane.b32.xlu0 %v2248, 71
      %v2504 = vpop.permute.xlu0 %2503
      %2505 = vrot.lane.b32.xlu0 %v2249, 71
      %v2506 = vpop.permute.xlu0 %2505
      %2507 = vrot.lane.b32.xlu0 %v2250, 71
      %v2508 = vpop.permute.xlu0 %2507
      %2509 = vrot.lane.b32.xlu0 %v2261, 71
      %v2510 = vpop.permute.xlu0 %2509
      %v2511 = vsel %vm1233, %v2498, %v2500
      %v2512 = vsel %vm1233, %v2500, %v2502
      %v2513 = vsel %vm1233, %v2502, %v2504
      %v2514 = vsel %vm1233, %v2504, %v2506
      %v2515 = vsel %vm1233, %v2506, %v2508
      %v2516 = vsel %vm1233, %v2508, %v2510
      %2531 = vrot.lane.b32.xlu0 %v2298, 70
      %v2532 = vpop.permute.xlu0 %2531
      %2533 = vrot.lane.b32.xlu0 %v2299, 70
      %v2534 = vpop.permute.xlu0 %2533
      %2535 = vrot.lane.b32.xlu0 %v2300, 70
      %v2536 = vpop.permute.xlu0 %2535
      %2537 = vrot.lane.b32.xlu0 %v2301, 70
      %v2538 = vpop.permute.xlu0 %2537
      %2539 = vrot.lane.b32.xlu0 %v2302, 70
      %v2540 = vpop.permute.xlu0 %2539
      %2541 = vrot.lane.b32.xlu0 %v2303, 70
      %v2542 = vpop.permute.xlu0 %2541
      %2543 = vrot.lane.b32.xlu0 %v2304, 70
      %v2544 = vpop.permute.xlu0 %2543
      %v2545 = vsel %vm1261, %v2532, %v2534
      %v2546 = vsel %vm1261, %v2534, %v2536
      %v2547 = vsel %vm1261, %v2536, %v2538
      %v2548 = vsel %vm1261, %v2538, %v2540
      %v2549 = vsel %vm1261, %v2540, %v2542
      %v2550 = vsel %vm1261, %v2542, %v2544
      %2559 = vset.pattern.permute.xlu0 0
      %2560 = vperm.xlu0 %2559, %v2216
      %v2561 = vpop.permute.xlu0 %2560
      %2564 = vset.pattern.permute.xlu0 0
      %2565 = vperm.xlu0 %2564, %v2217
      %v2566 = vpop.permute.xlu0 %2565
      %v2570 = vunpack.c.l.b16 %v2214
      %v2571 = vunpack.c.h.b16 %v2214
      %v2572 = vunpack.c.l.b16 %v2215
      %v2573 = vunpack.c.h.b16 %v2215
      %v2574 = vpack.c.b16 %v2572, %v2570
      %v2575 = vpack.c.b16 %v2573, %v2571
      %v2578 = vsel %vm1998, %v2575, 0
      %2580 = vmatprep.subr.bf16.mxu0 %v2264
      %2581 = vmatpush1.bf16.msra.mxu0 %v2263
      %2582 = vmatprep.subr.bf16.mxu0 %v2322
      %2583 = vmatpush1.bf16.msra.mxu0 %v2321
      %2584 = vmatprep.subr.bf16.mxu0 %v2356
      %2585 = vmatpush1.bf16.msra.mxu0 %v2355
      %2586 = vmatprep.subr.bf16.mxu0 %v2390
      %2587 = vmatpush1.bf16.msra.mxu0 %v2389
      %2588 = vmatprep.subr.bf16.mxu0 %v2417
      %2589 = vmatpush1.bf16.msra.mxu0 %v2416
      %2590 = vmatprep.subr.bf16.mxu0 %v2451
      %2591 = vmatpush1.bf16.msra.mxu0 %v2450
      %2592 = vmatprep.subr.bf16.mxu0 %v2485
      %2593 = vmatpush1.bf16.msra.mxu0 %v2484
      %2594 = vmatprep.subr.bf16.mxu0 %v2512
      %2595 = vmatpush1.bf16.msra.mxu0 %v2511
      %2596 = vmatprep.subr.bf16.mxu0 %v2546
      %2597 = vmatpush1.bf16.msra.mxu0 %v2545
      %2598 = vmatprep.subr.bf16.mxu0 0
      %2599 = vmatpush1.bf16.msra.mxu0 0
      %2600 = vmatprep.subr.bf16.mxu0 0
      %2601 = vmatpush1.bf16.msra.mxu0 0
      %2602 = vmatprep.subr.bf16.mxu0 0
      %2603 = vmatpush1.bf16.msra.mxu0 0
      %2604 = vmatprep.subr.bf16.mxu0 0
      %2605 = vmatpush1.bf16.msra.mxu0 0
      %2606 = vmatprep.subr.bf16.mxu0 0
      %2607 = vmatpush1.bf16.msra.mxu0 0
      %2608 = vmatprep.subr.bf16.mxu0 0
      %2609 = vmatpush1.bf16.msra.mxu0 0
      %2610 = vmatprep.subr.bf16.mxu0 0
      %2611 = vmatpush1.bf16.msra.mxu0 0
      %2612 = vmatprep.mubr.bf16.mxu0 %v2578
      %2613 = vmatmul.mubr.bf16.gmra.mrb[0].mxu0 %v2574
      %v2614 = vpop.f32.mrb[0].mxu0
      %v2615 = vadd.f32 %v2561, %v2614
      %v2616 = vpop.f32.mrb[0].mxu0
      %v2617 = vadd.f32 %v2561, %v2616
      %v2618 = vpop.f32.mrb[0].mxu0
      %v2619 = vadd.f32 %v2566, %v2618
      %v2620 = vpop.f32.mrb[0].mxu0
      %v2621 = vadd.f32 %v2566, %v2620
      %2622 = vdwg.mxu0
      %2623 = vmatprep.subr.bf16.mxu0 %v2266
      %2624 = vmatpush1.bf16.msra.mxu0 %v2265
      %2625 = vmatprep.subr.bf16.mxu0 %v2324
      %2626 = vmatpush1.bf16.msra.mxu0 %v2323
      %2627 = vmatprep.subr.bf16.mxu0 %v2358
      %2628 = vmatpush1.bf16.msra.mxu0 %v2357
      %2629 = vmatprep.subr.bf16.mxu0 %v2392
      %2630 = vmatpush1.bf16.msra.mxu0 %v2391
      %2631 = vmatprep.subr.bf16.mxu0 %v2419
      %2632 = vmatpush1.bf16.msra.mxu0 %v2418
      %2633 = vmatprep.subr.bf16.mxu0 %v2453
      %2634 = vmatpush1.bf16.msra.mxu0 %v2452
      %2635 = vmatprep.subr.bf16.mxu0 %v2487
      %2636 = vmatpush1.bf16.msra.mxu0 %v2486
      %2637 = vmatprep.subr.bf16.mxu0 %v2514
      %2638 = vmatpush1.bf16.msra.mxu0 %v2513
      %2639 = vmatprep.subr.bf16.mxu0 %v2548
      %2640 = vmatpush1.bf16.msra.mxu0 %v2547
      %2641 = vmatprep.subr.bf16.mxu0 0
      %2642 = vmatpush1.bf16.msra.mxu0 0
      %2643 = vmatprep.subr.bf16.mxu0 0
      %2644 = vmatpush1.bf16.msra.mxu0 0
      %2645 = vmatprep.subr.bf16.mxu0 0
      %2646 = vmatpush1.bf16.msra.mxu0 0
      %2647 = vmatprep.subr.bf16.mxu0 0
      %2648 = vmatpush1.bf16.msra.mxu0 0
      %2649 = vmatprep.subr.bf16.mxu0 0
      %2650 = vmatpush1.bf16.msra.mxu0 0
      %2651 = vmatprep.subr.bf16.mxu0 0
      %2652 = vmatpush1.bf16.msra.mxu0 0
      %2653 = vmatprep.subr.bf16.mxu0 0
      %2654 = vmatpush1.bf16.msra.mxu0 0
      %2655 = vmatprep.mubr.bf16.mxu0 %v2578
      %2656 = vmatmul.mubr.bf16.gmra.mrb[0].mxu0 %v2574
      %v2657 = vpop.f32.mrb[0].mxu0
      %v2658 = vadd.f32 %v2561, %v2657
      %v2659 = vpop.f32.mrb[0].mxu0
      %v2660 = vadd.f32 %v2561, %v2659
      %v2661 = vpop.f32.mrb[0].mxu0
      %v2662 = vadd.f32 %v2566, %v2661
      %v2663 = vpop.f32.mrb[0].mxu0
      %v2664 = vadd.f32 %v2566, %v2663
      %2665 = vdwg.mxu0
      %2666 = vmatprep.subr.bf16.mxu0 %v2268
      %2667 = vmatpush1.bf16.msra.mxu0 %v2267
      %2668 = vmatprep.subr.bf16.mxu0 %v2326
      %2669 = vmatpush1.bf16.msra.mxu0 %v2325
      %2670 = vmatprep.subr.bf16.mxu0 %v2360
      %2671 = vmatpush1.bf16.msra.mxu0 %v2359
      %2672 = vmatprep.subr.bf16.mxu0 %v2394
      %2673 = vmatpush1.bf16.msra.mxu0 %v2393
      %2674 = vmatprep.subr.bf16.mxu0 %v2421
      %2675 = vmatpush1.bf16.msra.mxu0 %v2420
      %2676 = vmatprep.subr.bf16.mxu0 %v2455
      %2677 = vmatpush1.bf16.msra.mxu0 %v2454
      %2678 = vmatprep.subr.bf16.mxu0 %v2489
      %2679 = vmatpush1.bf16.msra.mxu0 %v2488
      %2680 = vmatprep.subr.bf16.mxu0 %v2516
      %2681 = vmatpush1.bf16.msra.mxu0 %v2515
      %2682 = vmatprep.subr.bf16.mxu0 %v2550
      %2683 = vmatpush1.bf16.msra.mxu0 %v2549
      %2684 = vmatprep.subr.bf16.mxu0 0
      %2685 = vmatpush1.bf16.msra.mxu0 0
      %2686 = vmatprep.subr.bf16.mxu0 0
      %2687 = vmatpush1.bf16.msra.mxu0 0
      %2688 = vmatprep.subr.bf16.mxu0 0
      %2689 = vmatpush1.bf16.msra.mxu0 0
      %2690 = vmatprep.subr.bf16.mxu0 0
      %2691 = vmatpush1.bf16.msra.mxu0 0
      %2692 = vmatprep.subr.bf16.mxu0 0
      %2693 = vmatpush1.bf16.msra.mxu0 0
      %2694 = vmatprep.subr.bf16.mxu0 0
      %2695 = vmatpush1.bf16.msra.mxu0 0
      %2696 = vmatprep.subr.bf16.mxu0 0
      %2697 = vmatpush1.bf16.msra.mxu0 0
      %2698 = vmatprep.mubr.bf16.mxu0 %v2578
      %2699 = vmatmul.mubr.bf16.gmra.mrb[0].mxu0 %v2574
      %v2700 = vpop.f32.mrb[0].mxu0
      %v2701 = vadd.f32 %v2561, %v2700
      %v2702 = vpop.f32.mrb[0].mxu0
      %v2703 = vadd.f32 %v2561, %v2702
      %v2704 = vpop.f32.mrb[0].mxu0
      %v2705 = vadd.f32 %v2566, %v2704
      %v2706 = vpop.f32.mrb[0].mxu0
      %v2707 = vadd.f32 %v2566, %v2706
      %2708 = vdwg.mxu0
      %2709 = vmatprep.subr.bf16.mxu0 0
      %2710 = vmatpush1.bf16.msra.mxu0 %v2269
      %2711 = vmatprep.subr.bf16.mxu0 0
      %2712 = vmatpush1.bf16.msra.mxu0 %v2320
      %2713 = vmatprep.subr.bf16.mxu0 0
      %2714 = vmatpush1.bf16.msra.mxu0 %v2354
      %2715 = vmatprep.subr.bf16.mxu0 0
      %2716 = vmatpush1.bf16.msra.mxu0 %v2388
      %2717 = vmatprep.subr.bf16.mxu0 0
      %2718 = vmatpush1.bf16.msra.mxu0 %v2415
      %2719 = vmatprep.subr.bf16.mxu0 0
      %2720 = vmatpush1.bf16.msra.mxu0 %v2449
      %2721 = vmatprep.subr.bf16.mxu0 0
      %2722 = vmatpush1.bf16.msra.mxu0 %v2483
      %2723 = vmatprep.subr.bf16.mxu0 0
      %2724 = vmatpush1.bf16.msra.mxu0 %v2510
      %2725 = vmatprep.subr.bf16.mxu0 0
      %2726 = vmatpush1.bf16.msra.mxu0 %v2544
      %2727 = vmatprep.subr.bf16.mxu0 0
      %2728 = vmatpush1.bf16.msra.mxu0 0
      %2729 = vmatprep.subr.bf16.mxu0 0
      %2730 = vmatpush1.bf16.msra.mxu0 0
      %2731 = vmatprep.subr.bf16.mxu0 0
      %2732 = vmatpush1.bf16.msra.mxu0 0
      %2733 = vmatprep.subr.bf16.mxu0 0
      %2734 = vmatpush1.bf16.msra.mxu0 0
      %2735 = vmatprep.subr.bf16.mxu0 0
      %2736 = vmatpush1.bf16.msra.mxu0 0
      %2737 = vmatprep.subr.bf16.mxu0 0
      %2738 = vmatpush1.bf16.msra.mxu0 0
      %2739 = vmatprep.subr.bf16.mxu0 0
      %2740 = vmatpush1.bf16.msra.mxu0 0
      %2741 = vmatprep.mubr.bf16.mxu0 %v2578
      %2742 = vmatmul.mubr.bf16.gmra.mrb[0].mxu0 %v2574
      %v2743 = vpop.f32.mrb[0].mxu0
      %v2744 = vadd.f32 %v2561, %v2743
      %v2745 = vpop.f32.mrb[0].mxu0
      %v2746 = vpop.f32.mrb[0].mxu0
      %v2747 = vadd.f32 %v2566, %v2746
      %v2748 = vpop.f32.mrb[0].mxu0
      %2749 = vdwg.mxu0
      %v2750 = vadd.f32 %v2615, %v1621
      %v2751 = vadd.f32 %v2617, %v1622
      %v2752 = vadd.f32 %v2658, %v1623
      %v2753 = vadd.f32 %v2660, %v1624
      %v2754 = vadd.f32 %v2701, %v1625
      %v2755 = vadd.f32 %v2703, %v1626
      %v2756 = vadd.f32 %v2744, %v1627
      %v2757 = vadd.f32 %v2619, %v1628
      %v2758 = vadd.f32 %v2621, %v1629
      %v2759 = vadd.f32 %v2662, %v1630
      %v2760 = vadd.f32 %v2664, %v1631
      %v2761 = vadd.f32 %v2705, %v1632
      %v2762 = vadd.f32 %v2707, %v1633
      %v2763 = vadd.f32 %v2747, %v1634
      %vm2764 = vcmp.gt.f32.partialorder %v2750, 0.0
      %vm2765 = vcmp.gt.f32.partialorder %v2751, 0.0
      %vm2766 = vcmp.gt.f32.partialorder %v2752, 0.0
      %vm2767 = vcmp.gt.f32.partialorder %v2753, 0.0
      %vm2768 = vcmp.gt.f32.partialorder %v2754, 0.0
      %vm2769 = vcmp.gt.f32.partialorder %v2755, 0.0
      %vm2770 = vcmp.gt.f32.partialorder %v2756, 0.0
      %vm2771 = vcmp.gt.f32.partialorder %v2757, 0.0
      %vm2772 = vcmp.gt.f32.partialorder %v2758, 0.0
      %vm2773 = vcmp.gt.f32.partialorder %v2759, 0.0
      %vm2774 = vcmp.gt.f32.partialorder %v2760, 0.0
      %vm2775 = vcmp.gt.f32.partialorder %v2761, 0.0
      %vm2776 = vcmp.gt.f32.partialorder %v2762, 0.0
      %vm2777 = vcmp.gt.f32.partialorder %v2763, 0.0
      %v2778 = vmul.f32 %v2750, 0.01
      %v2779 = vmul.f32 %v2751, 0.01
      %v2780 = vmul.f32 %v2752, 0.01
      %v2781 = vmul.f32 %v2753, 0.01
      %v2782 = vmul.f32 %v2754, 0.01
      %v2783 = vmul.f32 %v2755, 0.01
      %v2784 = vmul.f32 %v2756, 0.01
      %v2785 = vmul.f32 %v2757, 0.01
      %v2786 = vmul.f32 %v2758, 0.01
      %v2787 = vmul.f32 %v2759, 0.01
      %v2788 = vmul.f32 %v2760, 0.01
      %v2789 = vmul.f32 %v2761, 0.01
      %v2790 = vmul.f32 %v2762, 0.01
      %v2791 = vmul.f32 %v2763, 0.01
      %v2792 = vsel %vm2764, %v2750, %v2778
      %v2793 = vsel %vm2765, %v2751, %v2779
      %v2794 = vsel %vm2766, %v2752, %v2780
      %v2795 = vsel %vm2767, %v2753, %v2781
      %v2796 = vsel %vm2768, %v2754, %v2782
      %v2797 = vsel %vm2769, %v2755, %v2783
      %v2798 = vsel %vm2770, %v2756, %v2784
      %v2799 = vsel %vm2771, %v2757, %v2785
      %v2800 = vsel %vm2772, %v2758, %v2786
      %v2801 = vsel %vm2773, %v2759, %v2787
      %v2802 = vsel %vm2774, %v2760, %v2788
      %v2803 = vsel %vm2775, %v2761, %v2789
      %v2804 = vsel %vm2776, %v2762, %v2790
      %v2805 = vsel %vm2777, %v2763, %v2791
      %v2806 = vpack.c.bf16 %v2799, %v2792
      %v2807 = vpack.c.bf16 %v2800, %v2793
      %v2808 = vpack.c.bf16 %v2801, %v2794
      %v2809 = vpack.c.bf16 %v2802, %v2795
      %v2810 = vpack.c.bf16 %v2803, %v2796
      %v2811 = vpack.c.bf16 %v2804, %v2797
      %v2812 = vpack.c.bf16 %v2805, %v2798
      %v2813 = vld [vmem:[%s10] sm:$0xff]
      %v2814 = vld [vmem:[%s10 + $0x8] sm:$0xff]
      %v2815 = vld [vmem:[%s10 + $0x10] sm:$0xff]
      %v2816 = vld [vmem:[%s10 + $0x18] sm:$0xff]
      %v2817 = vld [vmem:[%s10 + $0x20] sm:$0xff]
      %v2818 = vld [vmem:[%s10 + $0x28] sm:$0xff]
      %v2819 = vld [vmem:[%s10 + $0x30] sm:$0xff]
      %v2820 = vld [vmem:[%s10 + $0x38] sm:$0xff]
      %v2821 = vld [vmem:[%s10 + $0x40] sm:$0xff]
      %v2822 = vld [vmem:[%s10 + $0x48] sm:$0xff]
      %v2823 = vld [vmem:[%s10 + $0x50] sm:$0xff]
      %v2824 = vld [vmem:[%s10 + $0x58] sm:$0xff]
      %v2825 = vld [vmem:[%s10 + $0x60] sm:$0xff]
      %v2826 = vld [vmem:[%s10 + $0x68] sm:$0xff]
      %v2827 = vld [vmem:[%s10 + $0x70] sm:$0xff]
      %v2828 = vld [vmem:[%s10 + $0x78] sm:$0xff]
      %v2829 = vld [vmem:[%s10 + $0x80] sm:$0xff]
      %v2830 = vld [vmem:[%s10 + $0x88] sm:$0xff]
      %v2831 = vld [vmem:[%s10 + $0x90] sm:$0xff]
      %v2832 = vld [vmem:[%s10 + $0x98] sm:$0xff]
      %v2833 = vld [vmem:[%s10 + $0xa0] sm:$0xff]
      %v2834 = vld [vmem:[%s10 + $0xa8] sm:$0xff]
      %v2835 = vld [vmem:[%s10 + $0xb0] sm:$0xff]
      %v2836 = vld [vmem:[%s10 + $0xb8] sm:$0xff]
      %v2837 = vld [vmem:[%s10 + $0xc0] sm:$0xff]
      %v2838 = vld [vmem:[%s10 + $0xc8] sm:$0xff]
      %v2839 = vld [vmem:[%s10 + $0xd0] sm:$0xff]
      %v2840 = vld [vmem:[%s10 + $0xd8] sm:$0xff]
      %v2841 = vld [vmem:[%s10 + $0xe0] sm:$0xff]
      %v2842 = vld [vmem:[%s10 + $0xe8] sm:$0xff]
      %v2843 = vld [vmem:[%s10 + $0xf0] sm:$0xff]
      %v2844 = vld [vmem:[%s10 + $0xf8] sm:$0xff]
      %v2845 = vld [vmem:[%s10 + $0x100] sm:$0xff]
      %v2846 = vld [vmem:[%s10 + $0x108] sm:$0xff]
      %v2847 = vld [vmem:[%s10 + $0x110] sm:$0xff]
      %v2848 = vld [vmem:[%s10 + $0x118] sm:$0xff]
      %v2849 = vld [vmem:[%s10 + $0x120] sm:$0xff]
      %v2850 = vld [vmem:[%s10 + $0x128] sm:$0xff]
      %v2851 = vld [vmem:[%s10 + $0x130] sm:$0xff]
      %v2852 = vld [vmem:[%s10 + $0x138] sm:$0xff]
      %v2853 = vld [vmem:[%s10 + $0x140] sm:$0xff]
      %v2854 = vld [vmem:[%s10 + $0x148] sm:$0xff]
      %v2855 = vld [vmem:[%s10 + $0x150] sm:$0xff]
      %v2856 = vld [vmem:[%s10 + $0x158] sm:$0xff]
      %v2857 = vld [vmem:[%s10 + $0x160] sm:$0xff]
      %v2858 = vld [vmem:[%s10 + $0x168] sm:$0xff]
      %v2859 = vld [vmem:[%s10 + $0x170] sm:$0xff]
      %v2860 = vld [vmem:[%s10 + $0x178] sm:$0xff]
      %v2861 = vld [vmem:[%s10 + $0x180] sm:$0xff]
      %v2862 = vld [vmem:[%s10 + $0x188] sm:$0xff]
      %v2863 = vld [vmem:[%s10 + $0x190] sm:$0xff]
      %v2864 = vld [vmem:[%s10 + $0x198] sm:$0xff]
      %v2865 = vld [vmem:[%s10 + $0x1a0] sm:$0xff]
      %v2866 = vld [vmem:[%s10 + $0x1a8] sm:$0xff]
      %v2867 = vld [vmem:[%s10 + $0x1b0] sm:$0xff]
      %v2868 = vld [vmem:[%s10 + $0x1b8] sm:$0xff]
      %v2869 = vld [vmem:[%s10 + $0x1c0] sm:$0xff]
      %v2870 = vld [vmem:[%s10 + $0x1c8] sm:$0xff]
      %v2871 = vld [vmem:[%s10 + $0x1d0] sm:$0xff]
      %v2872 = vld [vmem:[%s10 + $0x1d8] sm:$0xff]
      %v2873 = vld [vmem:[%s10 + $0x1e0] sm:$0xff]
      %v2874 = vld [vmem:[%s10 + $0x1e8] sm:$0xff]
      %v2875 = vld [vmem:[%s10 + $0x1f0] sm:$0xff]
      %v2876 = vld [vmem:[%s10 + $0x1f8] sm:$0xff]
      %v2877 = vld [vmem:[%s10 + $0x200] sm:$0xff]
      %v2878 = vld [vmem:[%s10 + $0x208] sm:$0xff]
      %v2879 = vld [vmem:[%s10 + $0x210] sm:$0xff]
      %v2880 = vld [vmem:[%s10 + $0x218] sm:$0xff]
      %v2881 = vld [vmem:[%s10 + $0x220] sm:$0xff]
      %v2882 = vld [vmem:[%s10 + $0x228] sm:$0xff]
      %v2883 = vld [vmem:[%s10 + $0x230] sm:$0xff]
      %v2884 = vld [vmem:[%s10 + $0x238] sm:$0xff]
      %v2885 = vld [vmem:[%s10 + $0x240] sm:$0xff]
      %v2886 = vld [vmem:[%s10 + $0x248] sm:$0xff]
      %v2887 = vld [vmem:[%s10 + $0x250] sm:$0xff]
      %v2888 = vld [vmem:[%s10 + $0x258] sm:$0xff]
      %v2889 = vld [vmem:[%s10 + $0x260] sm:$0xff]
      %v2890 = vld [vmem:[%s10 + $0x268] sm:$0xff]
      %v2891 = vld [vmem:[%s10 + $0x270] sm:$0xff]
      %v2892 = vld [vmem:[%s10 + $0x278] sm:$0xff]
      %v2893 = vld [vmem:[%s10 + $0x280] sm:$0xff]
      %v2894 = vld [vmem:[%s10 + $0x288] sm:$0xff]
      %v2895 = vld [vmem:[%s10 + $0x290] sm:$0xff]
      %v2896 = vld [vmem:[%s10 + $0x298] sm:$0xff]
      %v2897 = vld [vmem:[%s10 + $0x2a0] sm:$0xff]
      %v2898 = vld [vmem:[%s10 + $0x2a8] sm:$0xff]
      %v2899 = vld [vmem:[%s10 + $0x2b0] sm:$0xff]
      %v2900 = vld [vmem:[%s10 + $0x2b8] sm:$0xff]
      %v2901 = vld [vmem:[%s10 + $0x2c0] sm:$0xff]
      %v2902 = vld [vmem:[%s10 + $0x2c8] sm:$0xff]
      %v2903 = vld [vmem:[%s10 + $0x2d0] sm:$0xff]
      %v2904 = vld [vmem:[%s10 + $0x2d8] sm:$0xff]
      %v2905 = vld [vmem:[%s10 + $0x2e0] sm:$0xff]
      %v2906 = vld [vmem:[%s10 + $0x2e8] sm:$0xff]
      %v2907 = vld [vmem:[%s10 + $0x2f0] sm:$0xff]
      %v2908 = vld [vmem:[%s10 + $0x2f8] sm:$0xff]
      %v2909 = vld [vmem:[%s10 + $0x300] sm:$0xff]
      %v2910 = vld [vmem:[%s10 + $0x308] sm:$0xff]
      %v3009 = vunpack.c.l.b16 %v2813
      %v3010 = vunpack.c.h.b16 %v2813
      %v3011 = vunpack.c.l.b16 %v2814
      %v3012 = vunpack.c.h.b16 %v2814
      %v3013 = vunpack.c.l.b16 %v2815
      %v3014 = vunpack.c.h.b16 %v2815
      %v3015 = vunpack.c.l.b16 %v2816
      %v3016 = vunpack.c.h.b16 %v2816
      %v3017 = vunpack.c.l.b16 %v2817
      %v3018 = vunpack.c.h.b16 %v2817
      %v3019 = vunpack.c.l.b16 %v2818
      %v3020 = vunpack.c.h.b16 %v2818
      %v3021 = vunpack.c.l.b16 %v2819
      %v3022 = vunpack.c.h.b16 %v2819
      %v3023 = vunpack.c.l.b16 %v2820
      %v3024 = vunpack.c.h.b16 %v2820
      %v3025 = vunpack.c.l.b16 %v2821
      %v3026 = vunpack.c.h.b16 %v2821
      %v3027 = vunpack.c.l.b16 %v2822
      %v3028 = vunpack.c.h.b16 %v2822
      %v3029 = vunpack.c.l.b16 %v2823
      %v3030 = vunpack.c.h.b16 %v2823
      %v3031 = vunpack.c.l.b16 %v2824
      %v3032 = vunpack.c.h.b16 %v2824
      %v3033 = vunpack.c.l.b16 %v2825
      %v3034 = vunpack.c.h.b16 %v2825
      %v3035 = vunpack.c.l.b16 %v2826
      %v3036 = vunpack.c.h.b16 %v2826
      %v3037 = vunpack.c.l.b16 %v2827
      %v3038 = vunpack.c.h.b16 %v2827
      %v3039 = vunpack.c.l.b16 %v2828
      %v3040 = vunpack.c.h.b16 %v2828
      %v3041 = vunpack.c.l.b16 %v2829
      %v3042 = vunpack.c.h.b16 %v2829
      %v3043 = vunpack.c.l.b16 %v2830
      %v3044 = vunpack.c.h.b16 %v2830
      %v3045 = vunpack.c.l.b16 %v2831
      %v3046 = vunpack.c.h.b16 %v2831
      %v3047 = vunpack.c.l.b16 %v2832
      %v3048 = vunpack.c.h.b16 %v2832
      %v3049 = vunpack.c.l.b16 %v2833
      %v3050 = vunpack.c.h.b16 %v2833
      %v3051 = vunpack.c.l.b16 %v2834
      %v3052 = vunpack.c.h.b16 %v2834
      %v3053 = vunpack.c.l.b16 %v2835
      %v3054 = vunpack.c.h.b16 %v2835
      %v3055 = vunpack.c.l.b16 %v2836
      %v3056 = vunpack.c.h.b16 %v2836
      %v3057 = vunpack.c.l.b16 %v2837
      %v3058 = vunpack.c.h.b16 %v2837
      %v3059 = vunpack.c.l.b16 %v2838
      %v3060 = vunpack.c.h.b16 %v2838
      %v3061 = vunpack.c.l.b16 %v2839
      %v3062 = vunpack.c.h.b16 %v2839
      %v3063 = vunpack.c.l.b16 %v2840
      %v3064 = vunpack.c.h.b16 %v2840
      %v3065 = vunpack.c.l.b16 %v2841
      %v3066 = vunpack.c.h.b16 %v2841
      %v3067 = vunpack.c.l.b16 %v2842
      %v3068 = vunpack.c.h.b16 %v2842
      %v3069 = vunpack.c.l.b16 %v2843
      %v3070 = vunpack.c.h.b16 %v2843
      %v3071 = vunpack.c.l.b16 %v2844
      %v3072 = vunpack.c.h.b16 %v2844
      %v3073 = vunpack.c.l.b16 %v2845
      %v3074 = vunpack.c.h.b16 %v2845
      %v3075 = vunpack.c.l.b16 %v2846
      %v3076 = vunpack.c.h.b16 %v2846
      %v3077 = vunpack.c.l.b16 %v2847
      %v3078 = vunpack.c.h.b16 %v2847
      %v3079 = vunpack.c.l.b16 %v2848
      %v3080 = vunpack.c.h.b16 %v2848
      %v3081 = vunpack.c.l.b16 %v2849
      %v3082 = vunpack.c.h.b16 %v2849
      %v3083 = vunpack.c.l.b16 %v2850
      %v3084 = vunpack.c.h.b16 %v2850
      %v3085 = vunpack.c.l.b16 %v2851
      %v3086 = vunpack.c.h.b16 %v2851
      %v3087 = vunpack.c.l.b16 %v2852
      %v3088 = vunpack.c.h.b16 %v2852
      %v3089 = vunpack.c.l.b16 %v2853
      %v3090 = vunpack.c.h.b16 %v2853
      %v3091 = vunpack.c.l.b16 %v2854
      %v3092 = vunpack.c.h.b16 %v2854
      %v3093 = vunpack.c.l.b16 %v2855
      %v3094 = vunpack.c.h.b16 %v2855
      %v3095 = vunpack.c.l.b16 %v2856
      %v3096 = vunpack.c.h.b16 %v2856
      %v3097 = vunpack.c.l.b16 %v2857
      %v3098 = vunpack.c.h.b16 %v2857
      %v3099 = vunpack.c.l.b16 %v2858
      %v3100 = vunpack.c.h.b16 %v2858
      %v3101 = vunpack.c.l.b16 %v2859
      %v3102 = vunpack.c.h.b16 %v2859
      %v3103 = vunpack.c.l.b16 %v2860
      %v3104 = vunpack.c.h.b16 %v2860
      %v3105 = vunpack.c.l.b16 %v2861
      %v3106 = vunpack.c.h.b16 %v2861
      %v3107 = vunpack.c.l.b16 %v2862
      %v3108 = vunpack.c.h.b16 %v2862
      %v3109 = vunpack.c.l.b16 %v2863
      %v3110 = vunpack.c.h.b16 %v2863
      %v3111 = vunpack.c.l.b16 %v2864
      %v3112 = vunpack.c.h.b16 %v2864
      %v3113 = vunpack.c.l.b16 %v2865
      %v3114 = vunpack.c.h.b16 %v2865
      %v3115 = vunpack.c.l.b16 %v2866
      %v3116 = vunpack.c.h.b16 %v2866
      %v3117 = vunpack.c.l.b16 %v2867
      %v3118 = vunpack.c.h.b16 %v2867
      %v3119 = vunpack.c.l.b16 %v2868
      %v3120 = vunpack.c.h.b16 %v2868
      %v3121 = vunpack.c.l.b16 %v2869
      %v3122 = vunpack.c.h.b16 %v2869
      %v3123 = vunpack.c.l.b16 %v2870
      %v3124 = vunpack.c.h.b16 %v2870
      %v3125 = vunpack.c.l.b16 %v2871
      %v3126 = vunpack.c.h.b16 %v2871
      %v3127 = vunpack.c.l.b16 %v2872
      %v3128 = vunpack.c.h.b16 %v2872
      %v3129 = vunpack.c.l.b16 %v2873
      %v3130 = vunpack.c.h.b16 %v2873
      %v3131 = vunpack.c.l.b16 %v2874
      %v3132 = vunpack.c.h.b16 %v2874
      %v3133 = vunpack.c.l.b16 %v2875
      %v3134 = vunpack.c.h.b16 %v2875
      %v3135 = vunpack.c.l.b16 %v2876
      %v3136 = vunpack.c.h.b16 %v2876
      %v3137 = vunpack.c.l.b16 %v2877
      %v3138 = vunpack.c.h.b16 %v2877
      %v3139 = vunpack.c.l.b16 %v2878
      %v3140 = vunpack.c.h.b16 %v2878
      %v3141 = vunpack.c.l.b16 %v2879
      %v3142 = vunpack.c.h.b16 %v2879
      %v3143 = vunpack.c.l.b16 %v2880
      %v3144 = vunpack.c.h.b16 %v2880
      %v3145 = vunpack.c.l.b16 %v2881
      %v3146 = vunpack.c.h.b16 %v2881
      %v3147 = vunpack.c.l.b16 %v2882
      %v3148 = vunpack.c.h.b16 %v2882
      %v3149 = vunpack.c.l.b16 %v2883
      %v3150 = vunpack.c.h.b16 %v2883
      %v3151 = vunpack.c.l.b16 %v2884
      %v3152 = vunpack.c.h.b16 %v2884
      %v3153 = vunpack.c.l.b16 %v2885
      %v3154 = vunpack.c.h.b16 %v2885
      %v3155 = vunpack.c.l.b16 %v2886
      %v3156 = vunpack.c.h.b16 %v2886
      %v3157 = vunpack.c.l.b16 %v2887
      %v3158 = vunpack.c.h.b16 %v2887
      %v3159 = vunpack.c.l.b16 %v2888
      %v3160 = vunpack.c.h.b16 %v2888
      %v3161 = vunpack.c.l.b16 %v2889
      %v3162 = vunpack.c.h.b16 %v2889
      %v3163 = vunpack.c.l.b16 %v2890
      %v3164 = vunpack.c.h.b16 %v2890
      %v3165 = vunpack.c.l.b16 %v2891
      %v3166 = vunpack.c.h.b16 %v2891
      %v3167 = vunpack.c.l.b16 %v2892
      %v3168 = vunpack.c.h.b16 %v2892
      %v3169 = vunpack.c.l.b16 %v2893
      %v3170 = vunpack.c.h.b16 %v2893
      %v3171 = vunpack.c.l.b16 %v2894
      %v3172 = vunpack.c.h.b16 %v2894
      %v3173 = vunpack.c.l.b16 %v2895
      %v3174 = vunpack.c.h.b16 %v2895
      %v3175 = vunpack.c.l.b16 %v2896
      %v3176 = vunpack.c.h.b16 %v2896
      %v3177 = vunpack.c.l.b16 %v2897
      %v3178 = vunpack.c.h.b16 %v2897
      %v3179 = vunpack.c.l.b16 %v2898
      %v3180 = vunpack.c.h.b16 %v2898
      %v3181 = vunpack.c.l.b16 %v2899
      %v3182 = vunpack.c.h.b16 %v2899
      %v3183 = vunpack.c.l.b16 %v2900
      %v3184 = vunpack.c.h.b16 %v2900
      %v3185 = vunpack.c.l.b16 %v2901
      %v3186 = vunpack.c.h.b16 %v2901
      %v3187 = vunpack.c.l.b16 %v2902
      %v3188 = vunpack.c.h.b16 %v2902
      %v3189 = vunpack.c.l.b16 %v2903
      %v3190 = vunpack.c.h.b16 %v2903
      %v3191 = vunpack.c.l.b16 %v2904
      %v3192 = vunpack.c.h.b16 %v2904
      %v3193 = vunpack.c.l.b16 %v2905
      %v3194 = vunpack.c.h.b16 %v2905
      %v3195 = vunpack.c.l.b16 %v2906
      %v3196 = vunpack.c.h.b16 %v2906
      %v3197 = vunpack.c.l.b16 %v2907
      %v3198 = vunpack.c.h.b16 %v2907
      %v3199 = vunpack.c.l.b16 %v2908
      %v3200 = vunpack.c.h.b16 %v2908
      %v3201 = vunpack.c.l.b16 %v2909
      %v3202 = vunpack.c.h.b16 %v2909
      %v3203 = vunpack.c.l.b16 %v2910
      %v3204 = vunpack.c.h.b16 %v2910
      %v3205 = vpack.c.b16 %v3011, %v3009
      %v3206 = vpack.c.b16 %v3012, %v3010
      %v3207 = vpack.c.b16 %v3015, %v3013
      %v3208 = vpack.c.b16 %v3016, %v3014
      %v3209 = vpack.c.b16 %v3019, %v3017
      %v3210 = vpack.c.b16 %v3020, %v3018
      %v3211 = vpack.c.b16 %v3023, %v3021
      %v3212 = vpack.c.b16 %v3024, %v3022
      %v3213 = vpack.c.b16 %v3027, %v3025
      %v3214 = vpack.c.b16 %v3028, %v3026
      %v3215 = vpack.c.b16 %v3031, %v3029
      %v3216 = vpack.c.b16 %v3032, %v3030
      %v3217 = vpack.c.b16 %v3035, %v3033
      %v3218 = vpack.c.b16 %v3036, %v3034
      %v3219 = vpack.c.b16 %v3039, %v3037
      %v3220 = vpack.c.b16 %v3040, %v3038
      %v3221 = vpack.c.b16 %v3043, %v3041
      %v3222 = vpack.c.b16 %v3044, %v3042
      %v3223 = vpack.c.b16 %v3047, %v3045
      %v3224 = vpack.c.b16 %v3048, %v3046
      %v3225 = vpack.c.b16 %v3051, %v3049
      %v3226 = vpack.c.b16 %v3052, %v3050
      %v3227 = vpack.c.b16 %v3055, %v3053
      %v3228 = vpack.c.b16 %v3056, %v3054
      %v3229 = vpack.c.b16 %v3059, %v3057
      %v3230 = vpack.c.b16 %v3060, %v3058
      %v3231 = vpack.c.b16 %v3063, %v3061
      %v3232 = vpack.c.b16 %v3064, %v3062
      %v3233 = vpack.c.b16 %v3067, %v3065
      %v3234 = vpack.c.b16 %v3068, %v3066
      %v3235 = vpack.c.b16 %v3071, %v3069
      %v3236 = vpack.c.b16 %v3072, %v3070
      %v3237 = vpack.c.b16 %v3075, %v3073
      %v3238 = vpack.c.b16 %v3076, %v3074
      %v3239 = vpack.c.b16 %v3079, %v3077
      %v3240 = vpack.c.b16 %v3080, %v3078
      %v3241 = vpack.c.b16 %v3083, %v3081
      %v3242 = vpack.c.b16 %v3084, %v3082
      %v3243 = vpack.c.b16 %v3087, %v3085
      %v3244 = vpack.c.b16 %v3088, %v3086
      %v3245 = vpack.c.b16 %v3091, %v3089
      %v3246 = vpack.c.b16 %v3092, %v3090
      %v3247 = vpack.c.b16 %v3095, %v3093
      %v3248 = vpack.c.b16 %v3096, %v3094
      %v3249 = vpack.c.b16 %v3099, %v3097
      %v3250 = vpack.c.b16 %v3100, %v3098
      %v3251 = vpack.c.b16 %v3103, %v3101
      %v3252 = vpack.c.b16 %v3104, %v3102
      %v3253 = vpack.c.b16 %v3107, %v3105
      %v3254 = vpack.c.b16 %v3108, %v3106
      %v3255 = vpack.c.b16 %v3111, %v3109
      %v3256 = vpack.c.b16 %v3112, %v3110
      %v3257 = vpack.c.b16 %v3115, %v3113
      %v3258 = vpack.c.b16 %v3116, %v3114
      %v3259 = vpack.c.b16 %v3119, %v3117
      %v3260 = vpack.c.b16 %v3120, %v3118
      %v3261 = vpack.c.b16 %v3123, %v3121
      %v3262 = vpack.c.b16 %v3124, %v3122
      %v3263 = vpack.c.b16 %v3127, %v3125
      %v3264 = vpack.c.b16 %v3128, %v3126
      %v3265 = vpack.c.b16 %v3131, %v3129
      %v3266 = vpack.c.b16 %v3132, %v3130
      %v3267 = vpack.c.b16 %v3135, %v3133
      %v3268 = vpack.c.b16 %v3136, %v3134
      %v3269 = vpack.c.b16 %v3139, %v3137
      %v3270 = vpack.c.b16 %v3140, %v3138
      %v3271 = vpack.c.b16 %v3143, %v3141
      %v3272 = vpack.c.b16 %v3144, %v3142
      %v3273 = vpack.c.b16 %v3147, %v3145
      %v3274 = vpack.c.b16 %v3148, %v3146
      %v3275 = vpack.c.b16 %v3151, %v3149
      %v3276 = vpack.c.b16 %v3152, %v3150
      %v3277 = vpack.c.b16 %v3155, %v3153
      %v3278 = vpack.c.b16 %v3156, %v3154
      %v3279 = vpack.c.b16 %v3159, %v3157
      %v3280 = vpack.c.b16 %v3160, %v3158
      %v3281 = vpack.c.b16 %v3163, %v3161
      %v3282 = vpack.c.b16 %v3164, %v3162
      %v3283 = vpack.c.b16 %v3167, %v3165
      %v3284 = vpack.c.b16 %v3168, %v3166
      %v3285 = vpack.c.b16 %v3171, %v3169
      %v3286 = vpack.c.b16 %v3172, %v3170
      %v3287 = vpack.c.b16 %v3175, %v3173
      %v3288 = vpack.c.b16 %v3176, %v3174
      %v3289 = vpack.c.b16 %v3179, %v3177
      %v3290 = vpack.c.b16 %v3180, %v3178
      %v3291 = vpack.c.b16 %v3183, %v3181
      %v3292 = vpack.c.b16 %v3184, %v3182
      %v3293 = vpack.c.b16 %v3187, %v3185
      %v3294 = vpack.c.b16 %v3188, %v3186
      %v3295 = vpack.c.b16 %v3191, %v3189
      %v3296 = vpack.c.b16 %v3192, %v3190
      %v3297 = vpack.c.b16 %v3195, %v3193
      %v3298 = vpack.c.b16 %v3196, %v3194
      %v3299 = vpack.c.b16 %v3199, %v3197
      %v3300 = vpack.c.b16 %v3200, %v3198
      %v3301 = vpack.c.b16 %v3203, %v3201
      %v3302 = vpack.c.b16 %v3204, %v3202
      %v3402 = vsel %vm1998, %v2812, 0
      %3404 = vmatprep.subr.bf16.mxu0 %v3206
      %3405 = vmatpush1.bf16.msra.mxu0 %v3205
      %3406 = vmatprep.subr.bf16.mxu0 %v3208
      %3407 = vmatpush1.bf16.msra.mxu0 %v3207
      %3408 = vmatprep.subr.bf16.mxu0 %v3210
      %3409 = vmatpush1.bf16.msra.mxu0 %v3209
      %3410 = vmatprep.subr.bf16.mxu0 %v3212
      %3411 = vmatpush1.bf16.msra.mxu0 %v3211
      %3412 = vmatprep.subr.bf16.mxu0 %v3214
      %3413 = vmatpush1.bf16.msra.mxu0 %v3213
      %3414 = vmatprep.subr.bf16.mxu0 %v3216
      %3415 = vmatpush1.bf16.msra.mxu0 %v3215
      %3416 = vmatprep.subr.bf16.mxu0 %v3218
      %3417 = vmatpush1.bf16.msra.mxu0 %v3217
      %3418 = vmatprep.subr.bf16.mxu0 %v3220
      %3419 = vmatpush1.bf16.msra.mxu0 %v3219
      %3420 = vmatprep.subr.bf16.mxu0 %v3222
      %3421 = vmatpush1.bf16.msra.mxu0 %v3221
      %3422 = vmatprep.subr.bf16.mxu0 %v3224
      %3423 = vmatpush1.bf16.msra.mxu0 %v3223
      %3424 = vmatprep.subr.bf16.mxu0 %v3226
      %3425 = vmatpush1.bf16.msra.mxu0 %v3225
      %3426 = vmatprep.subr.bf16.mxu0 %v3228
      %3427 = vmatpush1.bf16.msra.mxu0 %v3227
      %3428 = vmatprep.subr.bf16.mxu0 %v3230
      %3429 = vmatpush1.bf16.msra.mxu0 %v3229
      %3430 = vmatprep.subr.bf16.mxu0 %v3232
      %3431 = vmatpush1.bf16.msra.mxu0 %v3231
      %3432 = vmatprep.subr.bf16.mxu0 %v3234
      %3433 = vmatpush1.bf16.msra.mxu0 %v3233
      %3434 = vmatprep.subr.bf16.mxu0 %v3236
      %3435 = vmatpush1.bf16.msra.mxu0 %v3235
      %3436 = vmatprep.mubr.bf16.mxu0 %v2807
      %3437 = vmatmul.mubr.bf16.gmra.mrb[0].mxu0 %v2806
      %v3438 = vpop.f32.mrb[0].mxu0
      %v3439 = vadd.f32 0.0, %v3438
      %v3440 = vpop.f32.mrb[0].mxu0
      %v3441 = vadd.f32 0.0, %v3440
      %v3442 = vpop.f32.mrb[0].mxu0
      %v3443 = vadd.f32 0.0, %v3442
      %v3444 = vpop.f32.mrb[0].mxu0
      %v3445 = vadd.f32 0.0, %v3444
      %3446 = vdwg.mxu0
      %3447 = vmatprep.subr.bf16.mxu0 %v3238
      %3448 = vmatpush1.bf16.msra.mxu0 %v3237
      %3449 = vmatprep.subr.bf16.mxu0 %v3240
      %3450 = vmatpush1.bf16.msra.mxu0 %v3239
      %3451 = vmatprep.subr.bf16.mxu0 %v3242
      %3452 = vmatpush1.bf16.msra.mxu0 %v3241
      %3453 = vmatprep.subr.bf16.mxu0 %v3244
      %3454 = vmatpush1.bf16.msra.mxu0 %v3243
      %3455 = vmatprep.subr.bf16.mxu0 %v3246
      %3456 = vmatpush1.bf16.msra.mxu0 %v3245
      %3457 = vmatprep.subr.bf16.mxu0 %v3248
      %3458 = vmatpush1.bf16.msra.mxu0 %v3247
      %3459 = vmatprep.subr.bf16.mxu0 %v3250
      %3460 = vmatpush1.bf16.msra.mxu0 %v3249
      %3461 = vmatprep.subr.bf16.mxu0 %v3252
      %3462 = vmatpush1.bf16.msra.mxu0 %v3251
      %3463 = vmatprep.subr.bf16.mxu0 %v3254
      %3464 = vmatpush1.bf16.msra.mxu0 %v3253
      %3465 = vmatprep.subr.bf16.mxu0 %v3256
      %3466 = vmatpush1.bf16.msra.mxu0 %v3255
      %3467 = vmatprep.subr.bf16.mxu0 %v3258
      %3468 = vmatpush1.bf16.msra.mxu0 %v3257
      %3469 = vmatprep.subr.bf16.mxu0 %v3260
      %3470 = vmatpush1.bf16.msra.mxu0 %v3259
      %3471 = vmatprep.subr.bf16.mxu0 %v3262
      %3472 = vmatpush1.bf16.msra.mxu0 %v3261
      %3473 = vmatprep.subr.bf16.mxu0 %v3264
      %3474 = vmatpush1.bf16.msra.mxu0 %v3263
      %3475 = vmatprep.subr.bf16.mxu0 %v3266
      %3476 = vmatpush1.bf16.msra.mxu0 %v3265
      %3477 = vmatprep.subr.bf16.mxu0 %v3268
      %3478 = vmatpush1.bf16.msra.mxu0 %v3267
      %3479 = vmatprep.mubr.bf16.mxu0 %v2809
      %3480 = vmatmul.mubr.bf16.gmra.mrb[0].mxu0 %v2808
      %v3481 = vpop.f32.mrb[0].mxu0
      %v3482 = vadd.f32 %v3439, %v3481
      %v3483 = vpop.f32.mrb[0].mxu0
      %v3484 = vadd.f32 %v3441, %v3483
      %v3485 = vpop.f32.mrb[0].mxu0
      %v3486 = vadd.f32 %v3443, %v3485
      %v3487 = vpop.f32.mrb[0].mxu0
      %v3488 = vadd.f32 %v3445, %v3487
      %3489 = vdwg.mxu0
      %3490 = vmatprep.subr.bf16.mxu0 %v3270
      %3491 = vmatpush1.bf16.msra.mxu0 %v3269
      %3492 = vmatprep.subr.bf16.mxu0 %v3272
      %3493 = vmatpush1.bf16.msra.mxu0 %v3271
      %3494 = vmatprep.subr.bf16.mxu0 %v3274
      %3495 = vmatpush1.bf16.msra.mxu0 %v3273
      %3496 = vmatprep.subr.bf16.mxu0 %v3276
      %3497 = vmatpush1.bf16.msra.mxu0 %v3275
      %3498 = vmatprep.subr.bf16.mxu0 %v3278
      %3499 = vmatpush1.bf16.msra.mxu0 %v3277
      %3500 = vmatprep.subr.bf16.mxu0 %v3280
      %3501 = vmatpush1.bf16.msra.mxu0 %v3279
      %3502 = vmatprep.subr.bf16.mxu0 %v3282
      %3503 = vmatpush1.bf16.msra.mxu0 %v3281
      %3504 = vmatprep.subr.bf16.mxu0 %v3284
      %3505 = vmatpush1.bf16.msra.mxu0 %v3283
      %3506 = vmatprep.subr.bf16.mxu0 %v3286
      %3507 = vmatpush1.bf16.msra.mxu0 %v3285
      %3508 = vmatprep.subr.bf16.mxu0 %v3288
      %3509 = vmatpush1.bf16.msra.mxu0 %v3287
      %3510 = vmatprep.subr.bf16.mxu0 %v3290
      %3511 = vmatpush1.bf16.msra.mxu0 %v3289
      %3512 = vmatprep.subr.bf16.mxu0 %v3292
      %3513 = vmatpush1.bf16.msra.mxu0 %v3291
      %3514 = vmatprep.subr.bf16.mxu0 %v3294
      %3515 = vmatpush1.bf16.msra.mxu0 %v3293
      %3516 = vmatprep.subr.bf16.mxu0 %v3296
      %3517 = vmatpush1.bf16.msra.mxu0 %v3295
      %3518 = vmatprep.subr.bf16.mxu0 %v3298
      %3519 = vmatpush1.bf16.msra.mxu0 %v3297
      %3520 = vmatprep.subr.bf16.mxu0 %v3300
      %3521 = vmatpush1.bf16.msra.mxu0 %v3299
      %3522 = vmatprep.mubr.bf16.mxu0 %v2811
      %3523 = vmatmul.mubr.bf16.gmra.mrb[0].mxu0 %v2810
      %v3524 = vpop.f32.mrb[0].mxu0
      %v3525 = vadd.f32 %v3482, %v3524
      %v3526 = vpop.f32.mrb[0].mxu0
      %v3527 = vadd.f32 %v3484, %v3526
      %v3528 = vpop.f32.mrb[0].mxu0
      %v3529 = vadd.f32 %v3486, %v3528
      %v3530 = vpop.f32.mrb[0].mxu0
      %v3531 = vadd.f32 %v3488, %v3530
      %3532 = vdwg.mxu0
      %3533 = vmatprep.subr.bf16.mxu0 %v3302
      %3534 = vmatpush1.bf16.msra.mxu0 %v3301
      %3535 = vmatprep.subr.bf16.mxu0 0
      %3536 = vmatpush1.bf16.msra.mxu0 0
      %3537 = vmatprep.subr.bf16.mxu0 0
      %3538 = vmatpush1.bf16.msra.mxu0 0
      %3539 = vmatprep.subr.bf16.mxu0 0
      %3540 = vmatpush1.bf16.msra.mxu0 0
      %3541 = vmatprep.subr.bf16.mxu0 0
      %3542 = vmatpush1.bf16.msra.mxu0 0
      %3543 = vmatprep.subr.bf16.mxu0 0
      %3544 = vmatpush1.bf16.msra.mxu0 0
      %3545 = vmatprep.subr.bf16.mxu0 0
      %3546 = vmatpush1.bf16.msra.mxu0 0
      %3547 = vmatprep.subr.bf16.mxu0 0
      %3548 = vmatpush1.bf16.msra.mxu0 0
      %3549 = vmatprep.subr.bf16.mxu0 0
      %3550 = vmatpush1.bf16.msra.mxu0 0
      %3551 = vmatprep.subr.bf16.mxu0 0
      %3552 = vmatpush1.bf16.msra.mxu0 0
      %3553 = vmatprep.subr.bf16.mxu0 0
      %3554 = vmatpush1.bf16.msra.mxu0 0
      %3555 = vmatprep.subr.bf16.mxu0 0
      %3556 = vmatpush1.bf16.msra.mxu0 0
      %3557 = vmatprep.subr.bf16.mxu0 0
      %3558 = vmatpush1.bf16.msra.mxu0 0
      %3559 = vmatprep.subr.bf16.mxu0 0
      %3560 = vmatpush1.bf16.msra.mxu0 0
      %3561 = vmatprep.subr.bf16.mxu0 0
      %3562 = vmatpush1.bf16.msra.mxu0 0
      %3563 = vmatprep.subr.bf16.mxu0 0
      %3564 = vmatpush1.bf16.msra.mxu0 0
      %3565 = vmatprep.mubr.bf16.mxu0 0
      %3566 = vmatmul.mubr.bf16.gmra.mrb[0].mxu0 %v3402
      %v3567 = vpop.f32.mrb[0].mxu0
      %v3568 = vadd.f32 %v3525, %v3567
      %v3569 = vpop.f32.mrb[0].mxu0
      %v3570 = vadd.f32 %v3527, %v3569
      %v3571 = vpop.f32.mrb[0].mxu0
      %v3572 = vadd.f32 %v3529, %v3571
      %v3573 = vpop.f32.mrb[0].mxu0
      %v3574 = vadd.f32 %v3531, %v3573
      %3575 = vdwg.mxu0
      %v3576 = vld [vmem:[%s2 + $0x30] sm:$0xff]
      %v3577 = vld [vmem:[%s2 + $0x38] sm:$0xff]
      %v3578 = vld [vmem:[%s3 + $0x30] sm:$0xff]
      %v3579 = vld [vmem:[%s3 + $0x38] sm:$0xff]
      %v3580 = vpack.c.bf16 %v3572, %v3568
      %v3581 = vpack.c.bf16 %v3574, %v3570
      %3584 = vrot.lane.b32.xlu0 %v3580, 15
      %v3585 = vpop.permute.xlu0 %3584
      %3586 = vrot.lane.b32.xlu0 %v3581, 15
      %v3587 = vpop.permute.xlu0 %3586
      %vm3588 = vcmask 121856
      %v3589 = vsel %vm3588, %v3585, %v3587
      %vm3590 = vcmask 121856
      %v3592 = vsel %vm3590, 0, %v3585
      %vm3594 = vcmask 678912
      %v3596 = vsel %vm3594, %v3589, 0
      %v3599 = vunpack.c.l.b16 %v631
      %v3600 = vunpack.c.h.b16 %v631
      %v3601 = vpack.c.b16 %v3599, %v3599
      %v3602 = vpack.c.b16 %v3600, %v3600
      %v3604 = vpack.i.b16 %v3601, %v3601
      %v3606 = vlaneseq
      %v3607 = vshrl.u32 %v3606, 7
      %v3608 = vsub.s32 1, %v3607
      %v3609 = vrot.slane %v3604, %v3608
      %v3611 = vpack.i.b16 %v3602, %v3602
      %v3613 = vlaneseq
      %v3614 = vshrl.u32 %v3613, 7
      %v3615 = vsub.s32 1, %v3614
      %v3616 = vrot.slane %v3611, %v3615
      %v3617 = vmul.bf16 %v3592, %v3609
      %v3618 = vmul.bf16 %v3596, %v3616
      %v3619 = vshrl.u32 %v3601, 16
      %v3620 = vpack.i.b16 %v3619, %v3619
      %v3622 = vlaneseq
      %v3623 = vshrl.u32 %v3622, 7
      %v3624 = vsub.s32 1, %v3623
      %v3625 = vrot.slane %v3620, %v3624
      %v3626 = vshrl.u32 %v3602, 16
      %v3627 = vpack.i.b16 %v3626, %v3626
      %v3629 = vlaneseq
      %v3630 = vshrl.u32 %v3629, 7
      %v3631 = vsub.s32 1, %v3630
      %v3632 = vrot.slane %v3627, %v3631
      %3635 = vrot.lane.b32.xlu0 %v3625, 2
      %v3636 = vpop.permute.xlu0 %3635
      %3637 = vrot.lane.b32.xlu0 %v3632, 2
      %v3638 = vpop.permute.xlu0 %3637
      %v3639 = vsel %vm853, %v3636, %v3638
      %v3642 = vmul.bf16 %v3592, %v3636
      %v3643 = vmul.bf16 %v3596, %v3639
      %3646 = vrot.lane.b32.xlu0 %v3609, 14
      %v3647 = vpop.permute.xlu0 %3646
      %3648 = vrot.lane.b32.xlu0 %v3616, 14
      %v3649 = vpop.permute.xlu0 %3648
      %vm3650 = vcmask 113664
      %v3651 = vsel %vm3650, %v3647, %v3649
      %v3654 = vmul.bf16 %v3592, %v3647
      %v3655 = vmul.bf16 %v3596, %v3651
      %3656 = vrot.lane.b32.xlu0 %v3625, 16
      %v3657 = vpop.permute.xlu0 %3656
      %3658 = vrot.lane.b32.xlu0 %v3632, 16
      %v3659 = vpop.permute.xlu0 %3658
      %vm3660 = vcmask 130048
      %v3661 = vsel %vm3660, %v3657, %v3659
      %v3664 = vmul.bf16 %v3592, %v3657
      %v3665 = vmul.bf16 %v3596, %v3661
      %3666 = vrot.lane.b32.xlu0 %v3609, 28
      %v3667 = vpop.permute.xlu0 %3666
      %3668 = vrot.lane.b32.xlu0 %v3616, 28
      %v3669 = vpop.permute.xlu0 %3668
      %v3670 = vsel %vm895, %v3667, %v3669
      %v3673 = vmul.bf16 %v3592, %v3667
      %v3674 = vmul.bf16 %v3596, %v3670
      %3675 = vrot.lane.b32.xlu0 %v3625, 30
      %v3676 = vpop.permute.xlu0 %3675
      %3677 = vrot.lane.b32.xlu0 %v3632, 30
      %v3678 = vpop.permute.xlu0 %3677
      %v3679 = vsel %vm930, %v3676, %v3678
      %v3682 = vmul.bf16 %v3592, %v3676
      %v3683 = vmul.bf16 %v3596, %v3679
      %3686 = vrot.lane.b32.xlu0 %v3592, 127
      %v3687 = vpop.permute.xlu0 %3686
      %3688 = vrot.lane.b32.xlu0 %v3596, 127
      %v3689 = vpop.permute.xlu0 %3688
      %v3690 = vsel %vm1044, %v3687, %v3689
      %3695 = vrot.lane.b32.xlu0 %v3642, 126
      %v3696 = vpop.permute.xlu0 %3695
      %3697 = vrot.lane.b32.xlu0 %v3643, 126
      %v3698 = vpop.permute.xlu0 %3697
      %v3699 = vsel %vm1079, %v3696, %v3698
      %3704 = vrot.lane.b32.xlu0 %v3654, 114
      %v3705 = vpop.permute.xlu0 %3704
      %3706 = vrot.lane.b32.xlu0 %v3655, 114
      %v3707 = vpop.permute.xlu0 %3706
      %vm3708 = vcmask 932864
      %v3709 = vsel %vm3708, %v3705, %v3707
      %3712 = vrot.lane.b32.xlu0 %v3592, 113
      %v3713 = vpop.permute.xlu0 %3712
      %3714 = vrot.lane.b32.xlu0 %v3596, 113
      %v3715 = vpop.permute.xlu0 %3714
      %vm3716 = vcmask 924672
      %v3717 = vsel %vm3716, %v3713, %v3715
      %3722 = vrot.lane.b32.xlu0 %v3664, 112
      %v3723 = vpop.permute.xlu0 %3722
      %3724 = vrot.lane.b32.xlu0 %v3665, 112
      %v3725 = vpop.permute.xlu0 %3724
      %vm3726 = vcmask 916480
      %v3727 = vsel %vm3726, %v3723, %v3725
      %3732 = vrot.lane.b32.xlu0 %v3673, 100
      %v3733 = vpop.permute.xlu0 %3732
      %3734 = vrot.lane.b32.xlu0 %v3674, 100
      %v3735 = vpop.permute.xlu0 %3734
      %v3736 = vsel %vm1114, %v3733, %v3735
      %3739 = vrot.lane.b32.xlu0 %v3592, 99
      %v3740 = vpop.permute.xlu0 %3739
      %3741 = vrot.lane.b32.xlu0 %v3596, 99
      %v3742 = vpop.permute.xlu0 %3741
      %v3743 = vsel %vm1135, %v3740, %v3742
      %3748 = vrot.lane.b32.xlu0 %v3682, 98
      %v3749 = vpop.permute.xlu0 %3748
      %3750 = vrot.lane.b32.xlu0 %v3683, 98
      %v3751 = vpop.permute.xlu0 %3750
      %v3752 = vsel %vm1170, %v3749, %v3751
      %3756 = vset.pattern.permute.xlu0 0
      %3757 = vperm.xlu0 %3756, %v3578
      %v3758 = vpop.permute.xlu0 %3757
      %3761 = vset.pattern.permute.xlu0 0
      %3762 = vperm.xlu0 %3761, %v3579
      %v3763 = vpop.permute.xlu0 %3762
      %v3767 = vunpack.c.l.b16 %v3576
      %v3768 = vunpack.c.h.b16 %v3576
      %v3769 = vunpack.c.l.b16 %v3577
      %v3770 = vunpack.c.h.b16 %v3577
      %v3771 = vpack.c.b16 %v3769, %v3767
      %v3772 = vpack.c.b16 %v3770, %v3768
      %v3775 = vsel %vm1998, %v3772, 0
      %3777 = vmatprep.subr.bf16.mxu0 %v3618
      %3778 = vmatpush1.bf16.msra.mxu0 %v3617
      %3779 = vmatprep.subr.bf16.mxu0 %v3689
      %3780 = vmatpush1.bf16.msra.mxu0 %v3690
      %3781 = vmatprep.subr.bf16.mxu0 %v3698
      %3782 = vmatpush1.bf16.msra.mxu0 %v3699
      %3783 = vmatprep.subr.bf16.mxu0 %v3707
      %3784 = vmatpush1.bf16.msra.mxu0 %v3709
      %3785 = vmatprep.subr.bf16.mxu0 %v3715
      %3786 = vmatpush1.bf16.msra.mxu0 %v3717
      %3787 = vmatprep.subr.bf16.mxu0 %v3725
      %3788 = vmatpush1.bf16.msra.mxu0 %v3727
      %3789 = vmatprep.subr.bf16.mxu0 %v3735
      %3790 = vmatpush1.bf16.msra.mxu0 %v3736
      %3791 = vmatprep.subr.bf16.mxu0 %v3742
      %3792 = vmatpush1.bf16.msra.mxu0 %v3743
      %3793 = vmatprep.subr.bf16.mxu0 %v3751
      %3794 = vmatpush1.bf16.msra.mxu0 %v3752
      %3795 = vmatprep.subr.bf16.mxu0 0
      %3796 = vmatpush1.bf16.msra.mxu0 0
      %3797 = vmatprep.subr.bf16.mxu0 0
      %3798 = vmatpush1.bf16.msra.mxu0 0
      %3799 = vmatprep.subr.bf16.mxu0 0
      %3800 = vmatpush1.bf16.msra.mxu0 0
      %3801 = vmatprep.subr.bf16.mxu0 0
      %3802 = vmatpush1.bf16.msra.mxu0 0
      %3803 = vmatprep.subr.bf16.mxu0 0
      %3804 = vmatpush1.bf16.msra.mxu0 0
      %3805 = vmatprep.subr.bf16.mxu0 0
      %3806 = vmatpush1.bf16.msra.mxu0 0
      %3807 = vmatprep.subr.bf16.mxu0 0
      %3808 = vmatpush1.bf16.msra.mxu0 0
      %3809 = vmatprep.mubr.bf16.mxu0 %v3775
      %3810 = vmatmul.mubr.bf16.gmra.mrb[0].mxu0 %v3771
      %v3811 = vpop.f32.mrb[0].mxu0
      %v3812 = vadd.f32 %v3758, %v3811
      %v3813 = vpop.f32.mrb[0].mxu0
      %v3814 = vadd.f32 %v3758, %v3813
      %v3815 = vpop.f32.mrb[0].mxu0
      %v3816 = vadd.f32 %v3763, %v3815
      %v3817 = vpop.f32.mrb[0].mxu0
      %v3818 = vadd.f32 %v3763, %v3817
      %3819 = vdwg.mxu0
      %vm3820 = vcmp.gt.f32.partialorder %v3812, 0.0
      %vm3821 = vcmp.gt.f32.partialorder %v3814, 0.0
      %vm3822 = vcmp.gt.f32.partialorder %v3816, 0.0
      %vm3823 = vcmp.gt.f32.partialorder %v3818, 0.0
      %v3824 = vmul.f32 %v3812, 0.01
      %v3825 = vmul.f32 %v3814, 0.01
      %v3826 = vmul.f32 %v3816, 0.01
      %v3827 = vmul.f32 %v3818, 0.01
      %v3828 = vsel %vm3820, %v3812, %v3824
      %v3829 = vsel %vm3821, %v3814, %v3825
      %v3830 = vsel %vm3822, %v3816, %v3826
      %v3831 = vsel %vm3823, %v3818, %v3827
      %v3832 = vld [vmem:[%s2 + $0x40] sm:$0xff]
      %v3833 = vld [vmem:[%s2 + $0x48] sm:$0xff]
      %v3834 = vld [vmem:[%s3 + $0x40] sm:$0xff]
      %v3835 = vld [vmem:[%s3 + $0x48] sm:$0xff]
      %v3836 = vpack.c.bf16 %v3830, %v3828
      %v3837 = vpack.c.bf16 %v3831, %v3829
      %3840 = vrot.lane.b32.xlu0 %v3836, 15
      %v3841 = vpop.permute.xlu0 %3840
      %3842 = vrot.lane.b32.xlu0 %v3837, 15
      %v3843 = vpop.permute.xlu0 %3842
      %v3844 = vsel %vm3588, %v3841, %v3843
      %v3846 = vsel %vm3590, 0, %v3841
      %v3849 = vsel %vm3594, %v3844, 0
      %v3851 = vmul.bf16 %v3846, %v3609
      %v3852 = vmul.bf16 %v3849, %v3616
      %v3853 = vmul.bf16 %v3846, %v3636
      %v3854 = vmul.bf16 %v3849, %v3639
      %v3855 = vmul.bf16 %v3846, %v3647
      %v3856 = vmul.bf16 %v3849, %v3651
      %v3857 = vmul.bf16 %v3846, %v3657
      %v3858 = vmul.bf16 %v3849, %v3661
      %v3859 = vmul.bf16 %v3846, %v3667
      %v3860 = vmul.bf16 %v3849, %v3670
      %v3861 = vmul.bf16 %v3846, %v3676
      %v3862 = vmul.bf16 %v3849, %v3679
      %3865 = vrot.lane.b32.xlu0 %v3846, 127
      %v3866 = vpop.permute.xlu0 %3865
      %3867 = vrot.lane.b32.xlu0 %v3849, 127
      %v3868 = vpop.permute.xlu0 %3867
      %v3869 = vsel %vm1044, %v3866, %v3868
      %3874 = vrot.lane.b32.xlu0 %v3853, 126
      %v3875 = vpop.permute.xlu0 %3874
      %3876 = vrot.lane.b32.xlu0 %v3854, 126
      %v3877 = vpop.permute.xlu0 %3876
      %v3878 = vsel %vm1079, %v3875, %v3877
      %3883 = vrot.lane.b32.xlu0 %v3855, 114
      %v3884 = vpop.permute.xlu0 %3883
      %3885 = vrot.lane.b32.xlu0 %v3856, 114
      %v3886 = vpop.permute.xlu0 %3885
      %v3887 = vsel %vm3708, %v3884, %v3886
      %3890 = vrot.lane.b32.xlu0 %v3846, 113
      %v3891 = vpop.permute.xlu0 %3890
      %3892 = vrot.lane.b32.xlu0 %v3849, 113
      %v3893 = vpop.permute.xlu0 %3892
      %v3894 = vsel %vm3716, %v3891, %v3893
      %3899 = vrot.lane.b32.xlu0 %v3857, 112
      %v3900 = vpop.permute.xlu0 %3899
      %3901 = vrot.lane.b32.xlu0 %v3858, 112
      %v3902 = vpop.permute.xlu0 %3901
      %v3903 = vsel %vm3726, %v3900, %v3902
      %3908 = vrot.lane.b32.xlu0 %v3859, 100
      %v3909 = vpop.permute.xlu0 %3908
      %3910 = vrot.lane.b32.xlu0 %v3860, 100
      %v3911 = vpop.permute.xlu0 %3910
      %v3912 = vsel %vm1114, %v3909, %v3911
      %3915 = vrot.lane.b32.xlu0 %v3846, 99
      %v3916 = vpop.permute.xlu0 %3915
      %3917 = vrot.lane.b32.xlu0 %v3849, 99
      %v3918 = vpop.permute.xlu0 %3917
      %v3919 = vsel %vm1135, %v3916, %v3918
      %3924 = vrot.lane.b32.xlu0 %v3861, 98
      %v3925 = vpop.permute.xlu0 %3924
      %3926 = vrot.lane.b32.xlu0 %v3862, 98
      %v3927 = vpop.permute.xlu0 %3926
      %v3928 = vsel %vm1170, %v3925, %v3927
      %3932 = vset.pattern.permute.xlu0 0
      %3933 = vperm.xlu0 %3932, %v3834
      %v3934 = vpop.permute.xlu0 %3933
      %3937 = vset.pattern.permute.xlu0 0
      %3938 = vperm.xlu0 %3937, %v3835
      %v3939 = vpop.permute.xlu0 %3938
      %v3943 = vunpack.c.l.b16 %v3832
      %v3944 = vunpack.c.h.b16 %v3832
      %v3945 = vunpack.c.l.b16 %v3833
      %v3946 = vunpack.c.h.b16 %v3833
      %v3947 = vpack.c.b16 %v3945, %v3943
      %v3948 = vpack.c.b16 %v3946, %v3944
      %v3951 = vsel %vm1998, %v3948, 0
      %3953 = vmatprep.subr.bf16.mxu0 %v3852
      %3954 = vmatpush1.bf16.msra.mxu0 %v3851
      %3955 = vmatprep.subr.bf16.mxu0 %v3868
      %3956 = vmatpush1.bf16.msra.mxu0 %v3869
      %3957 = vmatprep.subr.bf16.mxu0 %v3877
      %3958 = vmatpush1.bf16.msra.mxu0 %v3878
      %3959 = vmatprep.subr.bf16.mxu0 %v3886
      %3960 = vmatpush1.bf16.msra.mxu0 %v3887
      %3961 = vmatprep.subr.bf16.mxu0 %v3893
      %3962 = vmatpush1.bf16.msra.mxu0 %v3894
      %3963 = vmatprep.subr.bf16.mxu0 %v3902
      %3964 = vmatpush1.bf16.msra.mxu0 %v3903
      %3965 = vmatprep.subr.bf16.mxu0 %v3911
      %3966 = vmatpush1.bf16.msra.mxu0 %v3912
      %3967 = vmatprep.subr.bf16.mxu0 %v3918
      %3968 = vmatpush1.bf16.msra.mxu0 %v3919
      %3969 = vmatprep.subr.bf16.mxu0 %v3927
      %3970 = vmatpush1.bf16.msra.mxu0 %v3928
      %3971 = vmatprep.subr.bf16.mxu0 0
      %3972 = vmatpush1.bf16.msra.mxu0 0
      %3973 = vmatprep.subr.bf16.mxu0 0
      %3974 = vmatpush1.bf16.msra.mxu0 0
      %3975 = vmatprep.subr.bf16.mxu0 0
      %3976 = vmatpush1.bf16.msra.mxu0 0
      %3977 = vmatprep.subr.bf16.mxu0 0
      %3978 = vmatpush1.bf16.msra.mxu0 0
      %3979 = vmatprep.subr.bf16.mxu0 0
      %3980 = vmatpush1.bf16.msra.mxu0 0
      %3981 = vmatprep.subr.bf16.mxu0 0
      %3982 = vmatpush1.bf16.msra.mxu0 0
      %3983 = vmatprep.subr.bf16.mxu0 0
      %3984 = vmatpush1.bf16.msra.mxu0 0
      %3985 = vmatprep.mubr.bf16.mxu0 %v3951
      %3986 = vmatmul.mubr.bf16.gmra.mrb[0].mxu0 %v3947
      %v3987 = vpop.f32.mrb[0].mxu0
      %v3988 = vadd.f32 %v3934, %v3987
      %v3989 = vpop.f32.mrb[0].mxu0
      %v3990 = vadd.f32 %v3934, %v3989
      %v3991 = vpop.f32.mrb[0].mxu0
      %v3992 = vadd.f32 %v3939, %v3991
      %v3993 = vpop.f32.mrb[0].mxu0
      %v3994 = vadd.f32 %v3939, %v3993
      %3995 = vdwg.mxu0
      %v3996 = vadd.f32 %v3988, %v3568
      %v3997 = vadd.f32 %v3990, %v3570
      %v3998 = vadd.f32 %v3992, %v3572
      %v3999 = vadd.f32 %v3994, %v3574
      %vm4000 = vcmp.gt.f32.partialorder %v3996, 0.0
      %vm4001 = vcmp.gt.f32.partialorder %v3997, 0.0
      %vm4002 = vcmp.gt.f32.partialorder %v3998, 0.0
      %vm4003 = vcmp.gt.f32.partialorder %v3999, 0.0
      %v4004 = vmul.f32 %v3996, 0.01
      %v4005 = vmul.f32 %v3997, 0.01
      %v4006 = vmul.f32 %v3998, 0.01
      %v4007 = vmul.f32 %v3999, 0.01
      %v4008 = vsel %vm4000, %v3996, %v4004
      %v4009 = vsel %vm4001, %v3997, %v4005
      %v4010 = vsel %vm4002, %v3998, %v4006
      %v4011 = vsel %vm4003, %v3999, %v4007
      %v4012 = vpack.c.bf16 %v4010, %v4008
      %v4013 = vpack.c.bf16 %v4011, %v4009
      %v4014 = vld [vmem:[%s11] sm:$0xf]
      %v4015 = vld [vmem:[%s11 + $0x4] sm:$0xf]
      %v4016 = vld [vmem:[%s11 + $0x8] sm:$0xf]
      %v4017 = vld [vmem:[%s11 + $0xc] sm:$0xf]
      %v4018 = vld [vmem:[%s11 + $0x10] sm:$0xf]
      %v4019 = vld [vmem:[%s11 + $0x14] sm:$0xf]
      %v4020 = vld [vmem:[%s11 + $0x18] sm:$0xf]
      %v4021 = vld [vmem:[%s11 + $0x1c] sm:$0xf]
      %v4022 = vld [vmem:[%s11 + $0x20] sm:$0xf]
      %v4023 = vld [vmem:[%s11 + $0x24] sm:$0xf]
      %v4024 = vld [vmem:[%s11 + $0x28] sm:$0xf]
      %v4025 = vld [vmem:[%s11 + $0x2c] sm:$0xf]
      %v4026 = vld [vmem:[%s11 + $0x30] sm:$0xf]
      %v4027 = vld [vmem:[%s11 + $0x34] sm:$0xf]
      %v4028 = vld [vmem:[%s11 + $0x38] sm:$0xf]
      %v4029 = vld [vmem:[%s11 + $0x3c] sm:$0xf]
      %v4030 = vld [vmem:[%s11 + $0x40] sm:$0xf]
      %v4031 = vld [vmem:[%s11 + $0x44] sm:$0xf]
      %v4032 = vld [vmem:[%s11 + $0x48] sm:$0xf]
      %v4033 = vld [vmem:[%s11 + $0x4c] sm:$0xf]
      %v4034 = vld [vmem:[%s11 + $0x50] sm:$0xf]
      %v4035 = vld [vmem:[%s11 + $0x54] sm:$0xf]
      %v4036 = vld [vmem:[%s11 + $0x58] sm:$0xf]
      %v4037 = vld [vmem:[%s11 + $0x5c] sm:$0xf]
      %v4038 = vld [vmem:[%s11 + $0x60] sm:$0x3]
      %v4064 = vunpack.c.l.b16 %v4014
      %v4065 = vunpack.c.l.b16 %v4015
      %v4066 = vunpack.c.l.b16 %v4016
      %v4067 = vunpack.c.l.b16 %v4017
      %v4068 = vunpack.c.l.b16 %v4018
      %v4069 = vunpack.c.l.b16 %v4019
      %v4070 = vunpack.c.l.b16 %v4020
      %v4071 = vunpack.c.l.b16 %v4021
      %v4072 = vunpack.c.l.b16 %v4022
      %v4073 = vunpack.c.l.b16 %v4023
      %v4074 = vunpack.c.l.b16 %v4024
      %v4075 = vunpack.c.l.b16 %v4025
      %v4076 = vunpack.c.l.b16 %v4026
      %v4077 = vunpack.c.l.b16 %v4027
      %v4078 = vunpack.c.l.b16 %v4028
      %v4079 = vunpack.c.l.b16 %v4029
      %v4080 = vunpack.c.l.b16 %v4030
      %v4081 = vunpack.c.l.b16 %v4031
      %v4082 = vunpack.c.l.b16 %v4032
      %v4083 = vunpack.c.l.b16 %v4033
      %v4084 = vunpack.c.l.b16 %v4034
      %v4085 = vunpack.c.l.b16 %v4035
      %v4086 = vunpack.c.l.b16 %v4036
      %v4087 = vunpack.c.l.b16 %v4037
      %v4088 = vunpack.c.l.b16 %v4038
      %v4089 = vpack.c.b16 %v4065, %v4064
      %v4090 = vpack.c.b16 %v4067, %v4066
      %v4091 = vpack.c.b16 %v4069, %v4068
      %v4092 = vpack.c.b16 %v4071, %v4070
      %v4093 = vpack.c.b16 %v4073, %v4072
      %v4094 = vpack.c.b16 %v4075, %v4074
      %v4095 = vpack.c.b16 %v4077, %v4076
      %v4096 = vpack.c.b16 %v4079, %v4078
      %v4097 = vpack.c.b16 %v4081, %v4080
      %v4098 = vpack.c.b16 %v4083, %v4082
      %v4099 = vpack.c.b16 %v4085, %v4084
      %v4100 = vpack.c.b16 %v4087, %v4086
      %v4101 = vpack.c.b16 %v4088, %v4088
      %vm4114 = vcmask 556032
      %v4116 = vsel %vm4114, %v4013, 0
      %v4119 = vsel %vm1268, %v4101, 0
      %4121 = vmatprep.subr.bf16.mxu0 0
      %4122 = vmatpush1.bf16.msra.mxu0 %v4089
      %4123 = vmatprep.subr.bf16.mxu0 0
      %4124 = vmatpush1.bf16.msra.mxu0 %v4090
      %4125 = vmatprep.subr.bf16.mxu0 0
      %4126 = vmatpush1.bf16.msra.mxu0 %v4091
      %4127 = vmatprep.subr.bf16.mxu0 0
      %4128 = vmatpush1.bf16.msra.mxu0 %v4092
      %4129 = vmatprep.subr.bf16.mxu0 0
      %4130 = vmatpush1.bf16.msra.mxu0 %v4093
      %4131 = vmatprep.subr.bf16.mxu0 0
      %4132 = vmatpush1.bf16.msra.mxu0 %v4094
      %4133 = vmatprep.subr.bf16.mxu0 0
      %4134 = vmatpush1.bf16.msra.mxu0 %v4095
      %4135 = vmatprep.subr.bf16.mxu0 0
      %4136 = vmatpush1.bf16.msra.mxu0 %v4096
      %4137 = vmatprep.subr.bf16.mxu0 0
      %4138 = vmatpush1.bf16.msra.mxu0 %v4097
      %4139 = vmatprep.subr.bf16.mxu0 0
      %4140 = vmatpush1.bf16.msra.mxu0 %v4098
      %4141 = vmatprep.subr.bf16.mxu0 0
      %4142 = vmatpush1.bf16.msra.mxu0 %v4099
      %4143 = vmatprep.subr.bf16.mxu0 0
      %4144 = vmatpush1.bf16.msra.mxu0 %v4100
      %4145 = vmatprep.subr.bf16.mxu0 0
      %4146 = vmatpush1.bf16.msra.mxu0 %v4119
      %4147 = vmatprep.subr.bf16.mxu0 0
      %4148 = vmatpush1.bf16.msra.mxu0 0
      %4149 = vmatprep.subr.bf16.mxu0 0
      %4150 = vmatpush1.bf16.msra.mxu0 0
      %4151 = vmatprep.subr.bf16.mxu0 0
      %4152 = vmatpush1.bf16.msra.mxu0 0
      %4153 = vmatprep.mubr.bf16.mxu0 %v4116
      %4154 = vmatmul.mubr.bf16.gmra.mrb[0].mxu0 %v4012
      %v4155 = vpop.f32.mrb[0].mxu0
      %v4156 = vadd.f32 0.0, %v4155
      %v4157 = vpop.f32.mrb[0].mxu0
      %v4158 = vpop.f32.mrb[0].mxu0
      %v4159 = vadd.f32 0.0, %v4158
      %v4160 = vpop.f32.mrb[0].mxu0
      %4161 = vdwg.mxu0
      %v4162 = vpack.c.bf16 %v4159, %v4156
      %v4163 = vld [vmem:[%s14] sm:$0xff]
      %v4164 = vld [vmem:[%s14 + $0x8] sm:$0xff]
      %v4165 = vld [vmem:[%s14 + $0x10] sm:$0xff]
      %v4166 = vld [vmem:[%s14 + $0x18] sm:$0xf]
      %v4167 = vld [vmem:[%s14 + $0x1c] sm:$0xff]
      %v4168 = vld [vmem:[%s14 + $0x24] sm:$0xff]
      %v4169 = vld [vmem:[%s14 + $0x2c] sm:$0xff]
      %v4170 = vld [vmem:[%s14 + $0x34] sm:$0xf]
      %v4171 = vld [vmem:[%s14 + $0x38] sm:$0xff]
      %v4172 = vld [vmem:[%s14 + $0x40] sm:$0xff]
      %v4173 = vld [vmem:[%s14 + $0x48] sm:$0xff]
      %v4174 = vld [vmem:[%s14 + $0x50] sm:$0xf]
      %v4175 = vld [vmem:[%s14 + $0x54] sm:$0xff]
      %v4176 = vld [vmem:[%s14 + $0x5c] sm:$0xff]
      %v4177 = vld [vmem:[%s14 + $0x64] sm:$0xff]
      %v4178 = vld [vmem:[%s14 + $0x6c] sm:$0xf]
      %v4179 = vld [vmem:[%s14 + $0x70] sm:$0xff]
      %v4180 = vld [vmem:[%s14 + $0x78] sm:$0xff]
      %v4181 = vld [vmem:[%s14 + $0x80] sm:$0xff]
      %v4182 = vld [vmem:[%s14 + $0x88] sm:$0xf]
      %v4183 = vld [vmem:[%s14 + $0x8c] sm:$0xff]
      %v4184 = vld [vmem:[%s14 + $0x94] sm:$0xff]
      %v4185 = vld [vmem:[%s14 + $0x9c] sm:$0xff]
      %v4186 = vld [vmem:[%s14 + $0xa4] sm:$0xf]
      %v4187 = vld [vmem:[%s14 + $0xa8] sm:$0x11]
      %v4188 = vld [vmem:[%s14 + $0xb0] sm:$0x11]
      %v4189 = vld [vmem:[%s14 + $0xb8] sm:$0x11]
      %v4190 = vld [vmem:[%s14 + $0xc0] sm:$0x1]
      %v4219 = vunpack.c.l.b16 %v4163
      %v4220 = vunpack.c.h.b16 %v4163
      %v4221 = vunpack.c.l.b16 %v4164
      %v4222 = vunpack.c.h.b16 %v4164
      %v4223 = vunpack.c.l.b16 %v4165
      %v4224 = vunpack.c.h.b16 %v4165
      %v4225 = vunpack.c.l.b16 %v4166
      %v4226 = vunpack.c.l.b16 %v4167
      %v4227 = vunpack.c.h.b16 %v4167
      %v4228 = vunpack.c.l.b16 %v4168
      %v4229 = vunpack.c.h.b16 %v4168
      %v4230 = vunpack.c.l.b16 %v4169
      %v4231 = vunpack.c.h.b16 %v4169
      %v4232 = vunpack.c.l.b16 %v4170
      %v4233 = vunpack.c.l.b16 %v4171
      %v4234 = vunpack.c.h.b16 %v4171
      %v4235 = vunpack.c.l.b16 %v4172
      %v4236 = vunpack.c.h.b16 %v4172
      %v4237 = vunpack.c.l.b16 %v4173
      %v4238 = vunpack.c.h.b16 %v4173
      %v4239 = vunpack.c.l.b16 %v4174
      %v4240 = vunpack.c.l.b16 %v4175
      %v4241 = vunpack.c.h.b16 %v4175
      %v4242 = vunpack.c.l.b16 %v4176
      %v4243 = vunpack.c.h.b16 %v4176
      %v4244 = vunpack.c.l.b16 %v4177
      %v4245 = vunpack.c.h.b16 %v4177
      %v4246 = vunpack.c.l.b16 %v4178
      %v4247 = vunpack.c.l.b16 %v4179
      %v4248 = vunpack.c.h.b16 %v4179
      %v4249 = vunpack.c.l.b16 %v4180
      %v4250 = vunpack.c.h.b16 %v4180
      %v4251 = vunpack.c.l.b16 %v4181
      %v4252 = vunpack.c.h.b16 %v4181
      %v4253 = vunpack.c.l.b16 %v4182
      %v4254 = vunpack.c.l.b16 %v4183
      %v4255 = vunpack.c.h.b16 %v4183
      %v4256 = vunpack.c.l.b16 %v4184
      %v4257 = vunpack.c.h.b16 %v4184
      %v4258 = vunpack.c.l.b16 %v4185
      %v4259 = vunpack.c.h.b16 %v4185
      %v4260 = vunpack.c.l.b16 %v4186
      %v4261 = vunpack.c.l.b16 %v4187
      %v4262 = vunpack.c.h.b16 %v4187
      %v4263 = vunpack.c.l.b16 %v4188
      %v4264 = vunpack.c.h.b16 %v4188
      %v4265 = vunpack.c.l.b16 %v4189
      %v4266 = vunpack.c.h.b16 %v4189
      %v4267 = vunpack.c.l.b16 %v4190
      %v4268 = vpack.c.b16 %v4226, %v4219
      %v4269 = vpack.c.b16 %v4227, %v4220
      %v4270 = vpack.c.b16 %v4228, %v4221
      %v4271 = vpack.c.b16 %v4229, %v4222
      %v4272 = vpack.c.b16 %v4230, %v4223
      %v4273 = vpack.c.b16 %v4231, %v4224
      %v4274 = vpack.c.b16 %v4232, %v4225
      %v4275 = vpack.c.b16 %v4240, %v4233
      %v4276 = vpack.c.b16 %v4241, %v4234
      %v4277 = vpack.c.b16 %v4242, %v4235
      %v4278 = vpack.c.b16 %v4243, %v4236
      %v4279 = vpack.c.b16 %v4244, %v4237
      %v4280 = vpack.c.b16 %v4245, %v4238
      %v4281 = vpack.c.b16 %v4246, %v4239
      %v4282 = vpack.c.b16 %v4254, %v4247
      %v4283 = vpack.c.b16 %v4255, %v4248
      %v4284 = vpack.c.b16 %v4256, %v4249
      %v4285 = vpack.c.b16 %v4257, %v4250
      %v4286 = vpack.c.b16 %v4258, %v4251
      %v4287 = vpack.c.b16 %v4259, %v4252
      %v4288 = vpack.c.b16 %v4260, %v4253
      %v4289 = vpack.c.b16 %v4261, %v4261
      %v4290 = vpack.c.b16 %v4262, %v4262
      %v4291 = vpack.c.b16 %v4263, %v4263
      %v4292 = vpack.c.b16 %v4264, %v4264
      %v4293 = vpack.c.b16 %v4265, %v4265
      %v4294 = vpack.c.b16 %v4266, %v4266
      %v4295 = vpack.c.b16 %v4267, %v4267
      %vm4317 = vcmask 400384
      %v4319 = vsel %vm4317, %v4162, 0
      %vm4321 = vcmask 1040384
      %v4322 = vsel 0, 4294967295, 65535
      %v4323 = vsel %vm4321, %v4322, 0
      %v4325 = vand.u32 %v4289, %v4323
      %v4328 = vand.u32 %v4290, %v4323
      %v4331 = vand.u32 %v4291, %v4323
      %v4334 = vand.u32 %v4292, %v4323
      %v4337 = vand.u32 %v4293, %v4323
      %v4340 = vand.u32 %v4294, %v4323
      %v4343 = vand.u32 %v4295, %v4323
      %4345 = vmatprep.subr.bf16.mxu0 %v4269
      %4346 = vmatpush1.bf16.msra.mxu0 %v4268
      %4347 = vmatprep.subr.bf16.mxu0 %v4276
      %4348 = vmatpush1.bf16.msra.mxu0 %v4275
      %4349 = vmatprep.subr.bf16.mxu0 %v4283
      %4350 = vmatpush1.bf16.msra.mxu0 %v4282
      %4351 = vmatprep.subr.bf16.mxu0 %v4328
      %4352 = vmatpush1.bf16.msra.mxu0 %v4325
      %4353 = vmatprep.subr.bf16.mxu0 0
      %4354 = vmatpush1.bf16.msra.mxu0 0
      %4355 = vmatprep.subr.bf16.mxu0 0
      %4356 = vmatpush1.bf16.msra.mxu0 0
      %4357 = vmatprep.subr.bf16.mxu0 0
      %4358 = vmatpush1.bf16.msra.mxu0 0
      %4359 = vmatprep.subr.bf16.mxu0 0
      %4360 = vmatpush1.bf16.msra.mxu0 0
      %4361 = vmatprep.subr.bf16.mxu0 0
      %4362 = vmatpush1.bf16.msra.mxu0 0
      %4363 = vmatprep.subr.bf16.mxu0 0
      %4364 = vmatpush1.bf16.msra.mxu0 0
      %4365 = vmatprep.subr.bf16.mxu0 0
      %4366 = vmatpush1.bf16.msra.mxu0 0
      %4367 = vmatprep.subr.bf16.mxu0 0
      %4368 = vmatpush1.bf16.msra.mxu0 0
      %4369 = vmatprep.subr.bf16.mxu0 0
      %4370 = vmatpush1.bf16.msra.mxu0 0
      %4371 = vmatprep.subr.bf16.mxu0 0
      %4372 = vmatpush1.bf16.msra.mxu0 0
      %4373 = vmatprep.subr.bf16.mxu0 0
      %4374 = vmatpush1.bf16.msra.mxu0 0
      %4375 = vmatprep.subr.bf16.mxu0 0
      %4376 = vmatpush1.bf16.msra.mxu0 0
      %4377 = vmatprep.mubr.bf16.mxu0 0
      %4378 = vmatmul.mubr.bf16.gmra.mrb[0].mxu0 %v4319
      %v4379 = vpop.f32.mrb[0].mxu0
      %v4380 = vadd.f32 0.0, %v4379
      %v4381 = vpop.f32.mrb[0].mxu0
      %v4382 = vadd.f32 0.0, %v4381
      %v4383 = vpop.f32.mrb[0].mxu0
      %v4384 = vadd.f32 0.0, %v4383
      %v4385 = vpop.f32.mrb[0].mxu0
      %v4386 = vadd.f32 0.0, %v4385
      %4387 = vdwg.mxu0
      %4388 = vmatprep.subr.bf16.mxu0 %v4271
      %4389 = vmatpush1.bf16.msra.mxu0 %v4270
      %4390 = vmatprep.subr.bf16.mxu0 %v4278
      %4391 = vmatpush1.bf16.msra.mxu0 %v4277
      %4392 = vmatprep.subr.bf16.mxu0 %v4285
      %4393 = vmatpush1.bf16.msra.mxu0 %v4284
      %4394 = vmatprep.subr.bf16.mxu0 %v4334
      %4395 = vmatpush1.bf16.msra.mxu0 %v4331
      %4396 = vmatprep.subr.bf16.mxu0 0
      %4397 = vmatpush1.bf16.msra.mxu0 0
      %4398 = vmatprep.subr.bf16.mxu0 0
      %4399 = vmatpush1.bf16.msra.mxu0 0
      %4400 = vmatprep.subr.bf16.mxu0 0
      %4401 = vmatpush1.bf16.msra.mxu0 0
      %4402 = vmatprep.subr.bf16.mxu0 0
      %4403 = vmatpush1.bf16.msra.mxu0 0
      %4404 = vmatprep.subr.bf16.mxu0 0
      %4405 = vmatpush1.bf16.msra.mxu0 0
      %4406 = vmatprep.subr.bf16.mxu0 0
      %4407 = vmatpush1.bf16.msra.mxu0 0
      %4408 = vmatprep.subr.bf16.mxu0 0
      %4409 = vmatpush1.bf16.msra.mxu0 0
      %4410 = vmatprep.subr.bf16.mxu0 0
      %4411 = vmatpush1.bf16.msra.mxu0 0
      %4412 = vmatprep.subr.bf16.mxu0 0
      %4413 = vmatpush1.bf16.msra.mxu0 0
      %4414 = vmatprep.subr.bf16.mxu0 0
      %4415 = vmatpush1.bf16.msra.mxu0 0
      %4416 = vmatprep.subr.bf16.mxu0 0
      %4417 = vmatpush1.bf16.msra.mxu0 0
      %4418 = vmatprep.subr.bf16.mxu0 0
      %4419 = vmatpush1.bf16.msra.mxu0 0
      %4420 = vmatprep.mubr.bf16.mxu0 0
      %4421 = vmatmul.mubr.bf16.gmra.mrb[0].mxu0 %v4319
      %v4422 = vpop.f32.mrb[0].mxu0
      %v4423 = vadd.f32 0.0, %v4422
      %v4424 = vpop.f32.mrb[0].mxu0
      %v4425 = vadd.f32 0.0, %v4424
      %v4426 = vpop.f32.mrb[0].mxu0
      %v4427 = vadd.f32 0.0, %v4426
      %v4428 = vpop.f32.mrb[0].mxu0
      %v4429 = vadd.f32 0.0, %v4428
      %4430 = vdwg.mxu0
      %4431 = vmatprep.subr.bf16.mxu0 %v4273
      %4432 = vmatpush1.bf16.msra.mxu0 %v4272
      %4433 = vmatprep.subr.bf16.mxu0 %v4280
      %4434 = vmatpush1.bf16.msra.mxu0 %v4279
      %4435 = vmatprep.subr.bf16.mxu0 %v4287
      %4436 = vmatpush1.bf16.msra.mxu0 %v4286
      %4437 = vmatprep.subr.bf16.mxu0 %v4340
      %4438 = vmatpush1.bf16.msra.mxu0 %v4337
      %4439 = vmatprep.subr.bf16.mxu0 0
      %4440 = vmatpush1.bf16.msra.mxu0 0
      %4441 = vmatprep.subr.bf16.mxu0 0
      %4442 = vmatpush1.bf16.msra.mxu0 0
      %4443 = vmatprep.subr.bf16.mxu0 0
      %4444 = vmatpush1.bf16.msra.mxu0 0
      %4445 = vmatprep.subr.bf16.mxu0 0
      %4446 = vmatpush1.bf16.msra.mxu0 0
      %4447 = vmatprep.subr.bf16.mxu0 0
      %4448 = vmatpush1.bf16.msra.mxu0 0
      %4449 = vmatprep.subr.bf16.mxu0 0
      %4450 = vmatpush1.bf16.msra.mxu0 0
      %4451 = vmatprep.subr.bf16.mxu0 0
      %4452 = vmatpush1.bf16.msra.mxu0 0
      %4453 = vmatprep.subr.bf16.mxu0 0
      %4454 = vmatpush1.bf16.msra.mxu0 0
      %4455 = vmatprep.subr.bf16.mxu0 0
      %4456 = vmatpush1.bf16.msra.mxu0 0
      %4457 = vmatprep.subr.bf16.mxu0 0
      %4458 = vmatpush1.bf16.msra.mxu0 0
      %4459 = vmatprep.subr.bf16.mxu0 0
      %4460 = vmatpush1.bf16.msra.mxu0 0
      %4461 = vmatprep.subr.bf16.mxu0 0
      %4462 = vmatpush1.bf16.msra.mxu0 0
      %4463 = vmatprep.mubr.bf16.mxu0 0
      %4464 = vmatmul.mubr.bf16.gmra.mrb[0].mxu0 %v4319
      %v4465 = vpop.f32.mrb[0].mxu0
      %v4466 = vadd.f32 0.0, %v4465
      %v4467 = vpop.f32.mrb[0].mxu0
      %v4468 = vadd.f32 0.0, %v4467
      %v4469 = vpop.f32.mrb[0].mxu0
      %v4470 = vadd.f32 0.0, %v4469
      %v4471 = vpop.f32.mrb[0].mxu0
      %v4472 = vadd.f32 0.0, %v4471
      %4473 = vdwg.mxu0
      %4474 = vmatprep.subr.bf16.mxu0 0
      %4475 = vmatpush1.bf16.msra.mxu0 %v4274
      %4476 = vmatprep.subr.bf16.mxu0 0
      %4477 = vmatpush1.bf16.msra.mxu0 %v4281
      %4478 = vmatprep.subr.bf16.mxu0 0
      %4479 = vmatpush1.bf16.msra.mxu0 %v4288
      %4480 = vmatprep.subr.bf16.mxu0 0
      %4481 = vmatpush1.bf16.msra.mxu0 %v4343
      %4482 = vmatprep.subr.bf16.mxu0 0
      %4483 = vmatpush1.bf16.msra.mxu0 0
      %4484 = vmatprep.subr.bf16.mxu0 0
      %4485 = vmatpush1.bf16.msra.mxu0 0
      %4486 = vmatprep.subr.bf16.mxu0 0
      %4487 = vmatpush1.bf16.msra.mxu0 0
      %4488 = vmatprep.subr.bf16.mxu0 0
      %4489 = vmatpush1.bf16.msra.mxu0 0
      %4490 = vmatprep.subr.bf16.mxu0 0
      %4491 = vmatpush1.bf16.msra.mxu0 0
      %4492 = vmatprep.subr.bf16.mxu0 0
      %4493 = vmatpush1.bf16.msra.mxu0 0
      %4494 = vmatprep.subr.bf16.mxu0 0
      %4495 = vmatpush1.bf16.msra.mxu0 0
      %4496 = vmatprep.subr.bf16.mxu0 0
      %4497 = vmatpush1.bf16.msra.mxu0 0
      %4498 = vmatprep.subr.bf16.mxu0 0
      %4499 = vmatpush1.bf16.msra.mxu0 0
      %4500 = vmatprep.subr.bf16.mxu0 0
      %4501 = vmatpush1.bf16.msra.mxu0 0
      %4502 = vmatprep.subr.bf16.mxu0 0
      %4503 = vmatpush1.bf16.msra.mxu0 0
      %4504 = vmatprep.subr.bf16.mxu0 0
      %4505 = vmatpush1.bf16.msra.mxu0 0
      %4506 = vmatprep.mubr.bf16.mxu0 0
      %4507 = vmatmul.mubr.bf16.gmra.mrb[0].mxu0 %v4319
      %v4508 = vpop.f32.mrb[0].mxu0
      %v4509 = vadd.f32 0.0, %v4508
      %v4510 = vpop.f32.mrb[0].mxu0
      %v4511 = vpop.f32.mrb[0].mxu0
      %v4512 = vadd.f32 0.0, %v4511
      %v4513 = vpop.f32.mrb[0].mxu0
      %4514 = vdwg.mxu0
      %v4515 = vld [vmem:[%s15] sm:$0xff]
      %v4516 = vld [vmem:[%s15 + $0x8] sm:$0xff]
      %v4517 = vld [vmem:[%s15 + $0x10] sm:$0xff]
      %v4518 = vld [vmem:[%s15 + $0x18] sm:$0xff]
      %v4519 = vld [vmem:[%s15 + $0x20] sm:$0xff]
      %v4520 = vld [vmem:[%s15 + $0x28] sm:$0xff]
      %v4521 = vld [vmem:[%s15 + $0x30] sm:$0xff]
      %v4522 = vld [vmem:[%s15 + $0x38] sm:$0xff]
      %v4523 = vld [vmem:[%s15 + $0x40] sm:$0xff]
      %v4524 = vld [vmem:[%s15 + $0x48] sm:$0xff]
      %v4525 = vld [vmem:[%s15 + $0x50] sm:$0xff]
      %v4526 = vld [vmem:[%s15 + $0x58] sm:$0xff]
      %v4527 = vld [vmem:[%s15 + $0x60] sm:$0xff]
      %v4528 = vld [vmem:[%s15 + $0x68] sm:$0xff]
      %v4529 = vmul.f32 %v4380, %v4515
      %v4530 = vmul.f32 %v4382, %v4516
      %v4531 = vmul.f32 %v4423, %v4517
      %v4532 = vmul.f32 %v4425, %v4518
      %v4533 = vmul.f32 %v4466, %v4519
      %v4534 = vmul.f32 %v4468, %v4520
      %v4535 = vmul.f32 %v4509, %v4521
      %v4536 = vmul.f32 %v4384, %v4522
      %v4537 = vmul.f32 %v4386, %v4523
      %v4538 = vmul.f32 %v4427, %v4524
      %v4539 = vmul.f32 %v4429, %v4525
      %v4540 = vmul.f32 %v4470, %v4526
      %v4541 = vmul.f32 %v4472, %v4527
      %v4542 = vmul.f32 %v4512, %v4528
      %v4543 = vadd.f32 %v4529, %v4536
      %v4544 = vrot.slane %v4543, 4
      %v4545 = vadd.f32 %v4543, %v4544
      %v4546 = vrot.slane %v4545, 2
      %v4547 = vadd.f32 %v4545, %v4546
      %v4548 = vrot.slane %v4547, 1
      %v4549 = vadd.f32 %v4547, %v4548
      %v4550 = vadd.f32 %v4530, %v4537
      %v4551 = vrot.slane %v4550, 4
      %v4552 = vadd.f32 %v4550, %v4551
      %v4553 = vrot.slane %v4552, 2
      %v4554 = vadd.f32 %v4552, %v4553
      %v4555 = vrot.slane %v4554, 1
      %v4556 = vadd.f32 %v4554, %v4555
      %v4557 = vadd.f32 %v4531, %v4538
      %v4558 = vrot.slane %v4557, 4
      %v4559 = vadd.f32 %v4557, %v4558
      %v4560 = vrot.slane %v4559, 2
      %v4561 = vadd.f32 %v4559, %v4560
      %v4562 = vrot.slane %v4561, 1
      %v4563 = vadd.f32 %v4561, %v4562
      %v4564 = vadd.f32 %v4532, %v4539
      %v4565 = vrot.slane %v4564, 4
      %v4566 = vadd.f32 %v4564, %v4565
      %v4567 = vrot.slane %v4566, 2
      %v4568 = vadd.f32 %v4566, %v4567
      %v4569 = vrot.slane %v4568, 1
      %v4570 = vadd.f32 %v4568, %v4569
      %v4571 = vadd.f32 %v4533, %v4540
      %v4572 = vrot.slane %v4571, 4
      %v4573 = vadd.f32 %v4571, %v4572
      %v4574 = vrot.slane %v4573, 2
      %v4575 = vadd.f32 %v4573, %v4574
      %v4576 = vrot.slane %v4575, 1
      %v4577 = vadd.f32 %v4575, %v4576
      %v4578 = vadd.f32 %v4534, %v4541
      %v4579 = vrot.slane %v4578, 4
      %v4580 = vadd.f32 %v4578, %v4579
      %v4581 = vrot.slane %v4580, 2
      %v4582 = vadd.f32 %v4580, %v4581
      %v4583 = vrot.slane %v4582, 1
      %v4584 = vadd.f32 %v4582, %v4583
      %v4585 = vsel %vm1998, %v4535, 0.0
      %v4586 = vsel %vm1998, %v4542, 0.0
      %v4587 = vadd.f32 %v4585, %v4586
      %v4588 = vrot.slane %v4587, 4
      %v4589 = vadd.f32 %v4587, %v4588
      %v4590 = vrot.slane %v4589, 2
      %v4591 = vadd.f32 %v4589, %v4590
      %v4592 = vrot.slane %v4591, 1
      %v4593 = vadd.f32 %v4591, %v4592
      %v4594 = vpack.c.bf16 %v4549, %v4549
      %v4595 = vpack.c.bf16 %v4556, %v4556
      %v4596 = vpack.c.bf16 %v4563, %v4563
      %v4597 = vpack.c.bf16 %v4570, %v4570
      %v4598 = vpack.c.bf16 %v4577, %v4577
      %v4599 = vpack.c.bf16 %v4584, %v4584
      %v4600 = vpack.c.bf16 %v4593, %v4593
      %v4601 = vld [vmem:[%s4] sm:$0xf]
      %v4602 = vld [vmem:[%s4 + $0x4] sm:$0xf]
      %v4603 = vld [vmem:[%s4 + $0x8] sm:$0xf]
      %v4604 = vld [vmem:[%s4 + $0xc] sm:$0xf]
      %v4605 = vld [vmem:[%s4 + $0x10] sm:$0xf]
      %v4606 = vld [vmem:[%s4 + $0x14] sm:$0xf]
      %v4607 = vld [vmem:[%s4 + $0x18] sm:$0xf]
      %v4608 = vld [vmem:[%s4 + $0x1c] sm:$0xf]
      %v4609 = vld [vmem:[%s4 + $0x20] sm:$0xf]
      %v4610 = vld [vmem:[%s4 + $0x24] sm:$0xf]
      %v4611 = vld [vmem:[%s4 + $0x28] sm:$0xf]
      %v4612 = vld [vmem:[%s4 + $0x2c] sm:$0xf]
      %v4613 = vld [vmem:[%s4 + $0x30] sm:$0xf]
      %v4614 = vld [vmem:[%s4 + $0x34] sm:$0xf]
      %v4615 = vld [vmem:[%s4 + $0x38] sm:$0xf]
      %v4616 = vld [vmem:[%s4 + $0x3c] sm:$0xf]
      %v4617 = vld [vmem:[%s4 + $0x40] sm:$0xf]
      %v4618 = vld [vmem:[%s4 + $0x44] sm:$0xf]
      %v4619 = vld [vmem:[%s4 + $0x48] sm:$0xf]
      %v4620 = vld [vmem:[%s4 + $0x4c] sm:$0xf]
      %v4621 = vld [vmem:[%s4 + $0x50] sm:$0xf]
      %v4622 = vld [vmem:[%s4 + $0x54] sm:$0xf]
      %v4623 = vld [vmem:[%s4 + $0x58] sm:$0xf]
      %v4624 = vld [vmem:[%s4 + $0x5c] sm:$0xf]
      %v4625 = vld [vmem:[%s4 + $0x60] sm:$0xf]
      %v4626 = vld [vmem:[%s4 + $0x64] sm:$0xf]
      %v4627 = vld [vmem:[%s4 + $0x68] sm:$0xf]
      %v4628 = vld [vmem:[%s4 + $0x6c] sm:$0xf]
      %v4629 = vld [vmem:[%s4 + $0x70] sm:$0xf]
      %v4630 = vld [vmem:[%s4 + $0x74] sm:$0xf]
      %v4631 = vld [vmem:[%s4 + $0x78] sm:$0xf]
      %v4632 = vld [vmem:[%s4 + $0x7c] sm:$0xf]
      %v4633 = vld [vmem:[%s4 + $0x80] sm:$0xf]
      %v4634 = vld [vmem:[%s4 + $0x84] sm:$0xf]
      %v4635 = vld [vmem:[%s4 + $0x88] sm:$0xf]
      %v4636 = vld [vmem:[%s4 + $0x8c] sm:$0xf]
      %v4637 = vld [vmem:[%s4 + $0x90] sm:$0xf]
      %v4638 = vld [vmem:[%s4 + $0x94] sm:$0xf]
      %v4639 = vld [vmem:[%s4 + $0x98] sm:$0xf]
      %v4640 = vld [vmem:[%s4 + $0x9c] sm:$0xf]
      %v4641 = vld [vmem:[%s4 + $0xa0] sm:$0xf]
      %v4642 = vld [vmem:[%s4 + $0xa4] sm:$0xf]
      %v4643 = vld [vmem:[%s4 + $0xa8] sm:$0xf]
      %v4644 = vld [vmem:[%s4 + $0xac] sm:$0xf]
      %v4645 = vld [vmem:[%s4 + $0xb0] sm:$0xf]
      %v4646 = vld [vmem:[%s4 + $0xb4] sm:$0xf]
      %v4647 = vld [vmem:[%s4 + $0xb8] sm:$0xf]
      %v4648 = vld [vmem:[%s4 + $0xbc] sm:$0xf]
      %v4649 = vld [vmem:[%s4 + $0xc0] sm:$0xf]
      %v4650 = vld [vmem:[%s4 + $0xc4] sm:$0xf]
      %v4651 = vld [vmem:[%s4 + $0xc8] sm:$0xf]
      %v4652 = vld [vmem:[%s4 + $0xcc] sm:$0xf]
      %v4653 = vld [vmem:[%s4 + $0xd0] sm:$0xf]
      %v4654 = vld [vmem:[%s4 + $0xd4] sm:$0xf]
      %v4655 = vld [vmem:[%s4 + $0xd8] sm:$0xf]
      %v4656 = vld [vmem:[%s4 + $0xdc] sm:$0xf]
      %v4657 = vld [vmem:[%s4 + $0xe0] sm:$0xf]
      %v4658 = vld [vmem:[%s4 + $0xe4] sm:$0xf]
      %v4659 = vld [vmem:[%s4 + $0xe8] sm:$0xf]
      %v4660 = vld [vmem:[%s4 + $0xec] sm:$0xf]
      %v4661 = vld [vmem:[%s4 + $0xf0] sm:$0xf]
      %v4662 = vld [vmem:[%s4 + $0xf4] sm:$0xf]
      %v4663 = vld [vmem:[%s4 + $0xf8] sm:$0xf]
      %v4664 = vld [vmem:[%s4 + $0xfc] sm:$0xf]
      %v4665 = vld [vmem:[%s4 + $0x100] sm:$0xf]
      %v4666 = vld [vmem:[%s4 + $0x104] sm:$0xf]
      %v4667 = vld [vmem:[%s4 + $0x108] sm:$0xf]
      %v4668 = vld [vmem:[%s4 + $0x10c] sm:$0xf]
      %v4669 = vld [vmem:[%s4 + $0x110] sm:$0xf]
      %v4670 = vld [vmem:[%s4 + $0x114] sm:$0xf]
      %v4671 = vld [vmem:[%s4 + $0x118] sm:$0xf]
      %v4672 = vld [vmem:[%s4 + $0x11c] sm:$0xf]
      %v4673 = vld [vmem:[%s4 + $0x120] sm:$0xf]
      %v4674 = vld [vmem:[%s4 + $0x124] sm:$0xf]
      %v4675 = vld [vmem:[%s4 + $0x128] sm:$0xf]
      %v4676 = vld [vmem:[%s4 + $0x12c] sm:$0xf]
      %v4677 = vld [vmem:[%s4 + $0x130] sm:$0xf]
      %v4678 = vld [vmem:[%s4 + $0x134] sm:$0xf]
      %v4679 = vld [vmem:[%s4 + $0x138] sm:$0xf]
      %v4680 = vld [vmem:[%s4 + $0x13c] sm:$0xf]
      %v4681 = vld [vmem:[%s4 + $0x140] sm:$0xf]
      %v4682 = vld [vmem:[%s4 + $0x144] sm:$0xf]
      %v4683 = vld [vmem:[%s4 + $0x148] sm:$0xf]
      %v4684 = vld [vmem:[%s4 + $0x14c] sm:$0xf]
      %v4685 = vld [vmem:[%s4 + $0x150] sm:$0xf]
      %v4686 = vld [vmem:[%s4 + $0x154] sm:$0xf]
      %v4687 = vld [vmem:[%s4 + $0x158] sm:$0xf]
      %v4688 = vld [vmem:[%s4 + $0x15c] sm:$0xf]
      %v4689 = vld [vmem:[%s4 + $0x160] sm:$0xf]
      %v4690 = vld [vmem:[%s4 + $0x164] sm:$0xf]
      %v4691 = vld [vmem:[%s4 + $0x168] sm:$0xf]
      %v4692 = vld [vmem:[%s4 + $0x16c] sm:$0xf]
      %v4693 = vld [vmem:[%s4 + $0x170] sm:$0xf]
      %v4694 = vld [vmem:[%s4 + $0x174] sm:$0xf]
      %v4695 = vld [vmem:[%s4 + $0x178] sm:$0xf]
      %v4696 = vld [vmem:[%s4 + $0x17c] sm:$0xf]
      %v4697 = vld [vmem:[%s4 + $0x180] sm:$0xf]
      %v4698 = vld [vmem:[%s4 + $0x184] sm:$0xf]
      %v4699 = vld [vmem:[%s8] sm:$0x1]
      %v4798 = vunpack.c.l.b16 %v4601
      %v4799 = vunpack.c.l.b16 %v4602
      %v4800 = vunpack.c.l.b16 %v4603
      %v4801 = vunpack.c.l.b16 %v4604
      %v4802 = vunpack.c.l.b16 %v4605
      %v4803 = vunpack.c.l.b16 %v4606
      %v4804 = vunpack.c.l.b16 %v4607
      %v4805 = vunpack.c.l.b16 %v4608
      %v4806 = vunpack.c.l.b16 %v4609
      %v4807 = vunpack.c.l.b16 %v4610
      %v4808 = vunpack.c.l.b16 %v4611
      %v4809 = vunpack.c.l.b16 %v4612
      %v4810 = vunpack.c.l.b16 %v4613
      %v4811 = vunpack.c.l.b16 %v4614
      %v4812 = vunpack.c.l.b16 %v4615
      %v4813 = vunpack.c.l.b16 %v4616
      %v4814 = vunpack.c.l.b16 %v4617
      %v4815 = vunpack.c.l.b16 %v4618
      %v4816 = vunpack.c.l.b16 %v4619
      %v4817 = vunpack.c.l.b16 %v4620
      %v4818 = vunpack.c.l.b16 %v4621
      %v4819 = vunpack.c.l.b16 %v4622
      %v4820 = vunpack.c.l.b16 %v4623
      %v4821 = vunpack.c.l.b16 %v4624
      %v4822 = vunpack.c.l.b16 %v4625
      %v4823 = vunpack.c.l.b16 %v4626
      %v4824 = vunpack.c.l.b16 %v4627
      %v4825 = vunpack.c.l.b16 %v4628
      %v4826 = vunpack.c.l.b16 %v4629
      %v4827 = vunpack.c.l.b16 %v4630
      %v4828 = vunpack.c.l.b16 %v4631
      %v4829 = vunpack.c.l.b16 %v4632
      %v4830 = vunpack.c.l.b16 %v4633
      %v4831 = vunpack.c.l.b16 %v4634
      %v4832 = vunpack.c.l.b16 %v4635
      %v4833 = vunpack.c.l.b16 %v4636
      %v4834 = vunpack.c.l.b16 %v4637
      %v4835 = vunpack.c.l.b16 %v4638
      %v4836 = vunpack.c.l.b16 %v4639
      %v4837 = vunpack.c.l.b16 %v4640
      %v4838 = vunpack.c.l.b16 %v4641
      %v4839 = vunpack.c.l.b16 %v4642
      %v4840 = vunpack.c.l.b16 %v4643
      %v4841 = vunpack.c.l.b16 %v4644
      %v4842 = vunpack.c.l.b16 %v4645
      %v4843 = vunpack.c.l.b16 %v4646
      %v4844 = vunpack.c.l.b16 %v4647
      %v4845 = vunpack.c.l.b16 %v4648
      %v4846 = vunpack.c.l.b16 %v4649
      %v4847 = vunpack.c.l.b16 %v4650
      %v4848 = vunpack.c.l.b16 %v4651
      %v4849 = vunpack.c.l.b16 %v4652
      %v4850 = vunpack.c.l.b16 %v4653
      %v4851 = vunpack.c.l.b16 %v4654
      %v4852 = vunpack.c.l.b16 %v4655
      %v4853 = vunpack.c.l.b16 %v4656
      %v4854 = vunpack.c.l.b16 %v4657
      %v4855 = vunpack.c.l.b16 %v4658
      %v4856 = vunpack.c.l.b16 %v4659
      %v4857 = vunpack.c.l.b16 %v4660
      %v4858 = vunpack.c.l.b16 %v4661
      %v4859 = vunpack.c.l.b16 %v4662
      %v4860 = vunpack.c.l.b16 %v4663
      %v4861 = vunpack.c.l.b16 %v4664
      %v4862 = vunpack.c.l.b16 %v4665
      %v4863 = vunpack.c.l.b16 %v4666
      %v4864 = vunpack.c.l.b16 %v4667
      %v4865 = vunpack.c.l.b16 %v4668
      %v4866 = vunpack.c.l.b16 %v4669
      %v4867 = vunpack.c.l.b16 %v4670
      %v4868 = vunpack.c.l.b16 %v4671
      %v4869 = vunpack.c.l.b16 %v4672
      %v4870 = vunpack.c.l.b16 %v4673
      %v4871 = vunpack.c.l.b16 %v4674
      %v4872 = vunpack.c.l.b16 %v4675
      %v4873 = vunpack.c.l.b16 %v4676
      %v4874 = vunpack.c.l.b16 %v4677
      %v4875 = vunpack.c.l.b16 %v4678
      %v4876 = vunpack.c.l.b16 %v4679
      %v4877 = vunpack.c.l.b16 %v4680
      %v4878 = vunpack.c.l.b16 %v4681
      %v4879 = vunpack.c.l.b16 %v4682
      %v4880 = vunpack.c.l.b16 %v4683
      %v4881 = vunpack.c.l.b16 %v4684
      %v4882 = vunpack.c.l.b16 %v4685
      %v4883 = vunpack.c.l.b16 %v4686
      %v4884 = vunpack.c.l.b16 %v4687
      %v4885 = vunpack.c.l.b16 %v4688
      %v4886 = vunpack.c.l.b16 %v4689
      %v4887 = vunpack.c.l.b16 %v4690
      %v4888 = vunpack.c.l.b16 %v4691
      %v4889 = vunpack.c.l.b16 %v4692
      %v4890 = vunpack.c.l.b16 %v4693
      %v4891 = vunpack.c.l.b16 %v4694
      %v4892 = vunpack.c.l.b16 %v4695
      %v4893 = vunpack.c.l.b16 %v4696
      %v4894 = vunpack.c.l.b16 %v4697
      %v4895 = vunpack.c.l.b16 %v4698
      %v4896 = vpack.c.b16 %v4799, %v4798
      %v4897 = vpack.c.b16 %v4801, %v4800
      %v4898 = vpack.c.b16 %v4803, %v4802
      %v4899 = vpack.c.b16 %v4805, %v4804
      %v4900 = vpack.c.b16 %v4807, %v4806
      %v4901 = vpack.c.b16 %v4809, %v4808
      %v4902 = vpack.c.b16 %v4811, %v4810
      %v4903 = vpack.c.b16 %v4813, %v4812
      %v4904 = vpack.c.b16 %v4815, %v4814
      %v4905 = vpack.c.b16 %v4817, %v4816
      %v4906 = vpack.c.b16 %v4819, %v4818
      %v4907 = vpack.c.b16 %v4821, %v4820
      %v4908 = vpack.c.b16 %v4823, %v4822
      %v4909 = vpack.c.b16 %v4825, %v4824
      %v4910 = vpack.c.b16 %v4827, %v4826
      %v4911 = vpack.c.b16 %v4829, %v4828
      %v4912 = vpack.c.b16 %v4831, %v4830
      %v4913 = vpack.c.b16 %v4833, %v4832
      %v4914 = vpack.c.b16 %v4835, %v4834
      %v4915 = vpack.c.b16 %v4837, %v4836
      %v4916 = vpack.c.b16 %v4839, %v4838
      %v4917 = vpack.c.b16 %v4841, %v4840
      %v4918 = vpack.c.b16 %v4843, %v4842
      %v4919 = vpack.c.b16 %v4845, %v4844
      %v4920 = vpack.c.b16 %v4847, %v4846
      %v4921 = vpack.c.b16 %v4849, %v4848
      %v4922 = vpack.c.b16 %v4851, %v4850
      %v4923 = vpack.c.b16 %v4853, %v4852
      %v4924 = vpack.c.b16 %v4855, %v4854
      %v4925 = vpack.c.b16 %v4857, %v4856
      %v4926 = vpack.c.b16 %v4859, %v4858
      %v4927 = vpack.c.b16 %v4861, %v4860
      %v4928 = vpack.c.b16 %v4863, %v4862
      %v4929 = vpack.c.b16 %v4865, %v4864
      %v4930 = vpack.c.b16 %v4867, %v4866
      %v4931 = vpack.c.b16 %v4869, %v4868
      %v4932 = vpack.c.b16 %v4871, %v4870
      %v4933 = vpack.c.b16 %v4873, %v4872
      %v4934 = vpack.c.b16 %v4875, %v4874
      %v4935 = vpack.c.b16 %v4877, %v4876
      %v4936 = vpack.c.b16 %v4879, %v4878
      %v4937 = vpack.c.b16 %v4881, %v4880
      %v4938 = vpack.c.b16 %v4883, %v4882
      %v4939 = vpack.c.b16 %v4885, %v4884
      %v4940 = vpack.c.b16 %v4887, %v4886
      %v4941 = vpack.c.b16 %v4889, %v4888
      %v4942 = vpack.c.b16 %v4891, %v4890
      %v4943 = vpack.c.b16 %v4893, %v4892
      %v4944 = vpack.c.b16 %v4895, %v4894
      %v4995 = vsel %vm1998, %v4600, 0
      %4997 = vmatprep.subr.bf16.mxu0 0
      %4998 = vmatpush1.bf16.msra.mxu0 %v4896
      %4999 = vmatprep.subr.bf16.mxu0 0
      %5000 = vmatpush1.bf16.msra.mxu0 %v4897
      %5001 = vmatprep.subr.bf16.mxu0 0
      %5002 = vmatpush1.bf16.msra.mxu0 %v4898
      %5003 = vmatprep.subr.bf16.mxu0 0
      %5004 = vmatpush1.bf16.msra.mxu0 %v4899
      %5005 = vmatprep.subr.bf16.mxu0 0
      %5006 = vmatpush1.bf16.msra.mxu0 %v4900
      %5007 = vmatprep.subr.bf16.mxu0 0
      %5008 = vmatpush1.bf16.msra.mxu0 %v4901
      %5009 = vmatprep.subr.bf16.mxu0 0
      %5010 = vmatpush1.bf16.msra.mxu0 %v4902
      %5011 = vmatprep.subr.bf16.mxu0 0
      %5012 = vmatpush1.bf16.msra.mxu0 %v4903
      %5013 = vmatprep.subr.bf16.mxu0 0
      %5014 = vmatpush1.bf16.msra.mxu0 %v4904
      %5015 = vmatprep.subr.bf16.mxu0 0
      %5016 = vmatpush1.bf16.msra.mxu0 %v4905
      %5017 = vmatprep.subr.bf16.mxu0 0
      %5018 = vmatpush1.bf16.msra.mxu0 %v4906
      %5019 = vmatprep.subr.bf16.mxu0 0
      %5020 = vmatpush1.bf16.msra.mxu0 %v4907
      %5021 = vmatprep.subr.bf16.mxu0 0
      %5022 = vmatpush1.bf16.msra.mxu0 %v4908
      %5023 = vmatprep.subr.bf16.mxu0 0
      %5024 = vmatpush1.bf16.msra.mxu0 %v4909
      %5025 = vmatprep.subr.bf16.mxu0 0
      %5026 = vmatpush1.bf16.msra.mxu0 %v4910
      %5027 = vmatprep.subr.bf16.mxu0 0
      %5028 = vmatpush1.bf16.msra.mxu0 %v4911
      %5029 = vmatprep.mubr.bf16.mxu0 %v4595
      %5030 = vmatmul.mubr.bf16.gmra.mrb[0].mxu0 %v4594
      %v5031 = vpop.f32.mrb[0].mxu0
      %v5032 = vadd.f32 %v4699, %v5031
      %v5033 = vpop.f32.mrb[0].mxu0
      %v5034 = vpop.f32.mrb[0].mxu0
      %v5035 = vpop.f32.mrb[0].mxu0
      %5036 = vdwg.mxu0
      %5037 = vmatprep.subr.bf16.mxu0 0
      %5038 = vmatpush1.bf16.msra.mxu0 %v4912
      %5039 = vmatprep.subr.bf16.mxu0 0
      %5040 = vmatpush1.bf16.msra.mxu0 %v4913
      %5041 = vmatprep.subr.bf16.mxu0 0
      %5042 = vmatpush1.bf16.msra.mxu0 %v4914
      %5043 = vmatprep.subr.bf16.mxu0 0
      %5044 = vmatpush1.bf16.msra.mxu0 %v4915
      %5045 = vmatprep.subr.bf16.mxu0 0
      %5046 = vmatpush1.bf16.msra.mxu0 %v4916
      %5047 = vmatprep.subr.bf16.mxu0 0
      %5048 = vmatpush1.bf16.msra.mxu0 %v4917
      %5049 = vmatprep.subr.bf16.mxu0 0
      %5050 = vmatpush1.bf16.msra.mxu0 %v4918
      %5051 = vmatprep.subr.bf16.mxu0 0
      %5052 = vmatpush1.bf16.msra.mxu0 %v4919
      %5053 = vmatprep.subr.bf16.mxu0 0
      %5054 = vmatpush1.bf16.msra.mxu0 %v4920
      %5055 = vmatprep.subr.bf16.mxu0 0
      %5056 = vmatpush1.bf16.msra.mxu0 %v4921
      %5057 = vmatprep.subr.bf16.mxu0 0
      %5058 = vmatpush1.bf16.msra.mxu0 %v4922
      %5059 = vmatprep.subr.bf16.mxu0 0
      %5060 = vmatpush1.bf16.msra.mxu0 %v4923
      %5061 = vmatprep.subr.bf16.mxu0 0
      %5062 = vmatpush1.bf16.msra.mxu0 %v4924
      %5063 = vmatprep.subr.bf16.mxu0 0
      %5064 = vmatpush1.bf16.msra.mxu0 %v4925
      %5065 = vmatprep.subr.bf16.mxu0 0
      %5066 = vmatpush1.bf16.msra.mxu0 %v4926
      %5067 = vmatprep.subr.bf16.mxu0 0
      %5068 = vmatpush1.bf16.msra.mxu0 %v4927
      %5069 = vmatprep.mubr.bf16.mxu0 %v4597
      %5070 = vmatmul.mubr.bf16.gmra.mrb[0].mxu0 %v4596
      %v5071 = vpop.f32.mrb[0].mxu0
      %v5072 = vadd.f32 %v5032, %v5071
      %v5073 = vpop.f32.mrb[0].mxu0
      %v5074 = vpop.f32.mrb[0].mxu0
      %v5075 = vpop.f32.mrb[0].mxu0
      %5076 = vdwg.mxu0
      %5077 = vmatprep.subr.bf16.mxu0 0
      %5078 = vmatpush1.bf16.msra.mxu0 %v4928
      %5079 = vmatprep.subr.bf16.mxu0 0
      %5080 = vmatpush1.bf16.msra.mxu0 %v4929
      %5081 = vmatprep.subr.bf16.mxu0 0
      %5082 = vmatpush1.bf16.msra.mxu0 %v4930
      %5083 = vmatprep.subr.bf16.mxu0 0
      %5084 = vmatpush1.bf16.msra.mxu0 %v4931
      %5085 = vmatprep.subr.bf16.mxu0 0
      %5086 = vmatpush1.bf16.msra.mxu0 %v4932
      %5087 = vmatprep.subr.bf16.mxu0 0
      %5088 = vmatpush1.bf16.msra.mxu0 %v4933
      %5089 = vmatprep.subr.bf16.mxu0 0
      %5090 = vmatpush1.bf16.msra.mxu0 %v4934
      %5091 = vmatprep.subr.bf16.mxu0 0
      %5092 = vmatpush1.bf16.msra.mxu0 %v4935
      %5093 = vmatprep.subr.bf16.mxu0 0
      %5094 = vmatpush1.bf16.msra.mxu0 %v4936
      %5095 = vmatprep.subr.bf16.mxu0 0
      %5096 = vmatpush1.bf16.msra.mxu0 %v4937
      %5097 = vmatprep.subr.bf16.mxu0 0
      %5098 = vmatpush1.bf16.msra.mxu0 %v4938
      %5099 = vmatprep.subr.bf16.mxu0 0
      %5100 = vmatpush1.bf16.msra.mxu0 %v4939
      %5101 = vmatprep.subr.bf16.mxu0 0
      %5102 = vmatpush1.bf16.msra.mxu0 %v4940
      %5103 = vmatprep.subr.bf16.mxu0 0
      %5104 = vmatpush1.bf16.msra.mxu0 %v4941
      %5105 = vmatprep.subr.bf16.mxu0 0
      %5106 = vmatpush1.bf16.msra.mxu0 %v4942
      %5107 = vmatprep.subr.bf16.mxu0 0
      %5108 = vmatpush1.bf16.msra.mxu0 %v4943
      %5109 = vmatprep.mubr.bf16.mxu0 %v4599
      %5110 = vmatmul.mubr.bf16.gmra.mrb[0].mxu0 %v4598
      %v5111 = vpop.f32.mrb[0].mxu0
      %v5112 = vadd.f32 %v5072, %v5111
      %v5113 = vpop.f32.mrb[0].mxu0
      %v5114 = vpop.f32.mrb[0].mxu0
      %v5115 = vpop.f32.mrb[0].mxu0
      %5116 = vdwg.mxu0
      %5117 = vmatprep.subr.bf16.mxu0 0
      %5118 = vmatpush1.bf16.msra.mxu0 %v4944
      %5119 = vmatprep.subr.bf16.mxu0 0
      %5120 = vmatpush1.bf16.msra.mxu0 0
      %5121 = vmatprep.subr.bf16.mxu0 0
      %5122 = vmatpush1.bf16.msra.mxu0 0
      %5123 = vmatprep.subr.bf16.mxu0 0
      %5124 = vmatpush1.bf16.msra.mxu0 0
      %5125 = vmatprep.subr.bf16.mxu0 0
      %5126 = vmatpush1.bf16.msra.mxu0 0
      %5127 = vmatprep.subr.bf16.mxu0 0
      %5128 = vmatpush1.bf16.msra.mxu0 0
      %5129 = vmatprep.subr.bf16.mxu0 0
      %5130 = vmatpush1.bf16.msra.mxu0 0
      %5131 = vmatprep.subr.bf16.mxu0 0
      %5132 = vmatpush1.bf16.msra.mxu0 0
      %5133 = vmatprep.subr.bf16.mxu0 0
      %5134 = vmatpush1.bf16.msra.mxu0 0
      %5135 = vmatprep.subr.bf16.mxu0 0
      %5136 = vmatpush1.bf16.msra.mxu0 0
      %5137 = vmatprep.subr.bf16.mxu0 0
      %5138 = vmatpush1.bf16.msra.mxu0 0
      %5139 = vmatprep.subr.bf16.mxu0 0
      %5140 = vmatpush1.bf16.msra.mxu0 0
      %5141 = vmatprep.subr.bf16.mxu0 0
      %5142 = vmatpush1.bf16.msra.mxu0 0
      %5143 = vmatprep.subr.bf16.mxu0 0
      %5144 = vmatpush1.bf16.msra.mxu0 0
      %5145 = vmatprep.subr.bf16.mxu0 0
      %5146 = vmatpush1.bf16.msra.mxu0 0
      %5147 = vmatprep.subr.bf16.mxu0 0
      %5148 = vmatpush1.bf16.msra.mxu0 0
      %5149 = vmatprep.mubr.bf16.mxu0 0
      %5150 = vmatmul.mubr.bf16.gmra.mrb[0].mxu0 %v4995
      %v5151 = vpop.f32.mrb[0].mxu0
      %v5152 = vadd.f32 %v5112, %v5151
      %v5153 = vpop.f32.mrb[0].mxu0
      %v5154 = vpop.f32.mrb[0].mxu0
      %v5155 = vpop.f32.mrb[0].mxu0
      %5156 = vdwg.mxu0
      %v5157 = vlaneseq
      %v5158 = vand.u32 %v5157, 127
      %vm5159 = vcmp.lt.s32.totalorder %v5158, 32
      %vm5160 = vcmp.gt.f32.partialorder %v5152, 0.0
      %v5161 = vmul.f32 %v5152, 0.01
      %v5162 = vsel %vm5160, %v5152, %v5161
      %v5163 = vmax.f32 %v5152, 0.0
      %v5164 = vsel %vm5159, %v5162, %v5163
      %v5165 = vpack.c.bf16 %v5164, %v5164
      %v5166 = vld [vmem:[%s5] sm:$0xf]
      %v5167 = vld [vmem:[%s5 + $0x4] sm:$0xf]
      %v5168 = vld [vmem:[%s5 + $0x8] sm:$0xf]
      %v5169 = vld [vmem:[%s5 + $0xc] sm:$0xf]
      %v5170 = vld [vmem:[%s5 + $0x10] sm:$0xf]
      %v5171 = vld [vmem:[%s5 + $0x14] sm:$0xf]
      %v5172 = vld [vmem:[%s5 + $0x18] sm:$0xf]
      %v5173 = vld [vmem:[%s5 + $0x1c] sm:$0xf]
      %v5174 = vld [vmem:[%s8 + $0x1] sm:$0x1]
      %v5183 = vunpack.c.l.b16 %v5166
      %v5184 = vunpack.c.l.b16 %v5167
      %v5185 = vunpack.c.l.b16 %v5168
      %v5186 = vunpack.c.l.b16 %v5169
      %v5187 = vunpack.c.l.b16 %v5170
      %v5188 = vunpack.c.l.b16 %v5171
      %v5189 = vunpack.c.l.b16 %v5172
      %v5190 = vunpack.c.l.b16 %v5173
      %v5191 = vpack.c.b16 %v5184, %v5183
      %v5192 = vpack.c.b16 %v5186, %v5185
      %v5193 = vpack.c.b16 %v5188, %v5187
      %v5194 = vpack.c.b16 %v5190, %v5189
      %vm5199 = vcmask 523264
      %v5201 = vsel %vm5199, %v5165, 0
      %5203 = vmatprep.subr.bf16.mxu0 0
      %5204 = vmatpush1.bf16.msra.mxu0 %v5191
      %5205 = vmatprep.subr.bf16.mxu0 0
      %5206 = vmatpush1.bf16.msra.mxu0 %v5192
      %5207 = vmatprep.subr.bf16.mxu0 0
      %5208 = vmatpush1.bf16.msra.mxu0 %v5193
      %5209 = vmatprep.subr.bf16.mxu0 0
      %5210 = vmatpush1.bf16.msra.mxu0 %v5194
      %5211 = vmatprep.subr.bf16.mxu0 0
      %5212 = vmatpush1.bf16.msra.mxu0 0
      %5213 = vmatprep.subr.bf16.mxu0 0
      %5214 = vmatpush1.bf16.msra.mxu0 0
      %5215 = vmatprep.subr.bf16.mxu0 0
      %5216 = vmatpush1.bf16.msra.mxu0 0
      %5217 = vmatprep.subr.bf16.mxu0 0
      %5218 = vmatpush1.bf16.msra.mxu0 0
      %5219 = vmatprep.subr.bf16.mxu0 0
      %5220 = vmatpush1.bf16.msra.mxu0 0
      %5221 = vmatprep.subr.bf16.mxu0 0
      %5222 = vmatpush1.bf16.msra.mxu0 0
      %5223 = vmatprep.subr.bf16.mxu0 0
      %5224 = vmatpush1.bf16.msra.mxu0 0
      %5225 = vmatprep.subr.bf16.mxu0 0
      %5226 = vmatpush1.bf16.msra.mxu0 0
      %5227 = vmatprep.subr.bf16.mxu0 0
      %5228 = vmatpush1.bf16.msra.mxu0 0
      %5229 = vmatprep.subr.bf16.mxu0 0
      %5230 = vmatpush1.bf16.msra.mxu0 0
      %5231 = vmatprep.subr.bf16.mxu0 0
      %5232 = vmatpush1.bf16.msra.mxu0 0
      %5233 = vmatprep.subr.bf16.mxu0 0
      %5234 = vmatpush1.bf16.msra.mxu0 0
      %5235 = vmatprep.mubr.bf16.mxu0 0
      %5236 = vmatmul.mubr.bf16.gmra.mrb[0].mxu0 %v5201
      %v5237 = vpop.f32.mrb[0].mxu0
      %v5238 = vadd.f32 %v5174, %v5237
      %v5239 = vpop.f32.mrb[0].mxu0
      %v5240 = vpop.f32.mrb[0].mxu0
      %v5241 = vpop.f32.mrb[0].mxu0
      %5242 = vdwg.mxu0
      %vm5243 = vcmask 516096
      %5244 = vst.msk [vmem:[%s625] sm:$0x1] %vm5243, %v5238
      %v5245 = vmax.f32 %v5238, 0.0
      %v5246 = vand.u32 2147483647, %v5238
      %v5247 = vsub.f32 0.0, %v5246
      %v5248 = vmul.f32 %v5247, 1.442695
      %v5249 = vpow.pop %v5248
      %v5250 = vadd.f32 %v5249, 1.0
      %v5251 = vlog2.pop %v5250
      %v5252 = vmul.f32 %v5251, 0.6931472
      %v5253 = vadd.f32 %v5245, %v5252
      %v5254 = vld [vmem:[%s617] sm:$0x1]
      %v5256 = vlaneseq
      %v5257 = vshrl.u32 %v5256, 7
      %v5258 = vsub.s32 0, %v5257
      %v5259 = vrot.slane %v5254, %v5258
      %5260 = vrot.lane.b32.xlu0 %v5259, 48
      %v5261 = vpop.permute.xlu0 %5260
      %v5263 = vmul.f32 %v5253, %v5261
      %5265 = vrot.lane.b32.xlu0 %v5263, 112
      %v5266 = vpop.permute.xlu0 %5265
      %v5268 = vadd.f32 %v5238, %v5266
      %v5269 = vpack.c.bf16 %v5268, %v5268
      %v5270 = vld [vmem:[%s6] sm:$0xf]
      %v5271 = vld [vmem:[%s6 + $0x4] sm:$0xf]
      %v5272 = vld [vmem:[%s8 + $0x2] sm:$0x1]
      %5274 = vrot.lane.b32.xlu0 %v5269, 96
      %v5275 = vpop.permute.xlu0 %5274
      %v5278 = vunpack.c.l.b16 %v5270
      %v5279 = vunpack.c.l.b16 %v5271
      %v5280 = vpack.c.b16 %v5279, %v5278
      %v5283 = vsel %vm1998, %v5275, 0
      %5285 = vmatprep.subr.bf16.mxu0 0
      %5286 = vmatpush1.bf16.msra.mxu0 %v5280
      %5287 = vmatprep.subr.bf16.mxu0 0
      %5288 = vmatpush1.bf16.msra.mxu0 0
      %5289 = vmatprep.subr.bf16.mxu0 0
      %5290 = vmatpush1.bf16.msra.mxu0 0
      %5291 = vmatprep.subr.bf16.mxu0 0
      %5292 = vmatpush1.bf16.msra.mxu0 0
      %5293 = vmatprep.subr.bf16.mxu0 0
      %5294 = vmatpush1.bf16.msra.mxu0 0
      %5295 = vmatprep.subr.bf16.mxu0 0
      %5296 = vmatpush1.bf16.msra.mxu0 0
      %5297 = vmatprep.subr.bf16.mxu0 0
      %5298 = vmatpush1.bf16.msra.mxu0 0
      %5299 = vmatprep.subr.bf16.mxu0 0
      %5300 = vmatpush1.bf16.msra.mxu0 0
      %5301 = vmatprep.subr.bf16.mxu0 0
      %5302 = vmatpush1.bf16.msra.mxu0 0
      %5303 = vmatprep.subr.bf16.mxu0 0
      %5304 = vmatpush1.bf16.msra.mxu0 0
      %5305 = vmatprep.subr.bf16.mxu0 0
      %5306 = vmatpush1.bf16.msra.mxu0 0
      %5307 = vmatprep.subr.bf16.mxu0 0
      %5308 = vmatpush1.bf16.msra.mxu0 0
      %5309 = vmatprep.subr.bf16.mxu0 0
      %5310 = vmatpush1.bf16.msra.mxu0 0
      %5311 = vmatprep.subr.bf16.mxu0 0
      %5312 = vmatpush1.bf16.msra.mxu0 0
      %5313 = vmatprep.subr.bf16.mxu0 0
      %5314 = vmatpush1.bf16.msra.mxu0 0
      %5315 = vmatprep.subr.bf16.mxu0 0
      %5316 = vmatpush1.bf16.msra.mxu0 0
      %5317 = vmatprep.mubr.bf16.mxu0 0
      %5318 = vmatmul.mubr.bf16.gmra.mrb[0].mxu0 %v5283
      %v5319 = vpop.f32.mrb[0].mxu0
      %v5320 = vadd.f32 %v5272, %v5319
      %v5321 = vpop.f32.mrb[0].mxu0
      %v5322 = vpop.f32.mrb[0].mxu0
      %v5323 = vpop.f32.mrb[0].mxu0
      %5324 = vdwg.mxu0
      %v5325 = vmax.f32 %v5320, 0.0
      %v5326 = vpack.c.bf16 %v5325, %v5325
      %5328 = vrot.lane.b32.xlu0 %v5326, 32
      %v5329 = vpop.permute.xlu0 %5328
      %5330 = vrot.lane.b32.xlu0 %v5326, 64
      %v5331 = vpop.permute.xlu0 %5330
      %5332 = vrot.lane.b32.xlu0 %v5326, 96
      %v5333 = vpop.permute.xlu0 %5332
      %vm5334 = vcmask 261120
      %v5337 = vsel %vm5334, %v5326, %v5329
      %v5339 = vsel %vm5199, %v5337, %v5331
      %vm5340 = vcmask 785408
      %v5342 = vsel %vm5340, %v5339, %v5333
      %v5343 = vld [vmem:[%s16] sm:$0xff]
      %v5344 = vpack.i.b16 %v5342, %v5342
      %v5346 = vlaneseq
      %v5347 = vshrl.u32 %v5346, 7
      %v5348 = vsub.s32 0, %v5347
      %v5349 = vrot.slane %v5344, %v5348
      %v5351 = vunpack.c.l.b16 %v5343
      %v5352 = vunpack.c.h.b16 %v5343
      %v5353 = vpack.c.b16 %v5351, %v5351
      %v5354 = vpack.c.b16 %v5352, %v5352
      %v5357 = vmul.bf16 %v5349, %v5353
      %v5358 = vmul.bf16 %v5349, %v5354
      %v5359 = vld [vmem:[%s7] sm:$0xf]
      %v5360 = vld [vmem:[%s7 + $0x4] sm:$0xf]
      %v5361 = vld [vmem:[%s7 + $0x8] sm:$0xf]
      %v5362 = vld [vmem:[%s7 + $0xc] sm:$0xf]
      %v5363 = vld [vmem:[%s7 + $0x10] sm:$0xf]
      %v5364 = vld [vmem:[%s7 + $0x14] sm:$0xf]
      %v5365 = vld [vmem:[%s7 + $0x18] sm:$0xf]
      %v5366 = vld [vmem:[%s7 + $0x1c] sm:$0xf]
      %v5367 = vld [vmem:[%s7 + $0x20] sm:$0xf]
      %v5368 = vld [vmem:[%s7 + $0x24] sm:$0xf]
      %v5369 = vld [vmem:[%s7 + $0x28] sm:$0xf]
      %v5370 = vld [vmem:[%s7 + $0x2c] sm:$0xf]
      %v5371 = vld [vmem:[%s7 + $0x30] sm:$0xf]
      %v5372 = vld [vmem:[%s7 + $0x34] sm:$0xf]
      %v5373 = vld [vmem:[%s7 + $0x38] sm:$0xf]
      %v5374 = vld [vmem:[%s7 + $0x3c] sm:$0xf]
      %v5375 = vld [vmem:[%s7 + $0x40] sm:$0xf]
      %v5376 = vld [vmem:[%s7 + $0x44] sm:$0xf]
      %v5377 = vld [vmem:[%s7 + $0x48] sm:$0xf]
      %v5378 = vld [vmem:[%s7 + $0x4c] sm:$0xf]
      %v5379 = vld [vmem:[%s7 + $0x50] sm:$0xf]
      %v5380 = vld [vmem:[%s7 + $0x54] sm:$0xf]
      %v5381 = vld [vmem:[%s7 + $0x58] sm:$0xf]
      %v5382 = vld [vmem:[%s7 + $0x5c] sm:$0xf]
      %v5383 = vld [vmem:[%s7 + $0x60] sm:$0xf]
      %v5384 = vld [vmem:[%s7 + $0x64] sm:$0xf]
      %v5385 = vld [vmem:[%s7 + $0x68] sm:$0xf]
      %v5386 = vld [vmem:[%s7 + $0x6c] sm:$0xf]
      %v5387 = vld [vmem:[%s7 + $0x70] sm:$0xf]
      %v5388 = vld [vmem:[%s7 + $0x74] sm:$0xf]
      %v5389 = vld [vmem:[%s7 + $0x78] sm:$0xf]
      %v5390 = vld [vmem:[%s7 + $0x7c] sm:$0xf]
      %v5391 = vld [vmem:[%s9] sm:$0xff]
      %v5424 = vunpack.c.l.b16 %v5359
      %v5425 = vunpack.c.l.b16 %v5360
      %v5426 = vunpack.c.l.b16 %v5361
      %v5427 = vunpack.c.l.b16 %v5362
      %v5428 = vunpack.c.l.b16 %v5363
      %v5429 = vunpack.c.l.b16 %v5364
      %v5430 = vunpack.c.l.b16 %v5365
      %v5431 = vunpack.c.l.b16 %v5366
      %v5432 = vunpack.c.l.b16 %v5367
      %v5433 = vunpack.c.l.b16 %v5368
      %v5434 = vunpack.c.l.b16 %v5369
      %v5435 = vunpack.c.l.b16 %v5370
      %v5436 = vunpack.c.l.b16 %v5371
      %v5437 = vunpack.c.l.b16 %v5372
      %v5438 = vunpack.c.l.b16 %v5373
      %v5439 = vunpack.c.l.b16 %v5374
      %v5440 = vunpack.c.l.b16 %v5375
      %v5441 = vunpack.c.l.b16 %v5376
      %v5442 = vunpack.c.l.b16 %v5377
      %v5443 = vunpack.c.l.b16 %v5378
      %v5444 = vunpack.c.l.b16 %v5379
      %v5445 = vunpack.c.l.b16 %v5380
      %v5446 = vunpack.c.l.b16 %v5381
      %v5447 = vunpack.c.l.b16 %v5382
      %v5448 = vunpack.c.l.b16 %v5383
      %v5449 = vunpack.c.l.b16 %v5384
      %v5450 = vunpack.c.l.b16 %v5385
      %v5451 = vunpack.c.l.b16 %v5386
      %v5452 = vunpack.c.l.b16 %v5387
      %v5453 = vunpack.c.l.b16 %v5388
      %v5454 = vunpack.c.l.b16 %v5389
      %v5455 = vunpack.c.l.b16 %v5390
      %v5456 = vpack.c.b16 %v5425, %v5424
      %v5457 = vpack.c.b16 %v5427, %v5426
      %v5458 = vpack.c.b16 %v5429, %v5428
      %v5459 = vpack.c.b16 %v5431, %v5430
      %v5460 = vpack.c.b16 %v5433, %v5432
      %v5461 = vpack.c.b16 %v5435, %v5434
      %v5462 = vpack.c.b16 %v5437, %v5436
      %v5463 = vpack.c.b16 %v5439, %v5438
      %v5464 = vpack.c.b16 %v5441, %v5440
      %v5465 = vpack.c.b16 %v5443, %v5442
      %v5466 = vpack.c.b16 %v5445, %v5444
      %v5467 = vpack.c.b16 %v5447, %v5446
      %v5468 = vpack.c.b16 %v5449, %v5448
      %v5469 = vpack.c.b16 %v5451, %v5450
      %v5470 = vpack.c.b16 %v5453, %v5452
      %v5471 = vpack.c.b16 %v5455, %v5454
      %5488 = vmatprep.subr.bf16.mxu0 0
      %5489 = vmatpush1.bf16.msra.mxu0 %v5456
      %5490 = vmatprep.subr.bf16.mxu0 0
      %5491 = vmatpush1.bf16.msra.mxu0 %v5457
      %5492 = vmatprep.subr.bf16.mxu0 0
      %5493 = vmatpush1.bf16.msra.mxu0 %v5458
      %5494 = vmatprep.subr.bf16.mxu0 0
      %5495 = vmatpush1.bf16.msra.mxu0 %v5459
      %5496 = vmatprep.subr.bf16.mxu0 0
      %5497 = vmatpush1.bf16.msra.mxu0 %v5460
      %5498 = vmatprep.subr.bf16.mxu0 0
      %5499 = vmatpush1.bf16.msra.mxu0 %v5461
      %5500 = vmatprep.subr.bf16.mxu0 0
      %5501 = vmatpush1.bf16.msra.mxu0 %v5462
      %5502 = vmatprep.subr.bf16.mxu0 0
      %5503 = vmatpush1.bf16.msra.mxu0 %v5463
      %5504 = vmatprep.subr.bf16.mxu0 0
      %5505 = vmatpush1.bf16.msra.mxu0 %v5464
      %5506 = vmatprep.subr.bf16.mxu0 0
      %5507 = vmatpush1.bf16.msra.mxu0 %v5465
      %5508 = vmatprep.subr.bf16.mxu0 0
      %5509 = vmatpush1.bf16.msra.mxu0 %v5466
      %5510 = vmatprep.subr.bf16.mxu0 0
      %5511 = vmatpush1.bf16.msra.mxu0 %v5467
      %5512 = vmatprep.subr.bf16.mxu0 0
      %5513 = vmatpush1.bf16.msra.mxu0 %v5468
      %5514 = vmatprep.subr.bf16.mxu0 0
      %5515 = vmatpush1.bf16.msra.mxu0 %v5469
      %5516 = vmatprep.subr.bf16.mxu0 0
      %5517 = vmatpush1.bf16.msra.mxu0 %v5470
      %5518 = vmatprep.subr.bf16.mxu0 0
      %5519 = vmatpush1.bf16.msra.mxu0 %v5471
      %5520 = vmatprep.mubr.bf16.mxu0 %v5358
      %5521 = vmatmul.mubr.bf16.gmra.mrb[0].mxu0 %v5357
      %v5522 = vpop.f32.mrb[0].mxu0
      %v5523 = vadd.f32 %v5391, %v5522
      %v5524 = vpop.f32.mrb[0].mxu0
      %v5525 = vpop.f32.mrb[0].mxu0
      %v5526 = vpop.f32.mrb[0].mxu0
      %5527 = vdwg.mxu0
      %v5528 = vmax.f32 %v5523, 0.0
      %v5529 = vld [vmem:[%s2 + $0x50] sm:$0xff]
      %v5530 = vld [vmem:[%s3 + $0x50] sm:$0xff]
      %v5531 = vpack.c.bf16 %v4159, %v5528
      %5533 = vrot.lane.b32.xlu0 %v5531, 8
      %v5534 = vpop.permute.xlu0 %5533
      %vm5535 = vcmask 64512
      %v5537 = vsel %vm5535, 0, %v5534
      %vm5538 = vcmask 465920
      %v5539 = vsel %vm5538, %v5537, 0
      %v5542 = vpack.i.b16 %v632, %v632
      %v5544 = vlaneseq
      %v5545 = vshrl.u32 %v5544, 7
      %v5546 = vsub.s32 2, %v5545
      %v5547 = vrot.slane %v5542, %v5546
      %v5548 = vmul.bf16 %v5539, %v5547
      %v5549 = vshrl.u32 %v632, 16
      %v5550 = vpack.i.b16 %v5549, %v5549
      %v5552 = vlaneseq
      %v5553 = vshrl.u32 %v5552, 7
      %v5554 = vsub.s32 2, %v5553
      %v5555 = vrot.slane %v5550, %v5554
      %5557 = vrot.lane.b32.xlu0 %v5555, 2
      %v5558 = vpop.permute.xlu0 %5557
      %v5560 = vmul.bf16 %v5539, %v5558
      %5562 = vrot.lane.b32.xlu0 %v5547, 7
      %v5563 = vpop.permute.xlu0 %5562
      %v5565 = vmul.bf16 %v5539, %v5563
      %5566 = vrot.lane.b32.xlu0 %v5555, 9
      %v5567 = vpop.permute.xlu0 %5566
      %v5569 = vmul.bf16 %v5539, %v5567
      %5570 = vrot.lane.b32.xlu0 %v5547, 14
      %v5571 = vpop.permute.xlu0 %5570
      %v5573 = vmul.bf16 %v5539, %v5571
      %5574 = vrot.lane.b32.xlu0 %v5555, 16
      %v5575 = vpop.permute.xlu0 %5574
      %v5577 = vmul.bf16 %v5539, %v5575
      %5579 = vrot.lane.b32.xlu0 %v5539, 127
      %v5580 = vpop.permute.xlu0 %5579
      %5583 = vrot.lane.b32.xlu0 %v5560, 126
      %v5584 = vpop.permute.xlu0 %5583
      %5587 = vrot.lane.b32.xlu0 %v5565, 121
      %v5588 = vpop.permute.xlu0 %5587
      %5590 = vrot.lane.b32.xlu0 %v5539, 120
      %v5591 = vpop.permute.xlu0 %5590
      %5594 = vrot.lane.b32.xlu0 %v5569, 119
      %v5595 = vpop.permute.xlu0 %5594
      %5598 = vrot.lane.b32.xlu0 %v5573, 114
      %v5599 = vpop.permute.xlu0 %5598
      %5601 = vrot.lane.b32.xlu0 %v5539, 113
      %v5602 = vpop.permute.xlu0 %5601
      %5605 = vrot.lane.b32.xlu0 %v5577, 112
      %v5606 = vpop.permute.xlu0 %5605
      %5609 = vset.pattern.permute.xlu0 0
      %5610 = vperm.xlu0 %5609, %v5530
      %v5611 = vpop.permute.xlu0 %5610
      %v5614 = vunpack.c.l.b16 %v5529
      %v5615 = vunpack.c.h.b16 %v5529
      %v5616 = vpack.c.b16 %v5614, %v5614
      %v5617 = vpack.c.b16 %v5615, %v5615
      %v5620 = vsel %vm1998, %v5617, 0
      %5622 = vmatprep.subr.bf16.mxu0 0
      %5623 = vmatpush1.bf16.msra.mxu0 %v5548
      %5624 = vmatprep.subr.bf16.mxu0 0
      %5625 = vmatpush1.bf16.msra.mxu0 %v5580
      %5626 = vmatprep.subr.bf16.mxu0 0
      %5627 = vmatpush1.bf16.msra.mxu0 %v5584
      %5628 = vmatprep.subr.bf16.mxu0 0
      %5629 = vmatpush1.bf16.msra.mxu0 %v5588
      %5630 = vmatprep.subr.bf16.mxu0 0
      %5631 = vmatpush1.bf16.msra.mxu0 %v5591
      %5632 = vmatprep.subr.bf16.mxu0 0
      %5633 = vmatpush1.bf16.msra.mxu0 %v5595
      %5634 = vmatprep.subr.bf16.mxu0 0
      %5635 = vmatpush1.bf16.msra.mxu0 %v5599
      %5636 = vmatprep.subr.bf16.mxu0 0
      %5637 = vmatpush1.bf16.msra.mxu0 %v5602
      %5638 = vmatprep.subr.bf16.mxu0 0
      %5639 = vmatpush1.bf16.msra.mxu0 %v5606
      %5640 = vmatprep.subr.bf16.mxu0 0
      %5641 = vmatpush1.bf16.msra.mxu0 0
      %5642 = vmatprep.subr.bf16.mxu0 0
      %5643 = vmatpush1.bf16.msra.mxu0 0
      %5644 = vmatprep.subr.bf16.mxu0 0
      %5645 = vmatpush1.bf16.msra.mxu0 0
      %5646 = vmatprep.subr.bf16.mxu0 0
      %5647 = vmatpush1.bf16.msra.mxu0 0
      %5648 = vmatprep.subr.bf16.mxu0 0
      %5649 = vmatpush1.bf16.msra.mxu0 0
      %5650 = vmatprep.subr.bf16.mxu0 0
      %5651 = vmatpush1.bf16.msra.mxu0 0
      %5652 = vmatprep.subr.bf16.mxu0 0
      %5653 = vmatpush1.bf16.msra.mxu0 0
      %5654 = vmatprep.mubr.bf16.mxu0 %v5620
      %5655 = vmatmul.mubr.bf16.gmra.mrb[0].mxu0 %v5616
      %v5656 = vpop.f32.mrb[0].mxu0
      %v5657 = vadd.f32 %v5611, %v5656
      %v5658 = vpop.f32.mrb[0].mxu0
      %v5659 = vpop.f32.mrb[0].mxu0
      %v5660 = vpop.f32.mrb[0].mxu0
      %5661 = vdwg.mxu0
      %vm5662 = vcmp.gt.f32.partialorder %v5657, 0.0
      %v5663 = vmul.f32 %v5657, 0.01
      %v5664 = vsel %vm5662, %v5657, %v5663
      %v5665 = vld [vmem:[%s2 + $0x70] sm:$0xf]
      %v5666 = vld [vmem:[%s3 + $0x70] sm:$0xff]
      %5668 = vset.pattern.permute.xlu0 0
      %5669 = vperm.xlu0 %5668, %v5666
      %v5670 = vpop.permute.xlu0 %5669
      %v5673 = vsel %vm1998, %v5665, 0
      %5675 = vmatprep.subr.bf16.mxu0 0
      %5676 = vmatpush1.bf16.msra.mxu0 %v5531
      %5677 = vmatprep.subr.bf16.mxu0 0
      %5678 = vmatpush1.bf16.msra.mxu0 0
      %5679 = vmatprep.subr.bf16.mxu0 0
      %5680 = vmatpush1.bf16.msra.mxu0 0
      %5681 = vmatprep.subr.bf16.mxu0 0
      %5682 = vmatpush1.bf16.msra.mxu0 0
      %5683 = vmatprep.subr.bf16.mxu0 0
      %5684 = vmatpush1.bf16.msra.mxu0 0
      %5685 = vmatprep.subr.bf16.mxu0 0
      %5686 = vmatpush1.bf16.msra.mxu0 0
      %5687 = vmatprep.subr.bf16.mxu0 0
      %5688 = vmatpush1.bf16.msra.mxu0 0
      %5689 = vmatprep.subr.bf16.mxu0 0
      %5690 = vmatpush1.bf16.msra.mxu0 0
      %5691 = vmatprep.subr.bf16.mxu0 0
      %5692 = vmatpush1.bf16.msra.mxu0 0
      %5693 = vmatprep.subr.bf16.mxu0 0
      %5694 = vmatpush1.bf16.msra.mxu0 0
      %5695 = vmatprep.subr.bf16.mxu0 0
      %5696 = vmatpush1.bf16.msra.mxu0 0
      %5697 = vmatprep.subr.bf16.mxu0 0
      %5698 = vmatpush1.bf16.msra.mxu0 0
      %5699 = vmatprep.subr.bf16.mxu0 0
      %5700 = vmatpush1.bf16.msra.mxu0 0
      %5701 = vmatprep.subr.bf16.mxu0 0
      %5702 = vmatpush1.bf16.msra.mxu0 0
      %5703 = vmatprep.subr.bf16.mxu0 0
      %5704 = vmatpush1.bf16.msra.mxu0 0
      %5705 = vmatprep.subr.bf16.mxu0 0
      %5706 = vmatpush1.bf16.msra.mxu0 0
      %5707 = vmatprep.mubr.bf16.mxu0 0
      %5708 = vmatmul.mubr.bf16.gmra.mrb[0].mxu0 %v5673
      %v5709 = vpop.f32.mrb[0].mxu0
      %v5710 = vadd.f32 %v5670, %v5709
      %v5711 = vpop.f32.mrb[0].mxu0
      %v5712 = vpop.f32.mrb[0].mxu0
      %v5713 = vpop.f32.mrb[0].mxu0
      %5714 = vdwg.mxu0
      %v5715 = vld [vmem:[%s2 + $0x60] sm:$0xf]
      %v5716 = vld [vmem:[%s3 + $0x60] sm:$0xff]
      %v5717 = vpack.c.bf16 %v5664, %v5664
      %5719 = vrot.lane.b32.xlu0 %v5717, 8
      %v5720 = vpop.permute.xlu0 %5719
      %v5722 = vsel %vm5535, 0, %v5720
      %v5723 = vsel %vm5538, %v5722, 0
      %v5725 = vmul.bf16 %v5723, %v5547
      %v5726 = vmul.bf16 %v5723, %v5558
      %v5727 = vmul.bf16 %v5723, %v5563
      %v5728 = vmul.bf16 %v5723, %v5567
      %v5729 = vmul.bf16 %v5723, %v5571
      %v5730 = vmul.bf16 %v5723, %v5575
      %v5732 = vrot.slane %v5723, 4
      %5733 = vrot.lane.b32.xlu0 %v5732, 127
      %v5734 = vpop.permute.xlu0 %5733
      %5736 = vrot.lane.b32.xlu0 %v5726, 126
      %v5737 = vpop.permute.xlu0 %5736
      %v5739 = vrot.slane %v5727, 4
      %5740 = vrot.lane.b32.xlu0 %v5739, 121
      %v5741 = vpop.permute.xlu0 %5740
      %5742 = vrot.lane.b32.xlu0 %v5723, 120
      %v5743 = vpop.permute.xlu0 %5742
      %v5745 = vrot.slane %v5728, 4
      %5746 = vrot.lane.b32.xlu0 %v5745, 119
      %v5747 = vpop.permute.xlu0 %5746
      %5749 = vrot.lane.b32.xlu0 %v5729, 114
      %v5750 = vpop.permute.xlu0 %5749
      %5751 = vrot.lane.b32.xlu0 %v5732, 113
      %v5752 = vpop.permute.xlu0 %5751
      %5754 = vrot.lane.b32.xlu0 %v5730, 112
      %v5755 = vpop.permute.xlu0 %5754
      %v5758 = vsel %vm1290, %v5725, %v5734
      %v5762 = vsel %vm1290, %v5737, %v5741
      %v5766 = vsel %vm1290, %v5743, %v5747
      %v5770 = vsel %vm1290, %v5750, %v5752
      %5773 = vset.pattern.permute.xlu0 0
      %5774 = vperm.xlu0 %5773, %v5716
      %v5775 = vpop.permute.xlu0 %5774
      %vm5777 = vcmask 588800
      %v5779 = vsel %vm5777, %v5715, 0
      %v5782 = vsel %vm1290, %v5755, 0
      %5784 = vmatprep.subr.bf16.mxu0 0
      %5785 = vmatpush1.bf16.msra.mxu0 %v5758
      %5786 = vmatprep.subr.bf16.mxu0 0
      %5787 = vmatpush1.bf16.msra.mxu0 %v5762
      %5788 = vmatprep.subr.bf16.mxu0 0
      %5789 = vmatpush1.bf16.msra.mxu0 %v5766
      %5790 = vmatprep.subr.bf16.mxu0 0
      %5791 = vmatpush1.bf16.msra.mxu0 %v5770
      %5792 = vmatprep.subr.bf16.mxu0 0
      %5793 = vmatpush1.bf16.msra.mxu0 %v5782
      %5794 = vmatprep.subr.bf16.mxu0 0
      %5795 = vmatpush1.bf16.msra.mxu0 0
      %5796 = vmatprep.subr.bf16.mxu0 0
      %5797 = vmatpush1.bf16.msra.mxu0 0
      %5798 = vmatprep.subr.bf16.mxu0 0
      %5799 = vmatpush1.bf16.msra.mxu0 0
      %5800 = vmatprep.subr.bf16.mxu0 0
      %5801 = vmatpush1.bf16.msra.mxu0 0
      %5802 = vmatprep.subr.bf16.mxu0 0
      %5803 = vmatpush1.bf16.msra.mxu0 0
      %5804 = vmatprep.subr.bf16.mxu0 0
      %5805 = vmatpush1.bf16.msra.mxu0 0
      %5806 = vmatprep.subr.bf16.mxu0 0
      %5807 = vmatpush1.bf16.msra.mxu0 0
      %5808 = vmatprep.subr.bf16.mxu0 0
      %5809 = vmatpush1.bf16.msra.mxu0 0
      %5810 = vmatprep.subr.bf16.mxu0 0
      %5811 = vmatpush1.bf16.msra.mxu0 0
      %5812 = vmatprep.subr.bf16.mxu0 0
      %5813 = vmatpush1.bf16.msra.mxu0 0
      %5814 = vmatprep.subr.bf16.mxu0 0
      %5815 = vmatpush1.bf16.msra.mxu0 0
      %5816 = vmatprep.mubr.bf16.mxu0 0
      %5817 = vmatmul.mubr.bf16.gmra.mrb[0].mxu0 %v5779
      %v5818 = vpop.f32.mrb[0].mxu0
      %v5819 = vadd.f32 %v5775, %v5818
      %v5820 = vpop.f32.mrb[0].mxu0
      %v5821 = vpop.f32.mrb[0].mxu0
      %v5822 = vpop.f32.mrb[0].mxu0
      %5823 = vdwg.mxu0
      %v5824 = vadd.f32 %v5819, %v5710
      %vm5825 = vcmp.gt.f32.partialorder %v5824, 0.0
      %v5826 = vmul.f32 %v5824, 0.01
      %v5827 = vsel %vm5825, %v5824, %v5826
      %v5828 = vpack.c.bf16 %v5827, %v5827
      %v5829 = vld [vmem:[%s12] sm:$0xff]
      %v5830 = vld [vmem:[%s12 + $0x8] sm:$0xff]
      %v5831 = vld [vmem:[%s12 + $0x10] sm:$0xff]
      %v5832 = vld [vmem:[%s12 + $0x18] sm:$0xff]
      %v5833 = vld [vmem:[%s12 + $0x20] sm:$0xff]
      %v5834 = vld [vmem:[%s12 + $0x28] sm:$0xff]
      %v5835 = vld [vmem:[%s12 + $0x30] sm:$0x11]
      %v5843 = vunpack.c.l.b16 %v5829
      %v5844 = vunpack.c.h.b16 %v5829
      %v5845 = vunpack.c.l.b16 %v5830
      %v5846 = vunpack.c.h.b16 %v5830
      %v5847 = vunpack.c.l.b16 %v5831
      %v5848 = vunpack.c.h.b16 %v5831
      %v5849 = vunpack.c.l.b16 %v5832
      %v5850 = vunpack.c.h.b16 %v5832
      %v5851 = vunpack.c.l.b16 %v5833
      %v5852 = vunpack.c.h.b16 %v5833
      %v5853 = vunpack.c.l.b16 %v5834
      %v5854 = vunpack.c.h.b16 %v5834
      %v5855 = vunpack.c.l.b16 %v5835
      %v5856 = vunpack.c.h.b16 %v5835
      %v5857 = vpack.c.b16 %v5845, %v5843
      %v5858 = vpack.c.b16 %v5846, %v5844
      %v5859 = vpack.c.b16 %v5849, %v5847
      %v5860 = vpack.c.b16 %v5850, %v5848
      %v5861 = vpack.c.b16 %v5853, %v5851
      %v5862 = vpack.c.b16 %v5854, %v5852
      %v5863 = vpack.c.b16 %v5855, %v5855
      %v5864 = vpack.c.b16 %v5856, %v5856
      %v5872 = vsel %vm4317, %v5828, 0
      %v5875 = vand.u32 %v5863, %v4323
      %v5878 = vand.u32 %v5864, %v4323
      %5880 = vmatprep.subr.bf16.mxu0 %v5858
      %5881 = vmatpush1.bf16.msra.mxu0 %v5857
      %5882 = vmatprep.subr.bf16.mxu0 %v5860
      %5883 = vmatpush1.bf16.msra.mxu0 %v5859
      %5884 = vmatprep.subr.bf16.mxu0 %v5862
      %5885 = vmatpush1.bf16.msra.mxu0 %v5861
      %5886 = vmatprep.subr.bf16.mxu0 %v5878
      %5887 = vmatpush1.bf16.msra.mxu0 %v5875
      %5888 = vmatprep.subr.bf16.mxu0 0
      %5889 = vmatpush1.bf16.msra.mxu0 0
      %5890 = vmatprep.subr.bf16.mxu0 0
      %5891 = vmatpush1.bf16.msra.mxu0 0
      %5892 = vmatprep.subr.bf16.mxu0 0
      %5893 = vmatpush1.bf16.msra.mxu0 0
      %5894 = vmatprep.subr.bf16.mxu0 0
      %5895 = vmatpush1.bf16.msra.mxu0 0
      %5896 = vmatprep.subr.bf16.mxu0 0
      %5897 = vmatpush1.bf16.msra.mxu0 0
      %5898 = vmatprep.subr.bf16.mxu0 0
      %5899 = vmatpush1.bf16.msra.mxu0 0
      %5900 = vmatprep.subr.bf16.mxu0 0
      %5901 = vmatpush1.bf16.msra.mxu0 0
      %5902 = vmatprep.subr.bf16.mxu0 0
      %5903 = vmatpush1.bf16.msra.mxu0 0
      %5904 = vmatprep.subr.bf16.mxu0 0
      %5905 = vmatpush1.bf16.msra.mxu0 0
      %5906 = vmatprep.subr.bf16.mxu0 0
      %5907 = vmatpush1.bf16.msra.mxu0 0
      %5908 = vmatprep.subr.bf16.mxu0 0
      %5909 = vmatpush1.bf16.msra.mxu0 0
      %5910 = vmatprep.subr.bf16.mxu0 0
      %5911 = vmatpush1.bf16.msra.mxu0 0
      %5912 = vmatprep.mubr.bf16.mxu0 0
      %5913 = vmatmul.mubr.bf16.gmra.mrb[0].mxu0 %v5872
      %v5914 = vpop.f32.mrb[0].mxu0
      %v5915 = vadd.f32 0.0, %v5914
      %v5916 = vpop.f32.mrb[0].mxu0
      %v5917 = vadd.f32 0.0, %v5916
      %v5918 = vpop.f32.mrb[0].mxu0
      %v5919 = vpop.f32.mrb[0].mxu0
      %5920 = vdwg.mxu0
      %v5921 = vld [vmem:[%s2 + $0x80] sm:$0xff]
      %v5922 = vld [vmem:[%s3 + $0x80] sm:$0xff]
      %v5923 = vpack.c.bf16 %v3572, %v5915
      %v5924 = vpack.c.bf16 %v3574, %v5917
      %5927 = vrot.lane.b32.xlu0 %v5923, 15
      %v5928 = vpop.permute.xlu0 %5927
      %5929 = vrot.lane.b32.xlu0 %v5924, 15
      %v5930 = vpop.permute.xlu0 %5929
      %v5931 = vsel %vm3588, %v5928, %v5930
      %v5933 = vsel %vm3590, 0, %v5928
      %v5936 = vsel %vm3594, %v5931, 0
      %v5938 = vmul.bf16 %v5933, %v3609
      %v5939 = vmul.bf16 %v5936, %v3616
      %v5940 = vmul.bf16 %v5933, %v3636
      %v5941 = vmul.bf16 %v5936, %v3639
      %v5942 = vmul.bf16 %v5933, %v3647
      %v5943 = vmul.bf16 %v5936, %v3651
      %v5944 = vmul.bf16 %v5933, %v3657
      %v5945 = vmul.bf16 %v5936, %v3661
      %v5946 = vmul.bf16 %v5933, %v3667
      %v5947 = vmul.bf16 %v5936, %v3670
      %v5948 = vmul.bf16 %v5933, %v3676
      %v5949 = vmul.bf16 %v5936, %v3679
      %5952 = vrot.lane.b32.xlu0 %v5933, 127
      %v5953 = vpop.permute.xlu0 %5952
      %5954 = vrot.lane.b32.xlu0 %v5936, 127
      %v5955 = vpop.permute.xlu0 %5954
      %v5956 = vsel %vm1044, %v5953, %v5955
      %5961 = vrot.lane.b32.xlu0 %v5940, 126
      %v5962 = vpop.permute.xlu0 %5961
      %5963 = vrot.lane.b32.xlu0 %v5941, 126
      %v5964 = vpop.permute.xlu0 %5963
      %v5965 = vsel %vm1079, %v5962, %v5964
      %5970 = vrot.lane.b32.xlu0 %v5942, 114
      %v5971 = vpop.permute.xlu0 %5970
      %5972 = vrot.lane.b32.xlu0 %v5943, 114
      %v5973 = vpop.permute.xlu0 %5972
      %v5974 = vsel %vm3708, %v5971, %v5973
      %5977 = vrot.lane.b32.xlu0 %v5933, 113
      %v5978 = vpop.permute.xlu0 %5977
      %5979 = vrot.lane.b32.xlu0 %v5936, 113
      %v5980 = vpop.permute.xlu0 %5979
      %v5981 = vsel %vm3716, %v5978, %v5980
      %5986 = vrot.lane.b32.xlu0 %v5944, 112
      %v5987 = vpop.permute.xlu0 %5986
      %5988 = vrot.lane.b32.xlu0 %v5945, 112
      %v5989 = vpop.permute.xlu0 %5988
      %v5990 = vsel %vm3726, %v5987, %v5989
      %5995 = vrot.lane.b32.xlu0 %v5946, 100
      %v5996 = vpop.permute.xlu0 %5995
      %5997 = vrot.lane.b32.xlu0 %v5947, 100
      %v5998 = vpop.permute.xlu0 %5997
      %v5999 = vsel %vm1114, %v5996, %v5998
      %6002 = vrot.lane.b32.xlu0 %v5933, 99
      %v6003 = vpop.permute.xlu0 %6002
      %6004 = vrot.lane.b32.xlu0 %v5936, 99
      %v6005 = vpop.permute.xlu0 %6004
      %v6006 = vsel %vm1135, %v6003, %v6005
      %6011 = vrot.lane.b32.xlu0 %v5948, 98
      %v6012 = vpop.permute.xlu0 %6011
      %6013 = vrot.lane.b32.xlu0 %v5949, 98
      %v6014 = vpop.permute.xlu0 %6013
      %v6015 = vsel %vm1170, %v6012, %v6014
      %6019 = vset.pattern.permute.xlu0 0
      %6020 = vperm.xlu0 %6019, %v5922
      %v6021 = vpop.permute.xlu0 %6020
      %v6024 = vunpack.c.l.b16 %v5921
      %v6025 = vunpack.c.h.b16 %v5921
      %v6026 = vpack.c.b16 %v6024, %v6024
      %v6027 = vpack.c.b16 %v6025, %v6025
      %v6030 = vsel %vm1998, %v6027, 0
      %6032 = vmatprep.subr.bf16.mxu0 %v5939
      %6033 = vmatpush1.bf16.msra.mxu0 %v5938
      %6034 = vmatprep.subr.bf16.mxu0 %v5955
      %6035 = vmatpush1.bf16.msra.mxu0 %v5956
      %6036 = vmatprep.subr.bf16.mxu0 %v5964
      %6037 = vmatpush1.bf16.msra.mxu0 %v5965
      %6038 = vmatprep.subr.bf16.mxu0 %v5973
      %6039 = vmatpush1.bf16.msra.mxu0 %v5974
      %6040 = vmatprep.subr.bf16.mxu0 %v5980
      %6041 = vmatpush1.bf16.msra.mxu0 %v5981
      %6042 = vmatprep.subr.bf16.mxu0 %v5989
      %6043 = vmatpush1.bf16.msra.mxu0 %v5990
      %6044 = vmatprep.subr.bf16.mxu0 %v5998
      %6045 = vmatpush1.bf16.msra.mxu0 %v5999
      %6046 = vmatprep.subr.bf16.mxu0 %v6005
      %6047 = vmatpush1.bf16.msra.mxu0 %v6006
      %6048 = vmatprep.subr.bf16.mxu0 %v6014
      %6049 = vmatpush1.bf16.msra.mxu0 %v6015
      %6050 = vmatprep.subr.bf16.mxu0 0
      %6051 = vmatpush1.bf16.msra.mxu0 0
      %6052 = vmatprep.subr.bf16.mxu0 0
      %6053 = vmatpush1.bf16.msra.mxu0 0
      %6054 = vmatprep.subr.bf16.mxu0 0
      %6055 = vmatpush1.bf16.msra.mxu0 0
      %6056 = vmatprep.subr.bf16.mxu0 0
      %6057 = vmatpush1.bf16.msra.mxu0 0
      %6058 = vmatprep.subr.bf16.mxu0 0
      %6059 = vmatpush1.bf16.msra.mxu0 0
      %6060 = vmatprep.subr.bf16.mxu0 0
      %6061 = vmatpush1.bf16.msra.mxu0 0
      %6062 = vmatprep.subr.bf16.mxu0 0
      %6063 = vmatpush1.bf16.msra.mxu0 0
      %6064 = vmatprep.mubr.bf16.mxu0 %v6030
      %6065 = vmatmul.mubr.bf16.gmra.mrb[0].mxu0 %v6026
      %v6066 = vpop.f32.mrb[0].mxu0
      %v6067 = vadd.f32 %v6021, %v6066
      %v6068 = vpop.f32.mrb[0].mxu0
      %v6069 = vadd.f32 %v6021, %v6068
      %v6070 = vpop.f32.mrb[0].mxu0
      %v6071 = vpop.f32.mrb[0].mxu0
      %6072 = vdwg.mxu0
      %vm6073 = vcmp.gt.f32.partialorder %v6067, 0.0
      %vm6074 = vcmp.gt.f32.partialorder %v6069, 0.0
      %v6075 = vmul.f32 %v6067, 0.01
      %v6076 = vmul.f32 %v6069, 0.01
      %v6077 = vsel %vm6073, %v6067, %v6075
      %v6078 = vsel %vm6074, %v6069, %v6076
      %v6079 = vld [vmem:[%s2 + $0xa0] sm:$0xf]
      %v6080 = vld [vmem:[%s3 + $0xa0] sm:$0xff]
      %6082 = vset.pattern.permute.xlu0 0
      %6083 = vperm.xlu0 %6082, %v6080
      %v6084 = vpop.permute.xlu0 %6083
      %v6087 = vsel %vm1998, %v6079, 0
      %6089 = vmatprep.subr.bf16.mxu0 %v5924
      %6090 = vmatpush1.bf16.msra.mxu0 %v5923
      %6091 = vmatprep.subr.bf16.mxu0 0
      %6092 = vmatpush1.bf16.msra.mxu0 0
      %6093 = vmatprep.subr.bf16.mxu0 0
      %6094 = vmatpush1.bf16.msra.mxu0 0
      %6095 = vmatprep.subr.bf16.mxu0 0
      %6096 = vmatpush1.bf16.msra.mxu0 0
      %6097 = vmatprep.subr.bf16.mxu0 0
      %6098 = vmatpush1.bf16.msra.mxu0 0
      %6099 = vmatprep.subr.bf16.mxu0 0
      %6100 = vmatpush1.bf16.msra.mxu0 0
      %6101 = vmatprep.subr.bf16.mxu0 0
      %6102 = vmatpush1.bf16.msra.mxu0 0
      %6103 = vmatprep.subr.bf16.mxu0 0
      %6104 = vmatpush1.bf16.msra.mxu0 0
      %6105 = vmatprep.subr.bf16.mxu0 0
      %6106 = vmatpush1.bf16.msra.mxu0 0
      %6107 = vmatprep.subr.bf16.mxu0 0
      %6108 = vmatpush1.bf16.msra.mxu0 0
      %6109 = vmatprep.subr.bf16.mxu0 0
      %6110 = vmatpush1.bf16.msra.mxu0 0
      %6111 = vmatprep.subr.bf16.mxu0 0
      %6112 = vmatpush1.bf16.msra.mxu0 0
      %6113 = vmatprep.subr.bf16.mxu0 0
      %6114 = vmatpush1.bf16.msra.mxu0 0
      %6115 = vmatprep.subr.bf16.mxu0 0
      %6116 = vmatpush1.bf16.msra.mxu0 0
      %6117 = vmatprep.subr.bf16.mxu0 0
      %6118 = vmatpush1.bf16.msra.mxu0 0
      %6119 = vmatprep.subr.bf16.mxu0 0
      %6120 = vmatpush1.bf16.msra.mxu0 0
      %6121 = vmatprep.mubr.bf16.mxu0 0
      %6122 = vmatmul.mubr.bf16.gmra.mrb[0].mxu0 %v6087
      %v6123 = vpop.f32.mrb[0].mxu0
      %v6124 = vadd.f32 %v6084, %v6123
      %v6125 = vpop.f32.mrb[0].mxu0
      %v6126 = vadd.f32 %v6084, %v6125
      %v6127 = vpop.f32.mrb[0].mxu0
      %v6128 = vpop.f32.mrb[0].mxu0
      %6129 = vdwg.mxu0
      %v6130 = vld [vmem:[%s2 + $0x90] sm:$0xf]
      %v6131 = vld [vmem:[%s3 + $0x90] sm:$0xff]
      %v6132 = vpack.c.bf16 %v6077, %v6077
      %v6133 = vpack.c.bf16 %v6078, %v6078
      %6136 = vrot.lane.b32.xlu0 %v6132, 15
      %v6137 = vpop.permute.xlu0 %6136
      %6138 = vrot.lane.b32.xlu0 %v6133, 15
      %v6139 = vpop.permute.xlu0 %6138
      %v6140 = vsel %vm3588, %v6137, %v6139
      %v6142 = vsel %vm3590, 0, %v6137
      %v6145 = vsel %vm3594, %v6140, 0
      %v6147 = vmul.bf16 %v6142, %v3609
      %v6148 = vmul.bf16 %v6145, %v3616
      %v6149 = vmul.bf16 %v6142, %v3636
      %v6150 = vmul.bf16 %v6145, %v3639
      %v6151 = vmul.bf16 %v6142, %v3647
      %v6152 = vmul.bf16 %v6145, %v3651
      %v6153 = vmul.bf16 %v6142, %v3657
      %v6154 = vmul.bf16 %v6145, %v3661
      %v6155 = vmul.bf16 %v6142, %v3667
      %v6156 = vmul.bf16 %v6145, %v3670
      %v6157 = vmul.bf16 %v6142, %v3676
      %v6158 = vmul.bf16 %v6145, %v3679
      %v6161 = vrot.slane %v6142, 4
      %v6162 = vrot.slane %v6145, 4
      %6163 = vrot.lane.b32.xlu0 %v6161, 127
      %v6164 = vpop.permute.xlu0 %6163
      %6165 = vrot.lane.b32.xlu0 %v6162, 127
      %v6166 = vpop.permute.xlu0 %6165
      %v6167 = vsel %vm1044, %v6164, %v6166
      %6170 = vrot.lane.b32.xlu0 %v6149, 126
      %v6171 = vpop.permute.xlu0 %6170
      %6172 = vrot.lane.b32.xlu0 %v6150, 126
      %v6173 = vpop.permute.xlu0 %6172
      %v6174 = vsel %vm1079, %v6171, %v6173
      %v6177 = vrot.slane %v6151, 4
      %v6178 = vrot.slane %v6152, 4
      %6179 = vrot.lane.b32.xlu0 %v6177, 114
      %v6180 = vpop.permute.xlu0 %6179
      %6181 = vrot.lane.b32.xlu0 %v6178, 114
      %v6182 = vpop.permute.xlu0 %6181
      %v6183 = vsel %vm3708, %v6180, %v6182
      %6184 = vrot.lane.b32.xlu0 %v6142, 113
      %v6185 = vpop.permute.xlu0 %6184
      %6186 = vrot.lane.b32.xlu0 %v6145, 113
      %v6187 = vpop.permute.xlu0 %6186
      %v6188 = vsel %vm3716, %v6185, %v6187
      %v6191 = vrot.slane %v6153, 4
      %v6192 = vrot.slane %v6154, 4
      %6193 = vrot.lane.b32.xlu0 %v6191, 112
      %v6194 = vpop.permute.xlu0 %6193
      %6195 = vrot.lane.b32.xlu0 %v6192, 112
      %v6196 = vpop.permute.xlu0 %6195
      %v6197 = vsel %vm3726, %v6194, %v6196
      %6200 = vrot.lane.b32.xlu0 %v6155, 100
      %v6201 = vpop.permute.xlu0 %6200
      %6202 = vrot.lane.b32.xlu0 %v6156, 100
      %v6203 = vpop.permute.xlu0 %6202
      %v6204 = vsel %vm1114, %v6201, %v6203
      %6205 = vrot.lane.b32.xlu0 %v6161, 99
      %v6206 = vpop.permute.xlu0 %6205
      %6207 = vrot.lane.b32.xlu0 %v6162, 99
      %v6208 = vpop.permute.xlu0 %6207
      %v6209 = vsel %vm1135, %v6206, %v6208
      %6212 = vrot.lane.b32.xlu0 %v6157, 98
      %v6213 = vpop.permute.xlu0 %6212
      %6214 = vrot.lane.b32.xlu0 %v6158, 98
      %v6215 = vpop.permute.xlu0 %6214
      %v6216 = vsel %vm1170, %v6213, %v6215
      %v6219 = vsel %vm1290, %v6147, %v6167
      %v6223 = vsel %vm1290, %v6148, %v6166
      %v6227 = vsel %vm1290, %v6174, %v6183
      %v6231 = vsel %vm1290, %v6173, %v6182
      %v6235 = vsel %vm1290, %v6188, %v6197
      %v6239 = vsel %vm1290, %v6187, %v6196
      %v6243 = vsel %vm1290, %v6204, %v6209
      %v6247 = vsel %vm1290, %v6203, %v6208
      %6250 = vset.pattern.permute.xlu0 0
      %6251 = vperm.xlu0 %6250, %v6131
      %v6252 = vpop.permute.xlu0 %6251
      %v6255 = vsel %vm5777, %v6130, 0
      %v6258 = vsel %vm1290, %v6216, 0
      %v6261 = vsel %vm1290, %v6215, 0
      %6263 = vmatprep.subr.bf16.mxu0 %v6223
      %6264 = vmatpush1.bf16.msra.mxu0 %v6219
      %6265 = vmatprep.subr.bf16.mxu0 %v6231
      %6266 = vmatpush1.bf16.msra.mxu0 %v6227
      %6267 = vmatprep.subr.bf16.mxu0 %v6239
      %6268 = vmatpush1.bf16.msra.mxu0 %v6235
      %6269 = vmatprep.subr.bf16.mxu0 %v6247
      %6270 = vmatpush1.bf16.msra.mxu0 %v6243
      %6271 = vmatprep.subr.bf16.mxu0 %v6261
      %6272 = vmatpush1.bf16.msra.mxu0 %v6258
      %6273 = vmatprep.subr.bf16.mxu0 0
      %6274 = vmatpush1.bf16.msra.mxu0 0
      %6275 = vmatprep.subr.bf16.mxu0 0
      %6276 = vmatpush1.bf16.msra.mxu0 0
      %6277 = vmatprep.subr.bf16.mxu0 0
      %6278 = vmatpush1.bf16.msra.mxu0 0
      %6279 = vmatprep.subr.bf16.mxu0 0
      %6280 = vmatpush1.bf16.msra.mxu0 0
      %6281 = vmatprep.subr.bf16.mxu0 0
      %6282 = vmatpush1.bf16.msra.mxu0 0
      %6283 = vmatprep.subr.bf16.mxu0 0
      %6284 = vmatpush1.bf16.msra.mxu0 0
      %6285 = vmatprep.subr.bf16.mxu0 0
      %6286 = vmatpush1.bf16.msra.mxu0 0
      %6287 = vmatprep.subr.bf16.mxu0 0
      %6288 = vmatpush1.bf16.msra.mxu0 0
      %6289 = vmatprep.subr.bf16.mxu0 0
      %6290 = vmatpush1.bf16.msra.mxu0 0
      %6291 = vmatprep.subr.bf16.mxu0 0
      %6292 = vmatpush1.bf16.msra.mxu0 0
      %6293 = vmatprep.subr.bf16.mxu0 0
      %6294 = vmatpush1.bf16.msra.mxu0 0
      %6295 = vmatprep.mubr.bf16.mxu0 0
      %6296 = vmatmul.mubr.bf16.gmra.mrb[0].mxu0 %v6255
      %v6297 = vpop.f32.mrb[0].mxu0
      %v6298 = vadd.f32 %v6252, %v6297
      %v6299 = vpop.f32.mrb[0].mxu0
      %v6300 = vadd.f32 %v6252, %v6299
      %v6301 = vpop.f32.mrb[0].mxu0
      %v6302 = vpop.f32.mrb[0].mxu0
      %6303 = vdwg.mxu0
      %v6304 = vadd.f32 %v6298, %v6124
      %v6305 = vadd.f32 %v6300, %v6126
      %vm6306 = vcmp.gt.f32.partialorder %v6304, 0.0
      %vm6307 = vcmp.gt.f32.partialorder %v6305, 0.0
      %v6308 = vmul.f32 %v6304, 0.01
      %v6309 = vmul.f32 %v6305, 0.01
      %v6310 = vsel %vm6306, %v6304, %v6308
      %v6311 = vsel %vm6307, %v6305, %v6309
      %v6312 = vpack.c.bf16 %v6310, %v6310
      %v6313 = vpack.c.bf16 %v6311, %v6311
      %v6314 = vld [vmem:[%s13] sm:$0xff]
      %v6315 = vld [vmem:[%s13 + $0x8] sm:$0xff]
      %v6316 = vld [vmem:[%s13 + $0x10] sm:$0xff]
      %v6317 = vld [vmem:[%s13 + $0x18] sm:$0xf]
      %v6318 = vld [vmem:[%s13 + $0x1c] sm:$0xff]
      %v6319 = vld [vmem:[%s13 + $0x24] sm:$0xff]
      %v6320 = vld [vmem:[%s13 + $0x2c] sm:$0xff]
      %v6321 = vld [vmem:[%s13 + $0x34] sm:$0xf]
      %v6322 = vld [vmem:[%s13 + $0x38] sm:$0xff]
      %v6323 = vld [vmem:[%s13 + $0x40] sm:$0xff]
      %v6324 = vld [vmem:[%s13 + $0x48] sm:$0xff]
      %v6325 = vld [vmem:[%s13 + $0x50] sm:$0xf]
      %v6326 = vld [vmem:[%s13 + $0x54] sm:$0xff]
      %v6327 = vld [vmem:[%s13 + $0x5c] sm:$0xff]
      %v6328 = vld [vmem:[%s13 + $0x64] sm:$0xff]
      %v6329 = vld [vmem:[%s13 + $0x6c] sm:$0xf]
      %v6330 = vld [vmem:[%s13 + $0x70] sm:$0xff]
      %v6331 = vld [vmem:[%s13 + $0x78] sm:$0xff]
      %v6332 = vld [vmem:[%s13 + $0x80] sm:$0xff]
      %v6333 = vld [vmem:[%s13 + $0x88] sm:$0xf]
      %v6334 = vld [vmem:[%s13 + $0x8c] sm:$0xff]
      %v6335 = vld [vmem:[%s13 + $0x94] sm:$0xff]
      %v6336 = vld [vmem:[%s13 + $0x9c] sm:$0xff]
      %v6337 = vld [vmem:[%s13 + $0xa4] sm:$0xf]
      %v6338 = vld [vmem:[%s13 + $0xa8] sm:$0xff]
      %v6339 = vld [vmem:[%s13 + $0xb0] sm:$0xff]
      %v6340 = vld [vmem:[%s13 + $0xb8] sm:$0xff]
      %v6341 = vld [vmem:[%s13 + $0xc0] sm:$0xf]
      %v6342 = vld [vmem:[%s13 + $0xc4] sm:$0xff]
      %v6343 = vld [vmem:[%s13 + $0xcc] sm:$0xff]
      %v6344 = vld [vmem:[%s13 + $0xd4] sm:$0xff]
      %v6345 = vld [vmem:[%s13 + $0xdc] sm:$0xf]
      %v6346 = vld [vmem:[%s13 + $0xe0] sm:$0xff]
      %v6347 = vld [vmem:[%s13 + $0xe8] sm:$0xff]
      %v6348 = vld [vmem:[%s13 + $0xf0] sm:$0xff]
      %v6349 = vld [vmem:[%s13 + $0xf8] sm:$0xf]
      %v6350 = vld [vmem:[%s13 + $0xfc] sm:$0xff]
      %v6351 = vld [vmem:[%s13 + $0x104] sm:$0xff]
      %v6352 = vld [vmem:[%s13 + $0x10c] sm:$0xff]
      %v6353 = vld [vmem:[%s13 + $0x114] sm:$0xf]
      %v6354 = vld [vmem:[%s13 + $0x118] sm:$0xff]
      %v6355 = vld [vmem:[%s13 + $0x120] sm:$0xff]
      %v6356 = vld [vmem:[%s13 + $0x128] sm:$0xff]
      %v6357 = vld [vmem:[%s13 + $0x130] sm:$0xf]
      %v6358 = vld [vmem:[%s13 + $0x134] sm:$0xff]
      %v6359 = vld [vmem:[%s13 + $0x13c] sm:$0xff]
      %v6360 = vld [vmem:[%s13 + $0x144] sm:$0xff]
      %v6361 = vld [vmem:[%s13 + $0x14c] sm:$0xf]
      %v6362 = vld [vmem:[%s13 + $0x150] sm:$0xff]
      %v6363 = vld [vmem:[%s13 + $0x158] sm:$0xff]
      %v6364 = vld [vmem:[%s13 + $0x160] sm:$0xff]
      %v6365 = vld [vmem:[%s13 + $0x168] sm:$0xf]
      %v6366 = vld [vmem:[%s13 + $0x16c] sm:$0xff]
      %v6367 = vld [vmem:[%s13 + $0x174] sm:$0xff]
      %v6368 = vld [vmem:[%s13 + $0x17c] sm:$0xff]
      %v6369 = vld [vmem:[%s13 + $0x184] sm:$0xf]
      %v6370 = vld [vmem:[%s13 + $0x188] sm:$0xff]
      %v6371 = vld [vmem:[%s13 + $0x190] sm:$0xff]
      %v6372 = vld [vmem:[%s13 + $0x198] sm:$0xff]
      %v6373 = vld [vmem:[%s13 + $0x1a0] sm:$0xf]
      %v6374 = vld [vmem:[%s13 + $0x1a4] sm:$0xff]
      %v6375 = vld [vmem:[%s13 + $0x1ac] sm:$0xff]
      %v6376 = vld [vmem:[%s13 + $0x1b4] sm:$0xff]
      %v6377 = vld [vmem:[%s13 + $0x1bc] sm:$0xf]
      %v6378 = vld [vmem:[%s13 + $0x1c0] sm:$0xff]
      %v6379 = vld [vmem:[%s13 + $0x1c8] sm:$0xff]
      %v6380 = vld [vmem:[%s13 + $0x1d0] sm:$0xff]
      %v6381 = vld [vmem:[%s13 + $0x1d8] sm:$0xf]
      %v6382 = vld [vmem:[%s13 + $0x1dc] sm:$0xff]
      %v6383 = vld [vmem:[%s13 + $0x1e4] sm:$0xff]
      %v6384 = vld [vmem:[%s13 + $0x1ec] sm:$0xff]
      %v6385 = vld [vmem:[%s13 + $0x1f4] sm:$0xf]
      %v6386 = vld [vmem:[%s13 + $0x1f8] sm:$0xff]
      %v6387 = vld [vmem:[%s13 + $0x200] sm:$0xff]
      %v6388 = vld [vmem:[%s13 + $0x208] sm:$0xff]
      %v6389 = vld [vmem:[%s13 + $0x210] sm:$0xf]
      %v6390 = vld [vmem:[%s13 + $0x214] sm:$0xff]
      %v6391 = vld [vmem:[%s13 + $0x21c] sm:$0xff]
      %v6392 = vld [vmem:[%s13 + $0x224] sm:$0xff]
      %v6393 = vld [vmem:[%s13 + $0x22c] sm:$0xf]
      %v6394 = vld [vmem:[%s13 + $0x230] sm:$0xff]
      %v6395 = vld [vmem:[%s13 + $0x238] sm:$0xff]
      %v6396 = vld [vmem:[%s13 + $0x240] sm:$0xff]
      %v6397 = vld [vmem:[%s13 + $0x248] sm:$0xf]
      %v6398 = vld [vmem:[%s13 + $0x24c] sm:$0xff]
      %v6399 = vld [vmem:[%s13 + $0x254] sm:$0xff]
      %v6400 = vld [vmem:[%s13 + $0x25c] sm:$0xff]
      %v6401 = vld [vmem:[%s13 + $0x264] sm:$0xf]
      %v6402 = vld [vmem:[%s13 + $0x268] sm:$0xff]
      %v6403 = vld [vmem:[%s13 + $0x270] sm:$0xff]
      %v6404 = vld [vmem:[%s13 + $0x278] sm:$0xff]
      %v6405 = vld [vmem:[%s13 + $0x280] sm:$0xf]
      %v6406 = vld [vmem:[%s13 + $0x284] sm:$0xff]
      %v6407 = vld [vmem:[%s13 + $0x28c] sm:$0xff]
      %v6408 = vld [vmem:[%s13 + $0x294] sm:$0xff]
      %v6409 = vld [vmem:[%s13 + $0x29c] sm:$0xf]
      %v6410 = vld [vmem:[%s13 + $0x2a0] sm:$0x33]
      %v6411 = vld [vmem:[%s13 + $0x2a8] sm:$0x33]
      %v6412 = vld [vmem:[%s13 + $0x2b0] sm:$0x33]
      %v6413 = vld [vmem:[%s13 + $0x2b8] sm:$0x3]
      %v6514 = vunpack.c.l.b16 %v6314
      %v6515 = vunpack.c.h.b16 %v6314
      %v6516 = vunpack.c.l.b16 %v6315
      %v6517 = vunpack.c.h.b16 %v6315
      %v6518 = vunpack.c.l.b16 %v6316
      %v6519 = vunpack.c.h.b16 %v6316
      %v6520 = vunpack.c.l.b16 %v6317
      %v6521 = vunpack.c.l.b16 %v6318
      %v6522 = vunpack.c.h.b16 %v6318
      %v6523 = vunpack.c.l.b16 %v6319
      %v6524 = vunpack.c.h.b16 %v6319
      %v6525 = vunpack.c.l.b16 %v6320
      %v6526 = vunpack.c.h.b16 %v6320
      %v6527 = vunpack.c.l.b16 %v6321
      %v6528 = vunpack.c.l.b16 %v6322
      %v6529 = vunpack.c.h.b16 %v6322
      %v6530 = vunpack.c.l.b16 %v6323
      %v6531 = vunpack.c.h.b16 %v6323
      %v6532 = vunpack.c.l.b16 %v6324
      %v6533 = vunpack.c.h.b16 %v6324
      %v6534 = vunpack.c.l.b16 %v6325
      %v6535 = vunpack.c.l.b16 %v6326
      %v6536 = vunpack.c.h.b16 %v6326
      %v6537 = vunpack.c.l.b16 %v6327
      %v6538 = vunpack.c.h.b16 %v6327
      %v6539 = vunpack.c.l.b16 %v6328
      %v6540 = vunpack.c.h.b16 %v6328
      %v6541 = vunpack.c.l.b16 %v6329
      %v6542 = vunpack.c.l.b16 %v6330
      %v6543 = vunpack.c.h.b16 %v6330
      %v6544 = vunpack.c.l.b16 %v6331
      %v6545 = vunpack.c.h.b16 %v6331
      %v6546 = vunpack.c.l.b16 %v6332
      %v6547 = vunpack.c.h.b16 %v6332
      %v6548 = vunpack.c.l.b16 %v6333
      %v6549 = vunpack.c.l.b16 %v6334
      %v6550 = vunpack.c.h.b16 %v6334
      %v6551 = vunpack.c.l.b16 %v6335
      %v6552 = vunpack.c.h.b16 %v6335
      %v6553 = vunpack.c.l.b16 %v6336
      %v6554 = vunpack.c.h.b16 %v6336
      %v6555 = vunpack.c.l.b16 %v6337
      %v6556 = vunpack.c.l.b16 %v6338
      %v6557 = vunpack.c.h.b16 %v6338
      %v6558 = vunpack.c.l.b16 %v6339
      %v6559 = vunpack.c.h.b16 %v6339
      %v6560 = vunpack.c.l.b16 %v6340
      %v6561 = vunpack.c.h.b16 %v6340
      %v6562 = vunpack.c.l.b16 %v6341
      %v6563 = vunpack.c.l.b16 %v6342
      %v6564 = vunpack.c.h.b16 %v6342
      %v6565 = vunpack.c.l.b16 %v6343
      %v6566 = vunpack.c.h.b16 %v6343
      %v6567 = vunpack.c.l.b16 %v6344
      %v6568 = vunpack.c.h.b16 %v6344
      %v6569 = vunpack.c.l.b16 %v6345
      %v6570 = vunpack.c.l.b16 %v6346
      %v6571 = vunpack.c.h.b16 %v6346
      %v6572 = vunpack.c.l.b16 %v6347
      %v6573 = vunpack.c.h.b16 %v6347
      %v6574 = vunpack.c.l.b16 %v6348
      %v6575 = vunpack.c.h.b16 %v6348
      %v6576 = vunpack.c.l.b16 %v6349
      %v6577 = vunpack.c.l.b16 %v6350
      %v6578 = vunpack.c.h.b16 %v6350
      %v6579 = vunpack.c.l.b16 %v6351
      %v6580 = vunpack.c.h.b16 %v6351
      %v6581 = vunpack.c.l.b16 %v6352
      %v6582 = vunpack.c.h.b16 %v6352
      %v6583 = vunpack.c.l.b16 %v6353
      %v6584 = vunpack.c.l.b16 %v6354
      %v6585 = vunpack.c.h.b16 %v6354
      %v6586 = vunpack.c.l.b16 %v6355
      %v6587 = vunpack.c.h.b16 %v6355
      %v6588 = vunpack.c.l.b16 %v6356
      %v6589 = vunpack.c.h.b16 %v6356
      %v6590 = vunpack.c.l.b16 %v6357
      %v6591 = vunpack.c.l.b16 %v6358
      %v6592 = vunpack.c.h.b16 %v6358
      %v6593 = vunpack.c.l.b16 %v6359
      %v6594 = vunpack.c.h.b16 %v6359
      %v6595 = vunpack.c.l.b16 %v6360
      %v6596 = vunpack.c.h.b16 %v6360
      %v6597 = vunpack.c.l.b16 %v6361
      %v6598 = vunpack.c.l.b16 %v6362
      %v6599 = vunpack.c.h.b16 %v6362
      %v6600 = vunpack.c.l.b16 %v6363
      %v6601 = vunpack.c.h.b16 %v6363
      %v6602 = vunpack.c.l.b16 %v6364
      %v6603 = vunpack.c.h.b16 %v6364
      %v6604 = vunpack.c.l.b16 %v6365
      %v6605 = vunpack.c.l.b16 %v6366
      %v6606 = vunpack.c.h.b16 %v6366
      %v6607 = vunpack.c.l.b16 %v6367
      %v6608 = vunpack.c.h.b16 %v6367
      %v6609 = vunpack.c.l.b16 %v6368
      %v6610 = vunpack.c.h.b16 %v6368
      %v6611 = vunpack.c.l.b16 %v6369
      %v6612 = vunpack.c.l.b16 %v6370
      %v6613 = vunpack.c.h.b16 %v6370
      %v6614 = vunpack.c.l.b16 %v6371
      %v6615 = vunpack.c.h.b16 %v6371
      %v6616 = vunpack.c.l.b16 %v6372
      %v6617 = vunpack.c.h.b16 %v6372
      %v6618 = vunpack.c.l.b16 %v6373
      %v6619 = vunpack.c.l.b16 %v6374
      %v6620 = vunpack.c.h.b16 %v6374
      %v6621 = vunpack.c.l.b16 %v6375
      %v6622 = vunpack.c.h.b16 %v6375
      %v6623 = vunpack.c.l.b16 %v6376
      %v6624 = vunpack.c.h.b16 %v6376
      %v6625 = vunpack.c.l.b16 %v6377
      %v6626 = vunpack.c.l.b16 %v6378
      %v6627 = vunpack.c.h.b16 %v6378
      %v6628 = vunpack.c.l.b16 %v6379
      %v6629 = vunpack.c.h.b16 %v6379
      %v6630 = vunpack.c.l.b16 %v6380
      %v6631 = vunpack.c.h.b16 %v6380
      %v6632 = vunpack.c.l.b16 %v6381
      %v6633 = vunpack.c.l.b16 %v6382
      %v6634 = vunpack.c.h.b16 %v6382
      %v6635 = vunpack.c.l.b16 %v6383
      %v6636 = vunpack.c.h.b16 %v6383
      %v6637 = vunpack.c.l.b16 %v6384
      %v6638 = vunpack.c.h.b16 %v6384
      %v6639 = vunpack.c.l.b16 %v6385
      %v6640 = vunpack.c.l.b16 %v6386
      %v6641 = vunpack.c.h.b16 %v6386
      %v6642 = vunpack.c.l.b16 %v6387
      %v6643 = vunpack.c.h.b16 %v6387
      %v6644 = vunpack.c.l.b16 %v6388
      %v6645 = vunpack.c.h.b16 %v6388
      %v6646 = vunpack.c.l.b16 %v6389
      %v6647 = vunpack.c.l.b16 %v6390
      %v6648 = vunpack.c.h.b16 %v6390
      %v6649 = vunpack.c.l.b16 %v6391
      %v6650 = vunpack.c.h.b16 %v6391
      %v6651 = vunpack.c.l.b16 %v6392
      %v6652 = vunpack.c.h.b16 %v6392
      %v6653 = vunpack.c.l.b16 %v6393
      %v6654 = vunpack.c.l.b16 %v6394
      %v6655 = vunpack.c.h.b16 %v6394
      %v6656 = vunpack.c.l.b16 %v6395
      %v6657 = vunpack.c.h.b16 %v6395
      %v6658 = vunpack.c.l.b16 %v6396
      %v6659 = vunpack.c.h.b16 %v6396
      %v6660 = vunpack.c.l.b16 %v6397
      %v6661 = vunpack.c.l.b16 %v6398
      %v6662 = vunpack.c.h.b16 %v6398
      %v6663 = vunpack.c.l.b16 %v6399
      %v6664 = vunpack.c.h.b16 %v6399
      %v6665 = vunpack.c.l.b16 %v6400
      %v6666 = vunpack.c.h.b16 %v6400
      %v6667 = vunpack.c.l.b16 %v6401
      %v6668 = vunpack.c.l.b16 %v6402
      %v6669 = vunpack.c.h.b16 %v6402
      %v6670 = vunpack.c.l.b16 %v6403
      %v6671 = vunpack.c.h.b16 %v6403
      %v6672 = vunpack.c.l.b16 %v6404
      %v6673 = vunpack.c.h.b16 %v6404
      %v6674 = vunpack.c.l.b16 %v6405
      %v6675 = vunpack.c.l.b16 %v6406
      %v6676 = vunpack.c.h.b16 %v6406
      %v6677 = vunpack.c.l.b16 %v6407
      %v6678 = vunpack.c.h.b16 %v6407
      %v6679 = vunpack.c.l.b16 %v6408
      %v6680 = vunpack.c.h.b16 %v6408
      %v6681 = vunpack.c.l.b16 %v6409
      %v6682 = vunpack.c.l.b16 %v6410
      %v6683 = vunpack.c.h.b16 %v6410
      %v6684 = vunpack.c.l.b16 %v6411
      %v6685 = vunpack.c.h.b16 %v6411
      %v6686 = vunpack.c.l.b16 %v6412
      %v6687 = vunpack.c.h.b16 %v6412
      %v6688 = vunpack.c.l.b16 %v6413
      %v6689 = vpack.c.b16 %v6521, %v6514
      %v6690 = vpack.c.b16 %v6522, %v6515
      %v6691 = vpack.c.b16 %v6523, %v6516
      %v6692 = vpack.c.b16 %v6524, %v6517
      %v6693 = vpack.c.b16 %v6525, %v6518
      %v6694 = vpack.c.b16 %v6526, %v6519
      %v6695 = vpack.c.b16 %v6527, %v6520
      %v6696 = vpack.c.b16 %v6535, %v6528
      %v6697 = vpack.c.b16 %v6536, %v6529
      %v6698 = vpack.c.b16 %v6537, %v6530
      %v6699 = vpack.c.b16 %v6538, %v6531
      %v6700 = vpack.c.b16 %v6539, %v6532
      %v6701 = vpack.c.b16 %v6540, %v6533
      %v6702 = vpack.c.b16 %v6541, %v6534
      %v6703 = vpack.c.b16 %v6549, %v6542
      %v6704 = vpack.c.b16 %v6550, %v6543
      %v6705 = vpack.c.b16 %v6551, %v6544
      %v6706 = vpack.c.b16 %v6552, %v6545
      %v6707 = vpack.c.b16 %v6553, %v6546
      %v6708 = vpack.c.b16 %v6554, %v6547
      %v6709 = vpack.c.b16 %v6555, %v6548
      %v6710 = vpack.c.b16 %v6563, %v6556
      %v6711 = vpack.c.b16 %v6564, %v6557
      %v6712 = vpack.c.b16 %v6565, %v6558
      %v6713 = vpack.c.b16 %v6566, %v6559
      %v6714 = vpack.c.b16 %v6567, %v6560
      %v6715 = vpack.c.b16 %v6568, %v6561
      %v6716 = vpack.c.b16 %v6569, %v6562
      %v6717 = vpack.c.b16 %v6577, %v6570
      %v6718 = vpack.c.b16 %v6578, %v6571
      %v6719 = vpack.c.b16 %v6579, %v6572
      %v6720 = vpack.c.b16 %v6580, %v6573
      %v6721 = vpack.c.b16 %v6581, %v6574
      %v6722 = vpack.c.b16 %v6582, %v6575
      %v6723 = vpack.c.b16 %v6583, %v6576
      %v6724 = vpack.c.b16 %v6591, %v6584
      %v6725 = vpack.c.b16 %v6592, %v6585
      %v6726 = vpack.c.b16 %v6593, %v6586
      %v6727 = vpack.c.b16 %v6594, %v6587
      %v6728 = vpack.c.b16 %v6595, %v6588
      %v6729 = vpack.c.b16 %v6596, %v6589
      %v6730 = vpack.c.b16 %v6597, %v6590
      %v6731 = vpack.c.b16 %v6605, %v6598
      %v6732 = vpack.c.b16 %v6606, %v6599
      %v6733 = vpack.c.b16 %v6607, %v6600
      %v6734 = vpack.c.b16 %v6608, %v6601
      %v6735 = vpack.c.b16 %v6609, %v6602
      %v6736 = vpack.c.b16 %v6610, %v6603
      %v6737 = vpack.c.b16 %v6611, %v6604
      %v6738 = vpack.c.b16 %v6619, %v6612
      %v6739 = vpack.c.b16 %v6620, %v6613
      %v6740 = vpack.c.b16 %v6621, %v6614
      %v6741 = vpack.c.b16 %v6622, %v6615
      %v6742 = vpack.c.b16 %v6623, %v6616
      %v6743 = vpack.c.b16 %v6624, %v6617
      %v6744 = vpack.c.b16 %v6625, %v6618
      %v6745 = vpack.c.b16 %v6633, %v6626
      %v6746 = vpack.c.b16 %v6634, %v6627
      %v6747 = vpack.c.b16 %v6635, %v6628
      %v6748 = vpack.c.b16 %v6636, %v6629
      %v6749 = vpack.c.b16 %v6637, %v6630
      %v6750 = vpack.c.b16 %v6638, %v6631
      %v6751 = vpack.c.b16 %v6639, %v6632
      %v6752 = vpack.c.b16 %v6647, %v6640
      %v6753 = vpack.c.b16 %v6648, %v6641
      %v6754 = vpack.c.b16 %v6649, %v6642
      %v6755 = vpack.c.b16 %v6650, %v6643
      %v6756 = vpack.c.b16 %v6651, %v6644
      %v6757 = vpack.c.b16 %v6652, %v6645
      %v6758 = vpack.c.b16 %v6653, %v6646
      %v6759 = vpack.c.b16 %v6661, %v6654
      %v6760 = vpack.c.b16 %v6662, %v6655
      %v6761 = vpack.c.b16 %v6663, %v6656
      %v6762 = vpack.c.b16 %v6664, %v6657
      %v6763 = vpack.c.b16 %v6665, %v6658
      %v6764 = vpack.c.b16 %v6666, %v6659
      %v6765 = vpack.c.b16 %v6667, %v6660
      %v6766 = vpack.c.b16 %v6675, %v6668
      %v6767 = vpack.c.b16 %v6676, %v6669
      %v6768 = vpack.c.b16 %v6677, %v6670
      %v6769 = vpack.c.b16 %v6678, %v6671
      %v6770 = vpack.c.b16 %v6679, %v6672
      %v6771 = vpack.c.b16 %v6680, %v6673
      %v6772 = vpack.c.b16 %v6681, %v6674
      %v6773 = vpack.c.b16 %v6682, %v6682
      %v6774 = vpack.c.b16 %v6683, %v6683
      %v6775 = vpack.c.b16 %v6684, %v6684
      %v6776 = vpack.c.b16 %v6685, %v6685
      %v6777 = vpack.c.b16 %v6686, %v6686
      %v6778 = vpack.c.b16 %v6687, %v6687
      %v6779 = vpack.c.b16 %v6688, %v6688
      %v6865 = vsel %vm4114, %v6313, 0
      %v6868 = vsel %vm1268, %v6773, 0
      %v6871 = vsel %vm1268, %v6774, 0
      %v6874 = vsel %vm1268, %v6775, 0
      %v6877 = vsel %vm1268, %v6776, 0
      %v6880 = vsel %vm1268, %v6777, 0
      %v6883 = vsel %vm1268, %v6778, 0
      %v6886 = vsel %vm1268, %v6779, 0
      %6888 = vmatprep.subr.bf16.mxu0 %v6690
      %6889 = vmatpush1.bf16.msra.mxu0 %v6689
      %6890 = vmatprep.subr.bf16.mxu0 %v6697
      %6891 = vmatpush1.bf16.msra.mxu0 %v6696
      %6892 = vmatprep.subr.bf16.mxu0 %v6704
      %6893 = vmatpush1.bf16.msra.mxu0 %v6703
      %6894 = vmatprep.subr.bf16.mxu0 %v6711
      %6895 = vmatpush1.bf16.msra.mxu0 %v6710
      %6896 = vmatprep.subr.bf16.mxu0 %v6718
      %6897 = vmatpush1.bf16.msra.mxu0 %v6717
      %6898 = vmatprep.subr.bf16.mxu0 %v6725
      %6899 = vmatpush1.bf16.msra.mxu0 %v6724
      %6900 = vmatprep.subr.bf16.mxu0 %v6732
      %6901 = vmatpush1.bf16.msra.mxu0 %v6731
      %6902 = vmatprep.subr.bf16.mxu0 %v6739
      %6903 = vmatpush1.bf16.msra.mxu0 %v6738
      %6904 = vmatprep.subr.bf16.mxu0 %v6746
      %6905 = vmatpush1.bf16.msra.mxu0 %v6745
      %6906 = vmatprep.subr.bf16.mxu0 %v6753
      %6907 = vmatpush1.bf16.msra.mxu0 %v6752
      %6908 = vmatprep.subr.bf16.mxu0 %v6760
      %6909 = vmatpush1.bf16.msra.mxu0 %v6759
      %6910 = vmatprep.subr.bf16.mxu0 %v6767
      %6911 = vmatpush1.bf16.msra.mxu0 %v6766
      %6912 = vmatprep.subr.bf16.mxu0 %v6871
      %6913 = vmatpush1.bf16.msra.mxu0 %v6868
      %6914 = vmatprep.subr.bf16.mxu0 0
      %6915 = vmatpush1.bf16.msra.mxu0 0
      %6916 = vmatprep.subr.bf16.mxu0 0
      %6917 = vmatpush1.bf16.msra.mxu0 0
      %6918 = vmatprep.subr.bf16.mxu0 0
      %6919 = vmatpush1.bf16.msra.mxu0 0
      %6920 = vmatprep.mubr.bf16.mxu0 %v6865
      %6921 = vmatmul.mubr.bf16.gmra.mrb[0].mxu0 %v6312
      %v6922 = vpop.f32.mrb[0].mxu0
      %v6923 = vadd.f32 0.0, %v6922
      %v6924 = vpop.f32.mrb[0].mxu0
      %v6925 = vadd.f32 0.0, %v6924
      %v6926 = vpop.f32.mrb[0].mxu0
      %v6927 = vpop.f32.mrb[0].mxu0
      %6928 = vdwg.mxu0
      %6929 = vmatprep.subr.bf16.mxu0 %v6692
      %6930 = vmatpush1.bf16.msra.mxu0 %v6691
      %6931 = vmatprep.subr.bf16.mxu0 %v6699
      %6932 = vmatpush1.bf16.msra.mxu0 %v6698
      %6933 = vmatprep.subr.bf16.mxu0 %v6706
      %6934 = vmatpush1.bf16.msra.mxu0 %v6705
      %6935 = vmatprep.subr.bf16.mxu0 %v6713
      %6936 = vmatpush1.bf16.msra.mxu0 %v6712
      %6937 = vmatprep.subr.bf16.mxu0 %v6720
      %6938 = vmatpush1.bf16.msra.mxu0 %v6719
      %6939 = vmatprep.subr.bf16.mxu0 %v6727
      %6940 = vmatpush1.bf16.msra.mxu0 %v6726
      %6941 = vmatprep.subr.bf16.mxu0 %v6734
      %6942 = vmatpush1.bf16.msra.mxu0 %v6733
      %6943 = vmatprep.subr.bf16.mxu0 %v6741
      %6944 = vmatpush1.bf16.msra.mxu0 %v6740
      %6945 = vmatprep.subr.bf16.mxu0 %v6748
      %6946 = vmatpush1.bf16.msra.mxu0 %v6747
      %6947 = vmatprep.subr.bf16.mxu0 %v6755
      %6948 = vmatpush1.bf16.msra.mxu0 %v6754
      %6949 = vmatprep.subr.bf16.mxu0 %v6762
      %6950 = vmatpush1.bf16.msra.mxu0 %v6761
      %6951 = vmatprep.subr.bf16.mxu0 %v6769
      %6952 = vmatpush1.bf16.msra.mxu0 %v6768
      %6953 = vmatprep.subr.bf16.mxu0 %v6877
      %6954 = vmatpush1.bf16.msra.mxu0 %v6874
      %6955 = vmatprep.subr.bf16.mxu0 0
      %6956 = vmatpush1.bf16.msra.mxu0 0
      %6957 = vmatprep.subr.bf16.mxu0 0
      %6958 = vmatpush1.bf16.msra.mxu0 0
      %6959 = vmatprep.subr.bf16.mxu0 0
      %6960 = vmatpush1.bf16.msra.mxu0 0
      %6961 = vmatprep.mubr.bf16.mxu0 %v6865
      %6962 = vmatmul.mubr.bf16.gmra.mrb[0].mxu0 %v6312
      %v6963 = vpop.f32.mrb[0].mxu0
      %v6964 = vadd.f32 0.0, %v6963
      %v6965 = vpop.f32.mrb[0].mxu0
      %v6966 = vadd.f32 0.0, %v6965
      %v6967 = vpop.f32.mrb[0].mxu0
      %v6968 = vpop.f32.mrb[0].mxu0
      %6969 = vdwg.mxu0
      %6970 = vmatprep.subr.bf16.mxu0 %v6694
      %6971 = vmatpush1.bf16.msra.mxu0 %v6693
      %6972 = vmatprep.subr.bf16.mxu0 %v6701
      %6973 = vmatpush1.bf16.msra.mxu0 %v6700
      %6974 = vmatprep.subr.bf16.mxu0 %v6708
      %6975 = vmatpush1.bf16.msra.mxu0 %v6707
      %6976 = vmatprep.subr.bf16.mxu0 %v6715
      %6977 = vmatpush1.bf16.msra.mxu0 %v6714
      %6978 = vmatprep.subr.bf16.mxu0 %v6722
      %6979 = vmatpush1.bf16.msra.mxu0 %v6721
      %6980 = vmatprep.subr.bf16.mxu0 %v6729
      %6981 = vmatpush1.bf16.msra.mxu0 %v6728
      %6982 = vmatprep.subr.bf16.mxu0 %v6736
      %6983 = vmatpush1.bf16.msra.mxu0 %v6735
      %6984 = vmatprep.subr.bf16.mxu0 %v6743
      %6985 = vmatpush1.bf16.msra.mxu0 %v6742
      %6986 = vmatprep.subr.bf16.mxu0 %v6750
      %6987 = vmatpush1.bf16.msra.mxu0 %v6749
      %6988 = vmatprep.subr.bf16.mxu0 %v6757
      %6989 = vmatpush1.bf16.msra.mxu0 %v6756
      %6990 = vmatprep.subr.bf16.mxu0 %v6764
      %6991 = vmatpush1.bf16.msra.mxu0 %v6763
      %6992 = vmatprep.subr.bf16.mxu0 %v6771
      %6993 = vmatpush1.bf16.msra.mxu0 %v6770
      %6994 = vmatprep.subr.bf16.mxu0 %v6883
      %6995 = vmatpush1.bf16.msra.mxu0 %v6880
      %6996 = vmatprep.subr.bf16.mxu0 0
      %6997 = vmatpush1.bf16.msra.mxu0 0
      %6998 = vmatprep.subr.bf16.mxu0 0
      %6999 = vmatpush1.bf16.msra.mxu0 0
      %7000 = vmatprep.subr.bf16.mxu0 0
      %7001 = vmatpush1.bf16.msra.mxu0 0
      %7002 = vmatprep.mubr.bf16.mxu0 %v6865
      %7003 = vmatmul.mubr.bf16.gmra.mrb[0].mxu0 %v6312
      %v7004 = vpop.f32.mrb[0].mxu0
      %v7005 = vadd.f32 0.0, %v7004
      %v7006 = vpop.f32.mrb[0].mxu0
      %v7007 = vadd.f32 0.0, %v7006
      %v7008 = vpop.f32.mrb[0].mxu0
      %v7009 = vpop.f32.mrb[0].mxu0
      %7010 = vdwg.mxu0
      %7011 = vmatprep.subr.bf16.mxu0 0
      %7012 = vmatpush1.bf16.msra.mxu0 %v6695
      %7013 = vmatprep.subr.bf16.mxu0 0
      %7014 = vmatpush1.bf16.msra.mxu0 %v6702
      %7015 = vmatprep.subr.bf16.mxu0 0
      %7016 = vmatpush1.bf16.msra.mxu0 %v6709
      %7017 = vmatprep.subr.bf16.mxu0 0
      %7018 = vmatpush1.bf16.msra.mxu0 %v6716
      %7019 = vmatprep.subr.bf16.mxu0 0
      %7020 = vmatpush1.bf16.msra.mxu0 %v6723
      %7021 = vmatprep.subr.bf16.mxu0 0
      %7022 = vmatpush1.bf16.msra.mxu0 %v6730
      %7023 = vmatprep.subr.bf16.mxu0 0
      %7024 = vmatpush1.bf16.msra.mxu0 %v6737
      %7025 = vmatprep.subr.bf16.mxu0 0
      %7026 = vmatpush1.bf16.msra.mxu0 %v6744
      %7027 = vmatprep.subr.bf16.mxu0 0
      %7028 = vmatpush1.bf16.msra.mxu0 %v6751
      %7029 = vmatprep.subr.bf16.mxu0 0
      %7030 = vmatpush1.bf16.msra.mxu0 %v6758
      %7031 = vmatprep.subr.bf16.mxu0 0
      %7032 = vmatpush1.bf16.msra.mxu0 %v6765
      %7033 = vmatprep.subr.bf16.mxu0 0
      %7034 = vmatpush1.bf16.msra.mxu0 %v6772
      %7035 = vmatprep.subr.bf16.mxu0 0
      %7036 = vmatpush1.bf16.msra.mxu0 %v6886
      %7037 = vmatprep.subr.bf16.mxu0 0
      %7038 = vmatpush1.bf16.msra.mxu0 0
      %7039 = vmatprep.subr.bf16.mxu0 0
      %7040 = vmatpush1.bf16.msra.mxu0 0
      %7041 = vmatprep.subr.bf16.mxu0 0
      %7042 = vmatpush1.bf16.msra.mxu0 0
      %7043 = vmatprep.mubr.bf16.mxu0 %v6865
      %7044 = vmatmul.mubr.bf16.gmra.mrb[0].mxu0 %v6312
      %v7045 = vpop.f32.mrb[0].mxu0
      %v7046 = vadd.f32 0.0, %v7045
      %v7047 = vpop.f32.mrb[0].mxu0
      %v7048 = vpop.f32.mrb[0].mxu0
      %v7049 = vpop.f32.mrb[0].mxu0
      %7050 = vdwg.mxu0
      %v7051 = vld [vmem:[%s2 + $0xb0] sm:$0xf]
      %v7052 = vld [vmem:[%s3 + $0xb0] sm:$0xff]
      %v7053 = vpack.c.bf16 %v6923, %v6923
      %v7054 = vpack.c.bf16 %v6925, %v6925
      %v7055 = vpack.c.bf16 %v6964, %v6964
      %v7056 = vpack.c.bf16 %v6966, %v6966
      %v7057 = vpack.c.bf16 %v7005, %v7005
      %v7058 = vpack.c.bf16 %v7007, %v7007
      %v7059 = vpack.c.bf16 %v7046, %v7046
      %7067 = vrot.lane.b32.xlu0 %v7053, 29
      %v7068 = vpop.permute.xlu0 %7067
      %7069 = vrot.lane.b32.xlu0 %v7054, 29
      %v7070 = vpop.permute.xlu0 %7069
      %7071 = vrot.lane.b32.xlu0 %v7055, 29
      %v7072 = vpop.permute.xlu0 %7071
      %7073 = vrot.lane.b32.xlu0 %v7056, 29
      %v7074 = vpop.permute.xlu0 %7073
      %7075 = vrot.lane.b32.xlu0 %v7057, 29
      %v7076 = vpop.permute.xlu0 %7075
      %7077 = vrot.lane.b32.xlu0 %v7058, 29
      %v7078 = vpop.permute.xlu0 %7077
      %7079 = vrot.lane.b32.xlu0 %v7059, 29
      %v7080 = vpop.permute.xlu0 %7079
      %v7081 = vsel %vm688, %v7068, %v7070
      %v7082 = vsel %vm688, %v7070, %v7072
      %v7083 = vsel %vm688, %v7072, %v7074
      %v7084 = vsel %vm688, %v7074, %v7076
      %v7085 = vsel %vm688, %v7076, %v7078
      %v7086 = vsel %vm688, %v7078, %v7080
      %v7093 = vsel %vm700, 0, %v7068
      %v7096 = vsel %vm705, %v7086, 0
      %v7098 = vmul.bf16 %v7093, %v733
      %v7099 = vmul.bf16 %v7081, %v740
      %v7100 = vmul.bf16 %v7082, %v747
      %v7101 = vmul.bf16 %v7083, %v754
      %v7102 = vmul.bf16 %v7084, %v761
      %v7103 = vmul.bf16 %v7085, %v768
      %v7104 = vmul.bf16 %v7096, %v775
      %v7105 = vmul.bf16 %v7093, %v840
      %v7106 = vmul.bf16 %v7081, %v854
      %v7107 = vmul.bf16 %v7082, %v855
      %v7108 = vmul.bf16 %v7083, %v856
      %v7109 = vmul.bf16 %v7084, %v857
      %v7110 = vmul.bf16 %v7085, %v858
      %v7111 = vmul.bf16 %v7096, %v859
      %v7112 = vmul.bf16 %v7093, %v882
      %v7113 = vmul.bf16 %v7081, %v896
      %v7114 = vmul.bf16 %v7082, %v897
      %v7115 = vmul.bf16 %v7083, %v898
      %v7116 = vmul.bf16 %v7084, %v899
      %v7117 = vmul.bf16 %v7085, %v900
      %v7118 = vmul.bf16 %v7096, %v901
      %v7119 = vmul.bf16 %v7093, %v917
      %v7120 = vmul.bf16 %v7081, %v931
      %v7121 = vmul.bf16 %v7082, %v932
      %v7122 = vmul.bf16 %v7083, %v933
      %v7123 = vmul.bf16 %v7084, %v934
      %v7124 = vmul.bf16 %v7085, %v935
      %v7125 = vmul.bf16 %v7096, %v936
      %v7126 = vmul.bf16 %v7093, %v952
      %v7127 = vmul.bf16 %v7081, %v966
      %v7128 = vmul.bf16 %v7082, %v967
      %v7129 = vmul.bf16 %v7083, %v968
      %v7130 = vmul.bf16 %v7084, %v969
      %v7131 = vmul.bf16 %v7085, %v970
      %v7132 = vmul.bf16 %v7096, %v971
      %v7133 = vmul.bf16 %v7093, %v987
      %v7134 = vmul.bf16 %v7081, %v1001
      %v7135 = vmul.bf16 %v7082, %v1002
      %v7136 = vmul.bf16 %v7083, %v1003
      %v7137 = vmul.bf16 %v7084, %v1004
      %v7138 = vmul.bf16 %v7085, %v1005
      %v7139 = vmul.bf16 %v7096, %v1006
      %v7142 = vrot.slane %v7093, 4
      %v7143 = vrot.slane %v7081, 4
      %v7144 = vrot.slane %v7082, 4
      %v7145 = vrot.slane %v7083, 4
      %v7146 = vrot.slane %v7084, 4
      %v7147 = vrot.slane %v7085, 4
      %v7148 = vrot.slane %v7096, 4
      %7149 = vrot.lane.b32.xlu0 %v7142, 127
      %v7150 = vpop.permute.xlu0 %7149
      %7151 = vrot.lane.b32.xlu0 %v7143, 127
      %v7152 = vpop.permute.xlu0 %7151
      %7153 = vrot.lane.b32.xlu0 %v7144, 127
      %v7154 = vpop.permute.xlu0 %7153
      %7155 = vrot.lane.b32.xlu0 %v7145, 127
      %v7156 = vpop.permute.xlu0 %7155
      %7157 = vrot.lane.b32.xlu0 %v7146, 127
      %v7158 = vpop.permute.xlu0 %7157
      %7159 = vrot.lane.b32.xlu0 %v7147, 127
      %v7160 = vpop.permute.xlu0 %7159
      %7161 = vrot.lane.b32.xlu0 %v7148, 127
      %v7162 = vpop.permute.xlu0 %7161
      %v7163 = vsel %vm1044, %v7150, %v7152
      %v7164 = vsel %vm1044, %v7152, %v7154
      %v7165 = vsel %vm1044, %v7154, %v7156
      %v7166 = vsel %vm1044, %v7156, %v7158
      %v7167 = vsel %vm1044, %v7158, %v7160
      %v7168 = vsel %vm1044, %v7160, %v7162
      %7176 = vrot.lane.b32.xlu0 %v7105, 126
      %v7177 = vpop.permute.xlu0 %7176
      %7178 = vrot.lane.b32.xlu0 %v7106, 126
      %v7179 = vpop.permute.xlu0 %7178
      %7180 = vrot.lane.b32.xlu0 %v7107, 126
      %v7181 = vpop.permute.xlu0 %7180
      %7182 = vrot.lane.b32.xlu0 %v7108, 126
      %v7183 = vpop.permute.xlu0 %7182
      %7184 = vrot.lane.b32.xlu0 %v7109, 126
      %v7185 = vpop.permute.xlu0 %7184
      %7186 = vrot.lane.b32.xlu0 %v7110, 126
      %v7187 = vpop.permute.xlu0 %7186
      %7188 = vrot.lane.b32.xlu0 %v7111, 126
      %v7189 = vpop.permute.xlu0 %7188
      %v7190 = vsel %vm1079, %v7177, %v7179
      %v7191 = vsel %vm1079, %v7179, %v7181
      %v7192 = vsel %vm1079, %v7181, %v7183
      %v7193 = vsel %vm1079, %v7183, %v7185
      %v7194 = vsel %vm1079, %v7185, %v7187
      %v7195 = vsel %vm1079, %v7187, %v7189
      %v7203 = vrot.slane %v7112, 4
      %v7204 = vrot.slane %v7113, 4
      %v7205 = vrot.slane %v7114, 4
      %v7206 = vrot.slane %v7115, 4
      %v7207 = vrot.slane %v7116, 4
      %v7208 = vrot.slane %v7117, 4
      %v7209 = vrot.slane %v7118, 4
      %7210 = vrot.lane.b32.xlu0 %v7203, 100
      %v7211 = vpop.permute.xlu0 %7210
      %7212 = vrot.lane.b32.xlu0 %v7204, 100
      %v7213 = vpop.permute.xlu0 %7212
      %7214 = vrot.lane.b32.xlu0 %v7205, 100
      %v7215 = vpop.permute.xlu0 %7214
      %7216 = vrot.lane.b32.xlu0 %v7206, 100
      %v7217 = vpop.permute.xlu0 %7216
      %7218 = vrot.lane.b32.xlu0 %v7207, 100
      %v7219 = vpop.permute.xlu0 %7218
      %7220 = vrot.lane.b32.xlu0 %v7208, 100
      %v7221 = vpop.permute.xlu0 %7220
      %7222 = vrot.lane.b32.xlu0 %v7209, 100
      %v7223 = vpop.permute.xlu0 %7222
      %v7224 = vsel %vm1114, %v7211, %v7213
      %v7225 = vsel %vm1114, %v7213, %v7215
      %v7226 = vsel %vm1114, %v7215, %v7217
      %v7227 = vsel %vm1114, %v7217, %v7219
      %v7228 = vsel %vm1114, %v7219, %v7221
      %v7229 = vsel %vm1114, %v7221, %v7223
      %7230 = vrot.lane.b32.xlu0 %v7093, 99
      %v7231 = vpop.permute.xlu0 %7230
      %7232 = vrot.lane.b32.xlu0 %v7081, 99
      %v7233 = vpop.permute.xlu0 %7232
      %7234 = vrot.lane.b32.xlu0 %v7082, 99
      %v7235 = vpop.permute.xlu0 %7234
      %7236 = vrot.lane.b32.xlu0 %v7083, 99
      %v7237 = vpop.permute.xlu0 %7236
      %7238 = vrot.lane.b32.xlu0 %v7084, 99
      %v7239 = vpop.permute.xlu0 %7238
      %7240 = vrot.lane.b32.xlu0 %v7085, 99
      %v7241 = vpop.permute.xlu0 %7240
      %7242 = vrot.lane.b32.xlu0 %v7096, 99
      %v7243 = vpop.permute.xlu0 %7242
      %v7244 = vsel %vm1135, %v7231, %v7233
      %v7245 = vsel %vm1135, %v7233, %v7235
      %v7246 = vsel %vm1135, %v7235, %v7237
      %v7247 = vsel %vm1135, %v7237, %v7239
      %v7248 = vsel %vm1135, %v7239, %v7241
      %v7249 = vsel %vm1135, %v7241, %v7243
      %v7257 = vrot.slane %v7119, 4
      %v7258 = vrot.slane %v7120, 4
      %v7259 = vrot.slane %v7121, 4
      %v7260 = vrot.slane %v7122, 4
      %v7261 = vrot.slane %v7123, 4
      %v7262 = vrot.slane %v7124, 4
      %v7263 = vrot.slane %v7125, 4
      %7264 = vrot.lane.b32.xlu0 %v7257, 98
      %v7265 = vpop.permute.xlu0 %7264
      %7266 = vrot.lane.b32.xlu0 %v7258, 98
      %v7267 = vpop.permute.xlu0 %7266
      %7268 = vrot.lane.b32.xlu0 %v7259, 98
      %v7269 = vpop.permute.xlu0 %7268
      %7270 = vrot.lane.b32.xlu0 %v7260, 98
      %v7271 = vpop.permute.xlu0 %7270
      %7272 = vrot.lane.b32.xlu0 %v7261, 98
      %v7273 = vpop.permute.xlu0 %7272
      %7274 = vrot.lane.b32.xlu0 %v7262, 98
      %v7275 = vpop.permute.xlu0 %7274
      %7276 = vrot.lane.b32.xlu0 %v7263, 98
      %v7277 = vpop.permute.xlu0 %7276
      %v7278 = vsel %vm1170, %v7265, %v7267
      %v7279 = vsel %vm1170, %v7267, %v7269
      %v7280 = vsel %vm1170, %v7269, %v7271
      %v7281 = vsel %vm1170, %v7271, %v7273
      %v7282 = vsel %vm1170, %v7273, %v7275
      %v7283 = vsel %vm1170, %v7275, %v7277
      %7291 = vrot.lane.b32.xlu0 %v7126, 72
      %v7292 = vpop.permute.xlu0 %7291
      %7293 = vrot.lane.b32.xlu0 %v7127, 72
      %v7294 = vpop.permute.xlu0 %7293
      %7295 = vrot.lane.b32.xlu0 %v7128, 72
      %v7296 = vpop.permute.xlu0 %7295
      %7297 = vrot.lane.b32.xlu0 %v7129, 72
      %v7298 = vpop.permute.xlu0 %7297
      %7299 = vrot.lane.b32.xlu0 %v7130, 72
      %v7300 = vpop.permute.xlu0 %7299
      %7301 = vrot.lane.b32.xlu0 %v7131, 72
      %v7302 = vpop.permute.xlu0 %7301
      %7303 = vrot.lane.b32.xlu0 %v7132, 72
      %v7304 = vpop.permute.xlu0 %7303
      %v7305 = vsel %vm1205, %v7292, %v7294
      %v7306 = vsel %vm1205, %v7294, %v7296
      %v7307 = vsel %vm1205, %v7296, %v7298
      %v7308 = vsel %vm1205, %v7298, %v7300
      %v7309 = vsel %vm1205, %v7300, %v7302
      %v7310 = vsel %vm1205, %v7302, %v7304
      %7311 = vrot.lane.b32.xlu0 %v7142, 71
      %v7312 = vpop.permute.xlu0 %7311
      %7313 = vrot.lane.b32.xlu0 %v7143, 71
      %v7314 = vpop.permute.xlu0 %7313
      %7315 = vrot.lane.b32.xlu0 %v7144, 71
      %v7316 = vpop.permute.xlu0 %7315
      %7317 = vrot.lane.b32.xlu0 %v7145, 71
      %v7318 = vpop.permute.xlu0 %7317
      %7319 = vrot.lane.b32.xlu0 %v7146, 71
      %v7320 = vpop.permute.xlu0 %7319
      %7321 = vrot.lane.b32.xlu0 %v7147, 71
      %v7322 = vpop.permute.xlu0 %7321
      %7323 = vrot.lane.b32.xlu0 %v7148, 71
      %v7324 = vpop.permute.xlu0 %7323
      %v7325 = vsel %vm1233, %v7312, %v7314
      %v7326 = vsel %vm1233, %v7314, %v7316
      %v7327 = vsel %vm1233, %v7316, %v7318
      %v7328 = vsel %vm1233, %v7318, %v7320
      %v7329 = vsel %vm1233, %v7320, %v7322
      %v7330 = vsel %vm1233, %v7322, %v7324
      %7338 = vrot.lane.b32.xlu0 %v7133, 70
      %v7339 = vpop.permute.xlu0 %7338
      %7340 = vrot.lane.b32.xlu0 %v7134, 70
      %v7341 = vpop.permute.xlu0 %7340
      %7342 = vrot.lane.b32.xlu0 %v7135, 70
      %v7343 = vpop.permute.xlu0 %7342
      %7344 = vrot.lane.b32.xlu0 %v7136, 70
      %v7345 = vpop.permute.xlu0 %7344
      %7346 = vrot.lane.b32.xlu0 %v7137, 70
      %v7347 = vpop.permute.xlu0 %7346
      %7348 = vrot.lane.b32.xlu0 %v7138, 70
      %v7349 = vpop.permute.xlu0 %7348
      %7350 = vrot.lane.b32.xlu0 %v7139, 70
      %v7351 = vpop.permute.xlu0 %7350
      %v7352 = vsel %vm1261, %v7339, %v7341
      %v7353 = vsel %vm1261, %v7341, %v7343
      %v7354 = vsel %vm1261, %v7343, %v7345
      %v7355 = vsel %vm1261, %v7345, %v7347
      %v7356 = vsel %vm1261, %v7347, %v7349
      %v7357 = vsel %vm1261, %v7349, %v7351
      %v7360 = vsel %vm1290, %v7098, %v7163
      %v7364 = vsel %vm1290, %v7099, %v7164
      %v7368 = vsel %vm1290, %v7100, %v7165
      %v7372 = vsel %vm1290, %v7101, %v7166
      %v7376 = vsel %vm1290, %v7102, %v7167
      %v7380 = vsel %vm1290, %v7103, %v7168
      %v7384 = vsel %vm1290, %v7104, %v7162
      %v7388 = vsel %vm1290, %v7190, %v7224
      %v7392 = vsel %vm1290, %v7191, %v7225
      %v7396 = vsel %vm1290, %v7192, %v7226
      %v7400 = vsel %vm1290, %v7193, %v7227
      %v7404 = vsel %vm1290, %v7194, %v7228
      %v7408 = vsel %vm1290, %v7195, %v7229
      %v7412 = vsel %vm1290, %v7189, %v7223
      %v7416 = vsel %vm1290, %v7244, %v7278
      %v7420 = vsel %vm1290, %v7245, %v7279
      %v7424 = vsel %vm1290, %v7246, %v7280
      %v7428 = vsel %vm1290, %v7247, %v7281
      %v7432 = vsel %vm1290, %v7248, %v7282
      %v7436 = vsel %vm1290, %v7249, %v7283
      %v7440 = vsel %vm1290, %v7243, %v7277
      %v7444 = vsel %vm1290, %v7305, %v7325
      %v7448 = vsel %vm1290, %v7306, %v7326
      %v7452 = vsel %vm1290, %v7307, %v7327
      %v7456 = vsel %vm1290, %v7308, %v7328
      %v7460 = vsel %vm1290, %v7309, %v7329
      %v7464 = vsel %vm1290, %v7310, %v7330
      %v7468 = vsel %vm1290, %v7304, %v7324
      %7471 = vset.pattern.permute.xlu0 0
      %7472 = vperm.xlu0 %7471, %v7052
      %v7473 = vpop.permute.xlu0 %7472
      %v7476 = vsel %vm5777, %v7051, 0
      %v7479 = vsel %vm1290, %v7352, 0
      %v7482 = vsel %vm1290, %v7353, 0
      %v7485 = vsel %vm1290, %v7354, 0
      %v7488 = vsel %vm1290, %v7355, 0
      %v7491 = vsel %vm1290, %v7356, 0
      %v7494 = vsel %vm1290, %v7357, 0
      %v7497 = vsel %vm1290, %v7351, 0
      %7499 = vmatprep.subr.bf16.mxu0 %v7364
      %7500 = vmatpush1.bf16.msra.mxu0 %v7360
      %7501 = vmatprep.subr.bf16.mxu0 %v7392
      %7502 = vmatpush1.bf16.msra.mxu0 %v7388
      %7503 = vmatprep.subr.bf16.mxu0 %v7420
      %7504 = vmatpush1.bf16.msra.mxu0 %v7416
      %7505 = vmatprep.subr.bf16.mxu0 %v7448
      %7506 = vmatpush1.bf16.msra.mxu0 %v7444
      %7507 = vmatprep.subr.bf16.mxu0 %v7482
      %7508 = vmatpush1.bf16.msra.mxu0 %v7479
      %7509 = vmatprep.subr.bf16.mxu0 0
      %7510 = vmatpush1.bf16.msra.mxu0 0
      %7511 = vmatprep.subr.bf16.mxu0 0
      %7512 = vmatpush1.bf16.msra.mxu0 0
      %7513 = vmatprep.subr.bf16.mxu0 0
      %7514 = vmatpush1.bf16.msra.mxu0 0
      %7515 = vmatprep.subr.bf16.mxu0 0
      %7516 = vmatpush1.bf16.msra.mxu0 0
      %7517 = vmatprep.subr.bf16.mxu0 0
      %7518 = vmatpush1.bf16.msra.mxu0 0
      %7519 = vmatprep.subr.bf16.mxu0 0
      %7520 = vmatpush1.bf16.msra.mxu0 0
      %7521 = vmatprep.subr.bf16.mxu0 0
      %7522 = vmatpush1.bf16.msra.mxu0 0
      %7523 = vmatprep.subr.bf16.mxu0 0
      %7524 = vmatpush1.bf16.msra.mxu0 0
      %7525 = vmatprep.subr.bf16.mxu0 0
      %7526 = vmatpush1.bf16.msra.mxu0 0
      %7527 = vmatprep.subr.bf16.mxu0 0
      %7528 = vmatpush1.bf16.msra.mxu0 0
      %7529 = vmatprep.subr.bf16.mxu0 0
      %7530 = vmatpush1.bf16.msra.mxu0 0
      %7531 = vmatprep.mubr.bf16.mxu0 0
      %7532 = vmatmul.mubr.bf16.gmra.mrb[0].mxu0 %v7476
      %v7533 = vpop.f32.mrb[0].mxu0
      %v7534 = vadd.f32 %v7473, %v7533
      %v7535 = vpop.f32.mrb[0].mxu0
      %v7536 = vadd.f32 %v7473, %v7535
      %v7537 = vpop.f32.mrb[0].mxu0
      %v7538 = vpop.f32.mrb[0].mxu0
      %7539 = vdwg.mxu0
      %7540 = vmatprep.subr.bf16.mxu0 %v7372
      %7541 = vmatpush1.bf16.msra.mxu0 %v7368
      %7542 = vmatprep.subr.bf16.mxu0 %v7400
      %7543 = vmatpush1.bf16.msra.mxu0 %v7396
      %7544 = vmatprep.subr.bf16.mxu0 %v7428
      %7545 = vmatpush1.bf16.msra.mxu0 %v7424
      %7546 = vmatprep.subr.bf16.mxu0 %v7456
      %7547 = vmatpush1.bf16.msra.mxu0 %v7452
      %7548 = vmatprep.subr.bf16.mxu0 %v7488
      %7549 = vmatpush1.bf16.msra.mxu0 %v7485
      %7550 = vmatprep.subr.bf16.mxu0 0
      %7551 = vmatpush1.bf16.msra.mxu0 0
      %7552 = vmatprep.subr.bf16.mxu0 0
      %7553 = vmatpush1.bf16.msra.mxu0 0
      %7554 = vmatprep.subr.bf16.mxu0 0
      %7555 = vmatpush1.bf16.msra.mxu0 0
      %7556 = vmatprep.subr.bf16.mxu0 0
      %7557 = vmatpush1.bf16.msra.mxu0 0
      %7558 = vmatprep.subr.bf16.mxu0 0
      %7559 = vmatpush1.bf16.msra.mxu0 0
      %7560 = vmatprep.subr.bf16.mxu0 0
      %7561 = vmatpush1.bf16.msra.mxu0 0
      %7562 = vmatprep.subr.bf16.mxu0 0
      %7563 = vmatpush1.bf16.msra.mxu0 0
      %7564 = vmatprep.subr.bf16.mxu0 0
      %7565 = vmatpush1.bf16.msra.mxu0 0
      %7566 = vmatprep.subr.bf16.mxu0 0
      %7567 = vmatpush1.bf16.msra.mxu0 0
      %7568 = vmatprep.subr.bf16.mxu0 0
      %7569 = vmatpush1.bf16.msra.mxu0 0
      %7570 = vmatprep.subr.bf16.mxu0 0
      %7571 = vmatpush1.bf16.msra.mxu0 0
      %7572 = vmatprep.mubr.bf16.mxu0 0
      %7573 = vmatmul.mubr.bf16.gmra.mrb[0].mxu0 %v7476
      %v7574 = vpop.f32.mrb[0].mxu0
      %v7575 = vadd.f32 %v7473, %v7574
      %v7576 = vpop.f32.mrb[0].mxu0
      %v7577 = vadd.f32 %v7473, %v7576
      %v7578 = vpop.f32.mrb[0].mxu0
      %v7579 = vpop.f32.mrb[0].mxu0
      %7580 = vdwg.mxu0
      %7581 = vmatprep.subr.bf16.mxu0 %v7380
      %7582 = vmatpush1.bf16.msra.mxu0 %v7376
      %7583 = vmatprep.subr.bf16.mxu0 %v7408
      %7584 = vmatpush1.bf16.msra.mxu0 %v7404
      %7585 = vmatprep.subr.bf16.mxu0 %v7436
      %7586 = vmatpush1.bf16.msra.mxu0 %v7432
      %7587 = vmatprep.subr.bf16.mxu0 %v7464
      %7588 = vmatpush1.bf16.msra.mxu0 %v7460
      %7589 = vmatprep.subr.bf16.mxu0 %v7494
      %7590 = vmatpush1.bf16.msra.mxu0 %v7491
      %7591 = vmatprep.subr.bf16.mxu0 0
      %7592 = vmatpush1.bf16.msra.mxu0 0
      %7593 = vmatprep.subr.bf16.mxu0 0
      %7594 = vmatpush1.bf16.msra.mxu0 0
      %7595 = vmatprep.subr.bf16.mxu0 0
      %7596 = vmatpush1.bf16.msra.mxu0 0
      %7597 = vmatprep.subr.bf16.mxu0 0
      %7598 = vmatpush1.bf16.msra.mxu0 0
      %7599 = vmatprep.subr.bf16.mxu0 0
      %7600 = vmatpush1.bf16.msra.mxu0 0
      %7601 = vmatprep.subr.bf16.mxu0 0
      %7602 = vmatpush1.bf16.msra.mxu0 0
      %7603 = vmatprep.subr.bf16.mxu0 0
      %7604 = vmatpush1.bf16.msra.mxu0 0
      %7605 = vmatprep.subr.bf16.mxu0 0
      %7606 = vmatpush1.bf16.msra.mxu0 0
      %7607 = vmatprep.subr.bf16.mxu0 0
      %7608 = vmatpush1.bf16.msra.mxu0 0
      %7609 = vmatprep.subr.bf16.mxu0 0
      %7610 = vmatpush1.bf16.msra.mxu0 0
      %7611 = vmatprep.subr.bf16.mxu0 0
      %7612 = vmatpush1.bf16.msra.mxu0 0
      %7613 = vmatprep.mubr.bf16.mxu0 0
      %7614 = vmatmul.mubr.bf16.gmra.mrb[0].mxu0 %v7476
      %v7615 = vpop.f32.mrb[0].mxu0
      %v7616 = vadd.f32 %v7473, %v7615
      %v7617 = vpop.f32.mrb[0].mxu0
      %v7618 = vadd.f32 %v7473, %v7617
      %v7619 = vpop.f32.mrb[0].mxu0
      %v7620 = vpop.f32.mrb[0].mxu0
      %7621 = vdwg.mxu0
      %7622 = vmatprep.subr.bf16.mxu0 0
      %7623 = vmatpush1.bf16.msra.mxu0 %v7384
      %7624 = vmatprep.subr.bf16.mxu0 0
      %7625 = vmatpush1.bf16.msra.mxu0 %v7412
      %7626 = vmatprep.subr.bf16.mxu0 0
      %7627 = vmatpush1.bf16.msra.mxu0 %v7440
      %7628 = vmatprep.subr.bf16.mxu0 0
      %7629 = vmatpush1.bf16.msra.mxu0 %v7468
      %7630 = vmatprep.subr.bf16.mxu0 0
      %7631 = vmatpush1.bf16.msra.mxu0 %v7497
      %7632 = vmatprep.subr.bf16.mxu0 0
      %7633 = vmatpush1.bf16.msra.mxu0 0
      %7634 = vmatprep.subr.bf16.mxu0 0
      %7635 = vmatpush1.bf16.msra.mxu0 0
      %7636 = vmatprep.subr.bf16.mxu0 0
      %7637 = vmatpush1.bf16.msra.mxu0 0
      %7638 = vmatprep.subr.bf16.mxu0 0
      %7639 = vmatpush1.bf16.msra.mxu0 0
      %7640 = vmatprep.subr.bf16.mxu0 0
      %7641 = vmatpush1.bf16.msra.mxu0 0
      %7642 = vmatprep.subr.bf16.mxu0 0
      %7643 = vmatpush1.bf16.msra.mxu0 0
      %7644 = vmatprep.subr.bf16.mxu0 0
      %7645 = vmatpush1.bf16.msra.mxu0 0
      %7646 = vmatprep.subr.bf16.mxu0 0
      %7647 = vmatpush1.bf16.msra.mxu0 0
      %7648 = vmatprep.subr.bf16.mxu0 0
      %7649 = vmatpush1.bf16.msra.mxu0 0
      %7650 = vmatprep.subr.bf16.mxu0 0
      %7651 = vmatpush1.bf16.msra.mxu0 0
      %7652 = vmatprep.subr.bf16.mxu0 0
      %7653 = vmatpush1.bf16.msra.mxu0 0
      %7654 = vmatprep.mubr.bf16.mxu0 0
      %7655 = vmatmul.mubr.bf16.gmra.mrb[0].mxu0 %v7476
      %v7656 = vpop.f32.mrb[0].mxu0
      %v7657 = vadd.f32 %v7473, %v7656
      %v7658 = vpop.f32.mrb[0].mxu0
      %v7659 = vpop.f32.mrb[0].mxu0
      %v7660 = vpop.f32.mrb[0].mxu0
      %7661 = vdwg.mxu0
      %vm7662 = vcmp.gt.f32.partialorder %v7534, 0.0
      %vm7663 = vcmp.gt.f32.partialorder %v7536, 0.0
      %vm7664 = vcmp.gt.f32.partialorder %v7575, 0.0
      %vm7665 = vcmp.gt.f32.partialorder %v7577, 0.0
      %vm7666 = vcmp.gt.f32.partialorder %v7616, 0.0
      %vm7667 = vcmp.gt.f32.partialorder %v7618, 0.0
      %vm7668 = vcmp.gt.f32.partialorder %v7657, 0.0
      %v7669 = vmul.f32 %v7534, 0.01
      %v7670 = vmul.f32 %v7536, 0.01
      %v7671 = vmul.f32 %v7575, 0.01
      %v7672 = vmul.f32 %v7577, 0.01
      %v7673 = vmul.f32 %v7616, 0.01
      %v7674 = vmul.f32 %v7618, 0.01
      %v7675 = vmul.f32 %v7657, 0.01
      %v7676 = vsel %vm7662, %v7534, %v7669
      %v7677 = vsel %vm7663, %v7536, %v7670
      %v7678 = vsel %vm7664, %v7575, %v7671
      %v7679 = vsel %vm7665, %v7577, %v7672
      %v7680 = vsel %vm7666, %v7616, %v7673
      %v7681 = vsel %vm7667, %v7618, %v7674
      %v7682 = vsel %vm7668, %v7657, %v7675
      %v7683 = vld [vmem:[%s2 + $0xc0] sm:$0xf]
      %v7684 = vld [vmem:[%s3 + $0xc0] sm:$0xff]
      %v7685 = vpack.c.bf16 %v7676, %v7676
      %v7686 = vpack.c.bf16 %v7677, %v7677
      %v7687 = vpack.c.bf16 %v7678, %v7678
      %v7688 = vpack.c.bf16 %v7679, %v7679
      %v7689 = vpack.c.bf16 %v7680, %v7680
      %v7690 = vpack.c.bf16 %v7681, %v7681
      %v7691 = vpack.c.bf16 %v7682, %v7682
      %7699 = vrot.lane.b32.xlu0 %v7685, 29
      %v7700 = vpop.permute.xlu0 %7699
      %7701 = vrot.lane.b32.xlu0 %v7686, 29
      %v7702 = vpop.permute.xlu0 %7701
      %7703 = vrot.lane.b32.xlu0 %v7687, 29
      %v7704 = vpop.permute.xlu0 %7703
      %7705 = vrot.lane.b32.xlu0 %v7688, 29
      %v7706 = vpop.permute.xlu0 %7705
      %7707 = vrot.lane.b32.xlu0 %v7689, 29
      %v7708 = vpop.permute.xlu0 %7707
      %7709 = vrot.lane.b32.xlu0 %v7690, 29
      %v7710 = vpop.permute.xlu0 %7709
      %7711 = vrot.lane.b32.xlu0 %v7691, 29
      %v7712 = vpop.permute.xlu0 %7711
      %v7713 = vsel %vm688, %v7700, %v7702
      %v7714 = vsel %vm688, %v7702, %v7704
      %v7715 = vsel %vm688, %v7704, %v7706
      %v7716 = vsel %vm688, %v7706, %v7708
      %v7717 = vsel %vm688, %v7708, %v7710
      %v7718 = vsel %vm688, %v7710, %v7712
      %v7725 = vsel %vm700, 0, %v7700
      %v7728 = vsel %vm705, %v7718, 0
      %v7730 = vmul.bf16 %v7725, %v733
      %v7731 = vmul.bf16 %v7713, %v740
      %v7732 = vmul.bf16 %v7714, %v747
      %v7733 = vmul.bf16 %v7715, %v754
      %v7734 = vmul.bf16 %v7716, %v761
      %v7735 = vmul.bf16 %v7717, %v768
      %v7736 = vmul.bf16 %v7728, %v775
      %v7737 = vmul.bf16 %v7725, %v840
      %v7738 = vmul.bf16 %v7713, %v854
      %v7739 = vmul.bf16 %v7714, %v855
      %v7740 = vmul.bf16 %v7715, %v856
      %v7741 = vmul.bf16 %v7716, %v857
      %v7742 = vmul.bf16 %v7717, %v858
      %v7743 = vmul.bf16 %v7728, %v859
      %v7744 = vmul.bf16 %v7725, %v882
      %v7745 = vmul.bf16 %v7713, %v896
      %v7746 = vmul.bf16 %v7714, %v897
      %v7747 = vmul.bf16 %v7715, %v898
      %v7748 = vmul.bf16 %v7716, %v899
      %v7749 = vmul.bf16 %v7717, %v900
      %v7750 = vmul.bf16 %v7728, %v901
      %v7751 = vmul.bf16 %v7725, %v917
      %v7752 = vmul.bf16 %v7713, %v931
      %v7753 = vmul.bf16 %v7714, %v932
      %v7754 = vmul.bf16 %v7715, %v933
      %v7755 = vmul.bf16 %v7716, %v934
      %v7756 = vmul.bf16 %v7717, %v935
      %v7757 = vmul.bf16 %v7728, %v936
      %v7758 = vmul.bf16 %v7725, %v952
      %v7759 = vmul.bf16 %v7713, %v966
      %v7760 = vmul.bf16 %v7714, %v967
      %v7761 = vmul.bf16 %v7715, %v968
      %v7762 = vmul.bf16 %v7716, %v969
      %v7763 = vmul.bf16 %v7717, %v970
      %v7764 = vmul.bf16 %v7728, %v971
      %v7765 = vmul.bf16 %v7725, %v987
      %v7766 = vmul.bf16 %v7713, %v1001
      %v7767 = vmul.bf16 %v7714, %v1002
      %v7768 = vmul.bf16 %v7715, %v1003
      %v7769 = vmul.bf16 %v7716, %v1004
      %v7770 = vmul.bf16 %v7717, %v1005
      %v7771 = vmul.bf16 %v7728, %v1006
      %v7774 = vrot.slane %v7725, 4
      %v7775 = vrot.slane %v7713, 4
      %v7776 = vrot.slane %v7714, 4
      %v7777 = vrot.slane %v7715, 4
      %v7778 = vrot.slane %v7716, 4
      %v7779 = vrot.slane %v7717, 4
      %v7780 = vrot.slane %v7728, 4
      %7781 = vrot.lane.b32.xlu0 %v7774, 127
      %v7782 = vpop.permute.xlu0 %7781
      %7783 = vrot.lane.b32.xlu0 %v7775, 127
      %v7784 = vpop.permute.xlu0 %7783
      %7785 = vrot.lane.b32.xlu0 %v7776, 127
      %v7786 = vpop.permute.xlu0 %7785
      %7787 = vrot.lane.b32.xlu0 %v7777, 127
      %v7788 = vpop.permute.xlu0 %7787
      %7789 = vrot.lane.b32.xlu0 %v7778, 127
      %v7790 = vpop.permute.xlu0 %7789
      %7791 = vrot.lane.b32.xlu0 %v7779, 127
      %v7792 = vpop.permute.xlu0 %7791
      %7793 = vrot.lane.b32.xlu0 %v7780, 127
      %v7794 = vpop.permute.xlu0 %7793
      %v7795 = vsel %vm1044, %v7782, %v7784
      %v7796 = vsel %vm1044, %v7784, %v7786
      %v7797 = vsel %vm1044, %v7786, %v7788
      %v7798 = vsel %vm1044, %v7788, %v7790
      %v7799 = vsel %vm1044, %v7790, %v7792
      %v7800 = vsel %vm1044, %v7792, %v7794
      %7808 = vrot.lane.b32.xlu0 %v7737, 126
      %v7809 = vpop.permute.xlu0 %7808
      %7810 = vrot.lane.b32.xlu0 %v7738, 126
      %v7811 = vpop.permute.xlu0 %7810
      %7812 = vrot.lane.b32.xlu0 %v7739, 126
      %v7813 = vpop.permute.xlu0 %7812
      %7814 = vrot.lane.b32.xlu0 %v7740, 126
      %v7815 = vpop.permute.xlu0 %7814
      %7816 = vrot.lane.b32.xlu0 %v7741, 126
      %v7817 = vpop.permute.xlu0 %7816
      %7818 = vrot.lane.b32.xlu0 %v7742, 126
      %v7819 = vpop.permute.xlu0 %7818
      %7820 = vrot.lane.b32.xlu0 %v7743, 126
      %v7821 = vpop.permute.xlu0 %7820
      %v7822 = vsel %vm1079, %v7809, %v7811
      %v7823 = vsel %vm1079, %v7811, %v7813
      %v7824 = vsel %vm1079, %v7813, %v7815
      %v7825 = vsel %vm1079, %v7815, %v7817
      %v7826 = vsel %vm1079, %v7817, %v7819
      %v7827 = vsel %vm1079, %v7819, %v7821
      %v7835 = vrot.slane %v7744, 4
      %v7836 = vrot.slane %v7745, 4
      %v7837 = vrot.slane %v7746, 4
      %v7838 = vrot.slane %v7747, 4
      %v7839 = vrot.slane %v7748, 4
      %v7840 = vrot.slane %v7749, 4
      %v7841 = vrot.slane %v7750, 4
      %7842 = vrot.lane.b32.xlu0 %v7835, 100
      %v7843 = vpop.permute.xlu0 %7842
      %7844 = vrot.lane.b32.xlu0 %v7836, 100
      %v7845 = vpop.permute.xlu0 %7844
      %7846 = vrot.lane.b32.xlu0 %v7837, 100
      %v7847 = vpop.permute.xlu0 %7846
      %7848 = vrot.lane.b32.xlu0 %v7838, 100
      %v7849 = vpop.permute.xlu0 %7848
      %7850 = vrot.lane.b32.xlu0 %v7839, 100
      %v7851 = vpop.permute.xlu0 %7850
      %7852 = vrot.lane.b32.xlu0 %v7840, 100
      %v7853 = vpop.permute.xlu0 %7852
      %7854 = vrot.lane.b32.xlu0 %v7841, 100
      %v7855 = vpop.permute.xlu0 %7854
      %v7856 = vsel %vm1114, %v7843, %v7845
      %v7857 = vsel %vm1114, %v7845, %v7847
      %v7858 = vsel %vm1114, %v7847, %v7849
      %v7859 = vsel %vm1114, %v7849, %v7851
      %v7860 = vsel %vm1114, %v7851, %v7853
      %v7861 = vsel %vm1114, %v7853, %v7855
      %7862 = vrot.lane.b32.xlu0 %v7725, 99
      %v7863 = vpop.permute.xlu0 %7862
      %7864 = vrot.lane.b32.xlu0 %v7713, 99
      %v7865 = vpop.permute.xlu0 %7864
      %7866 = vrot.lane.b32.xlu0 %v7714, 99
      %v7867 = vpop.permute.xlu0 %7866
      %7868 = vrot.lane.b32.xlu0 %v7715, 99
      %v7869 = vpop.permute.xlu0 %7868
      %7870 = vrot.lane.b32.xlu0 %v7716, 99
      %v7871 = vpop.permute.xlu0 %7870
      %7872 = vrot.lane.b32.xlu0 %v7717, 99
      %v7873 = vpop.permute.xlu0 %7872
      %7874 = vrot.lane.b32.xlu0 %v7728, 99
      %v7875 = vpop.permute.xlu0 %7874
      %v7876 = vsel %vm1135, %v7863, %v7865
      %v7877 = vsel %vm1135, %v7865, %v7867
      %v7878 = vsel %vm1135, %v7867, %v7869
      %v7879 = vsel %vm1135, %v7869, %v7871
      %v7880 = vsel %vm1135, %v7871, %v7873
      %v7881 = vsel %vm1135, %v7873, %v7875
      %v7889 = vrot.slane %v7751, 4
      %v7890 = vrot.slane %v7752, 4
      %v7891 = vrot.slane %v7753, 4
      %v7892 = vrot.slane %v7754, 4
      %v7893 = vrot.slane %v7755, 4
      %v7894 = vrot.slane %v7756, 4
      %v7895 = vrot.slane %v7757, 4
      %7896 = vrot.lane.b32.xlu0 %v7889, 98
      %v7897 = vpop.permute.xlu0 %7896
      %7898 = vrot.lane.b32.xlu0 %v7890, 98
      %v7899 = vpop.permute.xlu0 %7898
      %7900 = vrot.lane.b32.xlu0 %v7891, 98
      %v7901 = vpop.permute.xlu0 %7900
      %7902 = vrot.lane.b32.xlu0 %v7892, 98
      %v7903 = vpop.permute.xlu0 %7902
      %7904 = vrot.lane.b32.xlu0 %v7893, 98
      %v7905 = vpop.permute.xlu0 %7904
      %7906 = vrot.lane.b32.xlu0 %v7894, 98
      %v7907 = vpop.permute.xlu0 %7906
      %7908 = vrot.lane.b32.xlu0 %v7895, 98
      %v7909 = vpop.permute.xlu0 %7908
      %v7910 = vsel %vm1170, %v7897, %v7899
      %v7911 = vsel %vm1170, %v7899, %v7901
      %v7912 = vsel %vm1170, %v7901, %v7903
      %v7913 = vsel %vm1170, %v7903, %v7905
      %v7914 = vsel %vm1170, %v7905, %v7907
      %v7915 = vsel %vm1170, %v7907, %v7909
      %7923 = vrot.lane.b32.xlu0 %v7758, 72
      %v7924 = vpop.permute.xlu0 %7923
      %7925 = vrot.lane.b32.xlu0 %v7759, 72
      %v7926 = vpop.permute.xlu0 %7925
      %7927 = vrot.lane.b32.xlu0 %v7760, 72
      %v7928 = vpop.permute.xlu0 %7927
      %7929 = vrot.lane.b32.xlu0 %v7761, 72
      %v7930 = vpop.permute.xlu0 %7929
      %7931 = vrot.lane.b32.xlu0 %v7762, 72
      %v7932 = vpop.permute.xlu0 %7931
      %7933 = vrot.lane.b32.xlu0 %v7763, 72
      %v7934 = vpop.permute.xlu0 %7933
      %7935 = vrot.lane.b32.xlu0 %v7764, 72
      %v7936 = vpop.permute.xlu0 %7935
      %v7937 = vsel %vm1205, %v7924, %v7926
      %v7938 = vsel %vm1205, %v7926, %v7928
      %v7939 = vsel %vm1205, %v7928, %v7930
      %v7940 = vsel %vm1205, %v7930, %v7932
      %v7941 = vsel %vm1205, %v7932, %v7934
      %v7942 = vsel %vm1205, %v7934, %v7936
      %7943 = vrot.lane.b32.xlu0 %v7774, 71
      %v7944 = vpop.permute.xlu0 %7943
      %7945 = vrot.lane.b32.xlu0 %v7775, 71
      %v7946 = vpop.permute.xlu0 %7945
      %7947 = vrot.lane.b32.xlu0 %v7776, 71
      %v7948 = vpop.permute.xlu0 %7947
      %7949 = vrot.lane.b32.xlu0 %v7777, 71
      %v7950 = vpop.permute.xlu0 %7949
      %7951 = vrot.lane.b32.xlu0 %v7778, 71
      %v7952 = vpop.permute.xlu0 %7951
      %7953 = vrot.lane.b32.xlu0 %v7779, 71
      %v7954 = vpop.permute.xlu0 %7953
      %7955 = vrot.lane.b32.xlu0 %v7780, 71
      %v7956 = vpop.permute.xlu0 %7955
      %v7957 = vsel %vm1233, %v7944, %v7946
      %v7958 = vsel %vm1233, %v7946, %v7948
      %v7959 = vsel %vm1233, %v7948, %v7950
      %v7960 = vsel %vm1233, %v7950, %v7952
      %v7961 = vsel %vm1233, %v7952, %v7954
      %v7962 = vsel %vm1233, %v7954, %v7956
      %7970 = vrot.lane.b32.xlu0 %v7765, 70
      %v7971 = vpop.permute.xlu0 %7970
      %7972 = vrot.lane.b32.xlu0 %v7766, 70
      %v7973 = vpop.permute.xlu0 %7972
      %7974 = vrot.lane.b32.xlu0 %v7767, 70
      %v7975 = vpop.permute.xlu0 %7974
      %7976 = vrot.lane.b32.xlu0 %v7768, 70
      %v7977 = vpop.permute.xlu0 %7976
      %7978 = vrot.lane.b32.xlu0 %v7769, 70
      %v7979 = vpop.permute.xlu0 %7978
      %7980 = vrot.lane.b32.xlu0 %v7770, 70
      %v7981 = vpop.permute.xlu0 %7980
      %7982 = vrot.lane.b32.xlu0 %v7771, 70
      %v7983 = vpop.permute.xlu0 %7982
      %v7984 = vsel %vm1261, %v7971, %v7973
      %v7985 = vsel %vm1261, %v7973, %v7975
      %v7986 = vsel %vm1261, %v7975, %v7977
      %v7987 = vsel %vm1261, %v7977, %v7979
      %v7988 = vsel %vm1261, %v7979, %v7981
      %v7989 = vsel %vm1261, %v7981, %v7983
      %v7992 = vsel %vm1290, %v7730, %v7795
      %v7996 = vsel %vm1290, %v7731, %v7796
      %v8000 = vsel %vm1290, %v7732, %v7797
      %v8004 = vsel %vm1290, %v7733, %v7798
      %v8008 = vsel %vm1290, %v7734, %v7799
      %v8012 = vsel %vm1290, %v7735, %v7800
      %v8016 = vsel %vm1290, %v7736, %v7794
      %v8020 = vsel %vm1290, %v7822, %v7856
      %v8024 = vsel %vm1290, %v7823, %v7857
      %v8028 = vsel %vm1290, %v7824, %v7858
      %v8032 = vsel %vm1290, %v7825, %v7859
      %v8036 = vsel %vm1290, %v7826, %v7860
      %v8040 = vsel %vm1290, %v7827, %v7861
      %v8044 = vsel %vm1290, %v7821, %v7855
      %v8048 = vsel %vm1290, %v7876, %v7910
      %v8052 = vsel %vm1290, %v7877, %v7911
      %v8056 = vsel %vm1290, %v7878, %v7912
      %v8060 = vsel %vm1290, %v7879, %v7913
      %v8064 = vsel %vm1290, %v7880, %v7914
      %v8068 = vsel %vm1290, %v7881, %v7915
      %v8072 = vsel %vm1290, %v7875, %v7909
      %v8076 = vsel %vm1290, %v7937, %v7957
      %v8080 = vsel %vm1290, %v7938, %v7958
      %v8084 = vsel %vm1290, %v7939, %v7959
      %v8088 = vsel %vm1290, %v7940, %v7960
      %v8092 = vsel %vm1290, %v7941, %v7961
      %v8096 = vsel %vm1290, %v7942, %v7962
      %v8100 = vsel %vm1290, %v7936, %v7956
      %8103 = vset.pattern.permute.xlu0 0
      %8104 = vperm.xlu0 %8103, %v7684
      %v8105 = vpop.permute.xlu0 %8104
      %v8108 = vsel %vm5777, %v7683, 0
      %v8111 = vsel %vm1290, %v7984, 0
      %v8114 = vsel %vm1290, %v7985, 0
      %v8117 = vsel %vm1290, %v7986, 0
      %v8120 = vsel %vm1290, %v7987, 0
      %v8123 = vsel %vm1290, %v7988, 0
      %v8126 = vsel %vm1290, %v7989, 0
      %v8129 = vsel %vm1290, %v7983, 0
      %8131 = vmatprep.subr.bf16.mxu0 %v7996
      %8132 = vmatpush1.bf16.msra.mxu0 %v7992
      %8133 = vmatprep.subr.bf16.mxu0 %v8024
      %8134 = vmatpush1.bf16.msra.mxu0 %v8020
      %8135 = vmatprep.subr.bf16.mxu0 %v8052
      %8136 = vmatpush1.bf16.msra.mxu0 %v8048
      %8137 = vmatprep.subr.bf16.mxu0 %v8080
      %8138 = vmatpush1.bf16.msra.mxu0 %v8076
      %8139 = vmatprep.subr.bf16.mxu0 %v8114
      %8140 = vmatpush1.bf16.msra.mxu0 %v8111
      %8141 = vmatprep.subr.bf16.mxu0 0
      %8142 = vmatpush1.bf16.msra.mxu0 0
      %8143 = vmatprep.subr.bf16.mxu0 0
      %8144 = vmatpush1.bf16.msra.mxu0 0
      %8145 = vmatprep.subr.bf16.mxu0 0
      %8146 = vmatpush1.bf16.msra.mxu0 0
      %8147 = vmatprep.subr.bf16.mxu0 0
      %8148 = vmatpush1.bf16.msra.mxu0 0
      %8149 = vmatprep.subr.bf16.mxu0 0
      %8150 = vmatpush1.bf16.msra.mxu0 0
      %8151 = vmatprep.subr.bf16.mxu0 0
      %8152 = vmatpush1.bf16.msra.mxu0 0
      %8153 = vmatprep.subr.bf16.mxu0 0
      %8154 = vmatpush1.bf16.msra.mxu0 0
      %8155 = vmatprep.subr.bf16.mxu0 0
      %8156 = vmatpush1.bf16.msra.mxu0 0
      %8157 = vmatprep.subr.bf16.mxu0 0
      %8158 = vmatpush1.bf16.msra.mxu0 0
      %8159 = vmatprep.subr.bf16.mxu0 0
      %8160 = vmatpush1.bf16.msra.mxu0 0
      %8161 = vmatprep.subr.bf16.mxu0 0
      %8162 = vmatpush1.bf16.msra.mxu0 0
      %8163 = vmatprep.mubr.bf16.mxu0 0
      %8164 = vmatmul.mubr.bf16.gmra.mrb[0].mxu0 %v8108
      %v8165 = vpop.f32.mrb[0].mxu0
      %v8166 = vadd.f32 %v8105, %v8165
      %v8167 = vpop.f32.mrb[0].mxu0
      %v8168 = vadd.f32 %v8105, %v8167
      %v8169 = vpop.f32.mrb[0].mxu0
      %v8170 = vpop.f32.mrb[0].mxu0
      %8171 = vdwg.mxu0
      %8172 = vmatprep.subr.bf16.mxu0 %v8004
      %8173 = vmatpush1.bf16.msra.mxu0 %v8000
      %8174 = vmatprep.subr.bf16.mxu0 %v8032
      %8175 = vmatpush1.bf16.msra.mxu0 %v8028
      %8176 = vmatprep.subr.bf16.mxu0 %v8060
      %8177 = vmatpush1.bf16.msra.mxu0 %v8056
      %8178 = vmatprep.subr.bf16.mxu0 %v8088
      %8179 = vmatpush1.bf16.msra.mxu0 %v8084
      %8180 = vmatprep.subr.bf16.mxu0 %v8120
      %8181 = vmatpush1.bf16.msra.mxu0 %v8117
      %8182 = vmatprep.subr.bf16.mxu0 0
      %8183 = vmatpush1.bf16.msra.mxu0 0
      %8184 = vmatprep.subr.bf16.mxu0 0
      %8185 = vmatpush1.bf16.msra.mxu0 0
      %8186 = vmatprep.subr.bf16.mxu0 0
      %8187 = vmatpush1.bf16.msra.mxu0 0
      %8188 = vmatprep.subr.bf16.mxu0 0
      %8189 = vmatpush1.bf16.msra.mxu0 0
      %8190 = vmatprep.subr.bf16.mxu0 0
      %8191 = vmatpush1.bf16.msra.mxu0 0
      %8192 = vmatprep.subr.bf16.mxu0 0
      %8193 = vmatpush1.bf16.msra.mxu0 0
      %8194 = vmatprep.subr.bf16.mxu0 0
      %8195 = vmatpush1.bf16.msra.mxu0 0
      %8196 = vmatprep.subr.bf16.mxu0 0
      %8197 = vmatpush1.bf16.msra.mxu0 0
      %8198 = vmatprep.subr.bf16.mxu0 0
      %8199 = vmatpush1.bf16.msra.mxu0 0
      %8200 = vmatprep.subr.bf16.mxu0 0
      %8201 = vmatpush1.bf16.msra.mxu0 0
      %8202 = vmatprep.subr.bf16.mxu0 0
      %8203 = vmatpush1.bf16.msra.mxu0 0
      %8204 = vmatprep.mubr.bf16.mxu0 0
      %8205 = vmatmul.mubr.bf16.gmra.mrb[0].mxu0 %v8108
      %v8206 = vpop.f32.mrb[0].mxu0
      %v8207 = vadd.f32 %v8105, %v8206
      %v8208 = vpop.f32.mrb[0].mxu0
      %v8209 = vadd.f32 %v8105, %v8208
      %v8210 = vpop.f32.mrb[0].mxu0
      %v8211 = vpop.f32.mrb[0].mxu0
      %8212 = vdwg.mxu0
      %8213 = vmatprep.subr.bf16.mxu0 %v8012
      %8214 = vmatpush1.bf16.msra.mxu0 %v8008
      %8215 = vmatprep.subr.bf16.mxu0 %v8040
      %8216 = vmatpush1.bf16.msra.mxu0 %v8036
      %8217 = vmatprep.subr.bf16.mxu0 %v8068
      %8218 = vmatpush1.bf16.msra.mxu0 %v8064
      %8219 = vmatprep.subr.bf16.mxu0 %v8096
      %8220 = vmatpush1.bf16.msra.mxu0 %v8092
      %8221 = vmatprep.subr.bf16.mxu0 %v8126
      %8222 = vmatpush1.bf16.msra.mxu0 %v8123
      %8223 = vmatprep.subr.bf16.mxu0 0
      %8224 = vmatpush1.bf16.msra.mxu0 0
      %8225 = vmatprep.subr.bf16.mxu0 0
      %8226 = vmatpush1.bf16.msra.mxu0 0
      %8227 = vmatprep.subr.bf16.mxu0 0
      %8228 = vmatpush1.bf16.msra.mxu0 0
      %8229 = vmatprep.subr.bf16.mxu0 0
      %8230 = vmatpush1.bf16.msra.mxu0 0
      %8231 = vmatprep.subr.bf16.mxu0 0
      %8232 = vmatpush1.bf16.msra.mxu0 0
      %8233 = vmatprep.subr.bf16.mxu0 0
      %8234 = vmatpush1.bf16.msra.mxu0 0
      %8235 = vmatprep.subr.bf16.mxu0 0
      %8236 = vmatpush1.bf16.msra.mxu0 0
      %8237 = vmatprep.subr.bf16.mxu0 0
      %8238 = vmatpush1.bf16.msra.mxu0 0
      %8239 = vmatprep.subr.bf16.mxu0 0
      %8240 = vmatpush1.bf16.msra.mxu0 0
      %8241 = vmatprep.subr.bf16.mxu0 0
      %8242 = vmatpush1.bf16.msra.mxu0 0
      %8243 = vmatprep.subr.bf16.mxu0 0
      %8244 = vmatpush1.bf16.msra.mxu0 0
      %8245 = vmatprep.mubr.bf16.mxu0 0
      %8246 = vmatmul.mubr.bf16.gmra.mrb[0].mxu0 %v8108
      %v8247 = vpop.f32.mrb[0].mxu0
      %v8248 = vadd.f32 %v8105, %v8247
      %v8249 = vpop.f32.mrb[0].mxu0
      %v8250 = vadd.f32 %v8105, %v8249
      %v8251 = vpop.f32.mrb[0].mxu0
      %v8252 = vpop.f32.mrb[0].mxu0
      %8253 = vdwg.mxu0
      %8254 = vmatprep.subr.bf16.mxu0 0
      %8255 = vmatpush1.bf16.msra.mxu0 %v8016
      %8256 = vmatprep.subr.bf16.mxu0 0
      %8257 = vmatpush1.bf16.msra.mxu0 %v8044
      %8258 = vmatprep.subr.bf16.mxu0 0
      %8259 = vmatpush1.bf16.msra.mxu0 %v8072
      %8260 = vmatprep.subr.bf16.mxu0 0
      %8261 = vmatpush1.bf16.msra.mxu0 %v8100
      %8262 = vmatprep.subr.bf16.mxu0 0
      %8263 = vmatpush1.bf16.msra.mxu0 %v8129
      %8264 = vmatprep.subr.bf16.mxu0 0
      %8265 = vmatpush1.bf16.msra.mxu0 0
      %8266 = vmatprep.subr.bf16.mxu0 0
      %8267 = vmatpush1.bf16.msra.mxu0 0
      %8268 = vmatprep.subr.bf16.mxu0 0
      %8269 = vmatpush1.bf16.msra.mxu0 0
      %8270 = vmatprep.subr.bf16.mxu0 0
      %8271 = vmatpush1.bf16.msra.mxu0 0
      %8272 = vmatprep.subr.bf16.mxu0 0
      %8273 = vmatpush1.bf16.msra.mxu0 0
      %8274 = vmatprep.subr.bf16.mxu0 0
      %8275 = vmatpush1.bf16.msra.mxu0 0
      %8276 = vmatprep.subr.bf16.mxu0 0
      %8277 = vmatpush1.bf16.msra.mxu0 0
      %8278 = vmatprep.subr.bf16.mxu0 0
      %8279 = vmatpush1.bf16.msra.mxu0 0
      %8280 = vmatprep.subr.bf16.mxu0 0
      %8281 = vmatpush1.bf16.msra.mxu0 0
      %8282 = vmatprep.subr.bf16.mxu0 0
      %8283 = vmatpush1.bf16.msra.mxu0 0
      %8284 = vmatprep.subr.bf16.mxu0 0
      %8285 = vmatpush1.bf16.msra.mxu0 0
      %8286 = vmatprep.mubr.bf16.mxu0 0
      %8287 = vmatmul.mubr.bf16.gmra.mrb[0].mxu0 %v8108
      %v8288 = vpop.f32.mrb[0].mxu0
      %v8289 = vadd.f32 %v8105, %v8288
      %v8290 = vpop.f32.mrb[0].mxu0
      %v8291 = vpop.f32.mrb[0].mxu0
      %v8292 = vpop.f32.mrb[0].mxu0
      %8293 = vdwg.mxu0
      %v8294 = vadd.f32 %v8166, %v6923
      %v8295 = vadd.f32 %v8168, %v6925
      %v8296 = vadd.f32 %v8207, %v6964
      %v8297 = vadd.f32 %v8209, %v6966
      %v8298 = vadd.f32 %v8248, %v7005
      %v8299 = vadd.f32 %v8250, %v7007
      %v8300 = vadd.f32 %v8289, %v7046
      %vm8301 = vcmp.gt.f32.partialorder %v8294, 0.0
      %vm8302 = vcmp.gt.f32.partialorder %v8295, 0.0
      %vm8303 = vcmp.gt.f32.partialorder %v8296, 0.0
      %vm8304 = vcmp.gt.f32.partialorder %v8297, 0.0
      %vm8305 = vcmp.gt.f32.partialorder %v8298, 0.0
      %vm8306 = vcmp.gt.f32.partialorder %v8299, 0.0
      %vm8307 = vcmp.gt.f32.partialorder %v8300, 0.0
      %v8308 = vmul.f32 %v8294, 0.01
      %v8309 = vmul.f32 %v8295, 0.01
      %v8310 = vmul.f32 %v8296, 0.01
      %v8311 = vmul.f32 %v8297, 0.01
      %v8312 = vmul.f32 %v8298, 0.01
      %v8313 = vmul.f32 %v8299, 0.01
      %v8314 = vmul.f32 %v8300, 0.01
      %v8315 = vsel %vm8301, %v8294, %v8308
      %v8316 = vsel %vm8302, %v8295, %v8309
      %v8317 = vsel %vm8303, %v8296, %v8310
      %v8318 = vsel %vm8304, %v8297, %v8311
      %v8319 = vsel %vm8305, %v8298, %v8312
      %v8320 = vsel %vm8306, %v8299, %v8313
      %v8321 = vsel %vm8307, %v8300, %v8314
      %v8322 = vld [vmem:[%s2 + $0xd0] sm:$0x1]
      %v8323 = vld [vmem:[%s3 + $0xd0] sm:$0x3]
      %v8324 = vpack.c.bf16 %v8315, %v8315
      %v8325 = vpack.c.bf16 %v8316, %v8316
      %v8326 = vpack.c.bf16 %v8317, %v8317
      %v8327 = vpack.c.bf16 %v8318, %v8318
      %v8328 = vpack.c.bf16 %v8319, %v8319
      %v8329 = vpack.c.bf16 %v8320, %v8320
      %v8330 = vpack.c.bf16 %v8321, %v8321
      %8338 = vrot.lane.b32.xlu0 %v8324, 29
      %v8339 = vpop.permute.xlu0 %8338
      %8340 = vrot.lane.b32.xlu0 %v8325, 29
      %v8341 = vpop.permute.xlu0 %8340
      %8342 = vrot.lane.b32.xlu0 %v8326, 29
      %v8343 = vpop.permute.xlu0 %8342
      %8344 = vrot.lane.b32.xlu0 %v8327, 29
      %v8345 = vpop.permute.xlu0 %8344
      %8346 = vrot.lane.b32.xlu0 %v8328, 29
      %v8347 = vpop.permute.xlu0 %8346
      %8348 = vrot.lane.b32.xlu0 %v8329, 29
      %v8349 = vpop.permute.xlu0 %8348
      %8350 = vrot.lane.b32.xlu0 %v8330, 29
      %v8351 = vpop.permute.xlu0 %8350
      %v8352 = vsel %vm688, %v8339, %v8341
      %v8353 = vsel %vm688, %v8341, %v8343
      %v8354 = vsel %vm688, %v8343, %v8345
      %v8355 = vsel %vm688, %v8345, %v8347
      %v8356 = vsel %vm688, %v8347, %v8349
      %v8357 = vsel %vm688, %v8349, %v8351
      %v8364 = vsel %vm700, 0, %v8339
      %v8367 = vsel %vm705, %v8357, 0
      %v8369 = vmul.bf16 %v8364, %v733
      %v8370 = vmul.bf16 %v8352, %v740
      %v8371 = vmul.bf16 %v8353, %v747
      %v8372 = vmul.bf16 %v8354, %v754
      %v8373 = vmul.bf16 %v8355, %v761
      %v8374 = vmul.bf16 %v8356, %v768
      %v8375 = vmul.bf16 %v8367, %v775
      %v8376 = vmul.bf16 %v8364, %v840
      %v8377 = vmul.bf16 %v8352, %v854
      %v8378 = vmul.bf16 %v8353, %v855
      %v8379 = vmul.bf16 %v8354, %v856
      %v8380 = vmul.bf16 %v8355, %v857
      %v8381 = vmul.bf16 %v8356, %v858
      %v8382 = vmul.bf16 %v8367, %v859
      %v8383 = vmul.bf16 %v8364, %v882
      %v8384 = vmul.bf16 %v8352, %v896
      %v8385 = vmul.bf16 %v8353, %v897
      %v8386 = vmul.bf16 %v8354, %v898
      %v8387 = vmul.bf16 %v8355, %v899
      %v8388 = vmul.bf16 %v8356, %v900
      %v8389 = vmul.bf16 %v8367, %v901
      %v8390 = vmul.bf16 %v8364, %v917
      %v8391 = vmul.bf16 %v8352, %v931
      %v8392 = vmul.bf16 %v8353, %v932
      %v8393 = vmul.bf16 %v8354, %v933
      %v8394 = vmul.bf16 %v8355, %v934
      %v8395 = vmul.bf16 %v8356, %v935
      %v8396 = vmul.bf16 %v8367, %v936
      %v8397 = vmul.bf16 %v8364, %v952
      %v8398 = vmul.bf16 %v8352, %v966
      %v8399 = vmul.bf16 %v8353, %v967
      %v8400 = vmul.bf16 %v8354, %v968
      %v8401 = vmul.bf16 %v8355, %v969
      %v8402 = vmul.bf16 %v8356, %v970
      %v8403 = vmul.bf16 %v8367, %v971
      %v8404 = vmul.bf16 %v8364, %v987
      %v8405 = vmul.bf16 %v8352, %v1001
      %v8406 = vmul.bf16 %v8353, %v1002
      %v8407 = vmul.bf16 %v8354, %v1003
      %v8408 = vmul.bf16 %v8355, %v1004
      %v8409 = vmul.bf16 %v8356, %v1005
      %v8410 = vmul.bf16 %v8367, %v1006
      %v8413 = vrot.slane %v8364, 4
      %v8414 = vrot.slane %v8352, 4
      %v8415 = vrot.slane %v8353, 4
      %v8416 = vrot.slane %v8354, 4
      %v8417 = vrot.slane %v8355, 4
      %v8418 = vrot.slane %v8356, 4
      %v8419 = vrot.slane %v8367, 4
      %8420 = vrot.lane.b32.xlu0 %v8413, 127
      %v8421 = vpop.permute.xlu0 %8420
      %8422 = vrot.lane.b32.xlu0 %v8414, 127
      %v8423 = vpop.permute.xlu0 %8422
      %8424 = vrot.lane.b32.xlu0 %v8415, 127
      %v8425 = vpop.permute.xlu0 %8424
      %8426 = vrot.lane.b32.xlu0 %v8416, 127
      %v8427 = vpop.permute.xlu0 %8426
      %8428 = vrot.lane.b32.xlu0 %v8417, 127
      %v8429 = vpop.permute.xlu0 %8428
      %8430 = vrot.lane.b32.xlu0 %v8418, 127
      %v8431 = vpop.permute.xlu0 %8430
      %8432 = vrot.lane.b32.xlu0 %v8419, 127
      %v8433 = vpop.permute.xlu0 %8432
      %v8434 = vsel %vm1044, %v8421, %v8423
      %v8435 = vsel %vm1044, %v8423, %v8425
      %v8436 = vsel %vm1044, %v8425, %v8427
      %v8437 = vsel %vm1044, %v8427, %v8429
      %v8438 = vsel %vm1044, %v8429, %v8431
      %v8439 = vsel %vm1044, %v8431, %v8433
      %8447 = vrot.lane.b32.xlu0 %v8376, 126
      %v8448 = vpop.permute.xlu0 %8447
      %8449 = vrot.lane.b32.xlu0 %v8377, 126
      %v8450 = vpop.permute.xlu0 %8449
      %8451 = vrot.lane.b32.xlu0 %v8378, 126
      %v8452 = vpop.permute.xlu0 %8451
      %8453 = vrot.lane.b32.xlu0 %v8379, 126
      %v8454 = vpop.permute.xlu0 %8453
      %8455 = vrot.lane.b32.xlu0 %v8380, 126
      %v8456 = vpop.permute.xlu0 %8455
      %8457 = vrot.lane.b32.xlu0 %v8381, 126
      %v8458 = vpop.permute.xlu0 %8457
      %8459 = vrot.lane.b32.xlu0 %v8382, 126
      %v8460 = vpop.permute.xlu0 %8459
      %v8461 = vsel %vm1079, %v8448, %v8450
      %v8462 = vsel %vm1079, %v8450, %v8452
      %v8463 = vsel %vm1079, %v8452, %v8454
      %v8464 = vsel %vm1079, %v8454, %v8456
      %v8465 = vsel %vm1079, %v8456, %v8458
      %v8466 = vsel %vm1079, %v8458, %v8460
      %v8474 = vrot.slane %v8383, 4
      %v8475 = vrot.slane %v8384, 4
      %v8476 = vrot.slane %v8385, 4
      %v8477 = vrot.slane %v8386, 4
      %v8478 = vrot.slane %v8387, 4
      %v8479 = vrot.slane %v8388, 4
      %v8480 = vrot.slane %v8389, 4
      %8481 = vrot.lane.b32.xlu0 %v8474, 100
      %v8482 = vpop.permute.xlu0 %8481
      %8483 = vrot.lane.b32.xlu0 %v8475, 100
      %v8484 = vpop.permute.xlu0 %8483
      %8485 = vrot.lane.b32.xlu0 %v8476, 100
      %v8486 = vpop.permute.xlu0 %8485
      %8487 = vrot.lane.b32.xlu0 %v8477, 100
      %v8488 = vpop.permute.xlu0 %8487
      %8489 = vrot.lane.b32.xlu0 %v8478, 100
      %v8490 = vpop.permute.xlu0 %8489
      %8491 = vrot.lane.b32.xlu0 %v8479, 100
      %v8492 = vpop.permute.xlu0 %8491
      %8493 = vrot.lane.b32.xlu0 %v8480, 100
      %v8494 = vpop.permute.xlu0 %8493
      %v8495 = vsel %vm1114, %v8482, %v8484
      %v8496 = vsel %vm1114, %v8484, %v8486
      %v8497 = vsel %vm1114, %v8486, %v8488
      %v8498 = vsel %vm1114, %v8488, %v8490
      %v8499 = vsel %vm1114, %v8490, %v8492
      %v8500 = vsel %vm1114, %v8492, %v8494
      %8501 = vrot.lane.b32.xlu0 %v8364, 99
      %v8502 = vpop.permute.xlu0 %8501
      %8503 = vrot.lane.b32.xlu0 %v8352, 99
      %v8504 = vpop.permute.xlu0 %8503
      %8505 = vrot.lane.b32.xlu0 %v8353, 99
      %v8506 = vpop.permute.xlu0 %8505
      %8507 = vrot.lane.b32.xlu0 %v8354, 99
      %v8508 = vpop.permute.xlu0 %8507
      %8509 = vrot.lane.b32.xlu0 %v8355, 99
      %v8510 = vpop.permute.xlu0 %8509
      %8511 = vrot.lane.b32.xlu0 %v8356, 99
      %v8512 = vpop.permute.xlu0 %8511
      %8513 = vrot.lane.b32.xlu0 %v8367, 99
      %v8514 = vpop.permute.xlu0 %8513
      %v8515 = vsel %vm1135, %v8502, %v8504
      %v8516 = vsel %vm1135, %v8504, %v8506
      %v8517 = vsel %vm1135, %v8506, %v8508
      %v8518 = vsel %vm1135, %v8508, %v8510
      %v8519 = vsel %vm1135, %v8510, %v8512
      %v8520 = vsel %vm1135, %v8512, %v8514
      %v8528 = vrot.slane %v8390, 4
      %v8529 = vrot.slane %v8391, 4
      %v8530 = vrot.slane %v8392, 4
      %v8531 = vrot.slane %v8393, 4
      %v8532 = vrot.slane %v8394, 4
      %v8533 = vrot.slane %v8395, 4
      %v8534 = vrot.slane %v8396, 4
      %8535 = vrot.lane.b32.xlu0 %v8528, 98
      %v8536 = vpop.permute.xlu0 %8535
      %8537 = vrot.lane.b32.xlu0 %v8529, 98
      %v8538 = vpop.permute.xlu0 %8537
      %8539 = vrot.lane.b32.xlu0 %v8530, 98
      %v8540 = vpop.permute.xlu0 %8539
      %8541 = vrot.lane.b32.xlu0 %v8531, 98
      %v8542 = vpop.permute.xlu0 %8541
      %8543 = vrot.lane.b32.xlu0 %v8532, 98
      %v8544 = vpop.permute.xlu0 %8543
      %8545 = vrot.lane.b32.xlu0 %v8533, 98
      %v8546 = vpop.permute.xlu0 %8545
      %8547 = vrot.lane.b32.xlu0 %v8534, 98
      %v8548 = vpop.permute.xlu0 %8547
      %v8549 = vsel %vm1170, %v8536, %v8538
      %v8550 = vsel %vm1170, %v8538, %v8540
      %v8551 = vsel %vm1170, %v8540, %v8542
      %v8552 = vsel %vm1170, %v8542, %v8544
      %v8553 = vsel %vm1170, %v8544, %v8546
      %v8554 = vsel %vm1170, %v8546, %v8548
      %8562 = vrot.lane.b32.xlu0 %v8397, 72
      %v8563 = vpop.permute.xlu0 %8562
      %8564 = vrot.lane.b32.xlu0 %v8398, 72
      %v8565 = vpop.permute.xlu0 %8564
      %8566 = vrot.lane.b32.xlu0 %v8399, 72
      %v8567 = vpop.permute.xlu0 %8566
      %8568 = vrot.lane.b32.xlu0 %v8400, 72
      %v8569 = vpop.permute.xlu0 %8568
      %8570 = vrot.lane.b32.xlu0 %v8401, 72
      %v8571 = vpop.permute.xlu0 %8570
      %8572 = vrot.lane.b32.xlu0 %v8402, 72
      %v8573 = vpop.permute.xlu0 %8572
      %8574 = vrot.lane.b32.xlu0 %v8403, 72
      %v8575 = vpop.permute.xlu0 %8574
      %v8576 = vsel %vm1205, %v8563, %v8565
      %v8577 = vsel %vm1205, %v8565, %v8567
      %v8578 = vsel %vm1205, %v8567, %v8569
      %v8579 = vsel %vm1205, %v8569, %v8571
      %v8580 = vsel %vm1205, %v8571, %v8573
      %v8581 = vsel %vm1205, %v8573, %v8575
      %8582 = vrot.lane.b32.xlu0 %v8413, 71
      %v8583 = vpop.permute.xlu0 %8582
      %8584 = vrot.lane.b32.xlu0 %v8414, 71
      %v8585 = vpop.permute.xlu0 %8584
      %8586 = vrot.lane.b32.xlu0 %v8415, 71
      %v8587 = vpop.permute.xlu0 %8586
      %8588 = vrot.lane.b32.xlu0 %v8416, 71
      %v8589 = vpop.permute.xlu0 %8588
      %8590 = vrot.lane.b32.xlu0 %v8417, 71
      %v8591 = vpop.permute.xlu0 %8590
      %8592 = vrot.lane.b32.xlu0 %v8418, 71
      %v8593 = vpop.permute.xlu0 %8592
      %8594 = vrot.lane.b32.xlu0 %v8419, 71
      %v8595 = vpop.permute.xlu0 %8594
      %v8596 = vsel %vm1233, %v8583, %v8585
      %v8597 = vsel %vm1233, %v8585, %v8587
      %v8598 = vsel %vm1233, %v8587, %v8589
      %v8599 = vsel %vm1233, %v8589, %v8591
      %v8600 = vsel %vm1233, %v8591, %v8593
      %v8601 = vsel %vm1233, %v8593, %v8595
      %8609 = vrot.lane.b32.xlu0 %v8404, 70
      %v8610 = vpop.permute.xlu0 %8609
      %8611 = vrot.lane.b32.xlu0 %v8405, 70
      %v8612 = vpop.permute.xlu0 %8611
      %8613 = vrot.lane.b32.xlu0 %v8406, 70
      %v8614 = vpop.permute.xlu0 %8613
      %8615 = vrot.lane.b32.xlu0 %v8407, 70
      %v8616 = vpop.permute.xlu0 %8615
      %8617 = vrot.lane.b32.xlu0 %v8408, 70
      %v8618 = vpop.permute.xlu0 %8617
      %8619 = vrot.lane.b32.xlu0 %v8409, 70
      %v8620 = vpop.permute.xlu0 %8619
      %8621 = vrot.lane.b32.xlu0 %v8410, 70
      %v8622 = vpop.permute.xlu0 %8621
      %v8623 = vsel %vm1261, %v8610, %v8612
      %v8624 = vsel %vm1261, %v8612, %v8614
      %v8625 = vsel %vm1261, %v8614, %v8616
      %v8626 = vsel %vm1261, %v8616, %v8618
      %v8627 = vsel %vm1261, %v8618, %v8620
      %v8628 = vsel %vm1261, %v8620, %v8622
      %v8631 = vsel %vm1290, %v8369, %v8434
      %v8635 = vsel %vm1290, %v8370, %v8435
      %v8639 = vsel %vm1290, %v8371, %v8436
      %v8643 = vsel %vm1290, %v8372, %v8437
      %v8647 = vsel %vm1290, %v8373, %v8438
      %v8651 = vsel %vm1290, %v8374, %v8439
      %v8655 = vsel %vm1290, %v8375, %v8433
      %v8659 = vsel %vm1290, %v8461, %v8495
      %v8663 = vsel %vm1290, %v8462, %v8496
      %v8667 = vsel %vm1290, %v8463, %v8497
      %v8671 = vsel %vm1290, %v8464, %v8498
      %v8675 = vsel %vm1290, %v8465, %v8499
      %v8679 = vsel %vm1290, %v8466, %v8500
      %v8683 = vsel %vm1290, %v8460, %v8494
      %v8687 = vsel %vm1290, %v8515, %v8549
      %v8691 = vsel %vm1290, %v8516, %v8550
      %v8695 = vsel %vm1290, %v8517, %v8551
      %v8699 = vsel %vm1290, %v8518, %v8552
      %v8703 = vsel %vm1290, %v8519, %v8553
      %v8707 = vsel %vm1290, %v8520, %v8554
      %v8711 = vsel %vm1290, %v8514, %v8548
      %v8715 = vsel %vm1290, %v8576, %v8596
      %v8719 = vsel %vm1290, %v8577, %v8597
      %v8723 = vsel %vm1290, %v8578, %v8598
      %v8727 = vsel %vm1290, %v8579, %v8599
      %v8731 = vsel %vm1290, %v8580, %v8600
      %v8735 = vsel %vm1290, %v8581, %v8601
      %v8739 = vsel %vm1290, %v8575, %v8595
      %8742 = vset.pattern.permute.xlu0 0
      %8743 = vperm.xlu0 %8742, %v8323
      %v8744 = vpop.permute.xlu0 %8743
      %v8747 = vsel %vm5777, %v8322, 0
      %v8750 = vsel %vm1290, %v8623, 0
      %v8753 = vsel %vm1290, %v8624, 0
      %v8756 = vsel %vm1290, %v8625, 0
      %v8759 = vsel %vm1290, %v8626, 0
      %v8762 = vsel %vm1290, %v8627, 0
      %v8765 = vsel %vm1290, %v8628, 0
      %v8768 = vsel %vm1290, %v8622, 0
      %8770 = vmatprep.subr.bf16.mxu0 %v8635
      %8771 = vmatpush1.bf16.msra.mxu0 %v8631
      %8772 = vmatprep.subr.bf16.mxu0 %v8663
      %8773 = vmatpush1.bf16.msra.mxu0 %v8659
      %8774 = vmatprep.subr.bf16.mxu0 %v8691
      %8775 = vmatpush1.bf16.msra.mxu0 %v8687
      %8776 = vmatprep.subr.bf16.mxu0 %v8719
      %8777 = vmatpush1.bf16.msra.mxu0 %v8715
      %8778 = vmatprep.subr.bf16.mxu0 %v8753
      %8779 = vmatpush1.bf16.msra.mxu0 %v8750
      %8780 = vmatprep.subr.bf16.mxu0 0
      %8781 = vmatpush1.bf16.msra.mxu0 0
      %8782 = vmatprep.subr.bf16.mxu0 0
      %8783 = vmatpush1.bf16.msra.mxu0 0
      %8784 = vmatprep.subr.bf16.mxu0 0
      %8785 = vmatpush1.bf16.msra.mxu0 0
      %8786 = vmatprep.subr.bf16.mxu0 0
      %8787 = vmatpush1.bf16.msra.mxu0 0
      %8788 = vmatprep.subr.bf16.mxu0 0
      %8789 = vmatpush1.bf16.msra.mxu0 0
      %8790 = vmatprep.subr.bf16.mxu0 0
      %8791 = vmatpush1.bf16.msra.mxu0 0
      %8792 = vmatprep.subr.bf16.mxu0 0
      %8793 = vmatpush1.bf16.msra.mxu0 0
      %8794 = vmatprep.subr.bf16.mxu0 0
      %8795 = vmatpush1.bf16.msra.mxu0 0
      %8796 = vmatprep.subr.bf16.mxu0 0
      %8797 = vmatpush1.bf16.msra.mxu0 0
      %8798 = vmatprep.subr.bf16.mxu0 0
      %8799 = vmatpush1.bf16.msra.mxu0 0
      %8800 = vmatprep.subr.bf16.mxu0 0
      %8801 = vmatpush1.bf16.msra.mxu0 0
      %8802 = vmatprep.mubr.bf16.mxu0 0
      %8803 = vmatmul.mubr.bf16.gmra.mrb[0].mxu0 %v8747
      %v8804 = vpop.f32.mrb[0].mxu0
      %v8805 = vadd.f32 %v8744, %v8804
      %v8806 = vpop.f32.mrb[0].mxu0
      %v8807 = vadd.f32 %v8744, %v8806
      %v8808 = vpop.f32.mrb[0].mxu0
      %v8809 = vpop.f32.mrb[0].mxu0
      %8810 = vdwg.mxu0
      %8811 = vmatprep.subr.bf16.mxu0 %v8643
      %8812 = vmatpush1.bf16.msra.mxu0 %v8639
      %8813 = vmatprep.subr.bf16.mxu0 %v8671
      %8814 = vmatpush1.bf16.msra.mxu0 %v8667
      %8815 = vmatprep.subr.bf16.mxu0 %v8699
      %8816 = vmatpush1.bf16.msra.mxu0 %v8695
      %8817 = vmatprep.subr.bf16.mxu0 %v8727
      %8818 = vmatpush1.bf16.msra.mxu0 %v8723
      %8819 = vmatprep.subr.bf16.mxu0 %v8759
      %8820 = vmatpush1.bf16.msra.mxu0 %v8756
      %8821 = vmatprep.subr.bf16.mxu0 0
      %8822 = vmatpush1.bf16.msra.mxu0 0
      %8823 = vmatprep.subr.bf16.mxu0 0
      %8824 = vmatpush1.bf16.msra.mxu0 0
      %8825 = vmatprep.subr.bf16.mxu0 0
      %8826 = vmatpush1.bf16.msra.mxu0 0
      %8827 = vmatprep.subr.bf16.mxu0 0
      %8828 = vmatpush1.bf16.msra.mxu0 0
      %8829 = vmatprep.subr.bf16.mxu0 0
      %8830 = vmatpush1.bf16.msra.mxu0 0
      %8831 = vmatprep.subr.bf16.mxu0 0
      %8832 = vmatpush1.bf16.msra.mxu0 0
      %8833 = vmatprep.subr.bf16.mxu0 0
      %8834 = vmatpush1.bf16.msra.mxu0 0
      %8835 = vmatprep.subr.bf16.mxu0 0
      %8836 = vmatpush1.bf16.msra.mxu0 0
      %8837 = vmatprep.subr.bf16.mxu0 0
      %8838 = vmatpush1.bf16.msra.mxu0 0
      %8839 = vmatprep.subr.bf16.mxu0 0
      %8840 = vmatpush1.bf16.msra.mxu0 0
      %8841 = vmatprep.subr.bf16.mxu0 0
      %8842 = vmatpush1.bf16.msra.mxu0 0
      %8843 = vmatprep.mubr.bf16.mxu0 0
      %8844 = vmatmul.mubr.bf16.gmra.mrb[0].mxu0 %v8747
      %v8845 = vpop.f32.mrb[0].mxu0
      %v8846 = vadd.f32 %v8744, %v8845
      %v8847 = vpop.f32.mrb[0].mxu0
      %v8848 = vadd.f32 %v8744, %v8847
      %v8849 = vpop.f32.mrb[0].mxu0
      %v8850 = vpop.f32.mrb[0].mxu0
      %8851 = vdwg.mxu0
      %8852 = vmatprep.subr.bf16.mxu0 %v8651
      %8853 = vmatpush1.bf16.msra.mxu0 %v8647
      %8854 = vmatprep.subr.bf16.mxu0 %v8679
      %8855 = vmatpush1.bf16.msra.mxu0 %v8675
      %8856 = vmatprep.subr.bf16.mxu0 %v8707
      %8857 = vmatpush1.bf16.msra.mxu0 %v8703
      %8858 = vmatprep.subr.bf16.mxu0 %v8735
      %8859 = vmatpush1.bf16.msra.mxu0 %v8731
      %8860 = vmatprep.subr.bf16.mxu0 %v8765
      %8861 = vmatpush1.bf16.msra.mxu0 %v8762
      %8862 = vmatprep.subr.bf16.mxu0 0
      %8863 = vmatpush1.bf16.msra.mxu0 0
      %8864 = vmatprep.subr.bf16.mxu0 0
      %8865 = vmatpush1.bf16.msra.mxu0 0
      %8866 = vmatprep.subr.bf16.mxu0 0
      %8867 = vmatpush1.bf16.msra.mxu0 0
      %8868 = vmatprep.subr.bf16.mxu0 0
      %8869 = vmatpush1.bf16.msra.mxu0 0
      %8870 = vmatprep.subr.bf16.mxu0 0
      %8871 = vmatpush1.bf16.msra.mxu0 0
      %8872 = vmatprep.subr.bf16.mxu0 0
      %8873 = vmatpush1.bf16.msra.mxu0 0
      %8874 = vmatprep.subr.bf16.mxu0 0
      %8875 = vmatpush1.bf16.msra.mxu0 0
      %8876 = vmatprep.subr.bf16.mxu0 0
      %8877 = vmatpush1.bf16.msra.mxu0 0
      %8878 = vmatprep.subr.bf16.mxu0 0
      %8879 = vmatpush1.bf16.msra.mxu0 0
      %8880 = vmatprep.subr.bf16.mxu0 0
      %8881 = vmatpush1.bf16.msra.mxu0 0
      %8882 = vmatprep.subr.bf16.mxu0 0
      %8883 = vmatpush1.bf16.msra.mxu0 0
      %8884 = vmatprep.mubr.bf16.mxu0 0
      %8885 = vmatmul.mubr.bf16.gmra.mrb[0].mxu0 %v8747
      %v8886 = vpop.f32.mrb[0].mxu0
      %v8887 = vadd.f32 %v8744, %v8886
      %v8888 = vpop.f32.mrb[0].mxu0
      %v8889 = vadd.f32 %v8744, %v8888
      %v8890 = vpop.f32.mrb[0].mxu0
      %v8891 = vpop.f32.mrb[0].mxu0
      %8892 = vdwg.mxu0
      %8893 = vmatprep.subr.bf16.mxu0 0
      %8894 = vmatpush1.bf16.msra.mxu0 %v8655
      %8895 = vmatprep.subr.bf16.mxu0 0
      %8896 = vmatpush1.bf16.msra.mxu0 %v8683
      %8897 = vmatprep.subr.bf16.mxu0 0
      %8898 = vmatpush1.bf16.msra.mxu0 %v8711
      %8899 = vmatprep.subr.bf16.mxu0 0
      %8900 = vmatpush1.bf16.msra.mxu0 %v8739
      %8901 = vmatprep.subr.bf16.mxu0 0
      %8902 = vmatpush1.bf16.msra.mxu0 %v8768
      %8903 = vmatprep.subr.bf16.mxu0 0
      %8904 = vmatpush1.bf16.msra.mxu0 0
      %8905 = vmatprep.subr.bf16.mxu0 0
      %8906 = vmatpush1.bf16.msra.mxu0 0
      %8907 = vmatprep.subr.bf16.mxu0 0
      %8908 = vmatpush1.bf16.msra.mxu0 0
      %8909 = vmatprep.subr.bf16.mxu0 0
      %8910 = vmatpush1.bf16.msra.mxu0 0
      %8911 = vmatprep.subr.bf16.mxu0 0
      %8912 = vmatpush1.bf16.msra.mxu0 0
      %8913 = vmatprep.subr.bf16.mxu0 0
      %8914 = vmatpush1.bf16.msra.mxu0 0
      %8915 = vmatprep.subr.bf16.mxu0 0
      %8916 = vmatpush1.bf16.msra.mxu0 0
      %8917 = vmatprep.subr.bf16.mxu0 0
      %8918 = vmatpush1.bf16.msra.mxu0 0
      %8919 = vmatprep.subr.bf16.mxu0 0
      %8920 = vmatpush1.bf16.msra.mxu0 0
      %8921 = vmatprep.subr.bf16.mxu0 0
      %8922 = vmatpush1.bf16.msra.mxu0 0
      %8923 = vmatprep.subr.bf16.mxu0 0
      %8924 = vmatpush1.bf16.msra.mxu0 0
      %8925 = vmatprep.mubr.bf16.mxu0 0
      %8926 = vmatmul.mubr.bf16.gmra.mrb[0].mxu0 %v8747
      %v8927 = vpop.f32.mrb[0].mxu0
      %v8928 = vadd.f32 %v8744, %v8927
      %v8929 = vpop.f32.mrb[0].mxu0
      %v8930 = vpop.f32.mrb[0].mxu0
      %v8931 = vpop.f32.mrb[0].mxu0
      %8932 = vdwg.mxu0
      %v8933 = vand.u32 2147483647, %v8805
      %v8934 = vand.u32 2147483647, %v8807
      %v8935 = vand.u32 2147483647, %v8846
      %v8936 = vand.u32 2147483647, %v8848
      %v8937 = vand.u32 2147483647, %v8887
      %v8938 = vand.u32 2147483647, %v8889
      %v8939 = vand.u32 2147483647, %v8928
      %v8940 = vsub.f32 0.0, %v8933
      %v8941 = vsub.f32 0.0, %v8934
      %v8942 = vsub.f32 0.0, %v8935
      %v8943 = vsub.f32 0.0, %v8936
      %v8944 = vsub.f32 0.0, %v8937
      %v8945 = vsub.f32 0.0, %v8938
      %v8946 = vsub.f32 0.0, %v8939
      %v8947 = vmul.f32 %v8940, 1.442695
      %v8948 = vpow.pop %v8947
      %v8949 = vmul.f32 %v8941, 1.442695
      %v8950 = vpow.pop %v8949
      %v8951 = vmul.f32 %v8942, 1.442695
      %v8952 = vpow.pop %v8951
      %v8953 = vmul.f32 %v8943, 1.442695
      %v8954 = vpow.pop %v8953
      %v8955 = vmul.f32 %v8944, 1.442695
      %v8956 = vpow.pop %v8955
      %v8957 = vmul.f32 %v8945, 1.442695
      %v8958 = vpow.pop %v8957
      %v8959 = vmul.f32 %v8946, 1.442695
      %v8960 = vpow.pop %v8959
      %v8961 = vadd.f32 %v8948, 1.0
      %v8962 = vadd.f32 %v8950, 1.0
      %v8963 = vadd.f32 %v8952, 1.0
      %v8964 = vadd.f32 %v8954, 1.0
      %v8965 = vadd.f32 %v8956, 1.0
      %v8966 = vadd.f32 %v8958, 1.0
      %v8967 = vadd.f32 %v8960, 1.0
      %v8968 = vrcp.pop %v8961
      %v8969 = vrcp.pop %v8962
      %v8970 = vrcp.pop %v8963
      %v8971 = vrcp.pop %v8964
      %v8972 = vrcp.pop %v8965
      %v8973 = vrcp.pop %v8966
      %v8974 = vrcp.pop %v8967
      %vm8975 = vcmp.ge.f32.partialorder %v8805, 0.0
      %vm8976 = vcmp.ge.f32.partialorder %v8807, 0.0
      %vm8977 = vcmp.ge.f32.partialorder %v8846, 0.0
      %vm8978 = vcmp.ge.f32.partialorder %v8848, 0.0
      %vm8979 = vcmp.ge.f32.partialorder %v8887, 0.0
      %vm8980 = vcmp.ge.f32.partialorder %v8889, 0.0
      %vm8981 = vcmp.ge.f32.partialorder %v8928, 0.0
      %v8982 = vmul.f32 %v8948, %v8968
      %v8983 = vmul.f32 %v8950, %v8969
      %v8984 = vmul.f32 %v8952, %v8970
      %v8985 = vmul.f32 %v8954, %v8971
      %v8986 = vmul.f32 %v8956, %v8972
      %v8987 = vmul.f32 %v8958, %v8973
      %v8988 = vmul.f32 %v8960, %v8974
      %v8989 = vsel %vm8975, %v8968, %v8982
      %v8990 = vsel %vm8976, %v8969, %v8983
      %v8991 = vsel %vm8977, %v8970, %v8984
      %v8992 = vsel %vm8978, %v8971, %v8985
      %v8993 = vsel %vm8979, %v8972, %v8986
      %v8994 = vsel %vm8980, %v8973, %v8987
      %v8995 = vsel %vm8981, %v8974, %v8988
      %v9003 = vcombine.low %v8989, %v8990
      %v9004 = vcombine.low %v8991, %v8992
      %v9006 = vunpack.c.l.s4 1983009808
      %v9007 = vunpack.c.0.s8 %v9006
      %v9008 = vlaneseq
      %v9009 = vshrl.u32 %v9008, 7
      %v9010 = vsub.s32 %v9007, %v9009
      %v9011 = vrot.slane %v9003, %v9010
      %v9013 = vunpack.c.l.s4 1983009808
      %v9014 = vunpack.c.0.s8 %v9013
      %v9015 = vlaneseq
      %v9016 = vshrl.u32 %v9015, 7
      %v9017 = vsub.s32 %v9014, %v9016
      %v9018 = vrot.slane %v9004, %v9017
      %v9019 = vcombine.low %v9011, %v9018
      %v9020 = vcombine.low %v8993, %v8994
      %v9022 = vunpack.c.l.s4 1983009808
      %v9023 = vunpack.c.0.s8 %v9022
      %v9024 = vlaneseq
      %v9025 = vshrl.u32 %v9024, 7
      %v9026 = vsub.s32 %v9023, %v9025
      %v9027 = vrot.slane %v9020, %v9026
      %v9029 = vunpack.c.l.s4 1983009808
      %v9030 = vunpack.c.0.s8 %v9029
      %v9031 = vlaneseq
      %v9032 = vshrl.u32 %v9031, 7
      %v9033 = vsub.s32 %v9030, %v9032
      %v9034 = vrot.slane %v8995, %v9033
      %v9035 = vcombine.low %v9027, %v9034
      %9038 = vst [vmem:[%s622] sm:$0xff] %v9019
      %vm9039 = vcmask 1043458
      %vm9040 = vmor %vm9039, %vm1268
      %vm9041 = vcmask 128004
      %vm9042 = vmor %vm9041, %vm9040
      %9043 = vst.msk [vmem:[%s622 + $0x8] sm:$0x3f] %vm9042, %v9035
      %p9044 = scmp.lt.s32.totalorder %s31, 1
      %s9045 = scalar_select %p9044, %s31, 1
      %s9046 = smul.addr %s9045, 7
      %s9047 = smul.addr %s9046, 2
      %s9048 = scalar_lea.vmem %s18, %s9047
      %p9049 = scmp.lt.s32.totalorder %s31, 1
      %s9050 = scalar_select %p9049, %s31, 1
      %s9051 = scalar_lea.vmem %s19, %s9050
      // Predicated region
      $region93: #{encoder_decoder_forward.1} parent=91 // pred_check
        %p9052 = pneg %p437
      $region94: #{encoder_decoder_forward.1} parent=91 // pred_check_branch
        %9054 = sbr.rel (%p9052) target = $region96
      $region95: #{encoder_decoder_forward.1} parent=91 // pred_region
        _
      $region96: #{encoder_decoder_forward.1} parent=91 // pred_fallthru
        _
      // Predicated region
      $region97: #{encoder_decoder_forward.1} parent=91 // pred_check
        %p9055 = pneg %p463
      $region98: #{encoder_decoder_forward.1} parent=91 // pred_check_branch
        %9057 = sbr.rel (%p9055) target = $region100
      $region99: #{encoder_decoder_forward.1} parent=91 // pred_region
        _
      $region100: #{encoder_decoder_forward.1} parent=91 // pred_fallthru
        _
    $region92: #{encoder_decoder_forward.1} parent=5 // pred_fallthru
      _
    %p9058 = scmp.le.s32.totalorder 2, %s26
    // Predicated region
    $region101: #{encoder_decoder_forward.1} parent=5 // pred_check
      %p9059 = pneg %p9058
    $region102: #{encoder_decoder_forward.1} parent=5 // pred_check_branch
      %9061 = sbr.rel (%p9059) target = $region104
    $region103: #{encoder_decoder_forward.1} parent=5 // pred_region
      %s9062 = ssub.s32 %s26, 2
      // Predicated region
      $region105: #{encoder_decoder_forward.1} parent=103 // pred_check
        %p9063 = pneg %p443
      $region106: #{encoder_decoder_forward.1} parent=103 // pred_check_branch
        %9065 = sbr.rel (%p9063) target = $region108
      $region107: #{encoder_decoder_forward.1} parent=103 // pred_region
        %p9066 = scmp.lt.s32.totalorder %s32, 1
        %s9067 = scalar_select %p9066, %s32, 1
        %s9068 = smul.addr %s9067, 7
        %s9069 = smul.addr %s9068, 2
        %s9070 = scalar_lea.vmem %s18, %s9069
      $region108: #{encoder_decoder_forward.1} parent=103 // pred_fallthru
        _
      // Predicated region
      $region109: #{encoder_decoder_forward.1} parent=103 // pred_check
        %p9071 = pneg %p469
      $region110: #{encoder_decoder_forward.1} parent=103 // pred_check_branch
        %9073 = sbr.rel (%p9071) target = $region112
      $region111: #{encoder_decoder_forward.1} parent=103 // pred_region
        %p9074 = scmp.lt.s32.totalorder %s32, 1
        %s9075 = scalar_select %p9074, %s32, 1
        %s9076 = scalar_lea.vmem %s19, %s9075
      $region112: #{encoder_decoder_forward.1} parent=103 // pred_fallthru
        _
    $region104: #{encoder_decoder_forward.1} parent=5 // pred_fallthru
      _
  $region6: #{encoder_decoder_forward.1} parent=0 // loop_footer
    %s30 = sadd.s32 1, %s26
  $region7: #{encoder_decoder_forward.1} parent=0 // loop_footer_branch
    %25 = sbr.rel target = $region3
  $region8: #{encoder_decoder_forward.1} parent=0 // loop_exit
    _

</llo_original>
